<compile_context>
chip_gen: v5e
topology: v5e:2x2
jax: 0.10.0
libtpu: 0.0.40
codegen_flags: <defaults>
</compile_context>

<pallas_src>
import functools

import jax
import jax.numpy as jnp
from jax import lax
from jax.experimental import pallas as pl
from jax.experimental.pallas import tpu as pltpu

START_TAG = 26
STOP_TAG = 27
_BB = 8          # sentences per grid step == f32 sublane count of one vreg


# ---------------------------------------------------------------------------
# Weight packing: every parameter goes into one (rows, 128) f32 slab with
# 8-row-aligned pieces, so the kernel sees a single VMEM-resident input and
# unpacks it with static ref slices.
# ---------------------------------------------------------------------------
def _pack_weights(params, *, num_layers):
    def piece(mat):
        mat = jnp.asarray(mat, jnp.float32)
        r, c = mat.shape
        return jnp.pad(mat, ((0, (-r) % 8), (0, 128 - c)))

    items = []
    for l in range(num_layers):
        p = params["lstm"][l]
        for d in ("f", "b"):
            items += [(f"wih_{d}{l}", p["wih_" + d]),
                      (f"whh_{d}{l}", p["whh_" + d]),
                      (f"b_{d}{l}", p["b_" + d])]
    items += [("proj_w", params["proj_w_t"]),
              ("proj_b", params["proj_b"]),
              ("trans", params["transitions"]),
              ("trans_t", params["transitions"].T)]

    offs, pieces, cur = {}, [], 0
    for name, mat in items:
        offs[name] = cur
        padded = piece(mat)
        pieces.append(padded)
        cur += padded.shape[0]
    return jnp.concatenate(pieces, axis=0), offs


# ---------------------------------------------------------------------------
# Fused kernel: BiLSTM (all layers, both directions, batched over BB
# sentences) + tag projection + per-sentence Viterbi DP + backtrace.
# ---------------------------------------------------------------------------
def _make_kernel(T, BB, H, E0, tag, num_layers, offs, start_tag, stop_tag):
    H4 = 4 * H

    def sigmoid(x):
        # one EUP op (tanh) instead of exp + reciprocal
        return 0.5 * jnp.tanh(0.5 * x) + 0.5

    def kernel(x_ref, w_ref, out_ref):
        def w(name, rows, cols):
            r0 = offs[name]
            return w_ref[r0:r0 + rows, 0:cols]

        # -------- BiLSTM, batched over BB sentences -----------------------
        def lstm_direction(xw, whh, reverse):
            # xw : (T*BB, 4H) hoisted input projection (time-major rows)
            # whh: (H, 4H)
            h = jnp.ones((BB, H), jnp.float32)       # init_hidden() uses ones
            c = jnp.ones((BB, H), jnp.float32)
            hs = [None] * T
            steps = range(T - 1, -1, -1) if reverse else range(T)
            for t in steps:                           # fully unrolled
                g = xw[t * BB:(t + 1) * BB, :] + jnp.dot(
                    h, whh, preferred_element_type=jnp.float32)
                i_g = sigmoid(g[:, 0:H])
                f_g = sigmoid(g[:, H:2 * H])
                g_g = jnp.tanh(g[:, 2 * H:3 * H])
                o_g = sigmoid(g[:, 3 * H:4 * H])
                c = f_g * c + i_g * g_g
                h = o_g * jnp.tanh(c)
                hs[t] = h
            return jnp.concatenate(hs, axis=0)        # (T*BB, H), time-major

        parts, dims = [x_ref[...]], [E0]
        for l in range(num_layers):
            def x_proj(d):
                acc = w(f"b_{d}{l}", 1, H4)                       # (1, 4H)
                r0 = offs[f"wih_{d}{l}"]
                off = 0
                for p, dim in zip(parts, dims):
                    acc = acc + jnp.dot(
                        p, w_ref[r0 + off:r0 + off + dim, 0:H4],
                        preferred_element_type=jnp.float32)
                    off += dim
                return acc                                         # (T*BB, 4H)

            hs_f = lstm_direction(x_proj("f"), w(f"whh_f{l}", H, H4), False)
            hs_b = lstm_direction(x_proj("b"), w(f"whh_b{l}", H, H4), True)
            parts, dims = [hs_f, hs_b], [H, H]

        # -------- tag projection ------------------------------------------
        logits = w("proj_b", 1, tag)                               # (1, tag)
        r0 = offs["proj_w"]
        off = 0
        for p, dim in zip(parts, dims):
            logits = logits + jnp.dot(p, w_ref[r0 + off:r0 + off + dim, 0:tag],
                                      preferred_element_type=jnp.float32)
            off += dim                                             # (T*BB, tag)
        logits_t = logits.T                                        # (tag, T*BB)

        # -------- per-sentence Viterbi DP + backtrace ----------------------
        trans = w("trans", tag, tag)                               # [next, prev]
        trans_t = w("trans_t", tag, tag)                           # [prev, next]
        lane_tag = lax.broadcasted_iota(jnp.int32, (1, tag), 1)
        lane_tag_f = lane_tag.astype(jnp.float32)
        sub_tag_f = lax.broadcasted_iota(jnp.int32, (tag, 1), 0).astype(jnp.float32)
        lane128 = lax.broadcasted_iota(jnp.int32, (1, 128), 1)
        row_bb = lax.broadcasted_iota(jnp.int32, (BB, 128), 0)
        fv_init = jnp.where(lane_tag == start_tag, 0.0, -10000.0)  # (1, tag)

        def first_argmax(scores, mx, axis):
            # index (as f32) of the first maximum along `axis`
            idx = lax.broadcasted_iota(jnp.int32, scores.shape, axis
                                       ).astype(jnp.float32)
            return jnp.min(jnp.where(scores == mx, idx, float(tag)),
                           axis=axis, keepdims=True)

        def select_bp(bp, cur):          # bp[cur] as a (1, 1) f32
            if bp.shape[0] == 1:         # row (1, tag)
                return jnp.sum(jnp.where(lane_tag_f == cur, bp, 0.0),
                               axis=1, keepdims=True)
            return jnp.sum(jnp.where(sub_tag_f == cur, bp, 0.0),
                           axis=0, keepdims=True)                  # col (tag, 1)

        out = jnp.zeros((BB, 128), jnp.float32)
        for b in range(BB):
            fv = fv_init
            bps = []
            for t in range(T):
                r = t * BB + b
                if fv.shape[0] == 1:     # fv is a row over prev (lanes)
                    scores = trans + fv                            # [next, prev]
                    mx = jnp.max(scores, axis=1, keepdims=True)    # (tag, 1)
                    bps.append(first_argmax(scores, mx, axis=1))   # (tag, 1)
                    fv = mx + logits_t[:, r:r + 1]                 # -> col (tag,1)
                else:                    # fv is a column over prev (sublanes)
                    scores = trans_t + fv                          # [prev, next]
                    mx = jnp.max(scores, axis=0, keepdims=True)    # (1, tag)
                    bps.append(first_argmax(scores, mx, axis=0))   # (1, tag)
                    fv = mx + logits[r:r + 1, :]                   # -> row (1,tag)

            if fv.shape[0] == 1:         # terminal, row orientation
                term = fv + trans[stop_tag:stop_tag + 1, :]
                path_score = jnp.max(term, axis=1, keepdims=True)
                best = first_argmax(term, path_score, axis=1)
            else:                        # terminal, column orientation
                term = fv + trans_t[:, stop_tag:stop_tag + 1]
                path_score = jnp.max(term, axis=0, keepdims=True)
                best = first_argmax(term, path_score, axis=0)

            # in-kernel backtrace, accumulated into one lane-dense row
            cur = best                                             # (1, 1) f32
            row = jnp.where(lane128 == (T - 1), cur,
                            jnp.zeros((1, 128), jnp.float32))
            for t in range(T - 1, 0, -1):
                cur = select_bp(bps[t], cur)
                row = jnp.where(lane128 == (t - 1), cur, row)
            start = select_bp(bps[0], cur)                         # == START_TAG
            row = jnp.where(lane128 == T, path_score, row)
            row = jnp.where(lane128 == T + 1, start, row)
            out = jnp.where(row_bb == b, row, out)

        out_ref[...] = out               # single unmasked (8,128) store

    return kernel


# ---------------------------------------------------------------------------
# Wrapper: batched forward() of NER_Model.
# ---------------------------------------------------------------------------
@functools.partial(jax.jit, static_argnames=("hidden", "num_layers"))
def ner_forward(sentence, features, params, *, hidden, num_layers):
    """Returns per-sentence (path_score, tag_seq, start).

    `start` mirrors the reference's in-Python `assert start == START_TAG`.
    TODO(synk): the reference _viterbi_decode only type-checks for a single
    2-D feature matrix; we apply it independently to every batch row (the
    intended semantics).
    """
    B, T = sentence.shape
    trans = params["transitions"]
    tag = trans.shape[0]
    if tag <= max(START_TAG, STOP_TAG):
        raise ValueError("tag_size must cover START_TAG / STOP_TAG")
    if 4 * hidden > 128 or tag > 128 or T + 2 > 128:
        raise ValueError("this packing assumes 4*hidden, tag_size, T+2 <= 128")

    # Tiny embedding gather + concat stays in XLA; everything else in-kernel.
    we = params["word_emb"][sentence]                         # (B, T, Dw)
    fe = params["feat_emb"][features]                         # (B, T, Df)
    x = jnp.concatenate([we, fe], axis=2).astype(jnp.float32)  # (B, T, E0)
    E0 = x.shape[-1]

    BB = _BB
    pad_b = (-B) % BB
    if pad_b:
        x = jnp.pad(x, ((0, pad_b), (0, 0), (0, 0)))
    nb = (B + pad_b) // BB
    # rows = g*T*BB + t*BB + b_local  (time-major within each 8-sentence block)
    x = x.reshape(nb, BB, T, E0).transpose(0, 2, 1, 3).reshape(nb * T * BB, E0)

    slab, offs = _pack_weights(params, num_layers=num_layers)
    kernel = _make_kernel(T, BB, hidden, E0, tag, num_layers, offs,
                          START_TAG, STOP_TAG)

    out = pl.pallas_call(
        kernel,
        out_shape=jax.ShapeDtypeStruct((nb * BB, 128), jnp.float32),
        grid=(nb,),
        in_specs=[pl.BlockSpec((T * BB, E0), lambda g: (g, 0)),
                  pl.BlockSpec(slab.shape, lambda g: (0, 0))],  # VMEM-resident
        out_specs=pl.BlockSpec((BB, 128), lambda g: (g, 0)),
        compiler_params=pltpu.CompilerParams(
            dimension_semantics=("parallel",)),                 # 2 TCs on v7x
    )(x, slab)

    out = out[:B]
    score = out[:, T]
    path = out[:, :T].astype(jnp.int32)
    start = out[:, T + 1].astype(jnp.int32)
    return score, path, start


# ---------------------------------------------------------------------------
# Deterministic parameter init (shapes from NER_Model.__init__), weights
# pre-transposed to the layouts the kernel consumes.
# ---------------------------------------------------------------------------
def init_params(key, *, hidden, num_layers, word_vocab, word_dim,
                feat_vocab, feat_dim, tag_size):
    keys = jax.random.split(key, 8 + 8 * num_layers)
    ki = iter(keys)
    params = {
        "word_emb": jax.random.normal(next(ki), (word_vocab, word_dim), jnp.float32),
        "feat_emb": jax.random.normal(next(ki), (feat_vocab, feat_dim), jnp.float32),
        "transitions": jax.random.normal(next(ki), (tag_size, tag_size), jnp.float32),
    }
    k_lstm = 1.0 / jnp.sqrt(hidden)
    lstm_layers = []
    for l in range(num_layers):
        in_dim = (word_dim + feat_dim) if l == 0 else 2 * hidden
        layer = {}
        for d in ("f", "b"):
            w_ih = jax.random.uniform(next(ki), (4 * hidden, in_dim),
                                      jnp.float32, -k_lstm, k_lstm)
            w_hh = jax.random.uniform(next(ki), (4 * hidden, hidden),
                                      jnp.float32, -k_lstm, k_lstm)
            b_ih = jax.random.uniform(next(ki), (4 * hidden,),
                                      jnp.float32, -k_lstm, k_lstm)
            b_hh = jax.random.uniform(next(ki), (4 * hidden,),
                                      jnp.float32, -k_lstm, k_lstm)
            layer["wih_" + d] = w_ih.T                          # (in, 4H)
            layer["whh_" + d] = w_hh.T                          # (H, 4H)
            layer["b_" + d] = (b_ih + b_hh).reshape(1, 4 * hidden)
        lstm_layers.append(layer)
    params["lstm"] = lstm_layers

    k_proj = 1.0 / jnp.sqrt(2 * hidden)
    proj_w = jax.random.uniform(next(ki), (tag_size, 2 * hidden),
                                jnp.float32, -k_proj, k_proj)
    proj_b = jax.random.uniform(next(ki), (tag_size,),
                                jnp.float32, -k_proj, k_proj)
    params["proj_w_t"] = proj_w.T                               # (2H, tag)
    params["proj_b"] = proj_b.reshape(1, tag_size)
    return params


if __name__ == "__main__":
    blstm_hidden_size = 16
    num_layers = 1
    word_embedding_size = 50
    word_embedding_dim = 16
    feature_embedding_size = 12
    feature_embedding_dim = 8
    tag_size = 28            # must cover START_TAG=26, STOP_TAG=27
    batch, seq = 16, 8       # 2 grid steps of 8 sentences each

    key = jax.random.PRNGKey(0)
    k_par, k_sent, k_feat = jax.random.split(key, 3)
    params = init_params(k_par,
                         hidden=blstm_hidden_size, num_layers=num_layers,
                         word_vocab=word_embedding_size,
                         word_dim=word_embedding_dim,
                         feat_vocab=feature_embedding_size,
                         feat_dim=feature_embedding_dim,
                         tag_size=tag_size)

    sentence = jax.random.randint(k_sent, (batch, seq), 0, word_embedding_size,
                                  dtype=jnp.int32)
    features = jax.random.randint(k_feat, (batch, seq), 0, feature_embedding_size,
                                  dtype=jnp.int32)

    score, tag_seq, start = jax.block_until_ready(
        ner_forward(sentence, features, params,
                    hidden=blstm_hidden_size, num_layers=num_layers))

    assert tag_seq.shape == (batch, seq)
    assert bool(jnp.all(start == START_TAG))   # mirrors `assert start == START_TAG`
    assert bool(jnp.all(jnp.isfinite(score)))
    assert bool(jnp.all((tag_seq >= 0) & (tag_seq < tag_size)))
    print("KERNEL_OK")
</pallas_src>

<mosaic_0001>
module attributes {stable_mosaic.version = 11 : i64} {
  func.func @kernel(%arg0: i32, %arg1: memref<64x24xf32, #tpu.memory_space<vmem>>, %arg2: memref<200x128xf32, #tpu.memory_space<vmem>>, %arg3: memref<8x128xf32, #tpu.memory_space<vmem>>) attributes {dimension_semantics = [#tpu.dimension_semantics<parallel>], iteration_bounds = array<i64: 2>, scalar_prefetch = 0 : i64, scratch_operands = 0 : i64, tpu.core_type = #tpu.core_type<tc>, window_params = [{transform_indices = @transform_0, window_bounds = array<i64: 64, 24>}, {pipeline_mode = #tpu.pipeline_mode<synchronous>, transform_indices = @transform_1, window_bounds = array<i64: 200, 128>}, {transform_indices = @transform_2, window_bounds = array<i64: 8, 128>}]} {
    %c0 = arith.constant 0 : index
    %c0_0 = arith.constant 0 : index
    %0 = vector.load %arg1[%c0, %c0_0] : memref<64x24xf32, #tpu.memory_space<vmem>>, vector<64x24xf32>
    %c40 = arith.constant 40 : index
    %c0_1 = arith.constant 0 : index
    %1 = vector.load %arg2[%c40, %c0_1] : memref<200x128xf32, #tpu.memory_space<vmem>>, vector<1x64xf32>
    %c0_2 = arith.constant 0 : index
    %c0_3 = arith.constant 0 : index
    %2 = vector.load %arg2[%c0_2, %c0_3] : memref<200x128xf32, #tpu.memory_space<vmem>>, vector<24x64xf32>
    %cst = arith.constant dense<0.000000e+00> : vector<64x64xf32>
    %3 = tpu.matmul %0, %2, %cst {dimension_numbers = #tpu.dot_dimension_numbers<[1], [0], [0], [1], [0, 0, 1, 1], [], []>} : vector<64x24xf32>, vector<24x64xf32>, vector<64x64xf32> -> vector<64x64xf32>
    %4 = vector.broadcast %1 : vector<1x64xf32> to vector<64x64xf32>
    %5 = arith.addf %4, %3 : vector<64x64xf32>
    %c24 = arith.constant 24 : index
    %c0_4 = arith.constant 0 : index
    %6 = vector.load %arg2[%c24, %c0_4] : memref<200x128xf32, #tpu.memory_space<vmem>>, vector<16x64xf32>
    %cst_5 = arith.constant 1.000000e+00 : f32
    %7 = vector.broadcast %cst_5 : f32 to vector<8x16xf32>
    %cst_6 = arith.constant 1.000000e+00 : f32
    %8 = vector.broadcast %cst_6 : f32 to vector<8x16xf32>
    %9 = vector.extract_strided_slice %5 {offsets = [0, 0], sizes = [8, 64], strides = [1, 1]} : vector<64x64xf32> to vector<8x64xf32>
    %cst_7 = arith.constant dense<0.000000e+00> : vector<8x64xf32>
    %10 = tpu.matmul %7, %6, %cst_7 {dimension_numbers = #tpu.dot_dimension_numbers<[1], [0], [0], [1], [0, 0, 1, 1], [], []>} : vector<8x16xf32>, vector<16x64xf32>, vector<8x64xf32> -> vector<8x64xf32>
    %11 = arith.addf %9, %10 : vector<8x64xf32>
    %12 = vector.extract_strided_slice %11 {offsets = [0, 0], sizes = [8, 16], strides = [1, 1]} : vector<8x64xf32> to vector<8x16xf32>
    %cst_8 = arith.constant 5.000000e-01 : f32
    %13 = vector.broadcast %cst_8 : f32 to vector<8x16xf32>
    %14 = arith.mulf %13, %12 : vector<8x16xf32>
    %15 = math.tanh %14 : vector<8x16xf32>
    %cst_9 = arith.constant 5.000000e-01 : f32
    %16 = vector.broadcast %cst_9 : f32 to vector<8x16xf32>
    %17 = arith.mulf %16, %15 : vector<8x16xf32>
    %cst_10 = arith.constant 5.000000e-01 : f32
    %18 = vector.broadcast %cst_10 : f32 to vector<8x16xf32>
    %19 = arith.addf %17, %18 : vector<8x16xf32>
    %20 = vector.extract_strided_slice %11 {offsets = [0, 16], sizes = [8, 16], strides = [1, 1]} : vector<8x64xf32> to vector<8x16xf32>
    %cst_11 = arith.constant 5.000000e-01 : f32
    %21 = vector.broadcast %cst_11 : f32 to vector<8x16xf32>
    %22 = arith.mulf %21, %20 : vector<8x16xf32>
    %23 = math.tanh %22 : vector<8x16xf32>
    %cst_12 = arith.constant 5.000000e-01 : f32
    %24 = vector.broadcast %cst_12 : f32 to vector<8x16xf32>
    %25 = arith.mulf %24, %23 : vector<8x16xf32>
    %cst_13 = arith.constant 5.000000e-01 : f32
    %26 = vector.broadcast %cst_13 : f32 to vector<8x16xf32>
    %27 = arith.addf %25, %26 : vector<8x16xf32>
    %28 = vector.extract_strided_slice %11 {offsets = [0, 32], sizes = [8, 16], strides = [1, 1]} : vector<8x64xf32> to vector<8x16xf32>
    %29 = math.tanh %28 : vector<8x16xf32>
    %30 = vector.extract_strided_slice %11 {offsets = [0, 48], sizes = [8, 16], strides = [1, 1]} : vector<8x64xf32> to vector<8x16xf32>
    %cst_14 = arith.constant 5.000000e-01 : f32
    %31 = vector.broadcast %cst_14 : f32 to vector<8x16xf32>
    %32 = arith.mulf %31, %30 : vector<8x16xf32>
    %33 = math.tanh %32 : vector<8x16xf32>
    %cst_15 = arith.constant 5.000000e-01 : f32
    %34 = vector.broadcast %cst_15 : f32 to vector<8x16xf32>
    %35 = arith.mulf %34, %33 : vector<8x16xf32>
    %cst_16 = arith.constant 5.000000e-01 : f32
    %36 = vector.broadcast %cst_16 : f32 to vector<8x16xf32>
    %37 = arith.addf %35, %36 : vector<8x16xf32>
    %38 = arith.mulf %27, %8 : vector<8x16xf32>
    %39 = arith.mulf %19, %29 : vector<8x16xf32>
    %40 = arith.addf %38, %39 : vector<8x16xf32>
    %41 = math.tanh %40 : vector<8x16xf32>
    %42 = arith.mulf %37, %41 : vector<8x16xf32>
    %43 = vector.extract_strided_slice %5 {offsets = [8, 0], sizes = [8, 64], strides = [1, 1]} : vector<64x64xf32> to vector<8x64xf32>
    %cst_17 = arith.constant dense<0.000000e+00> : vector<8x64xf32>
    %44 = tpu.matmul %42, %6, %cst_17 {dimension_numbers = #tpu.dot_dimension_numbers<[1], [0], [0], [1], [0, 0, 1, 1], [], []>} : vector<8x16xf32>, vector<16x64xf32>, vector<8x64xf32> -> vector<8x64xf32>
    %45 = arith.addf %43, %44 : vector<8x64xf32>
    %46 = vector.extract_strided_slice %45 {offsets = [0, 0], sizes = [8, 16], strides = [1, 1]} : vector<8x64xf32> to vector<8x16xf32>
    %cst_18 = arith.constant 5.000000e-01 : f32
    %47 = vector.broadcast %cst_18 : f32 to vector<8x16xf32>
    %48 = arith.mulf %47, %46 : vector<8x16xf32>
    %49 = math.tanh %48 : vector<8x16xf32>
    %cst_19 = arith.constant 5.000000e-01 : f32
    %50 = vector.broadcast %cst_19 : f32 to vector<8x16xf32>
    %51 = arith.mulf %50, %49 : vector<8x16xf32>
    %cst_20 = arith.constant 5.000000e-01 : f32
    %52 = vector.broadcast %cst_20 : f32 to vector<8x16xf32>
    %53 = arith.addf %51, %52 : vector<8x16xf32>
    %54 = vector.extract_strided_slice %45 {offsets = [0, 16], sizes = [8, 16], strides = [1, 1]} : vector<8x64xf32> to vector<8x16xf32>
    %cst_21 = arith.constant 5.000000e-01 : f32
    %55 = vector.broadcast %cst_21 : f32 to vector<8x16xf32>
    %56 = arith.mulf %55, %54 : vector<8x16xf32>
    %57 = math.tanh %56 : vector<8x16xf32>
    %cst_22 = arith.constant 5.000000e-01 : f32
    %58 = vector.broadcast %cst_22 : f32 to vector<8x16xf32>
    %59 = arith.mulf %58, %57 : vector<8x16xf32>
    %cst_23 = arith.constant 5.000000e-01 : f32
    %60 = vector.broadcast %cst_23 : f32 to vector<8x16xf32>
    %61 = arith.addf %59, %60 : vector<8x16xf32>
    %62 = vector.extract_strided_slice %45 {offsets = [0, 32], sizes = [8, 16], strides = [1, 1]} : vector<8x64xf32> to vector<8x16xf32>
    %63 = math.tanh %62 : vector<8x16xf32>
    %64 = vector.extract_strided_slice %45 {offsets = [0, 48], sizes = [8, 16], strides = [1, 1]} : vector<8x64xf32> to vector<8x16xf32>
    %cst_24 = arith.constant 5.000000e-01 : f32
    %65 = vector.broadcast %cst_24 : f32 to vector<8x16xf32>
    %66 = arith.mulf %65, %64 : vector<8x16xf32>
    %67 = math.tanh %66 : vector<8x16xf32>
    %cst_25 = arith.constant 5.000000e-01 : f32
    %68 = vector.broadcast %cst_25 : f32 to vector<8x16xf32>
    %69 = arith.mulf %68, %67 : vector<8x16xf32>
    %cst_26 = arith.constant 5.000000e-01 : f32
    %70 = vector.broadcast %cst_26 : f32 to vector<8x16xf32>
    %71 = arith.addf %69, %70 : vector<8x16xf32>
    %72 = arith.mulf %61, %40 : vector<8x16xf32>
    %73 = arith.mulf %53, %63 : vector<8x16xf32>
    %74 = arith.addf %72, %73 : vector<8x16xf32>
    %75 = math.tanh %74 : vector<8x16xf32>
    %76 = arith.mulf %71, %75 : vector<8x16xf32>
    %77 = vector.extract_strided_slice %5 {offsets = [16, 0], sizes = [8, 64], strides = [1, 1]} : vector<64x64xf32> to vector<8x64xf32>
    %cst_27 = arith.constant dense<0.000000e+00> : vector<8x64xf32>
    %78 = tpu.matmul %76, %6, %cst_27 {dimension_numbers = #tpu.dot_dimension_numbers<[1], [0], [0], [1], [0, 0, 1, 1], [], []>} : vector<8x16xf32>, vector<16x64xf32>, vector<8x64xf32> -> vector<8x64xf32>
    %79 = arith.addf %77, %78 : vector<8x64xf32>
    %80 = vector.extract_strided_slice %79 {offsets = [0, 0], sizes = [8, 16], strides = [1, 1]} : vector<8x64xf32> to vector<8x16xf32>
    %cst_28 = arith.constant 5.000000e-01 : f32
    %81 = vector.broadcast %cst_28 : f32 to vector<8x16xf32>
    %82 = arith.mulf %81, %80 : vector<8x16xf32>
    %83 = math.tanh %82 : vector<8x16xf32>
    %cst_29 = arith.constant 5.000000e-01 : f32
    %84 = vector.broadcast %cst_29 : f32 to vector<8x16xf32>
    %85 = arith.mulf %84, %83 : vector<8x16xf32>
    %cst_30 = arith.constant 5.000000e-01 : f32
    %86 = vector.broadcast %cst_30 : f32 to vector<8x16xf32>
    %87 = arith.addf %85, %86 : vector<8x16xf32>
    %88 = vector.extract_strided_slice %79 {offsets = [0, 16], sizes = [8, 16], strides = [1, 1]} : vector<8x64xf32> to vector<8x16xf32>
    %cst_31 = arith.constant 5.000000e-01 : f32
    %89 = vector.broadcast %cst_31 : f32 to vector<8x16xf32>
    %90 = arith.mulf %89, %88 : vector<8x16xf32>
    %91 = math.tanh %90 : vector<8x16xf32>
    %cst_32 = arith.constant 5.000000e-01 : f32
    %92 = vector.broadcast %cst_32 : f32 to vector<8x16xf32>
    %93 = arith.mulf %92, %91 : vector<8x16xf32>
    %cst_33 = arith.constant 5.000000e-01 : f32
    %94 = vector.broadcast %cst_33 : f32 to vector<8x16xf32>
    %95 = arith.addf %93, %94 : vector<8x16xf32>
    %96 = vector.extract_strided_slice %79 {offsets = [0, 32], sizes = [8, 16], strides = [1, 1]} : vector<8x64xf32> to vector<8x16xf32>
    %97 = math.tanh %96 : vector<8x16xf32>
    %98 = vector.extract_strided_slice %79 {offsets = [0, 48], sizes = [8, 16], strides = [1, 1]} : vector<8x64xf32> to vector<8x16xf32>
    %cst_34 = arith.constant 5.000000e-01 : f32
    %99 = vector.broadcast %cst_34 : f32 to vector<8x16xf32>
    %100 = arith.mulf %99, %98 : vector<8x16xf32>
    %101 = math.tanh %100 : vector<8x16xf32>
    %cst_35 = arith.constant 5.000000e-01 : f32
    %102 = vector.broadcast %cst_35 : f32 to vector<8x16xf32>
    %103 = arith.mulf %102, %101 : vector<8x16xf32>
    %cst_36 = arith.constant 5.000000e-01 : f32
    %104 = vector.broadcast %cst_36 : f32 to vector<8x16xf32>
    %105 = arith.addf %103, %104 : vector<8x16xf32>
    %106 = arith.mulf %95, %74 : vector<8x16xf32>
    %107 = arith.mulf %87, %97 : vector<8x16xf32>
    %108 = arith.addf %106, %107 : vector<8x16xf32>
    %109 = math.tanh %108 : vector<8x16xf32>
    %110 = arith.mulf %105, %109 : vector<8x16xf32>
    %111 = vector.extract_strided_slice %5 {offsets = [24, 0], sizes = [8, 64], strides = [1, 1]} : vector<64x64xf32> to vector<8x64xf32>
    %cst_37 = arith.constant dense<0.000000e+00> : vector<8x64xf32>
    %112 = tpu.matmul %110, %6, %cst_37 {dimension_numbers = #tpu.dot_dimension_numbers<[1], [0], [0], [1], [0, 0, 1, 1], [], []>} : vector<8x16xf32>, vector<16x64xf32>, vector<8x64xf32> -> vector<8x64xf32>
    %113 = arith.addf %111, %112 : vector<8x64xf32>
    %114 = vector.extract_strided_slice %113 {offsets = [0, 0], sizes = [8, 16], strides = [1, 1]} : vector<8x64xf32> to vector<8x16xf32>
    %cst_38 = arith.constant 5.000000e-01 : f32
    %115 = vector.broadcast %cst_38 : f32 to vector<8x16xf32>
    %116 = arith.mulf %115, %114 : vector<8x16xf32>
    %117 = math.tanh %116 : vector<8x16xf32>
    %cst_39 = arith.constant 5.000000e-01 : f32
    %118 = vector.broadcast %cst_39 : f32 to vector<8x16xf32>
    %119 = arith.mulf %118, %117 : vector<8x16xf32>
    %cst_40 = arith.constant 5.000000e-01 : f32
    %120 = vector.broadcast %cst_40 : f32 to vector<8x16xf32>
    %121 = arith.addf %119, %120 : vector<8x16xf32>
    %122 = vector.extract_strided_slice %113 {offsets = [0, 16], sizes = [8, 16], strides = [1, 1]} : vector<8x64xf32> to vector<8x16xf32>
    %cst_41 = arith.constant 5.000000e-01 : f32
    %123 = vector.broadcast %cst_41 : f32 to vector<8x16xf32>
    %124 = arith.mulf %123, %122 : vector<8x16xf32>
    %125 = math.tanh %124 : vector<8x16xf32>
    %cst_42 = arith.constant 5.000000e-01 : f32
    %126 = vector.broadcast %cst_42 : f32 to vector<8x16xf32>
    %127 = arith.mulf %126, %125 : vector<8x16xf32>
    %cst_43 = arith.constant 5.000000e-01 : f32
    %128 = vector.broadcast %cst_43 : f32 to vector<8x16xf32>
    %129 = arith.addf %127, %128 : vector<8x16xf32>
    %130 = vector.extract_strided_slice %113 {offsets = [0, 32], sizes = [8, 16], strides = [1, 1]} : vector<8x64xf32> to vector<8x16xf32>
    %131 = math.tanh %130 : vector<8x16xf32>
    %132 = vector.extract_strided_slice %113 {offsets = [0, 48], sizes = [8, 16], strides = [1, 1]} : vector<8x64xf32> to vector<8x16xf32>
    %cst_44 = arith.constant 5.000000e-01 : f32
    %133 = vector.broadcast %cst_44 : f32 to vector<8x16xf32>
    %134 = arith.mulf %133, %132 : vector<8x16xf32>
    %135 = math.tanh %134 : vector<8x16xf32>
    %cst_45 = arith.constant 5.000000e-01 : f32
    %136 = vector.broadcast %cst_45 : f32 to vector<8x16xf32>
    %137 = arith.mulf %136, %135 : vector<8x16xf32>
    %cst_46 = arith.constant 5.000000e-01 : f32
    %138 = vector.broadcast %cst_46 : f32 to vector<8x16xf32>
    %139 = arith.addf %137, %138 : vector<8x16xf32>
    %140 = arith.mulf %129, %108 : vector<8x16xf32>
    %141 = arith.mulf %121, %131 : vector<8x16xf32>
    %142 = arith.addf %140, %141 : vector<8x16xf32>
    %143 = math.tanh %142 : vector<8x16xf32>
    %144 = arith.mulf %139, %143 : vector<8x16xf32>
    %145 = vector.extract_strided_slice %5 {offsets = [32, 0], sizes = [8, 64], strides = [1, 1]} : vector<64x64xf32> to vector<8x64xf32>
    %cst_47 = arith.constant dense<0.000000e+00> : vector<8x64xf32>
    %146 = tpu.matmul %144, %6, %cst_47 {dimension_numbers = #tpu.dot_dimension_numbers<[1], [0], [0], [1], [0, 0, 1, 1], [], []>} : vector<8x16xf32>, vector<16x64xf32>, vector<8x64xf32> -> vector<8x64xf32>
    %147 = arith.addf %145, %146 : vector<8x64xf32>
    %148 = vector.extract_strided_slice %147 {offsets = [0, 0], sizes = [8, 16], strides = [1, 1]} : vector<8x64xf32> to vector<8x16xf32>
    %cst_48 = arith.constant 5.000000e-01 : f32
    %149 = vector.broadcast %cst_48 : f32 to vector<8x16xf32>
    %150 = arith.mulf %149, %148 : vector<8x16xf32>
    %151 = math.tanh %150 : vector<8x16xf32>
    %cst_49 = arith.constant 5.000000e-01 : f32
    %152 = vector.broadcast %cst_49 : f32 to vector<8x16xf32>
    %153 = arith.mulf %152, %151 : vector<8x16xf32>
    %cst_50 = arith.constant 5.000000e-01 : f32
    %154 = vector.broadcast %cst_50 : f32 to vector<8x16xf32>
    %155 = arith.addf %153, %154 : vector<8x16xf32>
    %156 = vector.extract_strided_slice %147 {offsets = [0, 16], sizes = [8, 16], strides = [1, 1]} : vector<8x64xf32> to vector<8x16xf32>
    %cst_51 = arith.constant 5.000000e-01 : f32
    %157 = vector.broadcast %cst_51 : f32 to vector<8x16xf32>
    %158 = arith.mulf %157, %156 : vector<8x16xf32>
    %159 = math.tanh %158 : vector<8x16xf32>
    %cst_52 = arith.constant 5.000000e-01 : f32
    %160 = vector.broadcast %cst_52 : f32 to vector<8x16xf32>
    %161 = arith.mulf %160, %159 : vector<8x16xf32>
    %cst_53 = arith.constant 5.000000e-01 : f32
    %162 = vector.broadcast %cst_53 : f32 to vector<8x16xf32>
    %163 = arith.addf %161, %162 : vector<8x16xf32>
    %164 = vector.extract_strided_slice %147 {offsets = [0, 32], sizes = [8, 16], strides = [1, 1]} : vector<8x64xf32> to vector<8x16xf32>
    %165 = math.tanh %164 : vector<8x16xf32>
    %166 = vector.extract_strided_slice %147 {offsets = [0, 48], sizes = [8, 16], strides = [1, 1]} : vector<8x64xf32> to vector<8x16xf32>
    %cst_54 = arith.constant 5.000000e-01 : f32
    %167 = vector.broadcast %cst_54 : f32 to vector<8x16xf32>
    %168 = arith.mulf %167, %166 : vector<8x16xf32>
    %169 = math.tanh %168 : vector<8x16xf32>
    %cst_55 = arith.constant 5.000000e-01 : f32
    %170 = vector.broadcast %cst_55 : f32 to vector<8x16xf32>
    %171 = arith.mulf %170, %169 : vector<8x16xf32>
    %cst_56 = arith.constant 5.000000e-01 : f32
    %172 = vector.broadcast %cst_56 : f32 to vector<8x16xf32>
    %173 = arith.addf %171, %172 : vector<8x16xf32>
    %174 = arith.mulf %163, %142 : vector<8x16xf32>
    %175 = arith.mulf %155, %165 : vector<8x16xf32>
    %176 = arith.addf %174, %175 : vector<8x16xf32>
    %177 = math.tanh %176 : vector<8x16xf32>
    %178 = arith.mulf %173, %177 : vector<8x16xf32>
    %179 = vector.extract_strided_slice %5 {offsets = [40, 0], sizes = [8, 64], strides = [1, 1]} : vector<64x64xf32> to vector<8x64xf32>
    %cst_57 = arith.constant dense<0.000000e+00> : vector<8x64xf32>
    %180 = tpu.matmul %178, %6, %cst_57 {dimension_numbers = #tpu.dot_dimension_numbers<[1], [0], [0], [1], [0, 0, 1, 1], [], []>} : vector<8x16xf32>, vector<16x64xf32>, vector<8x64xf32> -> vector<8x64xf32>
    %181 = arith.addf %179, %180 : vector<8x64xf32>
    %182 = vector.extract_strided_slice %181 {offsets = [0, 0], sizes = [8, 16], strides = [1, 1]} : vector<8x64xf32> to vector<8x16xf32>
    %cst_58 = arith.constant 5.000000e-01 : f32
    %183 = vector.broadcast %cst_58 : f32 to vector<8x16xf32>
    %184 = arith.mulf %183, %182 : vector<8x16xf32>
    %185 = math.tanh %184 : vector<8x16xf32>
    %cst_59 = arith.constant 5.000000e-01 : f32
    %186 = vector.broadcast %cst_59 : f32 to vector<8x16xf32>
    %187 = arith.mulf %186, %185 : vector<8x16xf32>
    %cst_60 = arith.constant 5.000000e-01 : f32
    %188 = vector.broadcast %cst_60 : f32 to vector<8x16xf32>
    %189 = arith.addf %187, %188 : vector<8x16xf32>
    %190 = vector.extract_strided_slice %181 {offsets = [0, 16], sizes = [8, 16], strides = [1, 1]} : vector<8x64xf32> to vector<8x16xf32>
    %cst_61 = arith.constant 5.000000e-01 : f32
    %191 = vector.broadcast %cst_61 : f32 to vector<8x16xf32>
    %192 = arith.mulf %191, %190 : vector<8x16xf32>
    %193 = math.tanh %192 : vector<8x16xf32>
    %cst_62 = arith.constant 5.000000e-01 : f32
    %194 = vector.broadcast %cst_62 : f32 to vector<8x16xf32>
    %195 = arith.mulf %194, %193 : vector<8x16xf32>
    %cst_63 = arith.constant 5.000000e-01 : f32
    %196 = vector.broadcast %cst_63 : f32 to vector<8x16xf32>
    %197 = arith.addf %195, %196 : vector<8x16xf32>
    %198 = vector.extract_strided_slice %181 {offsets = [0, 32], sizes = [8, 16], strides = [1, 1]} : vector<8x64xf32> to vector<8x16xf32>
    %199 = math.tanh %198 : vector<8x16xf32>
    %200 = vector.extract_strided_slice %181 {offsets = [0, 48], sizes = [8, 16], strides = [1, 1]} : vector<8x64xf32> to vector<8x16xf32>
    %cst_64 = arith.constant 5.000000e-01 : f32
    %201 = vector.broadcast %cst_64 : f32 to vector<8x16xf32>
    %202 = arith.mulf %201, %200 : vector<8x16xf32>
    %203 = math.tanh %202 : vector<8x16xf32>
    %cst_65 = arith.constant 5.000000e-01 : f32
    %204 = vector.broadcast %cst_65 : f32 to vector<8x16xf32>
    %205 = arith.mulf %204, %203 : vector<8x16xf32>
    %cst_66 = arith.constant 5.000000e-01 : f32
    %206 = vector.broadcast %cst_66 : f32 to vector<8x16xf32>
    %207 = arith.addf %205, %206 : vector<8x16xf32>
    %208 = arith.mulf %197, %176 : vector<8x16xf32>
    %209 = arith.mulf %189, %199 : vector<8x16xf32>
    %210 = arith.addf %208, %209 : vector<8x16xf32>
    %211 = math.tanh %210 : vector<8x16xf32>
    %212 = arith.mulf %207, %211 : vector<8x16xf32>
    %213 = vector.extract_strided_slice %5 {offsets = [48, 0], sizes = [8, 64], strides = [1, 1]} : vector<64x64xf32> to vector<8x64xf32>
    %cst_67 = arith.constant dense<0.000000e+00> : vector<8x64xf32>
    %214 = tpu.matmul %212, %6, %cst_67 {dimension_numbers = #tpu.dot_dimension_numbers<[1], [0], [0], [1], [0, 0, 1, 1], [], []>} : vector<8x16xf32>, vector<16x64xf32>, vector<8x64xf32> -> vector<8x64xf32>
    %215 = arith.addf %213, %214 : vector<8x64xf32>
    %216 = vector.extract_strided_slice %215 {offsets = [0, 0], sizes = [8, 16], strides = [1, 1]} : vector<8x64xf32> to vector<8x16xf32>
    %cst_68 = arith.constant 5.000000e-01 : f32
    %217 = vector.broadcast %cst_68 : f32 to vector<8x16xf32>
    %218 = arith.mulf %217, %216 : vector<8x16xf32>
    %219 = math.tanh %218 : vector<8x16xf32>
    %cst_69 = arith.constant 5.000000e-01 : f32
    %220 = vector.broadcast %cst_69 : f32 to vector<8x16xf32>
    %221 = arith.mulf %220, %219 : vector<8x16xf32>
    %cst_70 = arith.constant 5.000000e-01 : f32
    %222 = vector.broadcast %cst_70 : f32 to vector<8x16xf32>
    %223 = arith.addf %221, %222 : vector<8x16xf32>
    %224 = vector.extract_strided_slice %215 {offsets = [0, 16], sizes = [8, 16], strides = [1, 1]} : vector<8x64xf32> to vector<8x16xf32>
    %cst_71 = arith.constant 5.000000e-01 : f32
    %225 = vector.broadcast %cst_71 : f32 to vector<8x16xf32>
    %226 = arith.mulf %225, %224 : vector<8x16xf32>
    %227 = math.tanh %226 : vector<8x16xf32>
    %cst_72 = arith.constant 5.000000e-01 : f32
    %228 = vector.broadcast %cst_72 : f32 to vector<8x16xf32>
    %229 = arith.mulf %228, %227 : vector<8x16xf32>
    %cst_73 = arith.constant 5.000000e-01 : f32
    %230 = vector.broadcast %cst_73 : f32 to vector<8x16xf32>
    %231 = arith.addf %229, %230 : vector<8x16xf32>
    %232 = vector.extract_strided_slice %215 {offsets = [0, 32], sizes = [8, 16], strides = [1, 1]} : vector<8x64xf32> to vector<8x16xf32>
    %233 = math.tanh %232 : vector<8x16xf32>
    %234 = vector.extract_strided_slice %215 {offsets = [0, 48], sizes = [8, 16], strides = [1, 1]} : vector<8x64xf32> to vector<8x16xf32>
    %cst_74 = arith.constant 5.000000e-01 : f32
    %235 = vector.broadcast %cst_74 : f32 to vector<8x16xf32>
    %236 = arith.mulf %235, %234 : vector<8x16xf32>
    %237 = math.tanh %236 : vector<8x16xf32>
    %cst_75 = arith.constant 5.000000e-01 : f32
    %238 = vector.broadcast %cst_75 : f32 to vector<8x16xf32>
    %239 = arith.mulf %238, %237 : vector<8x16xf32>
    %cst_76 = arith.constant 5.000000e-01 : f32
    %240 = vector.broadcast %cst_76 : f32 to vector<8x16xf32>
    %241 = arith.addf %239, %240 : vector<8x16xf32>
    %242 = arith.mulf %231, %210 : vector<8x16xf32>
    %243 = arith.mulf %223, %233 : vector<8x16xf32>
    %244 = arith.addf %242, %243 : vector<8x16xf32>
    %245 = math.tanh %244 : vector<8x16xf32>
    %246 = arith.mulf %241, %245 : vector<8x16xf32>
    %247 = vector.extract_strided_slice %5 {offsets = [56, 0], sizes = [8, 64], strides = [1, 1]} : vector<64x64xf32> to vector<8x64xf32>
    %cst_77 = arith.constant dense<0.000000e+00> : vector<8x64xf32>
    %248 = tpu.matmul %246, %6, %cst_77 {dimension_numbers = #tpu.dot_dimension_numbers<[1], [0], [0], [1], [0, 0, 1, 1], [], []>} : vector<8x16xf32>, vector<16x64xf32>, vector<8x64xf32> -> vector<8x64xf32>
    %249 = arith.addf %247, %248 : vector<8x64xf32>
    %250 = vector.extract_strided_slice %249 {offsets = [0, 0], sizes = [8, 16], strides = [1, 1]} : vector<8x64xf32> to vector<8x16xf32>
    %cst_78 = arith.constant 5.000000e-01 : f32
    %251 = vector.broadcast %cst_78 : f32 to vector<8x16xf32>
    %252 = arith.mulf %251, %250 : vector<8x16xf32>
    %253 = math.tanh %252 : vector<8x16xf32>
    %cst_79 = arith.constant 5.000000e-01 : f32
    %254 = vector.broadcast %cst_79 : f32 to vector<8x16xf32>
    %255 = arith.mulf %254, %253 : vector<8x16xf32>
    %cst_80 = arith.constant 5.000000e-01 : f32
    %256 = vector.broadcast %cst_80 : f32 to vector<8x16xf32>
    %257 = arith.addf %255, %256 : vector<8x16xf32>
    %258 = vector.extract_strided_slice %249 {offsets = [0, 16], sizes = [8, 16], strides = [1, 1]} : vector<8x64xf32> to vector<8x16xf32>
    %cst_81 = arith.constant 5.000000e-01 : f32
    %259 = vector.broadcast %cst_81 : f32 to vector<8x16xf32>
    %260 = arith.mulf %259, %258 : vector<8x16xf32>
    %261 = math.tanh %260 : vector<8x16xf32>
    %cst_82 = arith.constant 5.000000e-01 : f32
    %262 = vector.broadcast %cst_82 : f32 to vector<8x16xf32>
    %263 = arith.mulf %262, %261 : vector<8x16xf32>
    %cst_83 = arith.constant 5.000000e-01 : f32
    %264 = vector.broadcast %cst_83 : f32 to vector<8x16xf32>
    %265 = arith.addf %263, %264 : vector<8x16xf32>
    %266 = vector.extract_strided_slice %249 {offsets = [0, 32], sizes = [8, 16], strides = [1, 1]} : vector<8x64xf32> to vector<8x16xf32>
    %267 = math.tanh %266 : vector<8x16xf32>
    %268 = vector.extract_strided_slice %249 {offsets = [0, 48], sizes = [8, 16], strides = [1, 1]} : vector<8x64xf32> to vector<8x16xf32>
    %cst_84 = arith.constant 5.000000e-01 : f32
    %269 = vector.broadcast %cst_84 : f32 to vector<8x16xf32>
    %270 = arith.mulf %269, %268 : vector<8x16xf32>
    %271 = math.tanh %270 : vector<8x16xf32>
    %cst_85 = arith.constant 5.000000e-01 : f32
    %272 = vector.broadcast %cst_85 : f32 to vector<8x16xf32>
    %273 = arith.mulf %272, %271 : vector<8x16xf32>
    %cst_86 = arith.constant 5.000000e-01 : f32
    %274 = vector.broadcast %cst_86 : f32 to vector<8x16xf32>
    %275 = arith.addf %273, %274 : vector<8x16xf32>
    %276 = arith.mulf %265, %244 : vector<8x16xf32>
    %277 = arith.mulf %257, %267 : vector<8x16xf32>
    %278 = arith.addf %276, %277 : vector<8x16xf32>
    %279 = math.tanh %278 : vector<8x16xf32>
    %280 = arith.mulf %275, %279 : vector<8x16xf32>
    %281 = tpu.concatenate %42, %76, %110, %144, %178, %212, %246, %280 in 0 : vector<8x16xf32>, vector<8x16xf32>, vector<8x16xf32>, vector<8x16xf32>, vector<8x16xf32>, vector<8x16xf32>, vector<8x16xf32>, vector<8x16xf32> -> vector<64x16xf32>
    %c88 = arith.constant 88 : index
    %c0_87 = arith.constant 0 : index
    %282 = vector.load %arg2[%c88, %c0_87] : memref<200x128xf32, #tpu.memory_space<vmem>>, vector<1x64xf32>
    %c48 = arith.constant 48 : index
    %c0_88 = arith.constant 0 : index
    %283 = vector.load %arg2[%c48, %c0_88] : memref<200x128xf32, #tpu.memory_space<vmem>>, vector<24x64xf32>
    %cst_89 = arith.constant dense<0.000000e+00> : vector<64x64xf32>
    %284 = tpu.matmul %0, %283, %cst_89 {dimension_numbers = #tpu.dot_dimension_numbers<[1], [0], [0], [1], [0, 0, 1, 1], [], []>} : vector<64x24xf32>, vector<24x64xf32>, vector<64x64xf32> -> vector<64x64xf32>
    %285 = vector.broadcast %282 : vector<1x64xf32> to vector<64x64xf32>
    %286 = arith.addf %285, %284 : vector<64x64xf32>
    %c72 = arith.constant 72 : index
    %c0_90 = arith.constant 0 : index
    %287 = vector.load %arg2[%c72, %c0_90] : memref<200x128xf32, #tpu.memory_space<vmem>>, vector<16x64xf32>
    %cst_91 = arith.constant 1.000000e+00 : f32
    %288 = vector.broadcast %cst_91 : f32 to vector<8x16xf32>
    %cst_92 = arith.constant 1.000000e+00 : f32
    %289 = vector.broadcast %cst_92 : f32 to vector<8x16xf32>
    %290 = vector.extract_strided_slice %286 {offsets = [56, 0], sizes = [8, 64], strides = [1, 1]} : vector<64x64xf32> to vector<8x64xf32>
    %cst_93 = arith.constant dense<0.000000e+00> : vector<8x64xf32>
    %291 = tpu.matmul %288, %287, %cst_93 {dimension_numbers = #tpu.dot_dimension_numbers<[1], [0], [0], [1], [0, 0, 1, 1], [], []>} : vector<8x16xf32>, vector<16x64xf32>, vector<8x64xf32> -> vector<8x64xf32>
    %292 = arith.addf %290, %291 : vector<8x64xf32>
    %293 = vector.extract_strided_slice %292 {offsets = [0, 0], sizes = [8, 16], strides = [1, 1]} : vector<8x64xf32> to vector<8x16xf32>
    %cst_94 = arith.constant 5.000000e-01 : f32
    %294 = vector.broadcast %cst_94 : f32 to vector<8x16xf32>
    %295 = arith.mulf %294, %293 : vector<8x16xf32>
    %296 = math.tanh %295 : vector<8x16xf32>
    %cst_95 = arith.constant 5.000000e-01 : f32
    %297 = vector.broadcast %cst_95 : f32 to vector<8x16xf32>
    %298 = arith.mulf %297, %296 : vector<8x16xf32>
    %cst_96 = arith.constant 5.000000e-01 : f32
    %299 = vector.broadcast %cst_96 : f32 to vector<8x16xf32>
    %300 = arith.addf %298, %299 : vector<8x16xf32>
    %301 = vector.extract_strided_slice %292 {offsets = [0, 16], sizes = [8, 16], strides = [1, 1]} : vector<8x64xf32> to vector<8x16xf32>
    %cst_97 = arith.constant 5.000000e-01 : f32
    %302 = vector.broadcast %cst_97 : f32 to vector<8x16xf32>
    %303 = arith.mulf %302, %301 : vector<8x16xf32>
    %304 = math.tanh %303 : vector<8x16xf32>
    %cst_98 = arith.constant 5.000000e-01 : f32
    %305 = vector.broadcast %cst_98 : f32 to vector<8x16xf32>
    %306 = arith.mulf %305, %304 : vector<8x16xf32>
    %cst_99 = arith.constant 5.000000e-01 : f32
    %307 = vector.broadcast %cst_99 : f32 to vector<8x16xf32>
    %308 = arith.addf %306, %307 : vector<8x16xf32>
    %309 = vector.extract_strided_slice %292 {offsets = [0, 32], sizes = [8, 16], strides = [1, 1]} : vector<8x64xf32> to vector<8x16xf32>
    %310 = math.tanh %309 : vector<8x16xf32>
    %311 = vector.extract_strided_slice %292 {offsets = [0, 48], sizes = [8, 16], strides = [1, 1]} : vector<8x64xf32> to vector<8x16xf32>
    %cst_100 = arith.constant 5.000000e-01 : f32
    %312 = vector.broadcast %cst_100 : f32 to vector<8x16xf32>
    %313 = arith.mulf %312, %311 : vector<8x16xf32>
    %314 = math.tanh %313 : vector<8x16xf32>
    %cst_101 = arith.constant 5.000000e-01 : f32
    %315 = vector.broadcast %cst_101 : f32 to vector<8x16xf32>
    %316 = arith.mulf %315, %314 : vector<8x16xf32>
    %cst_102 = arith.constant 5.000000e-01 : f32
    %317 = vector.broadcast %cst_102 : f32 to vector<8x16xf32>
    %318 = arith.addf %316, %317 : vector<8x16xf32>
    %319 = arith.mulf %308, %289 : vector<8x16xf32>
    %320 = arith.mulf %300, %310 : vector<8x16xf32>
    %321 = arith.addf %319, %320 : vector<8x16xf32>
    %322 = math.tanh %321 : vector<8x16xf32>
    %323 = arith.mulf %318, %322 : vector<8x16xf32>
    %324 = vector.extract_strided_slice %286 {offsets = [48, 0], sizes = [8, 64], strides = [1, 1]} : vector<64x64xf32> to vector<8x64xf32>
    %cst_103 = arith.constant dense<0.000000e+00> : vector<8x64xf32>
    %325 = tpu.matmul %323, %287, %cst_103 {dimension_numbers = #tpu.dot_dimension_numbers<[1], [0], [0], [1], [0, 0, 1, 1], [], []>} : vector<8x16xf32>, vector<16x64xf32>, vector<8x64xf32> -> vector<8x64xf32>
    %326 = arith.addf %324, %325 : vector<8x64xf32>
    %327 = vector.extract_strided_slice %326 {offsets = [0, 0], sizes = [8, 16], strides = [1, 1]} : vector<8x64xf32> to vector<8x16xf32>
    %cst_104 = arith.constant 5.000000e-01 : f32
    %328 = vector.broadcast %cst_104 : f32 to vector<8x16xf32>
    %329 = arith.mulf %328, %327 : vector<8x16xf32>
    %330 = math.tanh %329 : vector<8x16xf32>
    %cst_105 = arith.constant 5.000000e-01 : f32
    %331 = vector.broadcast %cst_105 : f32 to vector<8x16xf32>
    %332 = arith.mulf %331, %330 : vector<8x16xf32>
    %cst_106 = arith.constant 5.000000e-01 : f32
    %333 = vector.broadcast %cst_106 : f32 to vector<8x16xf32>
    %334 = arith.addf %332, %333 : vector<8x16xf32>
    %335 = vector.extract_strided_slice %326 {offsets = [0, 16], sizes = [8, 16], strides = [1, 1]} : vector<8x64xf32> to vector<8x16xf32>
    %cst_107 = arith.constant 5.000000e-01 : f32
    %336 = vector.broadcast %cst_107 : f32 to vector<8x16xf32>
    %337 = arith.mulf %336, %335 : vector<8x16xf32>
    %338 = math.tanh %337 : vector<8x16xf32>
    %cst_108 = arith.constant 5.000000e-01 : f32
    %339 = vector.broadcast %cst_108 : f32 to vector<8x16xf32>
    %340 = arith.mulf %339, %338 : vector<8x16xf32>
    %cst_109 = arith.constant 5.000000e-01 : f32
    %341 = vector.broadcast %cst_109 : f32 to vector<8x16xf32>
    %342 = arith.addf %340, %341 : vector<8x16xf32>
    %343 = vector.extract_strided_slice %326 {offsets = [0, 32], sizes = [8, 16], strides = [1, 1]} : vector<8x64xf32> to vector<8x16xf32>
    %344 = math.tanh %343 : vector<8x16xf32>
    %345 = vector.extract_strided_slice %326 {offsets = [0, 48], sizes = [8, 16], strides = [1, 1]} : vector<8x64xf32> to vector<8x16xf32>
    %cst_110 = arith.constant 5.000000e-01 : f32
    %346 = vector.broadcast %cst_110 : f32 to vector<8x16xf32>
    %347 = arith.mulf %346, %345 : vector<8x16xf32>
    %348 = math.tanh %347 : vector<8x16xf32>
    %cst_111 = arith.constant 5.000000e-01 : f32
    %349 = vector.broadcast %cst_111 : f32 to vector<8x16xf32>
    %350 = arith.mulf %349, %348 : vector<8x16xf32>
    %cst_112 = arith.constant 5.000000e-01 : f32
    %351 = vector.broadcast %cst_112 : f32 to vector<8x16xf32>
    %352 = arith.addf %350, %351 : vector<8x16xf32>
    %353 = arith.mulf %342, %321 : vector<8x16xf32>
    %354 = arith.mulf %334, %344 : vector<8x16xf32>
    %355 = arith.addf %353, %354 : vector<8x16xf32>
    %356 = math.tanh %355 : vector<8x16xf32>
    %357 = arith.mulf %352, %356 : vector<8x16xf32>
    %358 = vector.extract_strided_slice %286 {offsets = [40, 0], sizes = [8, 64], strides = [1, 1]} : vector<64x64xf32> to vector<8x64xf32>
    %cst_113 = arith.constant dense<0.000000e+00> : vector<8x64xf32>
    %359 = tpu.matmul %357, %287, %cst_113 {dimension_numbers = #tpu.dot_dimension_numbers<[1], [0], [0], [1], [0, 0, 1, 1], [], []>} : vector<8x16xf32>, vector<16x64xf32>, vector<8x64xf32> -> vector<8x64xf32>
    %360 = arith.addf %358, %359 : vector<8x64xf32>
    %361 = vector.extract_strided_slice %360 {offsets = [0, 0], sizes = [8, 16], strides = [1, 1]} : vector<8x64xf32> to vector<8x16xf32>
    %cst_114 = arith.constant 5.000000e-01 : f32
    %362 = vector.broadcast %cst_114 : f32 to vector<8x16xf32>
    %363 = arith.mulf %362, %361 : vector<8x16xf32>
    %364 = math.tanh %363 : vector<8x16xf32>
    %cst_115 = arith.constant 5.000000e-01 : f32
    %365 = vector.broadcast %cst_115 : f32 to vector<8x16xf32>
    %366 = arith.mulf %365, %364 : vector<8x16xf32>
    %cst_116 = arith.constant 5.000000e-01 : f32
    %367 = vector.broadcast %cst_116 : f32 to vector<8x16xf32>
    %368 = arith.addf %366, %367 : vector<8x16xf32>
    %369 = vector.extract_strided_slice %360 {offsets = [0, 16], sizes = [8, 16], strides = [1, 1]} : vector<8x64xf32> to vector<8x16xf32>
    %cst_117 = arith.constant 5.000000e-01 : f32
    %370 = vector.broadcast %cst_117 : f32 to vector<8x16xf32>
    %371 = arith.mulf %370, %369 : vector<8x16xf32>
    %372 = math.tanh %371 : vector<8x16xf32>
    %cst_118 = arith.constant 5.000000e-01 : f32
    %373 = vector.broadcast %cst_118 : f32 to vector<8x16xf32>
    %374 = arith.mulf %373, %372 : vector<8x16xf32>
    %cst_119 = arith.constant 5.000000e-01 : f32
    %375 = vector.broadcast %cst_119 : f32 to vector<8x16xf32>
    %376 = arith.addf %374, %375 : vector<8x16xf32>
    %377 = vector.extract_strided_slice %360 {offsets = [0, 32], sizes = [8, 16], strides = [1, 1]} : vector<8x64xf32> to vector<8x16xf32>
    %378 = math.tanh %377 : vector<8x16xf32>
    %379 = vector.extract_strided_slice %360 {offsets = [0, 48], sizes = [8, 16], strides = [1, 1]} : vector<8x64xf32> to vector<8x16xf32>
    %cst_120 = arith.constant 5.000000e-01 : f32
    %380 = vector.broadcast %cst_120 : f32 to vector<8x16xf32>
    %381 = arith.mulf %380, %379 : vector<8x16xf32>
    %382 = math.tanh %381 : vector<8x16xf32>
    %cst_121 = arith.constant 5.000000e-01 : f32
    %383 = vector.broadcast %cst_121 : f32 to vector<8x16xf32>
    %384 = arith.mulf %383, %382 : vector<8x16xf32>
    %cst_122 = arith.constant 5.000000e-01 : f32
    %385 = vector.broadcast %cst_122 : f32 to vector<8x16xf32>
    %386 = arith.addf %384, %385 : vector<8x16xf32>
    %387 = arith.mulf %376, %355 : vector<8x16xf32>
    %388 = arith.mulf %368, %378 : vector<8x16xf32>
    %389 = arith.addf %387, %388 : vector<8x16xf32>
    %390 = math.tanh %389 : vector<8x16xf32>
    %391 = arith.mulf %386, %390 : vector<8x16xf32>
    %392 = vector.extract_strided_slice %286 {offsets = [32, 0], sizes = [8, 64], strides = [1, 1]} : vector<64x64xf32> to vector<8x64xf32>
    %cst_123 = arith.constant dense<0.000000e+00> : vector<8x64xf32>
    %393 = tpu.matmul %391, %287, %cst_123 {dimension_numbers = #tpu.dot_dimension_numbers<[1], [0], [0], [1], [0, 0, 1, 1], [], []>} : vector<8x16xf32>, vector<16x64xf32>, vector<8x64xf32> -> vector<8x64xf32>
    %394 = arith.addf %392, %393 : vector<8x64xf32>
    %395 = vector.extract_strided_slice %394 {offsets = [0, 0], sizes = [8, 16], strides = [1, 1]} : vector<8x64xf32> to vector<8x16xf32>
    %cst_124 = arith.constant 5.000000e-01 : f32
    %396 = vector.broadcast %cst_124 : f32 to vector<8x16xf32>
    %397 = arith.mulf %396, %395 : vector<8x16xf32>
    %398 = math.tanh %397 : vector<8x16xf32>
    %cst_125 = arith.constant 5.000000e-01 : f32
    %399 = vector.broadcast %cst_125 : f32 to vector<8x16xf32>
    %400 = arith.mulf %399, %398 : vector<8x16xf32>
    %cst_126 = arith.constant 5.000000e-01 : f32
    %401 = vector.broadcast %cst_126 : f32 to vector<8x16xf32>
    %402 = arith.addf %400, %401 : vector<8x16xf32>
    %403 = vector.extract_strided_slice %394 {offsets = [0, 16], sizes = [8, 16], strides = [1, 1]} : vector<8x64xf32> to vector<8x16xf32>
    %cst_127 = arith.constant 5.000000e-01 : f32
    %404 = vector.broadcast %cst_127 : f32 to vector<8x16xf32>
    %405 = arith.mulf %404, %403 : vector<8x16xf32>
    %406 = math.tanh %405 : vector<8x16xf32>
    %cst_128 = arith.constant 5.000000e-01 : f32
    %407 = vector.broadcast %cst_128 : f32 to vector<8x16xf32>
    %408 = arith.mulf %407, %406 : vector<8x16xf32>
    %cst_129 = arith.constant 5.000000e-01 : f32
    %409 = vector.broadcast %cst_129 : f32 to vector<8x16xf32>
    %410 = arith.addf %408, %409 : vector<8x16xf32>
    %411 = vector.extract_strided_slice %394 {offsets = [0, 32], sizes = [8, 16], strides = [1, 1]} : vector<8x64xf32> to vector<8x16xf32>
    %412 = math.tanh %411 : vector<8x16xf32>
    %413 = vector.extract_strided_slice %394 {offsets = [0, 48], sizes = [8, 16], strides = [1, 1]} : vector<8x64xf32> to vector<8x16xf32>
    %cst_130 = arith.constant 5.000000e-01 : f32
    %414 = vector.broadcast %cst_130 : f32 to vector<8x16xf32>
    %415 = arith.mulf %414, %413 : vector<8x16xf32>
    %416 = math.tanh %415 : vector<8x16xf32>
    %cst_131 = arith.constant 5.000000e-01 : f32
    %417 = vector.broadcast %cst_131 : f32 to vector<8x16xf32>
    %418 = arith.mulf %417, %416 : vector<8x16xf32>
    %cst_132 = arith.constant 5.000000e-01 : f32
    %419 = vector.broadcast %cst_132 : f32 to vector<8x16xf32>
    %420 = arith.addf %418, %419 : vector<8x16xf32>
    %421 = arith.mulf %410, %389 : vector<8x16xf32>
    %422 = arith.mulf %402, %412 : vector<8x16xf32>
    %423 = arith.addf %421, %422 : vector<8x16xf32>
    %424 = math.tanh %423 : vector<8x16xf32>
    %425 = arith.mulf %420, %424 : vector<8x16xf32>
    %426 = vector.extract_strided_slice %286 {offsets = [24, 0], sizes = [8, 64], strides = [1, 1]} : vector<64x64xf32> to vector<8x64xf32>
    %cst_133 = arith.constant dense<0.000000e+00> : vector<8x64xf32>
    %427 = tpu.matmul %425, %287, %cst_133 {dimension_numbers = #tpu.dot_dimension_numbers<[1], [0], [0], [1], [0, 0, 1, 1], [], []>} : vector<8x16xf32>, vector<16x64xf32>, vector<8x64xf32> -> vector<8x64xf32>
    %428 = arith.addf %426, %427 : vector<8x64xf32>
    %429 = vector.extract_strided_slice %428 {offsets = [0, 0], sizes = [8, 16], strides = [1, 1]} : vector<8x64xf32> to vector<8x16xf32>
    %cst_134 = arith.constant 5.000000e-01 : f32
    %430 = vector.broadcast %cst_134 : f32 to vector<8x16xf32>
    %431 = arith.mulf %430, %429 : vector<8x16xf32>
    %432 = math.tanh %431 : vector<8x16xf32>
    %cst_135 = arith.constant 5.000000e-01 : f32
    %433 = vector.broadcast %cst_135 : f32 to vector<8x16xf32>
    %434 = arith.mulf %433, %432 : vector<8x16xf32>
    %cst_136 = arith.constant 5.000000e-01 : f32
    %435 = vector.broadcast %cst_136 : f32 to vector<8x16xf32>
    %436 = arith.addf %434, %435 : vector<8x16xf32>
    %437 = vector.extract_strided_slice %428 {offsets = [0, 16], sizes = [8, 16], strides = [1, 1]} : vector<8x64xf32> to vector<8x16xf32>
    %cst_137 = arith.constant 5.000000e-01 : f32
    %438 = vector.broadcast %cst_137 : f32 to vector<8x16xf32>
    %439 = arith.mulf %438, %437 : vector<8x16xf32>
    %440 = math.tanh %439 : vector<8x16xf32>
    %cst_138 = arith.constant 5.000000e-01 : f32
    %441 = vector.broadcast %cst_138 : f32 to vector<8x16xf32>
    %442 = arith.mulf %441, %440 : vector<8x16xf32>
    %cst_139 = arith.constant 5.000000e-01 : f32
    %443 = vector.broadcast %cst_139 : f32 to vector<8x16xf32>
    %444 = arith.addf %442, %443 : vector<8x16xf32>
    %445 = vector.extract_strided_slice %428 {offsets = [0, 32], sizes = [8, 16], strides = [1, 1]} : vector<8x64xf32> to vector<8x16xf32>
    %446 = math.tanh %445 : vector<8x16xf32>
    %447 = vector.extract_strided_slice %428 {offsets = [0, 48], sizes = [8, 16], strides = [1, 1]} : vector<8x64xf32> to vector<8x16xf32>
    %cst_140 = arith.constant 5.000000e-01 : f32
    %448 = vector.broadcast %cst_140 : f32 to vector<8x16xf32>
    %449 = arith.mulf %448, %447 : vector<8x16xf32>
    %450 = math.tanh %449 : vector<8x16xf32>
    %cst_141 = arith.constant 5.000000e-01 : f32
    %451 = vector.broadcast %cst_141 : f32 to vector<8x16xf32>
    %452 = arith.mulf %451, %450 : vector<8x16xf32>
    %cst_142 = arith.constant 5.000000e-01 : f32
    %453 = vector.broadcast %cst_142 : f32 to vector<8x16xf32>
    %454 = arith.addf %452, %453 : vector<8x16xf32>
    %455 = arith.mulf %444, %423 : vector<8x16xf32>
    %456 = arith.mulf %436, %446 : vector<8x16xf32>
    %457 = arith.addf %455, %456 : vector<8x16xf32>
    %458 = math.tanh %457 : vector<8x16xf32>
    %459 = arith.mulf %454, %458 : vector<8x16xf32>
    %460 = vector.extract_strided_slice %286 {offsets = [16, 0], sizes = [8, 64], strides = [1, 1]} : vector<64x64xf32> to vector<8x64xf32>
    %cst_143 = arith.constant dense<0.000000e+00> : vector<8x64xf32>
    %461 = tpu.matmul %459, %287, %cst_143 {dimension_numbers = #tpu.dot_dimension_numbers<[1], [0], [0], [1], [0, 0, 1, 1], [], []>} : vector<8x16xf32>, vector<16x64xf32>, vector<8x64xf32> -> vector<8x64xf32>
    %462 = arith.addf %460, %461 : vector<8x64xf32>
    %463 = vector.extract_strided_slice %462 {offsets = [0, 0], sizes = [8, 16], strides = [1, 1]} : vector<8x64xf32> to vector<8x16xf32>
    %cst_144 = arith.constant 5.000000e-01 : f32
    %464 = vector.broadcast %cst_144 : f32 to vector<8x16xf32>
    %465 = arith.mulf %464, %463 : vector<8x16xf32>
    %466 = math.tanh %465 : vector<8x16xf32>
    %cst_145 = arith.constant 5.000000e-01 : f32
    %467 = vector.broadcast %cst_145 : f32 to vector<8x16xf32>
    %468 = arith.mulf %467, %466 : vector<8x16xf32>
    %cst_146 = arith.constant 5.000000e-01 : f32
    %469 = vector.broadcast %cst_146 : f32 to vector<8x16xf32>
    %470 = arith.addf %468, %469 : vector<8x16xf32>
    %471 = vector.extract_strided_slice %462 {offsets = [0, 16], sizes = [8, 16], strides = [1, 1]} : vector<8x64xf32> to vector<8x16xf32>
    %cst_147 = arith.constant 5.000000e-01 : f32
    %472 = vector.broadcast %cst_147 : f32 to vector<8x16xf32>
    %473 = arith.mulf %472, %471 : vector<8x16xf32>
    %474 = math.tanh %473 : vector<8x16xf32>
    %cst_148 = arith.constant 5.000000e-01 : f32
    %475 = vector.broadcast %cst_148 : f32 to vector<8x16xf32>
    %476 = arith.mulf %475, %474 : vector<8x16xf32>
    %cst_149 = arith.constant 5.000000e-01 : f32
    %477 = vector.broadcast %cst_149 : f32 to vector<8x16xf32>
    %478 = arith.addf %476, %477 : vector<8x16xf32>
    %479 = vector.extract_strided_slice %462 {offsets = [0, 32], sizes = [8, 16], strides = [1, 1]} : vector<8x64xf32> to vector<8x16xf32>
    %480 = math.tanh %479 : vector<8x16xf32>
    %481 = vector.extract_strided_slice %462 {offsets = [0, 48], sizes = [8, 16], strides = [1, 1]} : vector<8x64xf32> to vector<8x16xf32>
    %cst_150 = arith.constant 5.000000e-01 : f32
    %482 = vector.broadcast %cst_150 : f32 to vector<8x16xf32>
    %483 = arith.mulf %482, %481 : vector<8x16xf32>
    %484 = math.tanh %483 : vector<8x16xf32>
    %cst_151 = arith.constant 5.000000e-01 : f32
    %485 = vector.broadcast %cst_151 : f32 to vector<8x16xf32>
    %486 = arith.mulf %485, %484 : vector<8x16xf32>
    %cst_152 = arith.constant 5.000000e-01 : f32
    %487 = vector.broadcast %cst_152 : f32 to vector<8x16xf32>
    %488 = arith.addf %486, %487 : vector<8x16xf32>
    %489 = arith.mulf %478, %457 : vector<8x16xf32>
    %490 = arith.mulf %470, %480 : vector<8x16xf32>
    %491 = arith.addf %489, %490 : vector<8x16xf32>
    %492 = math.tanh %491 : vector<8x16xf32>
    %493 = arith.mulf %488, %492 : vector<8x16xf32>
    %494 = vector.extract_strided_slice %286 {offsets = [8, 0], sizes = [8, 64], strides = [1, 1]} : vector<64x64xf32> to vector<8x64xf32>
    %cst_153 = arith.constant dense<0.000000e+00> : vector<8x64xf32>
    %495 = tpu.matmul %493, %287, %cst_153 {dimension_numbers = #tpu.dot_dimension_numbers<[1], [0], [0], [1], [0, 0, 1, 1], [], []>} : vector<8x16xf32>, vector<16x64xf32>, vector<8x64xf32> -> vector<8x64xf32>
    %496 = arith.addf %494, %495 : vector<8x64xf32>
    %497 = vector.extract_strided_slice %496 {offsets = [0, 0], sizes = [8, 16], strides = [1, 1]} : vector<8x64xf32> to vector<8x16xf32>
    %cst_154 = arith.constant 5.000000e-01 : f32
    %498 = vector.broadcast %cst_154 : f32 to vector<8x16xf32>
    %499 = arith.mulf %498, %497 : vector<8x16xf32>
    %500 = math.tanh %499 : vector<8x16xf32>
    %cst_155 = arith.constant 5.000000e-01 : f32
    %501 = vector.broadcast %cst_155 : f32 to vector<8x16xf32>
    %502 = arith.mulf %501, %500 : vector<8x16xf32>
    %cst_156 = arith.constant 5.000000e-01 : f32
    %503 = vector.broadcast %cst_156 : f32 to vector<8x16xf32>
    %504 = arith.addf %502, %503 : vector<8x16xf32>
    %505 = vector.extract_strided_slice %496 {offsets = [0, 16], sizes = [8, 16], strides = [1, 1]} : vector<8x64xf32> to vector<8x16xf32>
    %cst_157 = arith.constant 5.000000e-01 : f32
    %506 = vector.broadcast %cst_157 : f32 to vector<8x16xf32>
    %507 = arith.mulf %506, %505 : vector<8x16xf32>
    %508 = math.tanh %507 : vector<8x16xf32>
    %cst_158 = arith.constant 5.000000e-01 : f32
    %509 = vector.broadcast %cst_158 : f32 to vector<8x16xf32>
    %510 = arith.mulf %509, %508 : vector<8x16xf32>
    %cst_159 = arith.constant 5.000000e-01 : f32
    %511 = vector.broadcast %cst_159 : f32 to vector<8x16xf32>
    %512 = arith.addf %510, %511 : vector<8x16xf32>
    %513 = vector.extract_strided_slice %496 {offsets = [0, 32], sizes = [8, 16], strides = [1, 1]} : vector<8x64xf32> to vector<8x16xf32>
    %514 = math.tanh %513 : vector<8x16xf32>
    %515 = vector.extract_strided_slice %496 {offsets = [0, 48], sizes = [8, 16], strides = [1, 1]} : vector<8x64xf32> to vector<8x16xf32>
    %cst_160 = arith.constant 5.000000e-01 : f32
    %516 = vector.broadcast %cst_160 : f32 to vector<8x16xf32>
    %517 = arith.mulf %516, %515 : vector<8x16xf32>
    %518 = math.tanh %517 : vector<8x16xf32>
    %cst_161 = arith.constant 5.000000e-01 : f32
    %519 = vector.broadcast %cst_161 : f32 to vector<8x16xf32>
    %520 = arith.mulf %519, %518 : vector<8x16xf32>
    %cst_162 = arith.constant 5.000000e-01 : f32
    %521 = vector.broadcast %cst_162 : f32 to vector<8x16xf32>
    %522 = arith.addf %520, %521 : vector<8x16xf32>
    %523 = arith.mulf %512, %491 : vector<8x16xf32>
    %524 = arith.mulf %504, %514 : vector<8x16xf32>
    %525 = arith.addf %523, %524 : vector<8x16xf32>
    %526 = math.tanh %525 : vector<8x16xf32>
    %527 = arith.mulf %522, %526 : vector<8x16xf32>
    %528 = vector.extract_strided_slice %286 {offsets = [0, 0], sizes = [8, 64], strides = [1, 1]} : vector<64x64xf32> to vector<8x64xf32>
    %cst_163 = arith.constant dense<0.000000e+00> : vector<8x64xf32>
    %529 = tpu.matmul %527, %287, %cst_163 {dimension_numbers = #tpu.dot_dimension_numbers<[1], [0], [0], [1], [0, 0, 1, 1], [], []>} : vector<8x16xf32>, vector<16x64xf32>, vector<8x64xf32> -> vector<8x64xf32>
    %530 = arith.addf %528, %529 : vector<8x64xf32>
    %531 = vector.extract_strided_slice %530 {offsets = [0, 0], sizes = [8, 16], strides = [1, 1]} : vector<8x64xf32> to vector<8x16xf32>
    %cst_164 = arith.constant 5.000000e-01 : f32
    %532 = vector.broadcast %cst_164 : f32 to vector<8x16xf32>
    %533 = arith.mulf %532, %531 : vector<8x16xf32>
    %534 = math.tanh %533 : vector<8x16xf32>
    %cst_165 = arith.constant 5.000000e-01 : f32
    %535 = vector.broadcast %cst_165 : f32 to vector<8x16xf32>
    %536 = arith.mulf %535, %534 : vector<8x16xf32>
    %cst_166 = arith.constant 5.000000e-01 : f32
    %537 = vector.broadcast %cst_166 : f32 to vector<8x16xf32>
    %538 = arith.addf %536, %537 : vector<8x16xf32>
    %539 = vector.extract_strided_slice %530 {offsets = [0, 16], sizes = [8, 16], strides = [1, 1]} : vector<8x64xf32> to vector<8x16xf32>
    %cst_167 = arith.constant 5.000000e-01 : f32
    %540 = vector.broadcast %cst_167 : f32 to vector<8x16xf32>
    %541 = arith.mulf %540, %539 : vector<8x16xf32>
    %542 = math.tanh %541 : vector<8x16xf32>
    %cst_168 = arith.constant 5.000000e-01 : f32
    %543 = vector.broadcast %cst_168 : f32 to vector<8x16xf32>
    %544 = arith.mulf %543, %542 : vector<8x16xf32>
    %cst_169 = arith.constant 5.000000e-01 : f32
    %545 = vector.broadcast %cst_169 : f32 to vector<8x16xf32>
    %546 = arith.addf %544, %545 : vector<8x16xf32>
    %547 = vector.extract_strided_slice %530 {offsets = [0, 32], sizes = [8, 16], strides = [1, 1]} : vector<8x64xf32> to vector<8x16xf32>
    %548 = math.tanh %547 : vector<8x16xf32>
    %549 = vector.extract_strided_slice %530 {offsets = [0, 48], sizes = [8, 16], strides = [1, 1]} : vector<8x64xf32> to vector<8x16xf32>
    %cst_170 = arith.constant 5.000000e-01 : f32
    %550 = vector.broadcast %cst_170 : f32 to vector<8x16xf32>
    %551 = arith.mulf %550, %549 : vector<8x16xf32>
    %552 = math.tanh %551 : vector<8x16xf32>
    %cst_171 = arith.constant 5.000000e-01 : f32
    %553 = vector.broadcast %cst_171 : f32 to vector<8x16xf32>
    %554 = arith.mulf %553, %552 : vector<8x16xf32>
    %cst_172 = arith.constant 5.000000e-01 : f32
    %555 = vector.broadcast %cst_172 : f32 to vector<8x16xf32>
    %556 = arith.addf %554, %555 : vector<8x16xf32>
    %557 = arith.mulf %546, %525 : vector<8x16xf32>
    %558 = arith.mulf %538, %548 : vector<8x16xf32>
    %559 = arith.addf %557, %558 : vector<8x16xf32>
    %560 = math.tanh %559 : vector<8x16xf32>
    %561 = arith.mulf %556, %560 : vector<8x16xf32>
    %562 = tpu.concatenate %561, %527, %493, %459, %425, %391, %357, %323 in 0 : vector<8x16xf32>, vector<8x16xf32>, vector<8x16xf32>, vector<8x16xf32>, vector<8x16xf32>, vector<8x16xf32>, vector<8x16xf32>, vector<8x16xf32> -> vector<64x16xf32>
    %c128 = arith.constant 128 : index
    %c0_173 = arith.constant 0 : index
    %563 = vector.load %arg2[%c128, %c0_173] : memref<200x128xf32, #tpu.memory_space<vmem>>, vector<1x28xf32>
    %c96 = arith.constant 96 : index
    %c0_174 = arith.constant 0 : index
    %564 = vector.load %arg2[%c96, %c0_174] : memref<200x128xf32, #tpu.memory_space<vmem>>, vector<16x28xf32>
    %cst_175 = arith.constant dense<0.000000e+00> : vector<64x28xf32>
    %565 = tpu.matmul %281, %564, %cst_175 {dimension_numbers = #tpu.dot_dimension_numbers<[1], [0], [0], [1], [0, 0, 1, 1], [], []>} : vector<64x16xf32>, vector<16x28xf32>, vector<64x28xf32> -> vector<64x28xf32>
    %566 = vector.broadcast %563 : vector<1x28xf32> to vector<64x28xf32>
    %567 = arith.addf %566, %565 : vector<64x28xf32>
    %c112 = arith.constant 112 : index
    %c0_176 = arith.constant 0 : index
    %568 = vector.load %arg2[%c112, %c0_176] : memref<200x128xf32, #tpu.memory_space<vmem>>, vector<16x28xf32>
    %cst_177 = arith.constant dense<0.000000e+00> : vector<64x28xf32>
    %569 = tpu.matmul %562, %568, %cst_177 {dimension_numbers = #tpu.dot_dimension_numbers<[1], [0], [0], [1], [0, 0, 1, 1], [], []>} : vector<64x16xf32>, vector<16x28xf32>, vector<64x28xf32> -> vector<64x28xf32>
    %570 = arith.addf %567, %569 : vector<64x28xf32>
    %571 = tpu.transpose %570, [1, 0] : vector<64x28xf32> -> vector<28x64xf32>
    %c136 = arith.constant 136 : index
    %c0_178 = arith.constant 0 : index
    %572 = vector.load %arg2[%c136, %c0_178] : memref<200x128xf32, #tpu.memory_space<vmem>>, vector<28x28xf32>
    %c168 = arith.constant 168 : index
    %c0_179 = arith.constant 0 : index
    %573 = vector.load %arg2[%c168, %c0_179] : memref<200x128xf32, #tpu.memory_space<vmem>>, vector<28x28xf32>
    %574 = tpu.iota {dimensions = array<i32: 1>} : vector<1x28xi32>
    %575 = arith.sitofp %574 : vector<1x28xi32> to vector<1x28xf32>
    %576 = tpu.iota {dimensions = array<i32: 0>} : vector<28x1xi32>
    %577 = arith.sitofp %576 : vector<28x1xi32> to vector<28x1xf32>
    %578 = tpu.iota {dimensions = array<i32: 1>} : vector<1x128xi32>
    %579 = tpu.iota {dimensions = array<i32: 0>} : vector<8x128xi32>
    %c26_i32 = arith.constant 26 : i32
    %580 = vector.broadcast %c26_i32 : i32 to vector<1x28xi32>
    %581 = arith.cmpi eq, %574, %580 : vector<1x28xi32>
    %cst_180 = arith.constant 0.000000e+00 : f32
    %cst_181 = arith.constant -1.000000e+04 : f32
    %582 = vector.broadcast %cst_180 : f32 to vector<1x28xf32>
    %583 = vector.broadcast %cst_181 : f32 to vector<1x28xf32>
    %584 = arith.select %581, %582, %583 : vector<1x28xi1>, vector<1x28xf32>
    %cst_182 = arith.constant 0.000000e+00 : f32
    %585 = vector.broadcast %cst_182 : f32 to vector<8x128xf32>
    %586 = vector.broadcast %584 : vector<1x28xf32> to vector<28x28xf32>
    %587 = arith.addf %572, %586 : vector<28x28xf32>
    %cst_183 = arith.constant dense<0xFF800000> : vector<28xf32>
    %588 = vector.multi_reduction <maximumf>, %587, %cst_183 [1] : vector<28x28xf32> to vector<28xf32>
    %589 = vector.shape_cast %588 : vector<28xf32> to vector<28x1xf32>
    %590 = tpu.iota {dimensions = array<i32: 1>} : vector<28x28xi32>
    %591 = arith.sitofp %590 : vector<28x28xi32> to vector<28x28xf32>
    %592 = vector.broadcast %589 : vector<28x1xf32> to vector<28x28xf32>
    %593 = arith.cmpf oeq, %587, %592 : vector<28x28xf32>
    %cst_184 = arith.constant 2.800000e+01 : f32
    %594 = vector.broadcast %cst_184 : f32 to vector<28x28xf32>
    %595 = arith.select %593, %591, %594 : vector<28x28xi1>, vector<28x28xf32>
    %cst_185 = arith.constant dense<0x7F800000> : vector<28xf32>
    %596 = vector.multi_reduction <minimumf>, %595, %cst_185 [1] : vector<28x28xf32> to vector<28xf32>
    %597 = vector.shape_cast %596 : vector<28xf32> to vector<28x1xf32>
    %598 = vector.extract_strided_slice %571 {offsets = [0, 0], sizes = [28, 1], strides = [1, 1]} : vector<28x64xf32> to vector<28x1xf32>
    %599 = arith.addf %589, %598 : vector<28x1xf32>
    %600 = vector.broadcast %599 : vector<28x1xf32> to vector<28x28xf32>
    %601 = arith.addf %573, %600 : vector<28x28xf32>
    %cst_186 = arith.constant dense<0xFF800000> : vector<28xf32>
    %602 = vector.multi_reduction <maximumf>, %601, %cst_186 [0] : vector<28x28xf32> to vector<28xf32>
    %603 = vector.shape_cast %602 : vector<28xf32> to vector<1x28xf32>
    %604 = tpu.iota {dimensions = array<i32: 0>} : vector<28x28xi32>
    %605 = arith.sitofp %604 : vector<28x28xi32> to vector<28x28xf32>
    %606 = vector.broadcast %603 : vector<1x28xf32> to vector<28x28xf32>
    %607 = arith.cmpf oeq, %601, %606 : vector<28x28xf32>
    %cst_187 = arith.constant 2.800000e+01 : f32
    %608 = vector.broadcast %cst_187 : f32 to vector<28x28xf32>
    %609 = arith.select %607, %605, %608 : vector<28x28xi1>, vector<28x28xf32>
    %cst_188 = arith.constant dense<0x7F800000> : vector<28xf32>
    %610 = vector.multi_reduction <minimumf>, %609, %cst_188 [0] : vector<28x28xf32> to vector<28xf32>
    %611 = vector.shape_cast %610 : vector<28xf32> to vector<1x28xf32>
    %612 = vector.extract_strided_slice %570 {offsets = [8, 0], sizes = [1, 28], strides = [1, 1]} : vector<64x28xf32> to vector<1x28xf32>
    %613 = arith.addf %603, %612 : vector<1x28xf32>
    %614 = vector.broadcast %613 : vector<1x28xf32> to vector<28x28xf32>
    %615 = arith.addf %572, %614 : vector<28x28xf32>
    %cst_189 = arith.constant dense<0xFF800000> : vector<28xf32>
    %616 = vector.multi_reduction <maximumf>, %615, %cst_189 [1] : vector<28x28xf32> to vector<28xf32>
    %617 = vector.shape_cast %616 : vector<28xf32> to vector<28x1xf32>
    %618 = tpu.iota {dimensions = array<i32: 1>} : vector<28x28xi32>
    %619 = arith.sitofp %618 : vector<28x28xi32> to vector<28x28xf32>
    %620 = vector.broadcast %617 : vector<28x1xf32> to vector<28x28xf32>
    %621 = arith.cmpf oeq, %615, %620 : vector<28x28xf32>
    %cst_190 = arith.constant 2.800000e+01 : f32
    %622 = vector.broadcast %cst_190 : f32 to vector<28x28xf32>
    %623 = arith.select %621, %619, %622 : vector<28x28xi1>, vector<28x28xf32>
    %cst_191 = arith.constant dense<0x7F800000> : vector<28xf32>
    %624 = vector.multi_reduction <minimumf>, %623, %cst_191 [1] : vector<28x28xf32> to vector<28xf32>
    %625 = vector.shape_cast %624 : vector<28xf32> to vector<28x1xf32>
    %626 = vector.extract_strided_slice %571 {offsets = [0, 16], sizes = [28, 1], strides = [1, 1]} : vector<28x64xf32> to vector<28x1xf32>
    %627 = arith.addf %617, %626 : vector<28x1xf32>
    %628 = vector.broadcast %627 : vector<28x1xf32> to vector<28x28xf32>
    %629 = arith.addf %573, %628 : vector<28x28xf32>
    %cst_192 = arith.constant dense<0xFF800000> : vector<28xf32>
    %630 = vector.multi_reduction <maximumf>, %629, %cst_192 [0] : vector<28x28xf32> to vector<28xf32>
    %631 = vector.shape_cast %630 : vector<28xf32> to vector<1x28xf32>
    %632 = tpu.iota {dimensions = array<i32: 0>} : vector<28x28xi32>
    %633 = arith.sitofp %632 : vector<28x28xi32> to vector<28x28xf32>
    %634 = vector.broadcast %631 : vector<1x28xf32> to vector<28x28xf32>
    %635 = arith.cmpf oeq, %629, %634 : vector<28x28xf32>
    %cst_193 = arith.constant 2.800000e+01 : f32
    %636 = vector.broadcast %cst_193 : f32 to vector<28x28xf32>
    %637 = arith.select %635, %633, %636 : vector<28x28xi1>, vector<28x28xf32>
    %cst_194 = arith.constant dense<0x7F800000> : vector<28xf32>
    %638 = vector.multi_reduction <minimumf>, %637, %cst_194 [0] : vector<28x28xf32> to vector<28xf32>
    %639 = vector.shape_cast %638 : vector<28xf32> to vector<1x28xf32>
    %640 = vector.extract_strided_slice %570 {offsets = [24, 0], sizes = [1, 28], strides = [1, 1]} : vector<64x28xf32> to vector<1x28xf32>
    %641 = arith.addf %631, %640 : vector<1x28xf32>
    %642 = vector.broadcast %641 : vector<1x28xf32> to vector<28x28xf32>
    %643 = arith.addf %572, %642 : vector<28x28xf32>
    %cst_195 = arith.constant dense<0xFF800000> : vector<28xf32>
    %644 = vector.multi_reduction <maximumf>, %643, %cst_195 [1] : vector<28x28xf32> to vector<28xf32>
    %645 = vector.shape_cast %644 : vector<28xf32> to vector<28x1xf32>
    %646 = tpu.iota {dimensions = array<i32: 1>} : vector<28x28xi32>
    %647 = arith.sitofp %646 : vector<28x28xi32> to vector<28x28xf32>
    %648 = vector.broadcast %645 : vector<28x1xf32> to vector<28x28xf32>
    %649 = arith.cmpf oeq, %643, %648 : vector<28x28xf32>
    %cst_196 = arith.constant 2.800000e+01 : f32
    %650 = vector.broadcast %cst_196 : f32 to vector<28x28xf32>
    %651 = arith.select %649, %647, %650 : vector<28x28xi1>, vector<28x28xf32>
    %cst_197 = arith.constant dense<0x7F800000> : vector<28xf32>
    %652 = vector.multi_reduction <minimumf>, %651, %cst_197 [1] : vector<28x28xf32> to vector<28xf32>
    %653 = vector.shape_cast %652 : vector<28xf32> to vector<28x1xf32>
    %654 = vector.extract_strided_slice %571 {offsets = [0, 32], sizes = [28, 1], strides = [1, 1]} : vector<28x64xf32> to vector<28x1xf32>
    %655 = arith.addf %645, %654 : vector<28x1xf32>
    %656 = vector.broadcast %655 : vector<28x1xf32> to vector<28x28xf32>
    %657 = arith.addf %573, %656 : vector<28x28xf32>
    %cst_198 = arith.constant dense<0xFF800000> : vector<28xf32>
    %658 = vector.multi_reduction <maximumf>, %657, %cst_198 [0] : vector<28x28xf32> to vector<28xf32>
    %659 = vector.shape_cast %658 : vector<28xf32> to vector<1x28xf32>
    %660 = tpu.iota {dimensions = array<i32: 0>} : vector<28x28xi32>
    %661 = arith.sitofp %660 : vector<28x28xi32> to vector<28x28xf32>
    %662 = vector.broadcast %659 : vector<1x28xf32> to vector<28x28xf32>
    %663 = arith.cmpf oeq, %657, %662 : vector<28x28xf32>
    %cst_199 = arith.constant 2.800000e+01 : f32
    %664 = vector.broadcast %cst_199 : f32 to vector<28x28xf32>
    %665 = arith.select %663, %661, %664 : vector<28x28xi1>, vector<28x28xf32>
    %cst_200 = arith.constant dense<0x7F800000> : vector<28xf32>
    %666 = vector.multi_reduction <minimumf>, %665, %cst_200 [0] : vector<28x28xf32> to vector<28xf32>
    %667 = vector.shape_cast %666 : vector<28xf32> to vector<1x28xf32>
    %668 = vector.extract_strided_slice %570 {offsets = [40, 0], sizes = [1, 28], strides = [1, 1]} : vector<64x28xf32> to vector<1x28xf32>
    %669 = arith.addf %659, %668 : vector<1x28xf32>
    %670 = vector.broadcast %669 : vector<1x28xf32> to vector<28x28xf32>
    %671 = arith.addf %572, %670 : vector<28x28xf32>
    %cst_201 = arith.constant dense<0xFF800000> : vector<28xf32>
    %672 = vector.multi_reduction <maximumf>, %671, %cst_201 [1] : vector<28x28xf32> to vector<28xf32>
    %673 = vector.shape_cast %672 : vector<28xf32> to vector<28x1xf32>
    %674 = tpu.iota {dimensions = array<i32: 1>} : vector<28x28xi32>
    %675 = arith.sitofp %674 : vector<28x28xi32> to vector<28x28xf32>
    %676 = vector.broadcast %673 : vector<28x1xf32> to vector<28x28xf32>
    %677 = arith.cmpf oeq, %671, %676 : vector<28x28xf32>
    %cst_202 = arith.constant 2.800000e+01 : f32
    %678 = vector.broadcast %cst_202 : f32 to vector<28x28xf32>
    %679 = arith.select %677, %675, %678 : vector<28x28xi1>, vector<28x28xf32>
    %cst_203 = arith.constant dense<0x7F800000> : vector<28xf32>
    %680 = vector.multi_reduction <minimumf>, %679, %cst_203 [1] : vector<28x28xf32> to vector<28xf32>
    %681 = vector.shape_cast %680 : vector<28xf32> to vector<28x1xf32>
    %682 = vector.extract_strided_slice %571 {offsets = [0, 48], sizes = [28, 1], strides = [1, 1]} : vector<28x64xf32> to vector<28x1xf32>
    %683 = arith.addf %673, %682 : vector<28x1xf32>
    %684 = vector.broadcast %683 : vector<28x1xf32> to vector<28x28xf32>
    %685 = arith.addf %573, %684 : vector<28x28xf32>
    %cst_204 = arith.constant dense<0xFF800000> : vector<28xf32>
    %686 = vector.multi_reduction <maximumf>, %685, %cst_204 [0] : vector<28x28xf32> to vector<28xf32>
    %687 = vector.shape_cast %686 : vector<28xf32> to vector<1x28xf32>
    %688 = tpu.iota {dimensions = array<i32: 0>} : vector<28x28xi32>
    %689 = arith.sitofp %688 : vector<28x28xi32> to vector<28x28xf32>
    %690 = vector.broadcast %687 : vector<1x28xf32> to vector<28x28xf32>
    %691 = arith.cmpf oeq, %685, %690 : vector<28x28xf32>
    %cst_205 = arith.constant 2.800000e+01 : f32
    %692 = vector.broadcast %cst_205 : f32 to vector<28x28xf32>
    %693 = arith.select %691, %689, %692 : vector<28x28xi1>, vector<28x28xf32>
    %cst_206 = arith.constant dense<0x7F800000> : vector<28xf32>
    %694 = vector.multi_reduction <minimumf>, %693, %cst_206 [0] : vector<28x28xf32> to vector<28xf32>
    %695 = vector.shape_cast %694 : vector<28xf32> to vector<1x28xf32>
    %696 = vector.extract_strided_slice %570 {offsets = [56, 0], sizes = [1, 28], strides = [1, 1]} : vector<64x28xf32> to vector<1x28xf32>
    %697 = arith.addf %687, %696 : vector<1x28xf32>
    %698 = vector.extract_strided_slice %572 {offsets = [27, 0], sizes = [1, 28], strides = [1, 1]} : vector<28x28xf32> to vector<1x28xf32>
    %699 = arith.addf %697, %698 : vector<1x28xf32>
    %cst_207 = arith.constant dense<0xFF800000> : vector<1xf32>
    %700 = vector.multi_reduction <maximumf>, %699, %cst_207 [1] : vector<1x28xf32> to vector<1xf32>
    %701 = vector.shape_cast %700 : vector<1xf32> to vector<1x1xf32>
    %702 = tpu.iota {dimensions = array<i32: 1>} : vector<1x28xi32>
    %703 = arith.sitofp %702 : vector<1x28xi32> to vector<1x28xf32>
    %704 = vector.broadcast %701 : vector<1x1xf32> to vector<1x28xf32>
    %705 = arith.cmpf oeq, %699, %704 : vector<1x28xf32>
    %cst_208 = arith.constant 2.800000e+01 : f32
    %706 = vector.broadcast %cst_208 : f32 to vector<1x28xf32>
    %707 = arith.select %705, %703, %706 : vector<1x28xi1>, vector<1x28xf32>
    %cst_209 = arith.constant dense<0x7F800000> : vector<1xf32>
    %708 = vector.multi_reduction <minimumf>, %707, %cst_209 [1] : vector<1x28xf32> to vector<1xf32>
    %709 = vector.shape_cast %708 : vector<1xf32> to vector<1x1xf32>
    %c7_i32 = arith.constant 7 : i32
    %710 = vector.broadcast %c7_i32 : i32 to vector<1x128xi32>
    %711 = arith.cmpi eq, %578, %710 : vector<1x128xi32>
    %cst_210 = arith.constant 0.000000e+00 : f32
    %712 = vector.broadcast %cst_210 : f32 to vector<1x128xf32>
    %713 = vector.shape_cast %709 : vector<1x1xf32> to vector<1x1xf32>
    %714 = vector.broadcast %713 : vector<1x1xf32> to vector<1x128xf32>
    %715 = arith.select %711, %714, %712 : vector<1x128xi1>, vector<1x128xf32>
    %716 = vector.broadcast %709 : vector<1x1xf32> to vector<1x28xf32>
    %717 = arith.cmpf oeq, %575, %716 : vector<1x28xf32>
    %cst_211 = arith.constant 0.000000e+00 : f32
    %718 = vector.broadcast %cst_211 : f32 to vector<1x28xf32>
    %719 = arith.select %717, %695, %718 : vector<1x28xi1>, vector<1x28xf32>
    %cst_212 = arith.constant dense<0.000000e+00> : vector<1xf32>
    %720 = vector.multi_reduction <add>, %719, %cst_212 [1] : vector<1x28xf32> to vector<1xf32>
    %721 = vector.shape_cast %720 : vector<1xf32> to vector<1x1xf32>
    %c6_i32 = arith.constant 6 : i32
    %722 = vector.broadcast %c6_i32 : i32 to vector<1x128xi32>
    %723 = arith.cmpi eq, %578, %722 : vector<1x128xi32>
    %724 = vector.shape_cast %721 : vector<1x1xf32> to vector<1x1xf32>
    %725 = vector.broadcast %724 : vector<1x1xf32> to vector<1x128xf32>
    %726 = arith.select %723, %725, %715 : vector<1x128xi1>, vector<1x128xf32>
    %727 = vector.broadcast %721 : vector<1x1xf32> to vector<28x1xf32>
    %728 = arith.cmpf oeq, %577, %727 : vector<28x1xf32>
    %cst_213 = arith.constant 0.000000e+00 : f32
    %729 = vector.broadcast %cst_213 : f32 to vector<28x1xf32>
    %730 = arith.select %728, %681, %729 : vector<28x1xi1>, vector<28x1xf32>
    %cst_214 = arith.constant dense<0.000000e+00> : vector<1xf32>
    %731 = vector.multi_reduction <add>, %730, %cst_214 [0] : vector<28x1xf32> to vector<1xf32>
    %732 = vector.shape_cast %731 : vector<1xf32> to vector<1x1xf32>
    %c5_i32 = arith.constant 5 : i32
    %733 = vector.broadcast %c5_i32 : i32 to vector<1x128xi32>
    %734 = arith.cmpi eq, %578, %733 : vector<1x128xi32>
    %735 = vector.shape_cast %732 : vector<1x1xf32> to vector<1x1xf32>
    %736 = vector.broadcast %735 : vector<1x1xf32> to vector<1x128xf32>
    %737 = arith.select %734, %736, %726 : vector<1x128xi1>, vector<1x128xf32>
    %738 = vector.broadcast %732 : vector<1x1xf32> to vector<1x28xf32>
    %739 = arith.cmpf oeq, %575, %738 : vector<1x28xf32>
    %cst_215 = arith.constant 0.000000e+00 : f32
    %740 = vector.broadcast %cst_215 : f32 to vector<1x28xf32>
    %741 = arith.select %739, %667, %740 : vector<1x28xi1>, vector<1x28xf32>
    %cst_216 = arith.constant dense<0.000000e+00> : vector<1xf32>
    %742 = vector.multi_reduction <add>, %741, %cst_216 [1] : vector<1x28xf32> to vector<1xf32>
    %743 = vector.shape_cast %742 : vector<1xf32> to vector<1x1xf32>
    %c4_i32 = arith.constant 4 : i32
    %744 = vector.broadcast %c4_i32 : i32 to vector<1x128xi32>
    %745 = arith.cmpi eq, %578, %744 : vector<1x128xi32>
    %746 = vector.shape_cast %743 : vector<1x1xf32> to vector<1x1xf32>
    %747 = vector.broadcast %746 : vector<1x1xf32> to vector<1x128xf32>
    %748 = arith.select %745, %747, %737 : vector<1x128xi1>, vector<1x128xf32>
    %749 = vector.broadcast %743 : vector<1x1xf32> to vector<28x1xf32>
    %750 = arith.cmpf oeq, %577, %749 : vector<28x1xf32>
    %cst_217 = arith.constant 0.000000e+00 : f32
    %751 = vector.broadcast %cst_217 : f32 to vector<28x1xf32>
    %752 = arith.select %750, %653, %751 : vector<28x1xi1>, vector<28x1xf32>
    %cst_218 = arith.constant dense<0.000000e+00> : vector<1xf32>
    %753 = vector.multi_reduction <add>, %752, %cst_218 [0] : vector<28x1xf32> to vector<1xf32>
    %754 = vector.shape_cast %753 : vector<1xf32> to vector<1x1xf32>
    %c3_i32 = arith.constant 3 : i32
    %755 = vector.broadcast %c3_i32 : i32 to vector<1x128xi32>
    %756 = arith.cmpi eq, %578, %755 : vector<1x128xi32>
    %757 = vector.shape_cast %754 : vector<1x1xf32> to vector<1x1xf32>
    %758 = vector.broadcast %757 : vector<1x1xf32> to vector<1x128xf32>
    %759 = arith.select %756, %758, %748 : vector<1x128xi1>, vector<1x128xf32>
    %760 = vector.broadcast %754 : vector<1x1xf32> to vector<1x28xf32>
    %761 = arith.cmpf oeq, %575, %760 : vector<1x28xf32>
    %cst_219 = arith.constant 0.000000e+00 : f32
    %762 = vector.broadcast %cst_219 : f32 to vector<1x28xf32>
    %763 = arith.select %761, %639, %762 : vector<1x28xi1>, vector<1x28xf32>
    %cst_220 = arith.constant dense<0.000000e+00> : vector<1xf32>
    %764 = vector.multi_reduction <add>, %763, %cst_220 [1] : vector<1x28xf32> to vector<1xf32>
    %765 = vector.shape_cast %764 : vector<1xf32> to vector<1x1xf32>
    %c2_i32 = arith.constant 2 : i32
    %766 = vector.broadcast %c2_i32 : i32 to vector<1x128xi32>
    %767 = arith.cmpi eq, %578, %766 : vector<1x128xi32>
    %768 = vector.shape_cast %765 : vector<1x1xf32> to vector<1x1xf32>
    %769 = vector.broadcast %768 : vector<1x1xf32> to vector<1x128xf32>
    %770 = arith.select %767, %769, %759 : vector<1x128xi1>, vector<1x128xf32>
    %771 = vector.broadcast %765 : vector<1x1xf32> to vector<28x1xf32>
    %772 = arith.cmpf oeq, %577, %771 : vector<28x1xf32>
    %cst_221 = arith.constant 0.000000e+00 : f32
    %773 = vector.broadcast %cst_221 : f32 to vector<28x1xf32>
    %774 = arith.select %772, %625, %773 : vector<28x1xi1>, vector<28x1xf32>
    %cst_222 = arith.constant dense<0.000000e+00> : vector<1xf32>
    %775 = vector.multi_reduction <add>, %774, %cst_222 [0] : vector<28x1xf32> to vector<1xf32>
    %776 = vector.shape_cast %775 : vector<1xf32> to vector<1x1xf32>
    %c1_i32 = arith.constant 1 : i32
    %777 = vector.broadcast %c1_i32 : i32 to vector<1x128xi32>
    %778 = arith.cmpi eq, %578, %777 : vector<1x128xi32>
    %779 = vector.shape_cast %776 : vector<1x1xf32> to vector<1x1xf32>
    %780 = vector.broadcast %779 : vector<1x1xf32> to vector<1x128xf32>
    %781 = arith.select %778, %780, %770 : vector<1x128xi1>, vector<1x128xf32>
    %782 = vector.broadcast %776 : vector<1x1xf32> to vector<1x28xf32>
    %783 = arith.cmpf oeq, %575, %782 : vector<1x28xf32>
    %cst_223 = arith.constant 0.000000e+00 : f32
    %784 = vector.broadcast %cst_223 : f32 to vector<1x28xf32>
    %785 = arith.select %783, %611, %784 : vector<1x28xi1>, vector<1x28xf32>
    %cst_224 = arith.constant dense<0.000000e+00> : vector<1xf32>
    %786 = vector.multi_reduction <add>, %785, %cst_224 [1] : vector<1x28xf32> to vector<1xf32>
    %787 = vector.shape_cast %786 : vector<1xf32> to vector<1x1xf32>
    %c0_i32 = arith.constant 0 : i32
    %788 = vector.broadcast %c0_i32 : i32 to vector<1x128xi32>
    %789 = arith.cmpi eq, %578, %788 : vector<1x128xi32>
    %790 = vector.shape_cast %787 : vector<1x1xf32> to vector<1x1xf32>
    %791 = vector.broadcast %790 : vector<1x1xf32> to vector<1x128xf32>
    %792 = arith.select %789, %791, %781 : vector<1x128xi1>, vector<1x128xf32>
    %793 = vector.broadcast %787 : vector<1x1xf32> to vector<28x1xf32>
    %794 = arith.cmpf oeq, %577, %793 : vector<28x1xf32>
    %cst_225 = arith.constant 0.000000e+00 : f32
    %795 = vector.broadcast %cst_225 : f32 to vector<28x1xf32>
    %796 = arith.select %794, %597, %795 : vector<28x1xi1>, vector<28x1xf32>
    %cst_226 = arith.constant dense<0.000000e+00> : vector<1xf32>
    %797 = vector.multi_reduction <add>, %796, %cst_226 [0] : vector<28x1xf32> to vector<1xf32>
    %798 = vector.shape_cast %797 : vector<1xf32> to vector<1x1xf32>
    %c8_i32 = arith.constant 8 : i32
    %799 = vector.broadcast %c8_i32 : i32 to vector<1x128xi32>
    %800 = arith.cmpi eq, %578, %799 : vector<1x128xi32>
    %801 = vector.shape_cast %701 : vector<1x1xf32> to vector<1x1xf32>
    %802 = vector.broadcast %801 : vector<1x1xf32> to vector<1x128xf32>
    %803 = arith.select %800, %802, %792 : vector<1x128xi1>, vector<1x128xf32>
    %c9_i32 = arith.constant 9 : i32
    %804 = vector.broadcast %c9_i32 : i32 to vector<1x128xi32>
    %805 = arith.cmpi eq, %578, %804 : vector<1x128xi32>
    %806 = vector.shape_cast %798 : vector<1x1xf32> to vector<1x1xf32>
    %807 = vector.broadcast %806 : vector<1x1xf32> to vector<1x128xf32>
    %808 = arith.select %805, %807, %803 : vector<1x128xi1>, vector<1x128xf32>
    %c0_i32_227 = arith.constant 0 : i32
    %809 = vector.broadcast %c0_i32_227 : i32 to vector<8x128xi32>
    %810 = arith.cmpi eq, %579, %809 : vector<8x128xi32>
    %811 = vector.shape_cast %808 : vector<1x128xf32> to vector<1x128xf32>
    %812 = vector.broadcast %811 : vector<1x128xf32> to vector<8x128xf32>
    %813 = arith.select %810, %812, %585 : vector<8x128xi1>, vector<8x128xf32>
    %814 = vector.broadcast %584 : vector<1x28xf32> to vector<28x28xf32>
    %815 = arith.addf %572, %814 : vector<28x28xf32>
    %cst_228 = arith.constant dense<0xFF800000> : vector<28xf32>
    %816 = vector.multi_reduction <maximumf>, %815, %cst_228 [1] : vector<28x28xf32> to vector<28xf32>
    %817 = vector.shape_cast %816 : vector<28xf32> to vector<28x1xf32>
    %818 = tpu.iota {dimensions = array<i32: 1>} : vector<28x28xi32>
    %819 = arith.sitofp %818 : vector<28x28xi32> to vector<28x28xf32>
    %820 = vector.broadcast %817 : vector<28x1xf32> to vector<28x28xf32>
    %821 = arith.cmpf oeq, %815, %820 : vector<28x28xf32>
    %cst_229 = arith.constant 2.800000e+01 : f32
    %822 = vector.broadcast %cst_229 : f32 to vector<28x28xf32>
    %823 = arith.select %821, %819, %822 : vector<28x28xi1>, vector<28x28xf32>
    %cst_230 = arith.constant dense<0x7F800000> : vector<28xf32>
    %824 = vector.multi_reduction <minimumf>, %823, %cst_230 [1] : vector<28x28xf32> to vector<28xf32>
    %825 = vector.shape_cast %824 : vector<28xf32> to vector<28x1xf32>
    %826 = vector.extract_strided_slice %571 {offsets = [0, 1], sizes = [28, 1], strides = [1, 1]} : vector<28x64xf32> to vector<28x1xf32>
    %827 = arith.addf %817, %826 : vector<28x1xf32>
    %828 = vector.broadcast %827 : vector<28x1xf32> to vector<28x28xf32>
    %829 = arith.addf %573, %828 : vector<28x28xf32>
    %cst_231 = arith.constant dense<0xFF800000> : vector<28xf32>
    %830 = vector.multi_reduction <maximumf>, %829, %cst_231 [0] : vector<28x28xf32> to vector<28xf32>
    %831 = vector.shape_cast %830 : vector<28xf32> to vector<1x28xf32>
    %832 = tpu.iota {dimensions = array<i32: 0>} : vector<28x28xi32>
    %833 = arith.sitofp %832 : vector<28x28xi32> to vector<28x28xf32>
    %834 = vector.broadcast %831 : vector<1x28xf32> to vector<28x28xf32>
    %835 = arith.cmpf oeq, %829, %834 : vector<28x28xf32>
    %cst_232 = arith.constant 2.800000e+01 : f32
    %836 = vector.broadcast %cst_232 : f32 to vector<28x28xf32>
    %837 = arith.select %835, %833, %836 : vector<28x28xi1>, vector<28x28xf32>
    %cst_233 = arith.constant dense<0x7F800000> : vector<28xf32>
    %838 = vector.multi_reduction <minimumf>, %837, %cst_233 [0] : vector<28x28xf32> to vector<28xf32>
    %839 = vector.shape_cast %838 : vector<28xf32> to vector<1x28xf32>
    %840 = vector.extract_strided_slice %570 {offsets = [9, 0], sizes = [1, 28], strides = [1, 1]} : vector<64x28xf32> to vector<1x28xf32>
    %841 = arith.addf %831, %840 : vector<1x28xf32>
    %842 = vector.broadcast %841 : vector<1x28xf32> to vector<28x28xf32>
    %843 = arith.addf %572, %842 : vector<28x28xf32>
    %cst_234 = arith.constant dense<0xFF800000> : vector<28xf32>
    %844 = vector.multi_reduction <maximumf>, %843, %cst_234 [1] : vector<28x28xf32> to vector<28xf32>
    %845 = vector.shape_cast %844 : vector<28xf32> to vector<28x1xf32>
    %846 = tpu.iota {dimensions = array<i32: 1>} : vector<28x28xi32>
    %847 = arith.sitofp %846 : vector<28x28xi32> to vector<28x28xf32>
    %848 = vector.broadcast %845 : vector<28x1xf32> to vector<28x28xf32>
    %849 = arith.cmpf oeq, %843, %848 : vector<28x28xf32>
    %cst_235 = arith.constant 2.800000e+01 : f32
    %850 = vector.broadcast %cst_235 : f32 to vector<28x28xf32>
    %851 = arith.select %849, %847, %850 : vector<28x28xi1>, vector<28x28xf32>
    %cst_236 = arith.constant dense<0x7F800000> : vector<28xf32>
    %852 = vector.multi_reduction <minimumf>, %851, %cst_236 [1] : vector<28x28xf32> to vector<28xf32>
    %853 = vector.shape_cast %852 : vector<28xf32> to vector<28x1xf32>
    %854 = vector.extract_strided_slice %571 {offsets = [0, 17], sizes = [28, 1], strides = [1, 1]} : vector<28x64xf32> to vector<28x1xf32>
    %855 = arith.addf %845, %854 : vector<28x1xf32>
    %856 = vector.broadcast %855 : vector<28x1xf32> to vector<28x28xf32>
    %857 = arith.addf %573, %856 : vector<28x28xf32>
    %cst_237 = arith.constant dense<0xFF800000> : vector<28xf32>
    %858 = vector.multi_reduction <maximumf>, %857, %cst_237 [0] : vector<28x28xf32> to vector<28xf32>
    %859 = vector.shape_cast %858 : vector<28xf32> to vector<1x28xf32>
    %860 = tpu.iota {dimensions = array<i32: 0>} : vector<28x28xi32>
    %861 = arith.sitofp %860 : vector<28x28xi32> to vector<28x28xf32>
    %862 = vector.broadcast %859 : vector<1x28xf32> to vector<28x28xf32>
    %863 = arith.cmpf oeq, %857, %862 : vector<28x28xf32>
    %cst_238 = arith.constant 2.800000e+01 : f32
    %864 = vector.broadcast %cst_238 : f32 to vector<28x28xf32>
    %865 = arith.select %863, %861, %864 : vector<28x28xi1>, vector<28x28xf32>
    %cst_239 = arith.constant dense<0x7F800000> : vector<28xf32>
    %866 = vector.multi_reduction <minimumf>, %865, %cst_239 [0] : vector<28x28xf32> to vector<28xf32>
    %867 = vector.shape_cast %866 : vector<28xf32> to vector<1x28xf32>
    %868 = vector.extract_strided_slice %570 {offsets = [25, 0], sizes = [1, 28], strides = [1, 1]} : vector<64x28xf32> to vector<1x28xf32>
    %869 = arith.addf %859, %868 : vector<1x28xf32>
    %870 = vector.broadcast %869 : vector<1x28xf32> to vector<28x28xf32>
    %871 = arith.addf %572, %870 : vector<28x28xf32>
    %cst_240 = arith.constant dense<0xFF800000> : vector<28xf32>
    %872 = vector.multi_reduction <maximumf>, %871, %cst_240 [1] : vector<28x28xf32> to vector<28xf32>
    %873 = vector.shape_cast %872 : vector<28xf32> to vector<28x1xf32>
    %874 = tpu.iota {dimensions = array<i32: 1>} : vector<28x28xi32>
    %875 = arith.sitofp %874 : vector<28x28xi32> to vector<28x28xf32>
    %876 = vector.broadcast %873 : vector<28x1xf32> to vector<28x28xf32>
    %877 = arith.cmpf oeq, %871, %876 : vector<28x28xf32>
    %cst_241 = arith.constant 2.800000e+01 : f32
    %878 = vector.broadcast %cst_241 : f32 to vector<28x28xf32>
    %879 = arith.select %877, %875, %878 : vector<28x28xi1>, vector<28x28xf32>
    %cst_242 = arith.constant dense<0x7F800000> : vector<28xf32>
    %880 = vector.multi_reduction <minimumf>, %879, %cst_242 [1] : vector<28x28xf32> to vector<28xf32>
    %881 = vector.shape_cast %880 : vector<28xf32> to vector<28x1xf32>
    %882 = vector.extract_strided_slice %571 {offsets = [0, 33], sizes = [28, 1], strides = [1, 1]} : vector<28x64xf32> to vector<28x1xf32>
    %883 = arith.addf %873, %882 : vector<28x1xf32>
    %884 = vector.broadcast %883 : vector<28x1xf32> to vector<28x28xf32>
    %885 = arith.addf %573, %884 : vector<28x28xf32>
    %cst_243 = arith.constant dense<0xFF800000> : vector<28xf32>
    %886 = vector.multi_reduction <maximumf>, %885, %cst_243 [0] : vector<28x28xf32> to vector<28xf32>
    %887 = vector.shape_cast %886 : vector<28xf32> to vector<1x28xf32>
    %888 = tpu.iota {dimensions = array<i32: 0>} : vector<28x28xi32>
    %889 = arith.sitofp %888 : vector<28x28xi32> to vector<28x28xf32>
    %890 = vector.broadcast %887 : vector<1x28xf32> to vector<28x28xf32>
    %891 = arith.cmpf oeq, %885, %890 : vector<28x28xf32>
    %cst_244 = arith.constant 2.800000e+01 : f32
    %892 = vector.broadcast %cst_244 : f32 to vector<28x28xf32>
    %893 = arith.select %891, %889, %892 : vector<28x28xi1>, vector<28x28xf32>
    %cst_245 = arith.constant dense<0x7F800000> : vector<28xf32>
    %894 = vector.multi_reduction <minimumf>, %893, %cst_245 [0] : vector<28x28xf32> to vector<28xf32>
    %895 = vector.shape_cast %894 : vector<28xf32> to vector<1x28xf32>
    %896 = vector.extract_strided_slice %570 {offsets = [41, 0], sizes = [1, 28], strides = [1, 1]} : vector<64x28xf32> to vector<1x28xf32>
    %897 = arith.addf %887, %896 : vector<1x28xf32>
    %898 = vector.broadcast %897 : vector<1x28xf32> to vector<28x28xf32>
    %899 = arith.addf %572, %898 : vector<28x28xf32>
    %cst_246 = arith.constant dense<0xFF800000> : vector<28xf32>
    %900 = vector.multi_reduction <maximumf>, %899, %cst_246 [1] : vector<28x28xf32> to vector<28xf32>
    %901 = vector.shape_cast %900 : vector<28xf32> to vector<28x1xf32>
    %902 = tpu.iota {dimensions = array<i32: 1>} : vector<28x28xi32>
    %903 = arith.sitofp %902 : vector<28x28xi32> to vector<28x28xf32>
    %904 = vector.broadcast %901 : vector<28x1xf32> to vector<28x28xf32>
    %905 = arith.cmpf oeq, %899, %904 : vector<28x28xf32>
    %cst_247 = arith.constant 2.800000e+01 : f32
    %906 = vector.broadcast %cst_247 : f32 to vector<28x28xf32>
    %907 = arith.select %905, %903, %906 : vector<28x28xi1>, vector<28x28xf32>
    %cst_248 = arith.constant dense<0x7F800000> : vector<28xf32>
    %908 = vector.multi_reduction <minimumf>, %907, %cst_248 [1] : vector<28x28xf32> to vector<28xf32>
    %909 = vector.shape_cast %908 : vector<28xf32> to vector<28x1xf32>
    %910 = vector.extract_strided_slice %571 {offsets = [0, 49], sizes = [28, 1], strides = [1, 1]} : vector<28x64xf32> to vector<28x1xf32>
    %911 = arith.addf %901, %910 : vector<28x1xf32>
    %912 = vector.broadcast %911 : vector<28x1xf32> to vector<28x28xf32>
    %913 = arith.addf %573, %912 : vector<28x28xf32>
    %cst_249 = arith.constant dense<0xFF800000> : vector<28xf32>
    %914 = vector.multi_reduction <maximumf>, %913, %cst_249 [0] : vector<28x28xf32> to vector<28xf32>
    %915 = vector.shape_cast %914 : vector<28xf32> to vector<1x28xf32>
    %916 = tpu.iota {dimensions = array<i32: 0>} : vector<28x28xi32>
    %917 = arith.sitofp %916 : vector<28x28xi32> to vector<28x28xf32>
    %918 = vector.broadcast %915 : vector<1x28xf32> to vector<28x28xf32>
    %919 = arith.cmpf oeq, %913, %918 : vector<28x28xf32>
    %cst_250 = arith.constant 2.800000e+01 : f32
    %920 = vector.broadcast %cst_250 : f32 to vector<28x28xf32>
    %921 = arith.select %919, %917, %920 : vector<28x28xi1>, vector<28x28xf32>
    %cst_251 = arith.constant dense<0x7F800000> : vector<28xf32>
    %922 = vector.multi_reduction <minimumf>, %921, %cst_251 [0] : vector<28x28xf32> to vector<28xf32>
    %923 = vector.shape_cast %922 : vector<28xf32> to vector<1x28xf32>
    %924 = vector.extract_strided_slice %570 {offsets = [57, 0], sizes = [1, 28], strides = [1, 1]} : vector<64x28xf32> to vector<1x28xf32>
    %925 = arith.addf %915, %924 : vector<1x28xf32>
    %926 = vector.extract_strided_slice %572 {offsets = [27, 0], sizes = [1, 28], strides = [1, 1]} : vector<28x28xf32> to vector<1x28xf32>
    %927 = arith.addf %925, %926 : vector<1x28xf32>
    %cst_252 = arith.constant dense<0xFF800000> : vector<1xf32>
    %928 = vector.multi_reduction <maximumf>, %927, %cst_252 [1] : vector<1x28xf32> to vector<1xf32>
    %929 = vector.shape_cast %928 : vector<1xf32> to vector<1x1xf32>
    %930 = tpu.iota {dimensions = array<i32: 1>} : vector<1x28xi32>
    %931 = arith.sitofp %930 : vector<1x28xi32> to vector<1x28xf32>
    %932 = vector.broadcast %929 : vector<1x1xf32> to vector<1x28xf32>
    %933 = arith.cmpf oeq, %927, %932 : vector<1x28xf32>
    %cst_253 = arith.constant 2.800000e+01 : f32
    %934 = vector.broadcast %cst_253 : f32 to vector<1x28xf32>
    %935 = arith.select %933, %931, %934 : vector<1x28xi1>, vector<1x28xf32>
    %cst_254 = arith.constant dense<0x7F800000> : vector<1xf32>
    %936 = vector.multi_reduction <minimumf>, %935, %cst_254 [1] : vector<1x28xf32> to vector<1xf32>
    %937 = vector.shape_cast %936 : vector<1xf32> to vector<1x1xf32>
    %c7_i32_255 = arith.constant 7 : i32
    %938 = vector.broadcast %c7_i32_255 : i32 to vector<1x128xi32>
    %939 = arith.cmpi eq, %578, %938 : vector<1x128xi32>
    %cst_256 = arith.constant 0.000000e+00 : f32
    %940 = vector.broadcast %cst_256 : f32 to vector<1x128xf32>
    %941 = vector.shape_cast %937 : vector<1x1xf32> to vector<1x1xf32>
    %942 = vector.broadcast %941 : vector<1x1xf32> to vector<1x128xf32>
    %943 = arith.select %939, %942, %940 : vector<1x128xi1>, vector<1x128xf32>
    %944 = vector.broadcast %937 : vector<1x1xf32> to vector<1x28xf32>
    %945 = arith.cmpf oeq, %575, %944 : vector<1x28xf32>
    %cst_257 = arith.constant 0.000000e+00 : f32
    %946 = vector.broadcast %cst_257 : f32 to vector<1x28xf32>
    %947 = arith.select %945, %923, %946 : vector<1x28xi1>, vector<1x28xf32>
    %cst_258 = arith.constant dense<0.000000e+00> : vector<1xf32>
    %948 = vector.multi_reduction <add>, %947, %cst_258 [1] : vector<1x28xf32> to vector<1xf32>
    %949 = vector.shape_cast %948 : vector<1xf32> to vector<1x1xf32>
    %c6_i32_259 = arith.constant 6 : i32
    %950 = vector.broadcast %c6_i32_259 : i32 to vector<1x128xi32>
    %951 = arith.cmpi eq, %578, %950 : vector<1x128xi32>
    %952 = vector.shape_cast %949 : vector<1x1xf32> to vector<1x1xf32>
    %953 = vector.broadcast %952 : vector<1x1xf32> to vector<1x128xf32>
    %954 = arith.select %951, %953, %943 : vector<1x128xi1>, vector<1x128xf32>
    %955 = vector.broadcast %949 : vector<1x1xf32> to vector<28x1xf32>
    %956 = arith.cmpf oeq, %577, %955 : vector<28x1xf32>
    %cst_260 = arith.constant 0.000000e+00 : f32
    %957 = vector.broadcast %cst_260 : f32 to vector<28x1xf32>
    %958 = arith.select %956, %909, %957 : vector<28x1xi1>, vector<28x1xf32>
    %cst_261 = arith.constant dense<0.000000e+00> : vector<1xf32>
    %959 = vector.multi_reduction <add>, %958, %cst_261 [0] : vector<28x1xf32> to vector<1xf32>
    %960 = vector.shape_cast %959 : vector<1xf32> to vector<1x1xf32>
    %c5_i32_262 = arith.constant 5 : i32
    %961 = vector.broadcast %c5_i32_262 : i32 to vector<1x128xi32>
    %962 = arith.cmpi eq, %578, %961 : vector<1x128xi32>
    %963 = vector.shape_cast %960 : vector<1x1xf32> to vector<1x1xf32>
    %964 = vector.broadcast %963 : vector<1x1xf32> to vector<1x128xf32>
    %965 = arith.select %962, %964, %954 : vector<1x128xi1>, vector<1x128xf32>
    %966 = vector.broadcast %960 : vector<1x1xf32> to vector<1x28xf32>
    %967 = arith.cmpf oeq, %575, %966 : vector<1x28xf32>
    %cst_263 = arith.constant 0.000000e+00 : f32
    %968 = vector.broadcast %cst_263 : f32 to vector<1x28xf32>
    %969 = arith.select %967, %895, %968 : vector<1x28xi1>, vector<1x28xf32>
    %cst_264 = arith.constant dense<0.000000e+00> : vector<1xf32>
    %970 = vector.multi_reduction <add>, %969, %cst_264 [1] : vector<1x28xf32> to vector<1xf32>
    %971 = vector.shape_cast %970 : vector<1xf32> to vector<1x1xf32>
    %c4_i32_265 = arith.constant 4 : i32
    %972 = vector.broadcast %c4_i32_265 : i32 to vector<1x128xi32>
    %973 = arith.cmpi eq, %578, %972 : vector<1x128xi32>
    %974 = vector.shape_cast %971 : vector<1x1xf32> to vector<1x1xf32>
    %975 = vector.broadcast %974 : vector<1x1xf32> to vector<1x128xf32>
    %976 = arith.select %973, %975, %965 : vector<1x128xi1>, vector<1x128xf32>
    %977 = vector.broadcast %971 : vector<1x1xf32> to vector<28x1xf32>
    %978 = arith.cmpf oeq, %577, %977 : vector<28x1xf32>
    %cst_266 = arith.constant 0.000000e+00 : f32
    %979 = vector.broadcast %cst_266 : f32 to vector<28x1xf32>
    %980 = arith.select %978, %881, %979 : vector<28x1xi1>, vector<28x1xf32>
    %cst_267 = arith.constant dense<0.000000e+00> : vector<1xf32>
    %981 = vector.multi_reduction <add>, %980, %cst_267 [0] : vector<28x1xf32> to vector<1xf32>
    %982 = vector.shape_cast %981 : vector<1xf32> to vector<1x1xf32>
    %c3_i32_268 = arith.constant 3 : i32
    %983 = vector.broadcast %c3_i32_268 : i32 to vector<1x128xi32>
    %984 = arith.cmpi eq, %578, %983 : vector<1x128xi32>
    %985 = vector.shape_cast %982 : vector<1x1xf32> to vector<1x1xf32>
    %986 = vector.broadcast %985 : vector<1x1xf32> to vector<1x128xf32>
    %987 = arith.select %984, %986, %976 : vector<1x128xi1>, vector<1x128xf32>
    %988 = vector.broadcast %982 : vector<1x1xf32> to vector<1x28xf32>
    %989 = arith.cmpf oeq, %575, %988 : vector<1x28xf32>
    %cst_269 = arith.constant 0.000000e+00 : f32
    %990 = vector.broadcast %cst_269 : f32 to vector<1x28xf32>
    %991 = arith.select %989, %867, %990 : vector<1x28xi1>, vector<1x28xf32>
    %cst_270 = arith.constant dense<0.000000e+00> : vector<1xf32>
    %992 = vector.multi_reduction <add>, %991, %cst_270 [1] : vector<1x28xf32> to vector<1xf32>
    %993 = vector.shape_cast %992 : vector<1xf32> to vector<1x1xf32>
    %c2_i32_271 = arith.constant 2 : i32
    %994 = vector.broadcast %c2_i32_271 : i32 to vector<1x128xi32>
    %995 = arith.cmpi eq, %578, %994 : vector<1x128xi32>
    %996 = vector.shape_cast %993 : vector<1x1xf32> to vector<1x1xf32>
    %997 = vector.broadcast %996 : vector<1x1xf32> to vector<1x128xf32>
    %998 = arith.select %995, %997, %987 : vector<1x128xi1>, vector<1x128xf32>
    %999 = vector.broadcast %993 : vector<1x1xf32> to vector<28x1xf32>
    %1000 = arith.cmpf oeq, %577, %999 : vector<28x1xf32>
    %cst_272 = arith.constant 0.000000e+00 : f32
    %1001 = vector.broadcast %cst_272 : f32 to vector<28x1xf32>
    %1002 = arith.select %1000, %853, %1001 : vector<28x1xi1>, vector<28x1xf32>
    %cst_273 = arith.constant dense<0.000000e+00> : vector<1xf32>
    %1003 = vector.multi_reduction <add>, %1002, %cst_273 [0] : vector<28x1xf32> to vector<1xf32>
    %1004 = vector.shape_cast %1003 : vector<1xf32> to vector<1x1xf32>
    %c1_i32_274 = arith.constant 1 : i32
    %1005 = vector.broadcast %c1_i32_274 : i32 to vector<1x128xi32>
    %1006 = arith.cmpi eq, %578, %1005 : vector<1x128xi32>
    %1007 = vector.shape_cast %1004 : vector<1x1xf32> to vector<1x1xf32>
    %1008 = vector.broadcast %1007 : vector<1x1xf32> to vector<1x128xf32>
    %1009 = arith.select %1006, %1008, %998 : vector<1x128xi1>, vector<1x128xf32>
    %1010 = vector.broadcast %1004 : vector<1x1xf32> to vector<1x28xf32>
    %1011 = arith.cmpf oeq, %575, %1010 : vector<1x28xf32>
    %cst_275 = arith.constant 0.000000e+00 : f32
    %1012 = vector.broadcast %cst_275 : f32 to vector<1x28xf32>
    %1013 = arith.select %1011, %839, %1012 : vector<1x28xi1>, vector<1x28xf32>
    %cst_276 = arith.constant dense<0.000000e+00> : vector<1xf32>
    %1014 = vector.multi_reduction <add>, %1013, %cst_276 [1] : vector<1x28xf32> to vector<1xf32>
    %1015 = vector.shape_cast %1014 : vector<1xf32> to vector<1x1xf32>
    %c0_i32_277 = arith.constant 0 : i32
    %1016 = vector.broadcast %c0_i32_277 : i32 to vector<1x128xi32>
    %1017 = arith.cmpi eq, %578, %1016 : vector<1x128xi32>
    %1018 = vector.shape_cast %1015 : vector<1x1xf32> to vector<1x1xf32>
    %1019 = vector.broadcast %1018 : vector<1x1xf32> to vector<1x128xf32>
    %1020 = arith.select %1017, %1019, %1009 : vector<1x128xi1>, vector<1x128xf32>
    %1021 = vector.broadcast %1015 : vector<1x1xf32> to vector<28x1xf32>
    %1022 = arith.cmpf oeq, %577, %1021 : vector<28x1xf32>
    %cst_278 = arith.constant 0.000000e+00 : f32
    %1023 = vector.broadcast %cst_278 : f32 to vector<28x1xf32>
    %1024 = arith.select %1022, %825, %1023 : vector<28x1xi1>, vector<28x1xf32>
    %cst_279 = arith.constant dense<0.000000e+00> : vector<1xf32>
    %1025 = vector.multi_reduction <add>, %1024, %cst_279 [0] : vector<28x1xf32> to vector<1xf32>
    %1026 = vector.shape_cast %1025 : vector<1xf32> to vector<1x1xf32>
    %c8_i32_280 = arith.constant 8 : i32
    %1027 = vector.broadcast %c8_i32_280 : i32 to vector<1x128xi32>
    %1028 = arith.cmpi eq, %578, %1027 : vector<1x128xi32>
    %1029 = vector.shape_cast %929 : vector<1x1xf32> to vector<1x1xf32>
    %1030 = vector.broadcast %1029 : vector<1x1xf32> to vector<1x128xf32>
    %1031 = arith.select %1028, %1030, %1020 : vector<1x128xi1>, vector<1x128xf32>
    %c9_i32_281 = arith.constant 9 : i32
    %1032 = vector.broadcast %c9_i32_281 : i32 to vector<1x128xi32>
    %1033 = arith.cmpi eq, %578, %1032 : vector<1x128xi32>
    %1034 = vector.shape_cast %1026 : vector<1x1xf32> to vector<1x1xf32>
    %1035 = vector.broadcast %1034 : vector<1x1xf32> to vector<1x128xf32>
    %1036 = arith.select %1033, %1035, %1031 : vector<1x128xi1>, vector<1x128xf32>
    %c1_i32_282 = arith.constant 1 : i32
    %1037 = vector.broadcast %c1_i32_282 : i32 to vector<8x128xi32>
    %1038 = arith.cmpi eq, %579, %1037 : vector<8x128xi32>
    %1039 = vector.shape_cast %1036 : vector<1x128xf32> to vector<1x128xf32>
    %1040 = vector.broadcast %1039 : vector<1x128xf32> to vector<8x128xf32>
    %1041 = arith.select %1038, %1040, %813 : vector<8x128xi1>, vector<8x128xf32>
    %1042 = vector.broadcast %584 : vector<1x28xf32> to vector<28x28xf32>
    %1043 = arith.addf %572, %1042 : vector<28x28xf32>
    %cst_283 = arith.constant dense<0xFF800000> : vector<28xf32>
    %1044 = vector.multi_reduction <maximumf>, %1043, %cst_283 [1] : vector<28x28xf32> to vector<28xf32>
    %1045 = vector.shape_cast %1044 : vector<28xf32> to vector<28x1xf32>
    %1046 = tpu.iota {dimensions = array<i32: 1>} : vector<28x28xi32>
    %1047 = arith.sitofp %1046 : vector<28x28xi32> to vector<28x28xf32>
    %1048 = vector.broadcast %1045 : vector<28x1xf32> to vector<28x28xf32>
    %1049 = arith.cmpf oeq, %1043, %1048 : vector<28x28xf32>
    %cst_284 = arith.constant 2.800000e+01 : f32
    %1050 = vector.broadcast %cst_284 : f32 to vector<28x28xf32>
    %1051 = arith.select %1049, %1047, %1050 : vector<28x28xi1>, vector<28x28xf32>
    %cst_285 = arith.constant dense<0x7F800000> : vector<28xf32>
    %1052 = vector.multi_reduction <minimumf>, %1051, %cst_285 [1] : vector<28x28xf32> to vector<28xf32>
    %1053 = vector.shape_cast %1052 : vector<28xf32> to vector<28x1xf32>
    %1054 = vector.extract_strided_slice %571 {offsets = [0, 2], sizes = [28, 1], strides = [1, 1]} : vector<28x64xf32> to vector<28x1xf32>
    %1055 = arith.addf %1045, %1054 : vector<28x1xf32>
    %1056 = vector.broadcast %1055 : vector<28x1xf32> to vector<28x28xf32>
    %1057 = arith.addf %573, %1056 : vector<28x28xf32>
    %cst_286 = arith.constant dense<0xFF800000> : vector<28xf32>
    %1058 = vector.multi_reduction <maximumf>, %1057, %cst_286 [0] : vector<28x28xf32> to vector<28xf32>
    %1059 = vector.shape_cast %1058 : vector<28xf32> to vector<1x28xf32>
    %1060 = tpu.iota {dimensions = array<i32: 0>} : vector<28x28xi32>
    %1061 = arith.sitofp %1060 : vector<28x28xi32> to vector<28x28xf32>
    %1062 = vector.broadcast %1059 : vector<1x28xf32> to vector<28x28xf32>
    %1063 = arith.cmpf oeq, %1057, %1062 : vector<28x28xf32>
    %cst_287 = arith.constant 2.800000e+01 : f32
    %1064 = vector.broadcast %cst_287 : f32 to vector<28x28xf32>
    %1065 = arith.select %1063, %1061, %1064 : vector<28x28xi1>, vector<28x28xf32>
    %cst_288 = arith.constant dense<0x7F800000> : vector<28xf32>
    %1066 = vector.multi_reduction <minimumf>, %1065, %cst_288 [0] : vector<28x28xf32> to vector<28xf32>
    %1067 = vector.shape_cast %1066 : vector<28xf32> to vector<1x28xf32>
    %1068 = vector.extract_strided_slice %570 {offsets = [10, 0], sizes = [1, 28], strides = [1, 1]} : vector<64x28xf32> to vector<1x28xf32>
    %1069 = arith.addf %1059, %1068 : vector<1x28xf32>
    %1070 = vector.broadcast %1069 : vector<1x28xf32> to vector<28x28xf32>
    %1071 = arith.addf %572, %1070 : vector<28x28xf32>
    %cst_289 = arith.constant dense<0xFF800000> : vector<28xf32>
    %1072 = vector.multi_reduction <maximumf>, %1071, %cst_289 [1] : vector<28x28xf32> to vector<28xf32>
    %1073 = vector.shape_cast %1072 : vector<28xf32> to vector<28x1xf32>
    %1074 = tpu.iota {dimensions = array<i32: 1>} : vector<28x28xi32>
    %1075 = arith.sitofp %1074 : vector<28x28xi32> to vector<28x28xf32>
    %1076 = vector.broadcast %1073 : vector<28x1xf32> to vector<28x28xf32>
    %1077 = arith.cmpf oeq, %1071, %1076 : vector<28x28xf32>
    %cst_290 = arith.constant 2.800000e+01 : f32
    %1078 = vector.broadcast %cst_290 : f32 to vector<28x28xf32>
    %1079 = arith.select %1077, %1075, %1078 : vector<28x28xi1>, vector<28x28xf32>
    %cst_291 = arith.constant dense<0x7F800000> : vector<28xf32>
    %1080 = vector.multi_reduction <minimumf>, %1079, %cst_291 [1] : vector<28x28xf32> to vector<28xf32>
    %1081 = vector.shape_cast %1080 : vector<28xf32> to vector<28x1xf32>
    %1082 = vector.extract_strided_slice %571 {offsets = [0, 18], sizes = [28, 1], strides = [1, 1]} : vector<28x64xf32> to vector<28x1xf32>
    %1083 = arith.addf %1073, %1082 : vector<28x1xf32>
    %1084 = vector.broadcast %1083 : vector<28x1xf32> to vector<28x28xf32>
    %1085 = arith.addf %573, %1084 : vector<28x28xf32>
    %cst_292 = arith.constant dense<0xFF800000> : vector<28xf32>
    %1086 = vector.multi_reduction <maximumf>, %1085, %cst_292 [0] : vector<28x28xf32> to vector<28xf32>
    %1087 = vector.shape_cast %1086 : vector<28xf32> to vector<1x28xf32>
    %1088 = tpu.iota {dimensions = array<i32: 0>} : vector<28x28xi32>
    %1089 = arith.sitofp %1088 : vector<28x28xi32> to vector<28x28xf32>
    %1090 = vector.broadcast %1087 : vector<1x28xf32> to vector<28x28xf32>
    %1091 = arith.cmpf oeq, %1085, %1090 : vector<28x28xf32>
    %cst_293 = arith.constant 2.800000e+01 : f32
    %1092 = vector.broadcast %cst_293 : f32 to vector<28x28xf32>
    %1093 = arith.select %1091, %1089, %1092 : vector<28x28xi1>, vector<28x28xf32>
    %cst_294 = arith.constant dense<0x7F800000> : vector<28xf32>
    %1094 = vector.multi_reduction <minimumf>, %1093, %cst_294 [0] : vector<28x28xf32> to vector<28xf32>
    %1095 = vector.shape_cast %1094 : vector<28xf32> to vector<1x28xf32>
    %1096 = vector.extract_strided_slice %570 {offsets = [26, 0], sizes = [1, 28], strides = [1, 1]} : vector<64x28xf32> to vector<1x28xf32>
    %1097 = arith.addf %1087, %1096 : vector<1x28xf32>
    %1098 = vector.broadcast %1097 : vector<1x28xf32> to vector<28x28xf32>
    %1099 = arith.addf %572, %1098 : vector<28x28xf32>
    %cst_295 = arith.constant dense<0xFF800000> : vector<28xf32>
    %1100 = vector.multi_reduction <maximumf>, %1099, %cst_295 [1] : vector<28x28xf32> to vector<28xf32>
    %1101 = vector.shape_cast %1100 : vector<28xf32> to vector<28x1xf32>
    %1102 = tpu.iota {dimensions = array<i32: 1>} : vector<28x28xi32>
    %1103 = arith.sitofp %1102 : vector<28x28xi32> to vector<28x28xf32>
    %1104 = vector.broadcast %1101 : vector<28x1xf32> to vector<28x28xf32>
    %1105 = arith.cmpf oeq, %1099, %1104 : vector<28x28xf32>
    %cst_296 = arith.constant 2.800000e+01 : f32
    %1106 = vector.broadcast %cst_296 : f32 to vector<28x28xf32>
    %1107 = arith.select %1105, %1103, %1106 : vector<28x28xi1>, vector<28x28xf32>
    %cst_297 = arith.constant dense<0x7F800000> : vector<28xf32>
    %1108 = vector.multi_reduction <minimumf>, %1107, %cst_297 [1] : vector<28x28xf32> to vector<28xf32>
    %1109 = vector.shape_cast %1108 : vector<28xf32> to vector<28x1xf32>
    %1110 = vector.extract_strided_slice %571 {offsets = [0, 34], sizes = [28, 1], strides = [1, 1]} : vector<28x64xf32> to vector<28x1xf32>
    %1111 = arith.addf %1101, %1110 : vector<28x1xf32>
    %1112 = vector.broadcast %1111 : vector<28x1xf32> to vector<28x28xf32>
    %1113 = arith.addf %573, %1112 : vector<28x28xf32>
    %cst_298 = arith.constant dense<0xFF800000> : vector<28xf32>
    %1114 = vector.multi_reduction <maximumf>, %1113, %cst_298 [0] : vector<28x28xf32> to vector<28xf32>
    %1115 = vector.shape_cast %1114 : vector<28xf32> to vector<1x28xf32>
    %1116 = tpu.iota {dimensions = array<i32: 0>} : vector<28x28xi32>
    %1117 = arith.sitofp %1116 : vector<28x28xi32> to vector<28x28xf32>
    %1118 = vector.broadcast %1115 : vector<1x28xf32> to vector<28x28xf32>
    %1119 = arith.cmpf oeq, %1113, %1118 : vector<28x28xf32>
    %cst_299 = arith.constant 2.800000e+01 : f32
    %1120 = vector.broadcast %cst_299 : f32 to vector<28x28xf32>
    %1121 = arith.select %1119, %1117, %1120 : vector<28x28xi1>, vector<28x28xf32>
    %cst_300 = arith.constant dense<0x7F800000> : vector<28xf32>
    %1122 = vector.multi_reduction <minimumf>, %1121, %cst_300 [0] : vector<28x28xf32> to vector<28xf32>
    %1123 = vector.shape_cast %1122 : vector<28xf32> to vector<1x28xf32>
    %1124 = vector.extract_strided_slice %570 {offsets = [42, 0], sizes = [1, 28], strides = [1, 1]} : vector<64x28xf32> to vector<1x28xf32>
    %1125 = arith.addf %1115, %1124 : vector<1x28xf32>
    %1126 = vector.broadcast %1125 : vector<1x28xf32> to vector<28x28xf32>
    %1127 = arith.addf %572, %1126 : vector<28x28xf32>
    %cst_301 = arith.constant dense<0xFF800000> : vector<28xf32>
    %1128 = vector.multi_reduction <maximumf>, %1127, %cst_301 [1] : vector<28x28xf32> to vector<28xf32>
    %1129 = vector.shape_cast %1128 : vector<28xf32> to vector<28x1xf32>
    %1130 = tpu.iota {dimensions = array<i32: 1>} : vector<28x28xi32>
    %1131 = arith.sitofp %1130 : vector<28x28xi32> to vector<28x28xf32>
    %1132 = vector.broadcast %1129 : vector<28x1xf32> to vector<28x28xf32>
    %1133 = arith.cmpf oeq, %1127, %1132 : vector<28x28xf32>
    %cst_302 = arith.constant 2.800000e+01 : f32
    %1134 = vector.broadcast %cst_302 : f32 to vector<28x28xf32>
    %1135 = arith.select %1133, %1131, %1134 : vector<28x28xi1>, vector<28x28xf32>
    %cst_303 = arith.constant dense<0x7F800000> : vector<28xf32>
    %1136 = vector.multi_reduction <minimumf>, %1135, %cst_303 [1] : vector<28x28xf32> to vector<28xf32>
    %1137 = vector.shape_cast %1136 : vector<28xf32> to vector<28x1xf32>
    %1138 = vector.extract_strided_slice %571 {offsets = [0, 50], sizes = [28, 1], strides = [1, 1]} : vector<28x64xf32> to vector<28x1xf32>
    %1139 = arith.addf %1129, %1138 : vector<28x1xf32>
    %1140 = vector.broadcast %1139 : vector<28x1xf32> to vector<28x28xf32>
    %1141 = arith.addf %573, %1140 : vector<28x28xf32>
    %cst_304 = arith.constant dense<0xFF800000> : vector<28xf32>
    %1142 = vector.multi_reduction <maximumf>, %1141, %cst_304 [0] : vector<28x28xf32> to vector<28xf32>
    %1143 = vector.shape_cast %1142 : vector<28xf32> to vector<1x28xf32>
    %1144 = tpu.iota {dimensions = array<i32: 0>} : vector<28x28xi32>
    %1145 = arith.sitofp %1144 : vector<28x28xi32> to vector<28x28xf32>
    %1146 = vector.broadcast %1143 : vector<1x28xf32> to vector<28x28xf32>
    %1147 = arith.cmpf oeq, %1141, %1146 : vector<28x28xf32>
    %cst_305 = arith.constant 2.800000e+01 : f32
    %1148 = vector.broadcast %cst_305 : f32 to vector<28x28xf32>
    %1149 = arith.select %1147, %1145, %1148 : vector<28x28xi1>, vector<28x28xf32>
    %cst_306 = arith.constant dense<0x7F800000> : vector<28xf32>
    %1150 = vector.multi_reduction <minimumf>, %1149, %cst_306 [0] : vector<28x28xf32> to vector<28xf32>
    %1151 = vector.shape_cast %1150 : vector<28xf32> to vector<1x28xf32>
    %1152 = vector.extract_strided_slice %570 {offsets = [58, 0], sizes = [1, 28], strides = [1, 1]} : vector<64x28xf32> to vector<1x28xf32>
    %1153 = arith.addf %1143, %1152 : vector<1x28xf32>
    %1154 = vector.extract_strided_slice %572 {offsets = [27, 0], sizes = [1, 28], strides = [1, 1]} : vector<28x28xf32> to vector<1x28xf32>
    %1155 = arith.addf %1153, %1154 : vector<1x28xf32>
    %cst_307 = arith.constant dense<0xFF800000> : vector<1xf32>
    %1156 = vector.multi_reduction <maximumf>, %1155, %cst_307 [1] : vector<1x28xf32> to vector<1xf32>
    %1157 = vector.shape_cast %1156 : vector<1xf32> to vector<1x1xf32>
    %1158 = tpu.iota {dimensions = array<i32: 1>} : vector<1x28xi32>
    %1159 = arith.sitofp %1158 : vector<1x28xi32> to vector<1x28xf32>
    %1160 = vector.broadcast %1157 : vector<1x1xf32> to vector<1x28xf32>
    %1161 = arith.cmpf oeq, %1155, %1160 : vector<1x28xf32>
    %cst_308 = arith.constant 2.800000e+01 : f32
    %1162 = vector.broadcast %cst_308 : f32 to vector<1x28xf32>
    %1163 = arith.select %1161, %1159, %1162 : vector<1x28xi1>, vector<1x28xf32>
    %cst_309 = arith.constant dense<0x7F800000> : vector<1xf32>
    %1164 = vector.multi_reduction <minimumf>, %1163, %cst_309 [1] : vector<1x28xf32> to vector<1xf32>
    %1165 = vector.shape_cast %1164 : vector<1xf32> to vector<1x1xf32>
    %c7_i32_310 = arith.constant 7 : i32
    %1166 = vector.broadcast %c7_i32_310 : i32 to vector<1x128xi32>
    %1167 = arith.cmpi eq, %578, %1166 : vector<1x128xi32>
    %cst_311 = arith.constant 0.000000e+00 : f32
    %1168 = vector.broadcast %cst_311 : f32 to vector<1x128xf32>
    %1169 = vector.shape_cast %1165 : vector<1x1xf32> to vector<1x1xf32>
    %1170 = vector.broadcast %1169 : vector<1x1xf32> to vector<1x128xf32>
    %1171 = arith.select %1167, %1170, %1168 : vector<1x128xi1>, vector<1x128xf32>
    %1172 = vector.broadcast %1165 : vector<1x1xf32> to vector<1x28xf32>
    %1173 = arith.cmpf oeq, %575, %1172 : vector<1x28xf32>
    %cst_312 = arith.constant 0.000000e+00 : f32
    %1174 = vector.broadcast %cst_312 : f32 to vector<1x28xf32>
    %1175 = arith.select %1173, %1151, %1174 : vector<1x28xi1>, vector<1x28xf32>
    %cst_313 = arith.constant dense<0.000000e+00> : vector<1xf32>
    %1176 = vector.multi_reduction <add>, %1175, %cst_313 [1] : vector<1x28xf32> to vector<1xf32>
    %1177 = vector.shape_cast %1176 : vector<1xf32> to vector<1x1xf32>
    %c6_i32_314 = arith.constant 6 : i32
    %1178 = vector.broadcast %c6_i32_314 : i32 to vector<1x128xi32>
    %1179 = arith.cmpi eq, %578, %1178 : vector<1x128xi32>
    %1180 = vector.shape_cast %1177 : vector<1x1xf32> to vector<1x1xf32>
    %1181 = vector.broadcast %1180 : vector<1x1xf32> to vector<1x128xf32>
    %1182 = arith.select %1179, %1181, %1171 : vector<1x128xi1>, vector<1x128xf32>
    %1183 = vector.broadcast %1177 : vector<1x1xf32> to vector<28x1xf32>
    %1184 = arith.cmpf oeq, %577, %1183 : vector<28x1xf32>
    %cst_315 = arith.constant 0.000000e+00 : f32
    %1185 = vector.broadcast %cst_315 : f32 to vector<28x1xf32>
    %1186 = arith.select %1184, %1137, %1185 : vector<28x1xi1>, vector<28x1xf32>
    %cst_316 = arith.constant dense<0.000000e+00> : vector<1xf32>
    %1187 = vector.multi_reduction <add>, %1186, %cst_316 [0] : vector<28x1xf32> to vector<1xf32>
    %1188 = vector.shape_cast %1187 : vector<1xf32> to vector<1x1xf32>
    %c5_i32_317 = arith.constant 5 : i32
    %1189 = vector.broadcast %c5_i32_317 : i32 to vector<1x128xi32>
    %1190 = arith.cmpi eq, %578, %1189 : vector<1x128xi32>
    %1191 = vector.shape_cast %1188 : vector<1x1xf32> to vector<1x1xf32>
    %1192 = vector.broadcast %1191 : vector<1x1xf32> to vector<1x128xf32>
    %1193 = arith.select %1190, %1192, %1182 : vector<1x128xi1>, vector<1x128xf32>
    %1194 = vector.broadcast %1188 : vector<1x1xf32> to vector<1x28xf32>
    %1195 = arith.cmpf oeq, %575, %1194 : vector<1x28xf32>
    %cst_318 = arith.constant 0.000000e+00 : f32
    %1196 = vector.broadcast %cst_318 : f32 to vector<1x28xf32>
    %1197 = arith.select %1195, %1123, %1196 : vector<1x28xi1>, vector<1x28xf32>
    %cst_319 = arith.constant dense<0.000000e+00> : vector<1xf32>
    %1198 = vector.multi_reduction <add>, %1197, %cst_319 [1] : vector<1x28xf32> to vector<1xf32>
    %1199 = vector.shape_cast %1198 : vector<1xf32> to vector<1x1xf32>
    %c4_i32_320 = arith.constant 4 : i32
    %1200 = vector.broadcast %c4_i32_320 : i32 to vector<1x128xi32>
    %1201 = arith.cmpi eq, %578, %1200 : vector<1x128xi32>
    %1202 = vector.shape_cast %1199 : vector<1x1xf32> to vector<1x1xf32>
    %1203 = vector.broadcast %1202 : vector<1x1xf32> to vector<1x128xf32>
    %1204 = arith.select %1201, %1203, %1193 : vector<1x128xi1>, vector<1x128xf32>
    %1205 = vector.broadcast %1199 : vector<1x1xf32> to vector<28x1xf32>
    %1206 = arith.cmpf oeq, %577, %1205 : vector<28x1xf32>
    %cst_321 = arith.constant 0.000000e+00 : f32
    %1207 = vector.broadcast %cst_321 : f32 to vector<28x1xf32>
    %1208 = arith.select %1206, %1109, %1207 : vector<28x1xi1>, vector<28x1xf32>
    %cst_322 = arith.constant dense<0.000000e+00> : vector<1xf32>
    %1209 = vector.multi_reduction <add>, %1208, %cst_322 [0] : vector<28x1xf32> to vector<1xf32>
    %1210 = vector.shape_cast %1209 : vector<1xf32> to vector<1x1xf32>
    %c3_i32_323 = arith.constant 3 : i32
    %1211 = vector.broadcast %c3_i32_323 : i32 to vector<1x128xi32>
    %1212 = arith.cmpi eq, %578, %1211 : vector<1x128xi32>
    %1213 = vector.shape_cast %1210 : vector<1x1xf32> to vector<1x1xf32>
    %1214 = vector.broadcast %1213 : vector<1x1xf32> to vector<1x128xf32>
    %1215 = arith.select %1212, %1214, %1204 : vector<1x128xi1>, vector<1x128xf32>
    %1216 = vector.broadcast %1210 : vector<1x1xf32> to vector<1x28xf32>
    %1217 = arith.cmpf oeq, %575, %1216 : vector<1x28xf32>
    %cst_324 = arith.constant 0.000000e+00 : f32
    %1218 = vector.broadcast %cst_324 : f32 to vector<1x28xf32>
    %1219 = arith.select %1217, %1095, %1218 : vector<1x28xi1>, vector<1x28xf32>
    %cst_325 = arith.constant dense<0.000000e+00> : vector<1xf32>
    %1220 = vector.multi_reduction <add>, %1219, %cst_325 [1] : vector<1x28xf32> to vector<1xf32>
    %1221 = vector.shape_cast %1220 : vector<1xf32> to vector<1x1xf32>
    %c2_i32_326 = arith.constant 2 : i32
    %1222 = vector.broadcast %c2_i32_326 : i32 to vector<1x128xi32>
    %1223 = arith.cmpi eq, %578, %1222 : vector<1x128xi32>
    %1224 = vector.shape_cast %1221 : vector<1x1xf32> to vector<1x1xf32>
    %1225 = vector.broadcast %1224 : vector<1x1xf32> to vector<1x128xf32>
    %1226 = arith.select %1223, %1225, %1215 : vector<1x128xi1>, vector<1x128xf32>
    %1227 = vector.broadcast %1221 : vector<1x1xf32> to vector<28x1xf32>
    %1228 = arith.cmpf oeq, %577, %1227 : vector<28x1xf32>
    %cst_327 = arith.constant 0.000000e+00 : f32
    %1229 = vector.broadcast %cst_327 : f32 to vector<28x1xf32>
    %1230 = arith.select %1228, %1081, %1229 : vector<28x1xi1>, vector<28x1xf32>
    %cst_328 = arith.constant dense<0.000000e+00> : vector<1xf32>
    %1231 = vector.multi_reduction <add>, %1230, %cst_328 [0] : vector<28x1xf32> to vector<1xf32>
    %1232 = vector.shape_cast %1231 : vector<1xf32> to vector<1x1xf32>
    %c1_i32_329 = arith.constant 1 : i32
    %1233 = vector.broadcast %c1_i32_329 : i32 to vector<1x128xi32>
    %1234 = arith.cmpi eq, %578, %1233 : vector<1x128xi32>
    %1235 = vector.shape_cast %1232 : vector<1x1xf32> to vector<1x1xf32>
    %1236 = vector.broadcast %1235 : vector<1x1xf32> to vector<1x128xf32>
    %1237 = arith.select %1234, %1236, %1226 : vector<1x128xi1>, vector<1x128xf32>
    %1238 = vector.broadcast %1232 : vector<1x1xf32> to vector<1x28xf32>
    %1239 = arith.cmpf oeq, %575, %1238 : vector<1x28xf32>
    %cst_330 = arith.constant 0.000000e+00 : f32
    %1240 = vector.broadcast %cst_330 : f32 to vector<1x28xf32>
    %1241 = arith.select %1239, %1067, %1240 : vector<1x28xi1>, vector<1x28xf32>
    %cst_331 = arith.constant dense<0.000000e+00> : vector<1xf32>
    %1242 = vector.multi_reduction <add>, %1241, %cst_331 [1] : vector<1x28xf32> to vector<1xf32>
    %1243 = vector.shape_cast %1242 : vector<1xf32> to vector<1x1xf32>
    %c0_i32_332 = arith.constant 0 : i32
    %1244 = vector.broadcast %c0_i32_332 : i32 to vector<1x128xi32>
    %1245 = arith.cmpi eq, %578, %1244 : vector<1x128xi32>
    %1246 = vector.shape_cast %1243 : vector<1x1xf32> to vector<1x1xf32>
    %1247 = vector.broadcast %1246 : vector<1x1xf32> to vector<1x128xf32>
    %1248 = arith.select %1245, %1247, %1237 : vector<1x128xi1>, vector<1x128xf32>
    %1249 = vector.broadcast %1243 : vector<1x1xf32> to vector<28x1xf32>
    %1250 = arith.cmpf oeq, %577, %1249 : vector<28x1xf32>
    %cst_333 = arith.constant 0.000000e+00 : f32
    %1251 = vector.broadcast %cst_333 : f32 to vector<28x1xf32>
    %1252 = arith.select %1250, %1053, %1251 : vector<28x1xi1>, vector<28x1xf32>
    %cst_334 = arith.constant dense<0.000000e+00> : vector<1xf32>
    %1253 = vector.multi_reduction <add>, %1252, %cst_334 [0] : vector<28x1xf32> to vector<1xf32>
    %1254 = vector.shape_cast %1253 : vector<1xf32> to vector<1x1xf32>
    %c8_i32_335 = arith.constant 8 : i32
    %1255 = vector.broadcast %c8_i32_335 : i32 to vector<1x128xi32>
    %1256 = arith.cmpi eq, %578, %1255 : vector<1x128xi32>
    %1257 = vector.shape_cast %1157 : vector<1x1xf32> to vector<1x1xf32>
    %1258 = vector.broadcast %1257 : vector<1x1xf32> to vector<1x128xf32>
    %1259 = arith.select %1256, %1258, %1248 : vector<1x128xi1>, vector<1x128xf32>
    %c9_i32_336 = arith.constant 9 : i32
    %1260 = vector.broadcast %c9_i32_336 : i32 to vector<1x128xi32>
    %1261 = arith.cmpi eq, %578, %1260 : vector<1x128xi32>
    %1262 = vector.shape_cast %1254 : vector<1x1xf32> to vector<1x1xf32>
    %1263 = vector.broadcast %1262 : vector<1x1xf32> to vector<1x128xf32>
    %1264 = arith.select %1261, %1263, %1259 : vector<1x128xi1>, vector<1x128xf32>
    %c2_i32_337 = arith.constant 2 : i32
    %1265 = vector.broadcast %c2_i32_337 : i32 to vector<8x128xi32>
    %1266 = arith.cmpi eq, %579, %1265 : vector<8x128xi32>
    %1267 = vector.shape_cast %1264 : vector<1x128xf32> to vector<1x128xf32>
    %1268 = vector.broadcast %1267 : vector<1x128xf32> to vector<8x128xf32>
    %1269 = arith.select %1266, %1268, %1041 : vector<8x128xi1>, vector<8x128xf32>
    %1270 = vector.broadcast %584 : vector<1x28xf32> to vector<28x28xf32>
    %1271 = arith.addf %572, %1270 : vector<28x28xf32>
    %cst_338 = arith.constant dense<0xFF800000> : vector<28xf32>
    %1272 = vector.multi_reduction <maximumf>, %1271, %cst_338 [1] : vector<28x28xf32> to vector<28xf32>
    %1273 = vector.shape_cast %1272 : vector<28xf32> to vector<28x1xf32>
    %1274 = tpu.iota {dimensions = array<i32: 1>} : vector<28x28xi32>
    %1275 = arith.sitofp %1274 : vector<28x28xi32> to vector<28x28xf32>
    %1276 = vector.broadcast %1273 : vector<28x1xf32> to vector<28x28xf32>
    %1277 = arith.cmpf oeq, %1271, %1276 : vector<28x28xf32>
    %cst_339 = arith.constant 2.800000e+01 : f32
    %1278 = vector.broadcast %cst_339 : f32 to vector<28x28xf32>
    %1279 = arith.select %1277, %1275, %1278 : vector<28x28xi1>, vector<28x28xf32>
    %cst_340 = arith.constant dense<0x7F800000> : vector<28xf32>
    %1280 = vector.multi_reduction <minimumf>, %1279, %cst_340 [1] : vector<28x28xf32> to vector<28xf32>
    %1281 = vector.shape_cast %1280 : vector<28xf32> to vector<28x1xf32>
    %1282 = vector.extract_strided_slice %571 {offsets = [0, 3], sizes = [28, 1], strides = [1, 1]} : vector<28x64xf32> to vector<28x1xf32>
    %1283 = arith.addf %1273, %1282 : vector<28x1xf32>
    %1284 = vector.broadcast %1283 : vector<28x1xf32> to vector<28x28xf32>
    %1285 = arith.addf %573, %1284 : vector<28x28xf32>
    %cst_341 = arith.constant dense<0xFF800000> : vector<28xf32>
    %1286 = vector.multi_reduction <maximumf>, %1285, %cst_341 [0] : vector<28x28xf32> to vector<28xf32>
    %1287 = vector.shape_cast %1286 : vector<28xf32> to vector<1x28xf32>
    %1288 = tpu.iota {dimensions = array<i32: 0>} : vector<28x28xi32>
    %1289 = arith.sitofp %1288 : vector<28x28xi32> to vector<28x28xf32>
    %1290 = vector.broadcast %1287 : vector<1x28xf32> to vector<28x28xf32>
    %1291 = arith.cmpf oeq, %1285, %1290 : vector<28x28xf32>
    %cst_342 = arith.constant 2.800000e+01 : f32
    %1292 = vector.broadcast %cst_342 : f32 to vector<28x28xf32>
    %1293 = arith.select %1291, %1289, %1292 : vector<28x28xi1>, vector<28x28xf32>
    %cst_343 = arith.constant dense<0x7F800000> : vector<28xf32>
    %1294 = vector.multi_reduction <minimumf>, %1293, %cst_343 [0] : vector<28x28xf32> to vector<28xf32>
    %1295 = vector.shape_cast %1294 : vector<28xf32> to vector<1x28xf32>
    %1296 = vector.extract_strided_slice %570 {offsets = [11, 0], sizes = [1, 28], strides = [1, 1]} : vector<64x28xf32> to vector<1x28xf32>
    %1297 = arith.addf %1287, %1296 : vector<1x28xf32>
    %1298 = vector.broadcast %1297 : vector<1x28xf32> to vector<28x28xf32>
    %1299 = arith.addf %572, %1298 : vector<28x28xf32>
    %cst_344 = arith.constant dense<0xFF800000> : vector<28xf32>
    %1300 = vector.multi_reduction <maximumf>, %1299, %cst_344 [1] : vector<28x28xf32> to vector<28xf32>
    %1301 = vector.shape_cast %1300 : vector<28xf32> to vector<28x1xf32>
    %1302 = tpu.iota {dimensions = array<i32: 1>} : vector<28x28xi32>
    %1303 = arith.sitofp %1302 : vector<28x28xi32> to vector<28x28xf32>
    %1304 = vector.broadcast %1301 : vector<28x1xf32> to vector<28x28xf32>
    %1305 = arith.cmpf oeq, %1299, %1304 : vector<28x28xf32>
    %cst_345 = arith.constant 2.800000e+01 : f32
    %1306 = vector.broadcast %cst_345 : f32 to vector<28x28xf32>
    %1307 = arith.select %1305, %1303, %1306 : vector<28x28xi1>, vector<28x28xf32>
    %cst_346 = arith.constant dense<0x7F800000> : vector<28xf32>
    %1308 = vector.multi_reduction <minimumf>, %1307, %cst_346 [1] : vector<28x28xf32> to vector<28xf32>
    %1309 = vector.shape_cast %1308 : vector<28xf32> to vector<28x1xf32>
    %1310 = vector.extract_strided_slice %571 {offsets = [0, 19], sizes = [28, 1], strides = [1, 1]} : vector<28x64xf32> to vector<28x1xf32>
    %1311 = arith.addf %1301, %1310 : vector<28x1xf32>
    %1312 = vector.broadcast %1311 : vector<28x1xf32> to vector<28x28xf32>
    %1313 = arith.addf %573, %1312 : vector<28x28xf32>
    %cst_347 = arith.constant dense<0xFF800000> : vector<28xf32>
    %1314 = vector.multi_reduction <maximumf>, %1313, %cst_347 [0] : vector<28x28xf32> to vector<28xf32>
    %1315 = vector.shape_cast %1314 : vector<28xf32> to vector<1x28xf32>
    %1316 = tpu.iota {dimensions = array<i32: 0>} : vector<28x28xi32>
    %1317 = arith.sitofp %1316 : vector<28x28xi32> to vector<28x28xf32>
    %1318 = vector.broadcast %1315 : vector<1x28xf32> to vector<28x28xf32>
    %1319 = arith.cmpf oeq, %1313, %1318 : vector<28x28xf32>
    %cst_348 = arith.constant 2.800000e+01 : f32
    %1320 = vector.broadcast %cst_348 : f32 to vector<28x28xf32>
    %1321 = arith.select %1319, %1317, %1320 : vector<28x28xi1>, vector<28x28xf32>
    %cst_349 = arith.constant dense<0x7F800000> : vector<28xf32>
    %1322 = vector.multi_reduction <minimumf>, %1321, %cst_349 [0] : vector<28x28xf32> to vector<28xf32>
    %1323 = vector.shape_cast %1322 : vector<28xf32> to vector<1x28xf32>
    %1324 = vector.extract_strided_slice %570 {offsets = [27, 0], sizes = [1, 28], strides = [1, 1]} : vector<64x28xf32> to vector<1x28xf32>
    %1325 = arith.addf %1315, %1324 : vector<1x28xf32>
    %1326 = vector.broadcast %1325 : vector<1x28xf32> to vector<28x28xf32>
    %1327 = arith.addf %572, %1326 : vector<28x28xf32>
    %cst_350 = arith.constant dense<0xFF800000> : vector<28xf32>
    %1328 = vector.multi_reduction <maximumf>, %1327, %cst_350 [1] : vector<28x28xf32> to vector<28xf32>
    %1329 = vector.shape_cast %1328 : vector<28xf32> to vector<28x1xf32>
    %1330 = tpu.iota {dimensions = array<i32: 1>} : vector<28x28xi32>
    %1331 = arith.sitofp %1330 : vector<28x28xi32> to vector<28x28xf32>
    %1332 = vector.broadcast %1329 : vector<28x1xf32> to vector<28x28xf32>
    %1333 = arith.cmpf oeq, %1327, %1332 : vector<28x28xf32>
    %cst_351 = arith.constant 2.800000e+01 : f32
    %1334 = vector.broadcast %cst_351 : f32 to vector<28x28xf32>
    %1335 = arith.select %1333, %1331, %1334 : vector<28x28xi1>, vector<28x28xf32>
    %cst_352 = arith.constant dense<0x7F800000> : vector<28xf32>
    %1336 = vector.multi_reduction <minimumf>, %1335, %cst_352 [1] : vector<28x28xf32> to vector<28xf32>
    %1337 = vector.shape_cast %1336 : vector<28xf32> to vector<28x1xf32>
    %1338 = vector.extract_strided_slice %571 {offsets = [0, 35], sizes = [28, 1], strides = [1, 1]} : vector<28x64xf32> to vector<28x1xf32>
    %1339 = arith.addf %1329, %1338 : vector<28x1xf32>
    %1340 = vector.broadcast %1339 : vector<28x1xf32> to vector<28x28xf32>
    %1341 = arith.addf %573, %1340 : vector<28x28xf32>
    %cst_353 = arith.constant dense<0xFF800000> : vector<28xf32>
    %1342 = vector.multi_reduction <maximumf>, %1341, %cst_353 [0] : vector<28x28xf32> to vector<28xf32>
    %1343 = vector.shape_cast %1342 : vector<28xf32> to vector<1x28xf32>
    %1344 = tpu.iota {dimensions = array<i32: 0>} : vector<28x28xi32>
    %1345 = arith.sitofp %1344 : vector<28x28xi32> to vector<28x28xf32>
    %1346 = vector.broadcast %1343 : vector<1x28xf32> to vector<28x28xf32>
    %1347 = arith.cmpf oeq, %1341, %1346 : vector<28x28xf32>
    %cst_354 = arith.constant 2.800000e+01 : f32
    %1348 = vector.broadcast %cst_354 : f32 to vector<28x28xf32>
    %1349 = arith.select %1347, %1345, %1348 : vector<28x28xi1>, vector<28x28xf32>
    %cst_355 = arith.constant dense<0x7F800000> : vector<28xf32>
    %1350 = vector.multi_reduction <minimumf>, %1349, %cst_355 [0] : vector<28x28xf32> to vector<28xf32>
    %1351 = vector.shape_cast %1350 : vector<28xf32> to vector<1x28xf32>
    %1352 = vector.extract_strided_slice %570 {offsets = [43, 0], sizes = [1, 28], strides = [1, 1]} : vector<64x28xf32> to vector<1x28xf32>
    %1353 = arith.addf %1343, %1352 : vector<1x28xf32>
    %1354 = vector.broadcast %1353 : vector<1x28xf32> to vector<28x28xf32>
    %1355 = arith.addf %572, %1354 : vector<28x28xf32>
    %cst_356 = arith.constant dense<0xFF800000> : vector<28xf32>
    %1356 = vector.multi_reduction <maximumf>, %1355, %cst_356 [1] : vector<28x28xf32> to vector<28xf32>
    %1357 = vector.shape_cast %1356 : vector<28xf32> to vector<28x1xf32>
    %1358 = tpu.iota {dimensions = array<i32: 1>} : vector<28x28xi32>
    %1359 = arith.sitofp %1358 : vector<28x28xi32> to vector<28x28xf32>
    %1360 = vector.broadcast %1357 : vector<28x1xf32> to vector<28x28xf32>
    %1361 = arith.cmpf oeq, %1355, %1360 : vector<28x28xf32>
    %cst_357 = arith.constant 2.800000e+01 : f32
    %1362 = vector.broadcast %cst_357 : f32 to vector<28x28xf32>
    %1363 = arith.select %1361, %1359, %1362 : vector<28x28xi1>, vector<28x28xf32>
    %cst_358 = arith.constant dense<0x7F800000> : vector<28xf32>
    %1364 = vector.multi_reduction <minimumf>, %1363, %cst_358 [1] : vector<28x28xf32> to vector<28xf32>
    %1365 = vector.shape_cast %1364 : vector<28xf32> to vector<28x1xf32>
    %1366 = vector.extract_strided_slice %571 {offsets = [0, 51], sizes = [28, 1], strides = [1, 1]} : vector<28x64xf32> to vector<28x1xf32>
    %1367 = arith.addf %1357, %1366 : vector<28x1xf32>
    %1368 = vector.broadcast %1367 : vector<28x1xf32> to vector<28x28xf32>
    %1369 = arith.addf %573, %1368 : vector<28x28xf32>
    %cst_359 = arith.constant dense<0xFF800000> : vector<28xf32>
    %1370 = vector.multi_reduction <maximumf>, %1369, %cst_359 [0] : vector<28x28xf32> to vector<28xf32>
    %1371 = vector.shape_cast %1370 : vector<28xf32> to vector<1x28xf32>
    %1372 = tpu.iota {dimensions = array<i32: 0>} : vector<28x28xi32>
    %1373 = arith.sitofp %1372 : vector<28x28xi32> to vector<28x28xf32>
    %1374 = vector.broadcast %1371 : vector<1x28xf32> to vector<28x28xf32>
    %1375 = arith.cmpf oeq, %1369, %1374 : vector<28x28xf32>
    %cst_360 = arith.constant 2.800000e+01 : f32
    %1376 = vector.broadcast %cst_360 : f32 to vector<28x28xf32>
    %1377 = arith.select %1375, %1373, %1376 : vector<28x28xi1>, vector<28x28xf32>
    %cst_361 = arith.constant dense<0x7F800000> : vector<28xf32>
    %1378 = vector.multi_reduction <minimumf>, %1377, %cst_361 [0] : vector<28x28xf32> to vector<28xf32>
    %1379 = vector.shape_cast %1378 : vector<28xf32> to vector<1x28xf32>
    %1380 = vector.extract_strided_slice %570 {offsets = [59, 0], sizes = [1, 28], strides = [1, 1]} : vector<64x28xf32> to vector<1x28xf32>
    %1381 = arith.addf %1371, %1380 : vector<1x28xf32>
    %1382 = vector.extract_strided_slice %572 {offsets = [27, 0], sizes = [1, 28], strides = [1, 1]} : vector<28x28xf32> to vector<1x28xf32>
    %1383 = arith.addf %1381, %1382 : vector<1x28xf32>
    %cst_362 = arith.constant dense<0xFF800000> : vector<1xf32>
    %1384 = vector.multi_reduction <maximumf>, %1383, %cst_362 [1] : vector<1x28xf32> to vector<1xf32>
    %1385 = vector.shape_cast %1384 : vector<1xf32> to vector<1x1xf32>
    %1386 = tpu.iota {dimensions = array<i32: 1>} : vector<1x28xi32>
    %1387 = arith.sitofp %1386 : vector<1x28xi32> to vector<1x28xf32>
    %1388 = vector.broadcast %1385 : vector<1x1xf32> to vector<1x28xf32>
    %1389 = arith.cmpf oeq, %1383, %1388 : vector<1x28xf32>
    %cst_363 = arith.constant 2.800000e+01 : f32
    %1390 = vector.broadcast %cst_363 : f32 to vector<1x28xf32>
    %1391 = arith.select %1389, %1387, %1390 : vector<1x28xi1>, vector<1x28xf32>
    %cst_364 = arith.constant dense<0x7F800000> : vector<1xf32>
    %1392 = vector.multi_reduction <minimumf>, %1391, %cst_364 [1] : vector<1x28xf32> to vector<1xf32>
    %1393 = vector.shape_cast %1392 : vector<1xf32> to vector<1x1xf32>
    %c7_i32_365 = arith.constant 7 : i32
    %1394 = vector.broadcast %c7_i32_365 : i32 to vector<1x128xi32>
    %1395 = arith.cmpi eq, %578, %1394 : vector<1x128xi32>
    %cst_366 = arith.constant 0.000000e+00 : f32
    %1396 = vector.broadcast %cst_366 : f32 to vector<1x128xf32>
    %1397 = vector.shape_cast %1393 : vector<1x1xf32> to vector<1x1xf32>
    %1398 = vector.broadcast %1397 : vector<1x1xf32> to vector<1x128xf32>
    %1399 = arith.select %1395, %1398, %1396 : vector<1x128xi1>, vector<1x128xf32>
    %1400 = vector.broadcast %1393 : vector<1x1xf32> to vector<1x28xf32>
    %1401 = arith.cmpf oeq, %575, %1400 : vector<1x28xf32>
    %cst_367 = arith.constant 0.000000e+00 : f32
    %1402 = vector.broadcast %cst_367 : f32 to vector<1x28xf32>
    %1403 = arith.select %1401, %1379, %1402 : vector<1x28xi1>, vector<1x28xf32>
    %cst_368 = arith.constant dense<0.000000e+00> : vector<1xf32>
    %1404 = vector.multi_reduction <add>, %1403, %cst_368 [1] : vector<1x28xf32> to vector<1xf32>
    %1405 = vector.shape_cast %1404 : vector<1xf32> to vector<1x1xf32>
    %c6_i32_369 = arith.constant 6 : i32
    %1406 = vector.broadcast %c6_i32_369 : i32 to vector<1x128xi32>
    %1407 = arith.cmpi eq, %578, %1406 : vector<1x128xi32>
    %1408 = vector.shape_cast %1405 : vector<1x1xf32> to vector<1x1xf32>
    %1409 = vector.broadcast %1408 : vector<1x1xf32> to vector<1x128xf32>
    %1410 = arith.select %1407, %1409, %1399 : vector<1x128xi1>, vector<1x128xf32>
    %1411 = vector.broadcast %1405 : vector<1x1xf32> to vector<28x1xf32>
    %1412 = arith.cmpf oeq, %577, %1411 : vector<28x1xf32>
    %cst_370 = arith.constant 0.000000e+00 : f32
    %1413 = vector.broadcast %cst_370 : f32 to vector<28x1xf32>
    %1414 = arith.select %1412, %1365, %1413 : vector<28x1xi1>, vector<28x1xf32>
    %cst_371 = arith.constant dense<0.000000e+00> : vector<1xf32>
    %1415 = vector.multi_reduction <add>, %1414, %cst_371 [0] : vector<28x1xf32> to vector<1xf32>
    %1416 = vector.shape_cast %1415 : vector<1xf32> to vector<1x1xf32>
    %c5_i32_372 = arith.constant 5 : i32
    %1417 = vector.broadcast %c5_i32_372 : i32 to vector<1x128xi32>
    %1418 = arith.cmpi eq, %578, %1417 : vector<1x128xi32>
    %1419 = vector.shape_cast %1416 : vector<1x1xf32> to vector<1x1xf32>
    %1420 = vector.broadcast %1419 : vector<1x1xf32> to vector<1x128xf32>
    %1421 = arith.select %1418, %1420, %1410 : vector<1x128xi1>, vector<1x128xf32>
    %1422 = vector.broadcast %1416 : vector<1x1xf32> to vector<1x28xf32>
    %1423 = arith.cmpf oeq, %575, %1422 : vector<1x28xf32>
    %cst_373 = arith.constant 0.000000e+00 : f32
    %1424 = vector.broadcast %cst_373 : f32 to vector<1x28xf32>
    %1425 = arith.select %1423, %1351, %1424 : vector<1x28xi1>, vector<1x28xf32>
    %cst_374 = arith.constant dense<0.000000e+00> : vector<1xf32>
    %1426 = vector.multi_reduction <add>, %1425, %cst_374 [1] : vector<1x28xf32> to vector<1xf32>
    %1427 = vector.shape_cast %1426 : vector<1xf32> to vector<1x1xf32>
    %c4_i32_375 = arith.constant 4 : i32
    %1428 = vector.broadcast %c4_i32_375 : i32 to vector<1x128xi32>
    %1429 = arith.cmpi eq, %578, %1428 : vector<1x128xi32>
    %1430 = vector.shape_cast %1427 : vector<1x1xf32> to vector<1x1xf32>
    %1431 = vector.broadcast %1430 : vector<1x1xf32> to vector<1x128xf32>
    %1432 = arith.select %1429, %1431, %1421 : vector<1x128xi1>, vector<1x128xf32>
    %1433 = vector.broadcast %1427 : vector<1x1xf32> to vector<28x1xf32>
    %1434 = arith.cmpf oeq, %577, %1433 : vector<28x1xf32>
    %cst_376 = arith.constant 0.000000e+00 : f32
    %1435 = vector.broadcast %cst_376 : f32 to vector<28x1xf32>
    %1436 = arith.select %1434, %1337, %1435 : vector<28x1xi1>, vector<28x1xf32>
    %cst_377 = arith.constant dense<0.000000e+00> : vector<1xf32>
    %1437 = vector.multi_reduction <add>, %1436, %cst_377 [0] : vector<28x1xf32> to vector<1xf32>
    %1438 = vector.shape_cast %1437 : vector<1xf32> to vector<1x1xf32>
    %c3_i32_378 = arith.constant 3 : i32
    %1439 = vector.broadcast %c3_i32_378 : i32 to vector<1x128xi32>
    %1440 = arith.cmpi eq, %578, %1439 : vector<1x128xi32>
    %1441 = vector.shape_cast %1438 : vector<1x1xf32> to vector<1x1xf32>
    %1442 = vector.broadcast %1441 : vector<1x1xf32> to vector<1x128xf32>
    %1443 = arith.select %1440, %1442, %1432 : vector<1x128xi1>, vector<1x128xf32>
    %1444 = vector.broadcast %1438 : vector<1x1xf32> to vector<1x28xf32>
    %1445 = arith.cmpf oeq, %575, %1444 : vector<1x28xf32>
    %cst_379 = arith.constant 0.000000e+00 : f32
    %1446 = vector.broadcast %cst_379 : f32 to vector<1x28xf32>
    %1447 = arith.select %1445, %1323, %1446 : vector<1x28xi1>, vector<1x28xf32>
    %cst_380 = arith.constant dense<0.000000e+00> : vector<1xf32>
    %1448 = vector.multi_reduction <add>, %1447, %cst_380 [1] : vector<1x28xf32> to vector<1xf32>
    %1449 = vector.shape_cast %1448 : vector<1xf32> to vector<1x1xf32>
    %c2_i32_381 = arith.constant 2 : i32
    %1450 = vector.broadcast %c2_i32_381 : i32 to vector<1x128xi32>
    %1451 = arith.cmpi eq, %578, %1450 : vector<1x128xi32>
    %1452 = vector.shape_cast %1449 : vector<1x1xf32> to vector<1x1xf32>
    %1453 = vector.broadcast %1452 : vector<1x1xf32> to vector<1x128xf32>
    %1454 = arith.select %1451, %1453, %1443 : vector<1x128xi1>, vector<1x128xf32>
    %1455 = vector.broadcast %1449 : vector<1x1xf32> to vector<28x1xf32>
    %1456 = arith.cmpf oeq, %577, %1455 : vector<28x1xf32>
    %cst_382 = arith.constant 0.000000e+00 : f32
    %1457 = vector.broadcast %cst_382 : f32 to vector<28x1xf32>
    %1458 = arith.select %1456, %1309, %1457 : vector<28x1xi1>, vector<28x1xf32>
    %cst_383 = arith.constant dense<0.000000e+00> : vector<1xf32>
    %1459 = vector.multi_reduction <add>, %1458, %cst_383 [0] : vector<28x1xf32> to vector<1xf32>
    %1460 = vector.shape_cast %1459 : vector<1xf32> to vector<1x1xf32>
    %c1_i32_384 = arith.constant 1 : i32
    %1461 = vector.broadcast %c1_i32_384 : i32 to vector<1x128xi32>
    %1462 = arith.cmpi eq, %578, %1461 : vector<1x128xi32>
    %1463 = vector.shape_cast %1460 : vector<1x1xf32> to vector<1x1xf32>
    %1464 = vector.broadcast %1463 : vector<1x1xf32> to vector<1x128xf32>
    %1465 = arith.select %1462, %1464, %1454 : vector<1x128xi1>, vector<1x128xf32>
    %1466 = vector.broadcast %1460 : vector<1x1xf32> to vector<1x28xf32>
    %1467 = arith.cmpf oeq, %575, %1466 : vector<1x28xf32>
    %cst_385 = arith.constant 0.000000e+00 : f32
    %1468 = vector.broadcast %cst_385 : f32 to vector<1x28xf32>
    %1469 = arith.select %1467, %1295, %1468 : vector<1x28xi1>, vector<1x28xf32>
    %cst_386 = arith.constant dense<0.000000e+00> : vector<1xf32>
    %1470 = vector.multi_reduction <add>, %1469, %cst_386 [1] : vector<1x28xf32> to vector<1xf32>
    %1471 = vector.shape_cast %1470 : vector<1xf32> to vector<1x1xf32>
    %c0_i32_387 = arith.constant 0 : i32
    %1472 = vector.broadcast %c0_i32_387 : i32 to vector<1x128xi32>
    %1473 = arith.cmpi eq, %578, %1472 : vector<1x128xi32>
    %1474 = vector.shape_cast %1471 : vector<1x1xf32> to vector<1x1xf32>
    %1475 = vector.broadcast %1474 : vector<1x1xf32> to vector<1x128xf32>
    %1476 = arith.select %1473, %1475, %1465 : vector<1x128xi1>, vector<1x128xf32>
    %1477 = vector.broadcast %1471 : vector<1x1xf32> to vector<28x1xf32>
    %1478 = arith.cmpf oeq, %577, %1477 : vector<28x1xf32>
    %cst_388 = arith.constant 0.000000e+00 : f32
    %1479 = vector.broadcast %cst_388 : f32 to vector<28x1xf32>
    %1480 = arith.select %1478, %1281, %1479 : vector<28x1xi1>, vector<28x1xf32>
    %cst_389 = arith.constant dense<0.000000e+00> : vector<1xf32>
    %1481 = vector.multi_reduction <add>, %1480, %cst_389 [0] : vector<28x1xf32> to vector<1xf32>
    %1482 = vector.shape_cast %1481 : vector<1xf32> to vector<1x1xf32>
    %c8_i32_390 = arith.constant 8 : i32
    %1483 = vector.broadcast %c8_i32_390 : i32 to vector<1x128xi32>
    %1484 = arith.cmpi eq, %578, %1483 : vector<1x128xi32>
    %1485 = vector.shape_cast %1385 : vector<1x1xf32> to vector<1x1xf32>
    %1486 = vector.broadcast %1485 : vector<1x1xf32> to vector<1x128xf32>
    %1487 = arith.select %1484, %1486, %1476 : vector<1x128xi1>, vector<1x128xf32>
    %c9_i32_391 = arith.constant 9 : i32
    %1488 = vector.broadcast %c9_i32_391 : i32 to vector<1x128xi32>
    %1489 = arith.cmpi eq, %578, %1488 : vector<1x128xi32>
    %1490 = vector.shape_cast %1482 : vector<1x1xf32> to vector<1x1xf32>
    %1491 = vector.broadcast %1490 : vector<1x1xf32> to vector<1x128xf32>
    %1492 = arith.select %1489, %1491, %1487 : vector<1x128xi1>, vector<1x128xf32>
    %c3_i32_392 = arith.constant 3 : i32
    %1493 = vector.broadcast %c3_i32_392 : i32 to vector<8x128xi32>
    %1494 = arith.cmpi eq, %579, %1493 : vector<8x128xi32>
    %1495 = vector.shape_cast %1492 : vector<1x128xf32> to vector<1x128xf32>
    %1496 = vector.broadcast %1495 : vector<1x128xf32> to vector<8x128xf32>
    %1497 = arith.select %1494, %1496, %1269 : vector<8x128xi1>, vector<8x128xf32>
    %1498 = vector.broadcast %584 : vector<1x28xf32> to vector<28x28xf32>
    %1499 = arith.addf %572, %1498 : vector<28x28xf32>
    %cst_393 = arith.constant dense<0xFF800000> : vector<28xf32>
    %1500 = vector.multi_reduction <maximumf>, %1499, %cst_393 [1] : vector<28x28xf32> to vector<28xf32>
    %1501 = vector.shape_cast %1500 : vector<28xf32> to vector<28x1xf32>
    %1502 = tpu.iota {dimensions = array<i32: 1>} : vector<28x28xi32>
    %1503 = arith.sitofp %1502 : vector<28x28xi32> to vector<28x28xf32>
    %1504 = vector.broadcast %1501 : vector<28x1xf32> to vector<28x28xf32>
    %1505 = arith.cmpf oeq, %1499, %1504 : vector<28x28xf32>
    %cst_394 = arith.constant 2.800000e+01 : f32
    %1506 = vector.broadcast %cst_394 : f32 to vector<28x28xf32>
    %1507 = arith.select %1505, %1503, %1506 : vector<28x28xi1>, vector<28x28xf32>
    %cst_395 = arith.constant dense<0x7F800000> : vector<28xf32>
    %1508 = vector.multi_reduction <minimumf>, %1507, %cst_395 [1] : vector<28x28xf32> to vector<28xf32>
    %1509 = vector.shape_cast %1508 : vector<28xf32> to vector<28x1xf32>
    %1510 = vector.extract_strided_slice %571 {offsets = [0, 4], sizes = [28, 1], strides = [1, 1]} : vector<28x64xf32> to vector<28x1xf32>
    %1511 = arith.addf %1501, %1510 : vector<28x1xf32>
    %1512 = vector.broadcast %1511 : vector<28x1xf32> to vector<28x28xf32>
    %1513 = arith.addf %573, %1512 : vector<28x28xf32>
    %cst_396 = arith.constant dense<0xFF800000> : vector<28xf32>
    %1514 = vector.multi_reduction <maximumf>, %1513, %cst_396 [0] : vector<28x28xf32> to vector<28xf32>
    %1515 = vector.shape_cast %1514 : vector<28xf32> to vector<1x28xf32>
    %1516 = tpu.iota {dimensions = array<i32: 0>} : vector<28x28xi32>
    %1517 = arith.sitofp %1516 : vector<28x28xi32> to vector<28x28xf32>
    %1518 = vector.broadcast %1515 : vector<1x28xf32> to vector<28x28xf32>
    %1519 = arith.cmpf oeq, %1513, %1518 : vector<28x28xf32>
    %cst_397 = arith.constant 2.800000e+01 : f32
    %1520 = vector.broadcast %cst_397 : f32 to vector<28x28xf32>
    %1521 = arith.select %1519, %1517, %1520 : vector<28x28xi1>, vector<28x28xf32>
    %cst_398 = arith.constant dense<0x7F800000> : vector<28xf32>
    %1522 = vector.multi_reduction <minimumf>, %1521, %cst_398 [0] : vector<28x28xf32> to vector<28xf32>
    %1523 = vector.shape_cast %1522 : vector<28xf32> to vector<1x28xf32>
    %1524 = vector.extract_strided_slice %570 {offsets = [12, 0], sizes = [1, 28], strides = [1, 1]} : vector<64x28xf32> to vector<1x28xf32>
    %1525 = arith.addf %1515, %1524 : vector<1x28xf32>
    %1526 = vector.broadcast %1525 : vector<1x28xf32> to vector<28x28xf32>
    %1527 = arith.addf %572, %1526 : vector<28x28xf32>
    %cst_399 = arith.constant dense<0xFF800000> : vector<28xf32>
    %1528 = vector.multi_reduction <maximumf>, %1527, %cst_399 [1] : vector<28x28xf32> to vector<28xf32>
    %1529 = vector.shape_cast %1528 : vector<28xf32> to vector<28x1xf32>
    %1530 = tpu.iota {dimensions = array<i32: 1>} : vector<28x28xi32>
    %1531 = arith.sitofp %1530 : vector<28x28xi32> to vector<28x28xf32>
    %1532 = vector.broadcast %1529 : vector<28x1xf32> to vector<28x28xf32>
    %1533 = arith.cmpf oeq, %1527, %1532 : vector<28x28xf32>
    %cst_400 = arith.constant 2.800000e+01 : f32
    %1534 = vector.broadcast %cst_400 : f32 to vector<28x28xf32>
    %1535 = arith.select %1533, %1531, %1534 : vector<28x28xi1>, vector<28x28xf32>
    %cst_401 = arith.constant dense<0x7F800000> : vector<28xf32>
    %1536 = vector.multi_reduction <minimumf>, %1535, %cst_401 [1] : vector<28x28xf32> to vector<28xf32>
    %1537 = vector.shape_cast %1536 : vector<28xf32> to vector<28x1xf32>
    %1538 = vector.extract_strided_slice %571 {offsets = [0, 20], sizes = [28, 1], strides = [1, 1]} : vector<28x64xf32> to vector<28x1xf32>
    %1539 = arith.addf %1529, %1538 : vector<28x1xf32>
    %1540 = vector.broadcast %1539 : vector<28x1xf32> to vector<28x28xf32>
    %1541 = arith.addf %573, %1540 : vector<28x28xf32>
    %cst_402 = arith.constant dense<0xFF800000> : vector<28xf32>
    %1542 = vector.multi_reduction <maximumf>, %1541, %cst_402 [0] : vector<28x28xf32> to vector<28xf32>
    %1543 = vector.shape_cast %1542 : vector<28xf32> to vector<1x28xf32>
    %1544 = tpu.iota {dimensions = array<i32: 0>} : vector<28x28xi32>
    %1545 = arith.sitofp %1544 : vector<28x28xi32> to vector<28x28xf32>
    %1546 = vector.broadcast %1543 : vector<1x28xf32> to vector<28x28xf32>
    %1547 = arith.cmpf oeq, %1541, %1546 : vector<28x28xf32>
    %cst_403 = arith.constant 2.800000e+01 : f32
    %1548 = vector.broadcast %cst_403 : f32 to vector<28x28xf32>
    %1549 = arith.select %1547, %1545, %1548 : vector<28x28xi1>, vector<28x28xf32>
    %cst_404 = arith.constant dense<0x7F800000> : vector<28xf32>
    %1550 = vector.multi_reduction <minimumf>, %1549, %cst_404 [0] : vector<28x28xf32> to vector<28xf32>
    %1551 = vector.shape_cast %1550 : vector<28xf32> to vector<1x28xf32>
    %1552 = vector.extract_strided_slice %570 {offsets = [28, 0], sizes = [1, 28], strides = [1, 1]} : vector<64x28xf32> to vector<1x28xf32>
    %1553 = arith.addf %1543, %1552 : vector<1x28xf32>
    %1554 = vector.broadcast %1553 : vector<1x28xf32> to vector<28x28xf32>
    %1555 = arith.addf %572, %1554 : vector<28x28xf32>
    %cst_405 = arith.constant dense<0xFF800000> : vector<28xf32>
    %1556 = vector.multi_reduction <maximumf>, %1555, %cst_405 [1] : vector<28x28xf32> to vector<28xf32>
    %1557 = vector.shape_cast %1556 : vector<28xf32> to vector<28x1xf32>
    %1558 = tpu.iota {dimensions = array<i32: 1>} : vector<28x28xi32>
    %1559 = arith.sitofp %1558 : vector<28x28xi32> to vector<28x28xf32>
    %1560 = vector.broadcast %1557 : vector<28x1xf32> to vector<28x28xf32>
    %1561 = arith.cmpf oeq, %1555, %1560 : vector<28x28xf32>
    %cst_406 = arith.constant 2.800000e+01 : f32
    %1562 = vector.broadcast %cst_406 : f32 to vector<28x28xf32>
    %1563 = arith.select %1561, %1559, %1562 : vector<28x28xi1>, vector<28x28xf32>
    %cst_407 = arith.constant dense<0x7F800000> : vector<28xf32>
    %1564 = vector.multi_reduction <minimumf>, %1563, %cst_407 [1] : vector<28x28xf32> to vector<28xf32>
    %1565 = vector.shape_cast %1564 : vector<28xf32> to vector<28x1xf32>
    %1566 = vector.extract_strided_slice %571 {offsets = [0, 36], sizes = [28, 1], strides = [1, 1]} : vector<28x64xf32> to vector<28x1xf32>
    %1567 = arith.addf %1557, %1566 : vector<28x1xf32>
    %1568 = vector.broadcast %1567 : vector<28x1xf32> to vector<28x28xf32>
    %1569 = arith.addf %573, %1568 : vector<28x28xf32>
    %cst_408 = arith.constant dense<0xFF800000> : vector<28xf32>
    %1570 = vector.multi_reduction <maximumf>, %1569, %cst_408 [0] : vector<28x28xf32> to vector<28xf32>
    %1571 = vector.shape_cast %1570 : vector<28xf32> to vector<1x28xf32>
    %1572 = tpu.iota {dimensions = array<i32: 0>} : vector<28x28xi32>
    %1573 = arith.sitofp %1572 : vector<28x28xi32> to vector<28x28xf32>
    %1574 = vector.broadcast %1571 : vector<1x28xf32> to vector<28x28xf32>
    %1575 = arith.cmpf oeq, %1569, %1574 : vector<28x28xf32>
    %cst_409 = arith.constant 2.800000e+01 : f32
    %1576 = vector.broadcast %cst_409 : f32 to vector<28x28xf32>
    %1577 = arith.select %1575, %1573, %1576 : vector<28x28xi1>, vector<28x28xf32>
    %cst_410 = arith.constant dense<0x7F800000> : vector<28xf32>
    %1578 = vector.multi_reduction <minimumf>, %1577, %cst_410 [0] : vector<28x28xf32> to vector<28xf32>
    %1579 = vector.shape_cast %1578 : vector<28xf32> to vector<1x28xf32>
    %1580 = vector.extract_strided_slice %570 {offsets = [44, 0], sizes = [1, 28], strides = [1, 1]} : vector<64x28xf32> to vector<1x28xf32>
    %1581 = arith.addf %1571, %1580 : vector<1x28xf32>
    %1582 = vector.broadcast %1581 : vector<1x28xf32> to vector<28x28xf32>
    %1583 = arith.addf %572, %1582 : vector<28x28xf32>
    %cst_411 = arith.constant dense<0xFF800000> : vector<28xf32>
    %1584 = vector.multi_reduction <maximumf>, %1583, %cst_411 [1] : vector<28x28xf32> to vector<28xf32>
    %1585 = vector.shape_cast %1584 : vector<28xf32> to vector<28x1xf32>
    %1586 = tpu.iota {dimensions = array<i32: 1>} : vector<28x28xi32>
    %1587 = arith.sitofp %1586 : vector<28x28xi32> to vector<28x28xf32>
    %1588 = vector.broadcast %1585 : vector<28x1xf32> to vector<28x28xf32>
    %1589 = arith.cmpf oeq, %1583, %1588 : vector<28x28xf32>
    %cst_412 = arith.constant 2.800000e+01 : f32
    %1590 = vector.broadcast %cst_412 : f32 to vector<28x28xf32>
    %1591 = arith.select %1589, %1587, %1590 : vector<28x28xi1>, vector<28x28xf32>
    %cst_413 = arith.constant dense<0x7F800000> : vector<28xf32>
    %1592 = vector.multi_reduction <minimumf>, %1591, %cst_413 [1] : vector<28x28xf32> to vector<28xf32>
    %1593 = vector.shape_cast %1592 : vector<28xf32> to vector<28x1xf32>
    %1594 = vector.extract_strided_slice %571 {offsets = [0, 52], sizes = [28, 1], strides = [1, 1]} : vector<28x64xf32> to vector<28x1xf32>
    %1595 = arith.addf %1585, %1594 : vector<28x1xf32>
    %1596 = vector.broadcast %1595 : vector<28x1xf32> to vector<28x28xf32>
    %1597 = arith.addf %573, %1596 : vector<28x28xf32>
    %cst_414 = arith.constant dense<0xFF800000> : vector<28xf32>
    %1598 = vector.multi_reduction <maximumf>, %1597, %cst_414 [0] : vector<28x28xf32> to vector<28xf32>
    %1599 = vector.shape_cast %1598 : vector<28xf32> to vector<1x28xf32>
    %1600 = tpu.iota {dimensions = array<i32: 0>} : vector<28x28xi32>
    %1601 = arith.sitofp %1600 : vector<28x28xi32> to vector<28x28xf32>
    %1602 = vector.broadcast %1599 : vector<1x28xf32> to vector<28x28xf32>
    %1603 = arith.cmpf oeq, %1597, %1602 : vector<28x28xf32>
    %cst_415 = arith.constant 2.800000e+01 : f32
    %1604 = vector.broadcast %cst_415 : f32 to vector<28x28xf32>
    %1605 = arith.select %1603, %1601, %1604 : vector<28x28xi1>, vector<28x28xf32>
    %cst_416 = arith.constant dense<0x7F800000> : vector<28xf32>
    %1606 = vector.multi_reduction <minimumf>, %1605, %cst_416 [0] : vector<28x28xf32> to vector<28xf32>
    %1607 = vector.shape_cast %1606 : vector<28xf32> to vector<1x28xf32>
    %1608 = vector.extract_strided_slice %570 {offsets = [60, 0], sizes = [1, 28], strides = [1, 1]} : vector<64x28xf32> to vector<1x28xf32>
    %1609 = arith.addf %1599, %1608 : vector<1x28xf32>
    %1610 = vector.extract_strided_slice %572 {offsets = [27, 0], sizes = [1, 28], strides = [1, 1]} : vector<28x28xf32> to vector<1x28xf32>
    %1611 = arith.addf %1609, %1610 : vector<1x28xf32>
    %cst_417 = arith.constant dense<0xFF800000> : vector<1xf32>
    %1612 = vector.multi_reduction <maximumf>, %1611, %cst_417 [1] : vector<1x28xf32> to vector<1xf32>
    %1613 = vector.shape_cast %1612 : vector<1xf32> to vector<1x1xf32>
    %1614 = tpu.iota {dimensions = array<i32: 1>} : vector<1x28xi32>
    %1615 = arith.sitofp %1614 : vector<1x28xi32> to vector<1x28xf32>
    %1616 = vector.broadcast %1613 : vector<1x1xf32> to vector<1x28xf32>
    %1617 = arith.cmpf oeq, %1611, %1616 : vector<1x28xf32>
    %cst_418 = arith.constant 2.800000e+01 : f32
    %1618 = vector.broadcast %cst_418 : f32 to vector<1x28xf32>
    %1619 = arith.select %1617, %1615, %1618 : vector<1x28xi1>, vector<1x28xf32>
    %cst_419 = arith.constant dense<0x7F800000> : vector<1xf32>
    %1620 = vector.multi_reduction <minimumf>, %1619, %cst_419 [1] : vector<1x28xf32> to vector<1xf32>
    %1621 = vector.shape_cast %1620 : vector<1xf32> to vector<1x1xf32>
    %c7_i32_420 = arith.constant 7 : i32
    %1622 = vector.broadcast %c7_i32_420 : i32 to vector<1x128xi32>
    %1623 = arith.cmpi eq, %578, %1622 : vector<1x128xi32>
    %cst_421 = arith.constant 0.000000e+00 : f32
    %1624 = vector.broadcast %cst_421 : f32 to vector<1x128xf32>
    %1625 = vector.shape_cast %1621 : vector<1x1xf32> to vector<1x1xf32>
    %1626 = vector.broadcast %1625 : vector<1x1xf32> to vector<1x128xf32>
    %1627 = arith.select %1623, %1626, %1624 : vector<1x128xi1>, vector<1x128xf32>
    %1628 = vector.broadcast %1621 : vector<1x1xf32> to vector<1x28xf32>
    %1629 = arith.cmpf oeq, %575, %1628 : vector<1x28xf32>
    %cst_422 = arith.constant 0.000000e+00 : f32
    %1630 = vector.broadcast %cst_422 : f32 to vector<1x28xf32>
    %1631 = arith.select %1629, %1607, %1630 : vector<1x28xi1>, vector<1x28xf32>
    %cst_423 = arith.constant dense<0.000000e+00> : vector<1xf32>
    %1632 = vector.multi_reduction <add>, %1631, %cst_423 [1] : vector<1x28xf32> to vector<1xf32>
    %1633 = vector.shape_cast %1632 : vector<1xf32> to vector<1x1xf32>
    %c6_i32_424 = arith.constant 6 : i32
    %1634 = vector.broadcast %c6_i32_424 : i32 to vector<1x128xi32>
    %1635 = arith.cmpi eq, %578, %1634 : vector<1x128xi32>
    %1636 = vector.shape_cast %1633 : vector<1x1xf32> to vector<1x1xf32>
    %1637 = vector.broadcast %1636 : vector<1x1xf32> to vector<1x128xf32>
    %1638 = arith.select %1635, %1637, %1627 : vector<1x128xi1>, vector<1x128xf32>
    %1639 = vector.broadcast %1633 : vector<1x1xf32> to vector<28x1xf32>
    %1640 = arith.cmpf oeq, %577, %1639 : vector<28x1xf32>
    %cst_425 = arith.constant 0.000000e+00 : f32
    %1641 = vector.broadcast %cst_425 : f32 to vector<28x1xf32>
    %1642 = arith.select %1640, %1593, %1641 : vector<28x1xi1>, vector<28x1xf32>
    %cst_426 = arith.constant dense<0.000000e+00> : vector<1xf32>
    %1643 = vector.multi_reduction <add>, %1642, %cst_426 [0] : vector<28x1xf32> to vector<1xf32>
    %1644 = vector.shape_cast %1643 : vector<1xf32> to vector<1x1xf32>
    %c5_i32_427 = arith.constant 5 : i32
    %1645 = vector.broadcast %c5_i32_427 : i32 to vector<1x128xi32>
    %1646 = arith.cmpi eq, %578, %1645 : vector<1x128xi32>
    %1647 = vector.shape_cast %1644 : vector<1x1xf32> to vector<1x1xf32>
    %1648 = vector.broadcast %1647 : vector<1x1xf32> to vector<1x128xf32>
    %1649 = arith.select %1646, %1648, %1638 : vector<1x128xi1>, vector<1x128xf32>
    %1650 = vector.broadcast %1644 : vector<1x1xf32> to vector<1x28xf32>
    %1651 = arith.cmpf oeq, %575, %1650 : vector<1x28xf32>
    %cst_428 = arith.constant 0.000000e+00 : f32
    %1652 = vector.broadcast %cst_428 : f32 to vector<1x28xf32>
    %1653 = arith.select %1651, %1579, %1652 : vector<1x28xi1>, vector<1x28xf32>
    %cst_429 = arith.constant dense<0.000000e+00> : vector<1xf32>
    %1654 = vector.multi_reduction <add>, %1653, %cst_429 [1] : vector<1x28xf32> to vector<1xf32>
    %1655 = vector.shape_cast %1654 : vector<1xf32> to vector<1x1xf32>
    %c4_i32_430 = arith.constant 4 : i32
    %1656 = vector.broadcast %c4_i32_430 : i32 to vector<1x128xi32>
    %1657 = arith.cmpi eq, %578, %1656 : vector<1x128xi32>
    %1658 = vector.shape_cast %1655 : vector<1x1xf32> to vector<1x1xf32>
    %1659 = vector.broadcast %1658 : vector<1x1xf32> to vector<1x128xf32>
    %1660 = arith.select %1657, %1659, %1649 : vector<1x128xi1>, vector<1x128xf32>
    %1661 = vector.broadcast %1655 : vector<1x1xf32> to vector<28x1xf32>
    %1662 = arith.cmpf oeq, %577, %1661 : vector<28x1xf32>
    %cst_431 = arith.constant 0.000000e+00 : f32
    %1663 = vector.broadcast %cst_431 : f32 to vector<28x1xf32>
    %1664 = arith.select %1662, %1565, %1663 : vector<28x1xi1>, vector<28x1xf32>
    %cst_432 = arith.constant dense<0.000000e+00> : vector<1xf32>
    %1665 = vector.multi_reduction <add>, %1664, %cst_432 [0] : vector<28x1xf32> to vector<1xf32>
    %1666 = vector.shape_cast %1665 : vector<1xf32> to vector<1x1xf32>
    %c3_i32_433 = arith.constant 3 : i32
    %1667 = vector.broadcast %c3_i32_433 : i32 to vector<1x128xi32>
    %1668 = arith.cmpi eq, %578, %1667 : vector<1x128xi32>
    %1669 = vector.shape_cast %1666 : vector<1x1xf32> to vector<1x1xf32>
    %1670 = vector.broadcast %1669 : vector<1x1xf32> to vector<1x128xf32>
    %1671 = arith.select %1668, %1670, %1660 : vector<1x128xi1>, vector<1x128xf32>
    %1672 = vector.broadcast %1666 : vector<1x1xf32> to vector<1x28xf32>
    %1673 = arith.cmpf oeq, %575, %1672 : vector<1x28xf32>
    %cst_434 = arith.constant 0.000000e+00 : f32
    %1674 = vector.broadcast %cst_434 : f32 to vector<1x28xf32>
    %1675 = arith.select %1673, %1551, %1674 : vector<1x28xi1>, vector<1x28xf32>
    %cst_435 = arith.constant dense<0.000000e+00> : vector<1xf32>
    %1676 = vector.multi_reduction <add>, %1675, %cst_435 [1] : vector<1x28xf32> to vector<1xf32>
    %1677 = vector.shape_cast %1676 : vector<1xf32> to vector<1x1xf32>
    %c2_i32_436 = arith.constant 2 : i32
    %1678 = vector.broadcast %c2_i32_436 : i32 to vector<1x128xi32>
    %1679 = arith.cmpi eq, %578, %1678 : vector<1x128xi32>
    %1680 = vector.shape_cast %1677 : vector<1x1xf32> to vector<1x1xf32>
    %1681 = vector.broadcast %1680 : vector<1x1xf32> to vector<1x128xf32>
    %1682 = arith.select %1679, %1681, %1671 : vector<1x128xi1>, vector<1x128xf32>
    %1683 = vector.broadcast %1677 : vector<1x1xf32> to vector<28x1xf32>
    %1684 = arith.cmpf oeq, %577, %1683 : vector<28x1xf32>
    %cst_437 = arith.constant 0.000000e+00 : f32
    %1685 = vector.broadcast %cst_437 : f32 to vector<28x1xf32>
    %1686 = arith.select %1684, %1537, %1685 : vector<28x1xi1>, vector<28x1xf32>
    %cst_438 = arith.constant dense<0.000000e+00> : vector<1xf32>
    %1687 = vector.multi_reduction <add>, %1686, %cst_438 [0] : vector<28x1xf32> to vector<1xf32>
    %1688 = vector.shape_cast %1687 : vector<1xf32> to vector<1x1xf32>
    %c1_i32_439 = arith.constant 1 : i32
    %1689 = vector.broadcast %c1_i32_439 : i32 to vector<1x128xi32>
    %1690 = arith.cmpi eq, %578, %1689 : vector<1x128xi32>
    %1691 = vector.shape_cast %1688 : vector<1x1xf32> to vector<1x1xf32>
    %1692 = vector.broadcast %1691 : vector<1x1xf32> to vector<1x128xf32>
    %1693 = arith.select %1690, %1692, %1682 : vector<1x128xi1>, vector<1x128xf32>
    %1694 = vector.broadcast %1688 : vector<1x1xf32> to vector<1x28xf32>
    %1695 = arith.cmpf oeq, %575, %1694 : vector<1x28xf32>
    %cst_440 = arith.constant 0.000000e+00 : f32
    %1696 = vector.broadcast %cst_440 : f32 to vector<1x28xf32>
    %1697 = arith.select %1695, %1523, %1696 : vector<1x28xi1>, vector<1x28xf32>
    %cst_441 = arith.constant dense<0.000000e+00> : vector<1xf32>
    %1698 = vector.multi_reduction <add>, %1697, %cst_441 [1] : vector<1x28xf32> to vector<1xf32>
    %1699 = vector.shape_cast %1698 : vector<1xf32> to vector<1x1xf32>
    %c0_i32_442 = arith.constant 0 : i32
    %1700 = vector.broadcast %c0_i32_442 : i32 to vector<1x128xi32>
    %1701 = arith.cmpi eq, %578, %1700 : vector<1x128xi32>
    %1702 = vector.shape_cast %1699 : vector<1x1xf32> to vector<1x1xf32>
    %1703 = vector.broadcast %1702 : vector<1x1xf32> to vector<1x128xf32>
    %1704 = arith.select %1701, %1703, %1693 : vector<1x128xi1>, vector<1x128xf32>
    %1705 = vector.broadcast %1699 : vector<1x1xf32> to vector<28x1xf32>
    %1706 = arith.cmpf oeq, %577, %1705 : vector<28x1xf32>
    %cst_443 = arith.constant 0.000000e+00 : f32
    %1707 = vector.broadcast %cst_443 : f32 to vector<28x1xf32>
    %1708 = arith.select %1706, %1509, %1707 : vector<28x1xi1>, vector<28x1xf32>
    %cst_444 = arith.constant dense<0.000000e+00> : vector<1xf32>
    %1709 = vector.multi_reduction <add>, %1708, %cst_444 [0] : vector<28x1xf32> to vector<1xf32>
    %1710 = vector.shape_cast %1709 : vector<1xf32> to vector<1x1xf32>
    %c8_i32_445 = arith.constant 8 : i32
    %1711 = vector.broadcast %c8_i32_445 : i32 to vector<1x128xi32>
    %1712 = arith.cmpi eq, %578, %1711 : vector<1x128xi32>
    %1713 = vector.shape_cast %1613 : vector<1x1xf32> to vector<1x1xf32>
    %1714 = vector.broadcast %1713 : vector<1x1xf32> to vector<1x128xf32>
    %1715 = arith.select %1712, %1714, %1704 : vector<1x128xi1>, vector<1x128xf32>
    %c9_i32_446 = arith.constant 9 : i32
    %1716 = vector.broadcast %c9_i32_446 : i32 to vector<1x128xi32>
    %1717 = arith.cmpi eq, %578, %1716 : vector<1x128xi32>
    %1718 = vector.shape_cast %1710 : vector<1x1xf32> to vector<1x1xf32>
    %1719 = vector.broadcast %1718 : vector<1x1xf32> to vector<1x128xf32>
    %1720 = arith.select %1717, %1719, %1715 : vector<1x128xi1>, vector<1x128xf32>
    %c4_i32_447 = arith.constant 4 : i32
    %1721 = vector.broadcast %c4_i32_447 : i32 to vector<8x128xi32>
    %1722 = arith.cmpi eq, %579, %1721 : vector<8x128xi32>
    %1723 = vector.shape_cast %1720 : vector<1x128xf32> to vector<1x128xf32>
    %1724 = vector.broadcast %1723 : vector<1x128xf32> to vector<8x128xf32>
    %1725 = arith.select %1722, %1724, %1497 : vector<8x128xi1>, vector<8x128xf32>
    %1726 = vector.broadcast %584 : vector<1x28xf32> to vector<28x28xf32>
    %1727 = arith.addf %572, %1726 : vector<28x28xf32>
    %cst_448 = arith.constant dense<0xFF800000> : vector<28xf32>
    %1728 = vector.multi_reduction <maximumf>, %1727, %cst_448 [1] : vector<28x28xf32> to vector<28xf32>
    %1729 = vector.shape_cast %1728 : vector<28xf32> to vector<28x1xf32>
    %1730 = tpu.iota {dimensions = array<i32: 1>} : vector<28x28xi32>
    %1731 = arith.sitofp %1730 : vector<28x28xi32> to vector<28x28xf32>
    %1732 = vector.broadcast %1729 : vector<28x1xf32> to vector<28x28xf32>
    %1733 = arith.cmpf oeq, %1727, %1732 : vector<28x28xf32>
    %cst_449 = arith.constant 2.800000e+01 : f32
    %1734 = vector.broadcast %cst_449 : f32 to vector<28x28xf32>
    %1735 = arith.select %1733, %1731, %1734 : vector<28x28xi1>, vector<28x28xf32>
    %cst_450 = arith.constant dense<0x7F800000> : vector<28xf32>
    %1736 = vector.multi_reduction <minimumf>, %1735, %cst_450 [1] : vector<28x28xf32> to vector<28xf32>
    %1737 = vector.shape_cast %1736 : vector<28xf32> to vector<28x1xf32>
    %1738 = vector.extract_strided_slice %571 {offsets = [0, 5], sizes = [28, 1], strides = [1, 1]} : vector<28x64xf32> to vector<28x1xf32>
    %1739 = arith.addf %1729, %1738 : vector<28x1xf32>
    %1740 = vector.broadcast %1739 : vector<28x1xf32> to vector<28x28xf32>
    %1741 = arith.addf %573, %1740 : vector<28x28xf32>
    %cst_451 = arith.constant dense<0xFF800000> : vector<28xf32>
    %1742 = vector.multi_reduction <maximumf>, %1741, %cst_451 [0] : vector<28x28xf32> to vector<28xf32>
    %1743 = vector.shape_cast %1742 : vector<28xf32> to vector<1x28xf32>
    %1744 = tpu.iota {dimensions = array<i32: 0>} : vector<28x28xi32>
    %1745 = arith.sitofp %1744 : vector<28x28xi32> to vector<28x28xf32>
    %1746 = vector.broadcast %1743 : vector<1x28xf32> to vector<28x28xf32>
    %1747 = arith.cmpf oeq, %1741, %1746 : vector<28x28xf32>
    %cst_452 = arith.constant 2.800000e+01 : f32
    %1748 = vector.broadcast %cst_452 : f32 to vector<28x28xf32>
    %1749 = arith.select %1747, %1745, %1748 : vector<28x28xi1>, vector<28x28xf32>
    %cst_453 = arith.constant dense<0x7F800000> : vector<28xf32>
    %1750 = vector.multi_reduction <minimumf>, %1749, %cst_453 [0] : vector<28x28xf32> to vector<28xf32>
    %1751 = vector.shape_cast %1750 : vector<28xf32> to vector<1x28xf32>
    %1752 = vector.extract_strided_slice %570 {offsets = [13, 0], sizes = [1, 28], strides = [1, 1]} : vector<64x28xf32> to vector<1x28xf32>
    %1753 = arith.addf %1743, %1752 : vector<1x28xf32>
    %1754 = vector.broadcast %1753 : vector<1x28xf32> to vector<28x28xf32>
    %1755 = arith.addf %572, %1754 : vector<28x28xf32>
    %cst_454 = arith.constant dense<0xFF800000> : vector<28xf32>
    %1756 = vector.multi_reduction <maximumf>, %1755, %cst_454 [1] : vector<28x28xf32> to vector<28xf32>
    %1757 = vector.shape_cast %1756 : vector<28xf32> to vector<28x1xf32>
    %1758 = tpu.iota {dimensions = array<i32: 1>} : vector<28x28xi32>
    %1759 = arith.sitofp %1758 : vector<28x28xi32> to vector<28x28xf32>
    %1760 = vector.broadcast %1757 : vector<28x1xf32> to vector<28x28xf32>
    %1761 = arith.cmpf oeq, %1755, %1760 : vector<28x28xf32>
    %cst_455 = arith.constant 2.800000e+01 : f32
    %1762 = vector.broadcast %cst_455 : f32 to vector<28x28xf32>
    %1763 = arith.select %1761, %1759, %1762 : vector<28x28xi1>, vector<28x28xf32>
    %cst_456 = arith.constant dense<0x7F800000> : vector<28xf32>
    %1764 = vector.multi_reduction <minimumf>, %1763, %cst_456 [1] : vector<28x28xf32> to vector<28xf32>
    %1765 = vector.shape_cast %1764 : vector<28xf32> to vector<28x1xf32>
    %1766 = vector.extract_strided_slice %571 {offsets = [0, 21], sizes = [28, 1], strides = [1, 1]} : vector<28x64xf32> to vector<28x1xf32>
    %1767 = arith.addf %1757, %1766 : vector<28x1xf32>
    %1768 = vector.broadcast %1767 : vector<28x1xf32> to vector<28x28xf32>
    %1769 = arith.addf %573, %1768 : vector<28x28xf32>
    %cst_457 = arith.constant dense<0xFF800000> : vector<28xf32>
    %1770 = vector.multi_reduction <maximumf>, %1769, %cst_457 [0] : vector<28x28xf32> to vector<28xf32>
    %1771 = vector.shape_cast %1770 : vector<28xf32> to vector<1x28xf32>
    %1772 = tpu.iota {dimensions = array<i32: 0>} : vector<28x28xi32>
    %1773 = arith.sitofp %1772 : vector<28x28xi32> to vector<28x28xf32>
    %1774 = vector.broadcast %1771 : vector<1x28xf32> to vector<28x28xf32>
    %1775 = arith.cmpf oeq, %1769, %1774 : vector<28x28xf32>
    %cst_458 = arith.constant 2.800000e+01 : f32
    %1776 = vector.broadcast %cst_458 : f32 to vector<28x28xf32>
    %1777 = arith.select %1775, %1773, %1776 : vector<28x28xi1>, vector<28x28xf32>
    %cst_459 = arith.constant dense<0x7F800000> : vector<28xf32>
    %1778 = vector.multi_reduction <minimumf>, %1777, %cst_459 [0] : vector<28x28xf32> to vector<28xf32>
    %1779 = vector.shape_cast %1778 : vector<28xf32> to vector<1x28xf32>
    %1780 = vector.extract_strided_slice %570 {offsets = [29, 0], sizes = [1, 28], strides = [1, 1]} : vector<64x28xf32> to vector<1x28xf32>
    %1781 = arith.addf %1771, %1780 : vector<1x28xf32>
    %1782 = vector.broadcast %1781 : vector<1x28xf32> to vector<28x28xf32>
    %1783 = arith.addf %572, %1782 : vector<28x28xf32>
    %cst_460 = arith.constant dense<0xFF800000> : vector<28xf32>
    %1784 = vector.multi_reduction <maximumf>, %1783, %cst_460 [1] : vector<28x28xf32> to vector<28xf32>
    %1785 = vector.shape_cast %1784 : vector<28xf32> to vector<28x1xf32>
    %1786 = tpu.iota {dimensions = array<i32: 1>} : vector<28x28xi32>
    %1787 = arith.sitofp %1786 : vector<28x28xi32> to vector<28x28xf32>
    %1788 = vector.broadcast %1785 : vector<28x1xf32> to vector<28x28xf32>
    %1789 = arith.cmpf oeq, %1783, %1788 : vector<28x28xf32>
    %cst_461 = arith.constant 2.800000e+01 : f32
    %1790 = vector.broadcast %cst_461 : f32 to vector<28x28xf32>
    %1791 = arith.select %1789, %1787, %1790 : vector<28x28xi1>, vector<28x28xf32>
    %cst_462 = arith.constant dense<0x7F800000> : vector<28xf32>
    %1792 = vector.multi_reduction <minimumf>, %1791, %cst_462 [1] : vector<28x28xf32> to vector<28xf32>
    %1793 = vector.shape_cast %1792 : vector<28xf32> to vector<28x1xf32>
    %1794 = vector.extract_strided_slice %571 {offsets = [0, 37], sizes = [28, 1], strides = [1, 1]} : vector<28x64xf32> to vector<28x1xf32>
    %1795 = arith.addf %1785, %1794 : vector<28x1xf32>
    %1796 = vector.broadcast %1795 : vector<28x1xf32> to vector<28x28xf32>
    %1797 = arith.addf %573, %1796 : vector<28x28xf32>
    %cst_463 = arith.constant dense<0xFF800000> : vector<28xf32>
    %1798 = vector.multi_reduction <maximumf>, %1797, %cst_463 [0] : vector<28x28xf32> to vector<28xf32>
    %1799 = vector.shape_cast %1798 : vector<28xf32> to vector<1x28xf32>
    %1800 = tpu.iota {dimensions = array<i32: 0>} : vector<28x28xi32>
    %1801 = arith.sitofp %1800 : vector<28x28xi32> to vector<28x28xf32>
    %1802 = vector.broadcast %1799 : vector<1x28xf32> to vector<28x28xf32>
    %1803 = arith.cmpf oeq, %1797, %1802 : vector<28x28xf32>
    %cst_464 = arith.constant 2.800000e+01 : f32
    %1804 = vector.broadcast %cst_464 : f32 to vector<28x28xf32>
    %1805 = arith.select %1803, %1801, %1804 : vector<28x28xi1>, vector<28x28xf32>
    %cst_465 = arith.constant dense<0x7F800000> : vector<28xf32>
    %1806 = vector.multi_reduction <minimumf>, %1805, %cst_465 [0] : vector<28x28xf32> to vector<28xf32>
    %1807 = vector.shape_cast %1806 : vector<28xf32> to vector<1x28xf32>
    %1808 = vector.extract_strided_slice %570 {offsets = [45, 0], sizes = [1, 28], strides = [1, 1]} : vector<64x28xf32> to vector<1x28xf32>
    %1809 = arith.addf %1799, %1808 : vector<1x28xf32>
    %1810 = vector.broadcast %1809 : vector<1x28xf32> to vector<28x28xf32>
    %1811 = arith.addf %572, %1810 : vector<28x28xf32>
    %cst_466 = arith.constant dense<0xFF800000> : vector<28xf32>
    %1812 = vector.multi_reduction <maximumf>, %1811, %cst_466 [1] : vector<28x28xf32> to vector<28xf32>
    %1813 = vector.shape_cast %1812 : vector<28xf32> to vector<28x1xf32>
    %1814 = tpu.iota {dimensions = array<i32: 1>} : vector<28x28xi32>
    %1815 = arith.sitofp %1814 : vector<28x28xi32> to vector<28x28xf32>
    %1816 = vector.broadcast %1813 : vector<28x1xf32> to vector<28x28xf32>
    %1817 = arith.cmpf oeq, %1811, %1816 : vector<28x28xf32>
    %cst_467 = arith.constant 2.800000e+01 : f32
    %1818 = vector.broadcast %cst_467 : f32 to vector<28x28xf32>
    %1819 = arith.select %1817, %1815, %1818 : vector<28x28xi1>, vector<28x28xf32>
    %cst_468 = arith.constant dense<0x7F800000> : vector<28xf32>
    %1820 = vector.multi_reduction <minimumf>, %1819, %cst_468 [1] : vector<28x28xf32> to vector<28xf32>
    %1821 = vector.shape_cast %1820 : vector<28xf32> to vector<28x1xf32>
    %1822 = vector.extract_strided_slice %571 {offsets = [0, 53], sizes = [28, 1], strides = [1, 1]} : vector<28x64xf32> to vector<28x1xf32>
    %1823 = arith.addf %1813, %1822 : vector<28x1xf32>
    %1824 = vector.broadcast %1823 : vector<28x1xf32> to vector<28x28xf32>
    %1825 = arith.addf %573, %1824 : vector<28x28xf32>
    %cst_469 = arith.constant dense<0xFF800000> : vector<28xf32>
    %1826 = vector.multi_reduction <maximumf>, %1825, %cst_469 [0] : vector<28x28xf32> to vector<28xf32>
    %1827 = vector.shape_cast %1826 : vector<28xf32> to vector<1x28xf32>
    %1828 = tpu.iota {dimensions = array<i32: 0>} : vector<28x28xi32>
    %1829 = arith.sitofp %1828 : vector<28x28xi32> to vector<28x28xf32>
    %1830 = vector.broadcast %1827 : vector<1x28xf32> to vector<28x28xf32>
    %1831 = arith.cmpf oeq, %1825, %1830 : vector<28x28xf32>
    %cst_470 = arith.constant 2.800000e+01 : f32
    %1832 = vector.broadcast %cst_470 : f32 to vector<28x28xf32>
    %1833 = arith.select %1831, %1829, %1832 : vector<28x28xi1>, vector<28x28xf32>
    %cst_471 = arith.constant dense<0x7F800000> : vector<28xf32>
    %1834 = vector.multi_reduction <minimumf>, %1833, %cst_471 [0] : vector<28x28xf32> to vector<28xf32>
    %1835 = vector.shape_cast %1834 : vector<28xf32> to vector<1x28xf32>
    %1836 = vector.extract_strided_slice %570 {offsets = [61, 0], sizes = [1, 28], strides = [1, 1]} : vector<64x28xf32> to vector<1x28xf32>
    %1837 = arith.addf %1827, %1836 : vector<1x28xf32>
    %1838 = vector.extract_strided_slice %572 {offsets = [27, 0], sizes = [1, 28], strides = [1, 1]} : vector<28x28xf32> to vector<1x28xf32>
    %1839 = arith.addf %1837, %1838 : vector<1x28xf32>
    %cst_472 = arith.constant dense<0xFF800000> : vector<1xf32>
    %1840 = vector.multi_reduction <maximumf>, %1839, %cst_472 [1] : vector<1x28xf32> to vector<1xf32>
    %1841 = vector.shape_cast %1840 : vector<1xf32> to vector<1x1xf32>
    %1842 = tpu.iota {dimensions = array<i32: 1>} : vector<1x28xi32>
    %1843 = arith.sitofp %1842 : vector<1x28xi32> to vector<1x28xf32>
    %1844 = vector.broadcast %1841 : vector<1x1xf32> to vector<1x28xf32>
    %1845 = arith.cmpf oeq, %1839, %1844 : vector<1x28xf32>
    %cst_473 = arith.constant 2.800000e+01 : f32
    %1846 = vector.broadcast %cst_473 : f32 to vector<1x28xf32>
    %1847 = arith.select %1845, %1843, %1846 : vector<1x28xi1>, vector<1x28xf32>
    %cst_474 = arith.constant dense<0x7F800000> : vector<1xf32>
    %1848 = vector.multi_reduction <minimumf>, %1847, %cst_474 [1] : vector<1x28xf32> to vector<1xf32>
    %1849 = vector.shape_cast %1848 : vector<1xf32> to vector<1x1xf32>
    %c7_i32_475 = arith.constant 7 : i32
    %1850 = vector.broadcast %c7_i32_475 : i32 to vector<1x128xi32>
    %1851 = arith.cmpi eq, %578, %1850 : vector<1x128xi32>
    %cst_476 = arith.constant 0.000000e+00 : f32
    %1852 = vector.broadcast %cst_476 : f32 to vector<1x128xf32>
    %1853 = vector.shape_cast %1849 : vector<1x1xf32> to vector<1x1xf32>
    %1854 = vector.broadcast %1853 : vector<1x1xf32> to vector<1x128xf32>
    %1855 = arith.select %1851, %1854, %1852 : vector<1x128xi1>, vector<1x128xf32>
    %1856 = vector.broadcast %1849 : vector<1x1xf32> to vector<1x28xf32>
    %1857 = arith.cmpf oeq, %575, %1856 : vector<1x28xf32>
    %cst_477 = arith.constant 0.000000e+00 : f32
    %1858 = vector.broadcast %cst_477 : f32 to vector<1x28xf32>
    %1859 = arith.select %1857, %1835, %1858 : vector<1x28xi1>, vector<1x28xf32>
    %cst_478 = arith.constant dense<0.000000e+00> : vector<1xf32>
    %1860 = vector.multi_reduction <add>, %1859, %cst_478 [1] : vector<1x28xf32> to vector<1xf32>
    %1861 = vector.shape_cast %1860 : vector<1xf32> to vector<1x1xf32>
    %c6_i32_479 = arith.constant 6 : i32
    %1862 = vector.broadcast %c6_i32_479 : i32 to vector<1x128xi32>
    %1863 = arith.cmpi eq, %578, %1862 : vector<1x128xi32>
    %1864 = vector.shape_cast %1861 : vector<1x1xf32> to vector<1x1xf32>
    %1865 = vector.broadcast %1864 : vector<1x1xf32> to vector<1x128xf32>
    %1866 = arith.select %1863, %1865, %1855 : vector<1x128xi1>, vector<1x128xf32>
    %1867 = vector.broadcast %1861 : vector<1x1xf32> to vector<28x1xf32>
    %1868 = arith.cmpf oeq, %577, %1867 : vector<28x1xf32>
    %cst_480 = arith.constant 0.000000e+00 : f32
    %1869 = vector.broadcast %cst_480 : f32 to vector<28x1xf32>
    %1870 = arith.select %1868, %1821, %1869 : vector<28x1xi1>, vector<28x1xf32>
    %cst_481 = arith.constant dense<0.000000e+00> : vector<1xf32>
    %1871 = vector.multi_reduction <add>, %1870, %cst_481 [0] : vector<28x1xf32> to vector<1xf32>
    %1872 = vector.shape_cast %1871 : vector<1xf32> to vector<1x1xf32>
    %c5_i32_482 = arith.constant 5 : i32
    %1873 = vector.broadcast %c5_i32_482 : i32 to vector<1x128xi32>
    %1874 = arith.cmpi eq, %578, %1873 : vector<1x128xi32>
    %1875 = vector.shape_cast %1872 : vector<1x1xf32> to vector<1x1xf32>
    %1876 = vector.broadcast %1875 : vector<1x1xf32> to vector<1x128xf32>
    %1877 = arith.select %1874, %1876, %1866 : vector<1x128xi1>, vector<1x128xf32>
    %1878 = vector.broadcast %1872 : vector<1x1xf32> to vector<1x28xf32>
    %1879 = arith.cmpf oeq, %575, %1878 : vector<1x28xf32>
    %cst_483 = arith.constant 0.000000e+00 : f32
    %1880 = vector.broadcast %cst_483 : f32 to vector<1x28xf32>
    %1881 = arith.select %1879, %1807, %1880 : vector<1x28xi1>, vector<1x28xf32>
    %cst_484 = arith.constant dense<0.000000e+00> : vector<1xf32>
    %1882 = vector.multi_reduction <add>, %1881, %cst_484 [1] : vector<1x28xf32> to vector<1xf32>
    %1883 = vector.shape_cast %1882 : vector<1xf32> to vector<1x1xf32>
    %c4_i32_485 = arith.constant 4 : i32
    %1884 = vector.broadcast %c4_i32_485 : i32 to vector<1x128xi32>
    %1885 = arith.cmpi eq, %578, %1884 : vector<1x128xi32>
    %1886 = vector.shape_cast %1883 : vector<1x1xf32> to vector<1x1xf32>
    %1887 = vector.broadcast %1886 : vector<1x1xf32> to vector<1x128xf32>
    %1888 = arith.select %1885, %1887, %1877 : vector<1x128xi1>, vector<1x128xf32>
    %1889 = vector.broadcast %1883 : vector<1x1xf32> to vector<28x1xf32>
    %1890 = arith.cmpf oeq, %577, %1889 : vector<28x1xf32>
    %cst_486 = arith.constant 0.000000e+00 : f32
    %1891 = vector.broadcast %cst_486 : f32 to vector<28x1xf32>
    %1892 = arith.select %1890, %1793, %1891 : vector<28x1xi1>, vector<28x1xf32>
    %cst_487 = arith.constant dense<0.000000e+00> : vector<1xf32>
    %1893 = vector.multi_reduction <add>, %1892, %cst_487 [0] : vector<28x1xf32> to vector<1xf32>
    %1894 = vector.shape_cast %1893 : vector<1xf32> to vector<1x1xf32>
    %c3_i32_488 = arith.constant 3 : i32
    %1895 = vector.broadcast %c3_i32_488 : i32 to vector<1x128xi32>
    %1896 = arith.cmpi eq, %578, %1895 : vector<1x128xi32>
    %1897 = vector.shape_cast %1894 : vector<1x1xf32> to vector<1x1xf32>
    %1898 = vector.broadcast %1897 : vector<1x1xf32> to vector<1x128xf32>
    %1899 = arith.select %1896, %1898, %1888 : vector<1x128xi1>, vector<1x128xf32>
    %1900 = vector.broadcast %1894 : vector<1x1xf32> to vector<1x28xf32>
    %1901 = arith.cmpf oeq, %575, %1900 : vector<1x28xf32>
    %cst_489 = arith.constant 0.000000e+00 : f32
    %1902 = vector.broadcast %cst_489 : f32 to vector<1x28xf32>
    %1903 = arith.select %1901, %1779, %1902 : vector<1x28xi1>, vector<1x28xf32>
    %cst_490 = arith.constant dense<0.000000e+00> : vector<1xf32>
    %1904 = vector.multi_reduction <add>, %1903, %cst_490 [1] : vector<1x28xf32> to vector<1xf32>
    %1905 = vector.shape_cast %1904 : vector<1xf32> to vector<1x1xf32>
    %c2_i32_491 = arith.constant 2 : i32
    %1906 = vector.broadcast %c2_i32_491 : i32 to vector<1x128xi32>
    %1907 = arith.cmpi eq, %578, %1906 : vector<1x128xi32>
    %1908 = vector.shape_cast %1905 : vector<1x1xf32> to vector<1x1xf32>
    %1909 = vector.broadcast %1908 : vector<1x1xf32> to vector<1x128xf32>
    %1910 = arith.select %1907, %1909, %1899 : vector<1x128xi1>, vector<1x128xf32>
    %1911 = vector.broadcast %1905 : vector<1x1xf32> to vector<28x1xf32>
    %1912 = arith.cmpf oeq, %577, %1911 : vector<28x1xf32>
    %cst_492 = arith.constant 0.000000e+00 : f32
    %1913 = vector.broadcast %cst_492 : f32 to vector<28x1xf32>
    %1914 = arith.select %1912, %1765, %1913 : vector<28x1xi1>, vector<28x1xf32>
    %cst_493 = arith.constant dense<0.000000e+00> : vector<1xf32>
    %1915 = vector.multi_reduction <add>, %1914, %cst_493 [0] : vector<28x1xf32> to vector<1xf32>
    %1916 = vector.shape_cast %1915 : vector<1xf32> to vector<1x1xf32>
    %c1_i32_494 = arith.constant 1 : i32
    %1917 = vector.broadcast %c1_i32_494 : i32 to vector<1x128xi32>
    %1918 = arith.cmpi eq, %578, %1917 : vector<1x128xi32>
    %1919 = vector.shape_cast %1916 : vector<1x1xf32> to vector<1x1xf32>
    %1920 = vector.broadcast %1919 : vector<1x1xf32> to vector<1x128xf32>
    %1921 = arith.select %1918, %1920, %1910 : vector<1x128xi1>, vector<1x128xf32>
    %1922 = vector.broadcast %1916 : vector<1x1xf32> to vector<1x28xf32>
    %1923 = arith.cmpf oeq, %575, %1922 : vector<1x28xf32>
    %cst_495 = arith.constant 0.000000e+00 : f32
    %1924 = vector.broadcast %cst_495 : f32 to vector<1x28xf32>
    %1925 = arith.select %1923, %1751, %1924 : vector<1x28xi1>, vector<1x28xf32>
    %cst_496 = arith.constant dense<0.000000e+00> : vector<1xf32>
    %1926 = vector.multi_reduction <add>, %1925, %cst_496 [1] : vector<1x28xf32> to vector<1xf32>
    %1927 = vector.shape_cast %1926 : vector<1xf32> to vector<1x1xf32>
    %c0_i32_497 = arith.constant 0 : i32
    %1928 = vector.broadcast %c0_i32_497 : i32 to vector<1x128xi32>
    %1929 = arith.cmpi eq, %578, %1928 : vector<1x128xi32>
    %1930 = vector.shape_cast %1927 : vector<1x1xf32> to vector<1x1xf32>
    %1931 = vector.broadcast %1930 : vector<1x1xf32> to vector<1x128xf32>
    %1932 = arith.select %1929, %1931, %1921 : vector<1x128xi1>, vector<1x128xf32>
    %1933 = vector.broadcast %1927 : vector<1x1xf32> to vector<28x1xf32>
    %1934 = arith.cmpf oeq, %577, %1933 : vector<28x1xf32>
    %cst_498 = arith.constant 0.000000e+00 : f32
    %1935 = vector.broadcast %cst_498 : f32 to vector<28x1xf32>
    %1936 = arith.select %1934, %1737, %1935 : vector<28x1xi1>, vector<28x1xf32>
    %cst_499 = arith.constant dense<0.000000e+00> : vector<1xf32>
    %1937 = vector.multi_reduction <add>, %1936, %cst_499 [0] : vector<28x1xf32> to vector<1xf32>
    %1938 = vector.shape_cast %1937 : vector<1xf32> to vector<1x1xf32>
    %c8_i32_500 = arith.constant 8 : i32
    %1939 = vector.broadcast %c8_i32_500 : i32 to vector<1x128xi32>
    %1940 = arith.cmpi eq, %578, %1939 : vector<1x128xi32>
    %1941 = vector.shape_cast %1841 : vector<1x1xf32> to vector<1x1xf32>
    %1942 = vector.broadcast %1941 : vector<1x1xf32> to vector<1x128xf32>
    %1943 = arith.select %1940, %1942, %1932 : vector<1x128xi1>, vector<1x128xf32>
    %c9_i32_501 = arith.constant 9 : i32
    %1944 = vector.broadcast %c9_i32_501 : i32 to vector<1x128xi32>
    %1945 = arith.cmpi eq, %578, %1944 : vector<1x128xi32>
    %1946 = vector.shape_cast %1938 : vector<1x1xf32> to vector<1x1xf32>
    %1947 = vector.broadcast %1946 : vector<1x1xf32> to vector<1x128xf32>
    %1948 = arith.select %1945, %1947, %1943 : vector<1x128xi1>, vector<1x128xf32>
    %c5_i32_502 = arith.constant 5 : i32
    %1949 = vector.broadcast %c5_i32_502 : i32 to vector<8x128xi32>
    %1950 = arith.cmpi eq, %579, %1949 : vector<8x128xi32>
    %1951 = vector.shape_cast %1948 : vector<1x128xf32> to vector<1x128xf32>
    %1952 = vector.broadcast %1951 : vector<1x128xf32> to vector<8x128xf32>
    %1953 = arith.select %1950, %1952, %1725 : vector<8x128xi1>, vector<8x128xf32>
    %1954 = vector.broadcast %584 : vector<1x28xf32> to vector<28x28xf32>
    %1955 = arith.addf %572, %1954 : vector<28x28xf32>
    %cst_503 = arith.constant dense<0xFF800000> : vector<28xf32>
    %1956 = vector.multi_reduction <maximumf>, %1955, %cst_503 [1] : vector<28x28xf32> to vector<28xf32>
    %1957 = vector.shape_cast %1956 : vector<28xf32> to vector<28x1xf32>
    %1958 = tpu.iota {dimensions = array<i32: 1>} : vector<28x28xi32>
    %1959 = arith.sitofp %1958 : vector<28x28xi32> to vector<28x28xf32>
    %1960 = vector.broadcast %1957 : vector<28x1xf32> to vector<28x28xf32>
    %1961 = arith.cmpf oeq, %1955, %1960 : vector<28x28xf32>
    %cst_504 = arith.constant 2.800000e+01 : f32
    %1962 = vector.broadcast %cst_504 : f32 to vector<28x28xf32>
    %1963 = arith.select %1961, %1959, %1962 : vector<28x28xi1>, vector<28x28xf32>
    %cst_505 = arith.constant dense<0x7F800000> : vector<28xf32>
    %1964 = vector.multi_reduction <minimumf>, %1963, %cst_505 [1] : vector<28x28xf32> to vector<28xf32>
    %1965 = vector.shape_cast %1964 : vector<28xf32> to vector<28x1xf32>
    %1966 = vector.extract_strided_slice %571 {offsets = [0, 6], sizes = [28, 1], strides = [1, 1]} : vector<28x64xf32> to vector<28x1xf32>
    %1967 = arith.addf %1957, %1966 : vector<28x1xf32>
    %1968 = vector.broadcast %1967 : vector<28x1xf32> to vector<28x28xf32>
    %1969 = arith.addf %573, %1968 : vector<28x28xf32>
    %cst_506 = arith.constant dense<0xFF800000> : vector<28xf32>
    %1970 = vector.multi_reduction <maximumf>, %1969, %cst_506 [0] : vector<28x28xf32> to vector<28xf32>
    %1971 = vector.shape_cast %1970 : vector<28xf32> to vector<1x28xf32>
    %1972 = tpu.iota {dimensions = array<i32: 0>} : vector<28x28xi32>
    %1973 = arith.sitofp %1972 : vector<28x28xi32> to vector<28x28xf32>
    %1974 = vector.broadcast %1971 : vector<1x28xf32> to vector<28x28xf32>
    %1975 = arith.cmpf oeq, %1969, %1974 : vector<28x28xf32>
    %cst_507 = arith.constant 2.800000e+01 : f32
    %1976 = vector.broadcast %cst_507 : f32 to vector<28x28xf32>
    %1977 = arith.select %1975, %1973, %1976 : vector<28x28xi1>, vector<28x28xf32>
    %cst_508 = arith.constant dense<0x7F800000> : vector<28xf32>
    %1978 = vector.multi_reduction <minimumf>, %1977, %cst_508 [0] : vector<28x28xf32> to vector<28xf32>
    %1979 = vector.shape_cast %1978 : vector<28xf32> to vector<1x28xf32>
    %1980 = vector.extract_strided_slice %570 {offsets = [14, 0], sizes = [1, 28], strides = [1, 1]} : vector<64x28xf32> to vector<1x28xf32>
    %1981 = arith.addf %1971, %1980 : vector<1x28xf32>
    %1982 = vector.broadcast %1981 : vector<1x28xf32> to vector<28x28xf32>
    %1983 = arith.addf %572, %1982 : vector<28x28xf32>
    %cst_509 = arith.constant dense<0xFF800000> : vector<28xf32>
    %1984 = vector.multi_reduction <maximumf>, %1983, %cst_509 [1] : vector<28x28xf32> to vector<28xf32>
    %1985 = vector.shape_cast %1984 : vector<28xf32> to vector<28x1xf32>
    %1986 = tpu.iota {dimensions = array<i32: 1>} : vector<28x28xi32>
    %1987 = arith.sitofp %1986 : vector<28x28xi32> to vector<28x28xf32>
    %1988 = vector.broadcast %1985 : vector<28x1xf32> to vector<28x28xf32>
    %1989 = arith.cmpf oeq, %1983, %1988 : vector<28x28xf32>
    %cst_510 = arith.constant 2.800000e+01 : f32
    %1990 = vector.broadcast %cst_510 : f32 to vector<28x28xf32>
    %1991 = arith.select %1989, %1987, %1990 : vector<28x28xi1>, vector<28x28xf32>
    %cst_511 = arith.constant dense<0x7F800000> : vector<28xf32>
    %1992 = vector.multi_reduction <minimumf>, %1991, %cst_511 [1] : vector<28x28xf32> to vector<28xf32>
    %1993 = vector.shape_cast %1992 : vector<28xf32> to vector<28x1xf32>
    %1994 = vector.extract_strided_slice %571 {offsets = [0, 22], sizes = [28, 1], strides = [1, 1]} : vector<28x64xf32> to vector<28x1xf32>
    %1995 = arith.addf %1985, %1994 : vector<28x1xf32>
    %1996 = vector.broadcast %1995 : vector<28x1xf32> to vector<28x28xf32>
    %1997 = arith.addf %573, %1996 : vector<28x28xf32>
    %cst_512 = arith.constant dense<0xFF800000> : vector<28xf32>
    %1998 = vector.multi_reduction <maximumf>, %1997, %cst_512 [0] : vector<28x28xf32> to vector<28xf32>
    %1999 = vector.shape_cast %1998 : vector<28xf32> to vector<1x28xf32>
    %2000 = tpu.iota {dimensions = array<i32: 0>} : vector<28x28xi32>
    %2001 = arith.sitofp %2000 : vector<28x28xi32> to vector<28x28xf32>
    %2002 = vector.broadcast %1999 : vector<1x28xf32> to vector<28x28xf32>
    %2003 = arith.cmpf oeq, %1997, %2002 : vector<28x28xf32>
    %cst_513 = arith.constant 2.800000e+01 : f32
    %2004 = vector.broadcast %cst_513 : f32 to vector<28x28xf32>
    %2005 = arith.select %2003, %2001, %2004 : vector<28x28xi1>, vector<28x28xf32>
    %cst_514 = arith.constant dense<0x7F800000> : vector<28xf32>
    %2006 = vector.multi_reduction <minimumf>, %2005, %cst_514 [0] : vector<28x28xf32> to vector<28xf32>
    %2007 = vector.shape_cast %2006 : vector<28xf32> to vector<1x28xf32>
    %2008 = vector.extract_strided_slice %570 {offsets = [30, 0], sizes = [1, 28], strides = [1, 1]} : vector<64x28xf32> to vector<1x28xf32>
    %2009 = arith.addf %1999, %2008 : vector<1x28xf32>
    %2010 = vector.broadcast %2009 : vector<1x28xf32> to vector<28x28xf32>
    %2011 = arith.addf %572, %2010 : vector<28x28xf32>
    %cst_515 = arith.constant dense<0xFF800000> : vector<28xf32>
    %2012 = vector.multi_reduction <maximumf>, %2011, %cst_515 [1] : vector<28x28xf32> to vector<28xf32>
    %2013 = vector.shape_cast %2012 : vector<28xf32> to vector<28x1xf32>
    %2014 = tpu.iota {dimensions = array<i32: 1>} : vector<28x28xi32>
    %2015 = arith.sitofp %2014 : vector<28x28xi32> to vector<28x28xf32>
    %2016 = vector.broadcast %2013 : vector<28x1xf32> to vector<28x28xf32>
    %2017 = arith.cmpf oeq, %2011, %2016 : vector<28x28xf32>
    %cst_516 = arith.constant 2.800000e+01 : f32
    %2018 = vector.broadcast %cst_516 : f32 to vector<28x28xf32>
    %2019 = arith.select %2017, %2015, %2018 : vector<28x28xi1>, vector<28x28xf32>
    %cst_517 = arith.constant dense<0x7F800000> : vector<28xf32>
    %2020 = vector.multi_reduction <minimumf>, %2019, %cst_517 [1] : vector<28x28xf32> to vector<28xf32>
    %2021 = vector.shape_cast %2020 : vector<28xf32> to vector<28x1xf32>
    %2022 = vector.extract_strided_slice %571 {offsets = [0, 38], sizes = [28, 1], strides = [1, 1]} : vector<28x64xf32> to vector<28x1xf32>
    %2023 = arith.addf %2013, %2022 : vector<28x1xf32>
    %2024 = vector.broadcast %2023 : vector<28x1xf32> to vector<28x28xf32>
    %2025 = arith.addf %573, %2024 : vector<28x28xf32>
    %cst_518 = arith.constant dense<0xFF800000> : vector<28xf32>
    %2026 = vector.multi_reduction <maximumf>, %2025, %cst_518 [0] : vector<28x28xf32> to vector<28xf32>
    %2027 = vector.shape_cast %2026 : vector<28xf32> to vector<1x28xf32>
    %2028 = tpu.iota {dimensions = array<i32: 0>} : vector<28x28xi32>
    %2029 = arith.sitofp %2028 : vector<28x28xi32> to vector<28x28xf32>
    %2030 = vector.broadcast %2027 : vector<1x28xf32> to vector<28x28xf32>
    %2031 = arith.cmpf oeq, %2025, %2030 : vector<28x28xf32>
    %cst_519 = arith.constant 2.800000e+01 : f32
    %2032 = vector.broadcast %cst_519 : f32 to vector<28x28xf32>
    %2033 = arith.select %2031, %2029, %2032 : vector<28x28xi1>, vector<28x28xf32>
    %cst_520 = arith.constant dense<0x7F800000> : vector<28xf32>
    %2034 = vector.multi_reduction <minimumf>, %2033, %cst_520 [0] : vector<28x28xf32> to vector<28xf32>
    %2035 = vector.shape_cast %2034 : vector<28xf32> to vector<1x28xf32>
    %2036 = vector.extract_strided_slice %570 {offsets = [46, 0], sizes = [1, 28], strides = [1, 1]} : vector<64x28xf32> to vector<1x28xf32>
    %2037 = arith.addf %2027, %2036 : vector<1x28xf32>
    %2038 = vector.broadcast %2037 : vector<1x28xf32> to vector<28x28xf32>
    %2039 = arith.addf %572, %2038 : vector<28x28xf32>
    %cst_521 = arith.constant dense<0xFF800000> : vector<28xf32>
    %2040 = vector.multi_reduction <maximumf>, %2039, %cst_521 [1] : vector<28x28xf32> to vector<28xf32>
    %2041 = vector.shape_cast %2040 : vector<28xf32> to vector<28x1xf32>
    %2042 = tpu.iota {dimensions = array<i32: 1>} : vector<28x28xi32>
    %2043 = arith.sitofp %2042 : vector<28x28xi32> to vector<28x28xf32>
    %2044 = vector.broadcast %2041 : vector<28x1xf32> to vector<28x28xf32>
    %2045 = arith.cmpf oeq, %2039, %2044 : vector<28x28xf32>
    %cst_522 = arith.constant 2.800000e+01 : f32
    %2046 = vector.broadcast %cst_522 : f32 to vector<28x28xf32>
    %2047 = arith.select %2045, %2043, %2046 : vector<28x28xi1>, vector<28x28xf32>
    %cst_523 = arith.constant dense<0x7F800000> : vector<28xf32>
    %2048 = vector.multi_reduction <minimumf>, %2047, %cst_523 [1] : vector<28x28xf32> to vector<28xf32>
    %2049 = vector.shape_cast %2048 : vector<28xf32> to vector<28x1xf32>
    %2050 = vector.extract_strided_slice %571 {offsets = [0, 54], sizes = [28, 1], strides = [1, 1]} : vector<28x64xf32> to vector<28x1xf32>
    %2051 = arith.addf %2041, %2050 : vector<28x1xf32>
    %2052 = vector.broadcast %2051 : vector<28x1xf32> to vector<28x28xf32>
    %2053 = arith.addf %573, %2052 : vector<28x28xf32>
    %cst_524 = arith.constant dense<0xFF800000> : vector<28xf32>
    %2054 = vector.multi_reduction <maximumf>, %2053, %cst_524 [0] : vector<28x28xf32> to vector<28xf32>
    %2055 = vector.shape_cast %2054 : vector<28xf32> to vector<1x28xf32>
    %2056 = tpu.iota {dimensions = array<i32: 0>} : vector<28x28xi32>
    %2057 = arith.sitofp %2056 : vector<28x28xi32> to vector<28x28xf32>
    %2058 = vector.broadcast %2055 : vector<1x28xf32> to vector<28x28xf32>
    %2059 = arith.cmpf oeq, %2053, %2058 : vector<28x28xf32>
    %cst_525 = arith.constant 2.800000e+01 : f32
    %2060 = vector.broadcast %cst_525 : f32 to vector<28x28xf32>
    %2061 = arith.select %2059, %2057, %2060 : vector<28x28xi1>, vector<28x28xf32>
    %cst_526 = arith.constant dense<0x7F800000> : vector<28xf32>
    %2062 = vector.multi_reduction <minimumf>, %2061, %cst_526 [0] : vector<28x28xf32> to vector<28xf32>
    %2063 = vector.shape_cast %2062 : vector<28xf32> to vector<1x28xf32>
    %2064 = vector.extract_strided_slice %570 {offsets = [62, 0], sizes = [1, 28], strides = [1, 1]} : vector<64x28xf32> to vector<1x28xf32>
    %2065 = arith.addf %2055, %2064 : vector<1x28xf32>
    %2066 = vector.extract_strided_slice %572 {offsets = [27, 0], sizes = [1, 28], strides = [1, 1]} : vector<28x28xf32> to vector<1x28xf32>
    %2067 = arith.addf %2065, %2066 : vector<1x28xf32>
    %cst_527 = arith.constant dense<0xFF800000> : vector<1xf32>
    %2068 = vector.multi_reduction <maximumf>, %2067, %cst_527 [1] : vector<1x28xf32> to vector<1xf32>
    %2069 = vector.shape_cast %2068 : vector<1xf32> to vector<1x1xf32>
    %2070 = tpu.iota {dimensions = array<i32: 1>} : vector<1x28xi32>
    %2071 = arith.sitofp %2070 : vector<1x28xi32> to vector<1x28xf32>
    %2072 = vector.broadcast %2069 : vector<1x1xf32> to vector<1x28xf32>
    %2073 = arith.cmpf oeq, %2067, %2072 : vector<1x28xf32>
    %cst_528 = arith.constant 2.800000e+01 : f32
    %2074 = vector.broadcast %cst_528 : f32 to vector<1x28xf32>
    %2075 = arith.select %2073, %2071, %2074 : vector<1x28xi1>, vector<1x28xf32>
    %cst_529 = arith.constant dense<0x7F800000> : vector<1xf32>
    %2076 = vector.multi_reduction <minimumf>, %2075, %cst_529 [1] : vector<1x28xf32> to vector<1xf32>
    %2077 = vector.shape_cast %2076 : vector<1xf32> to vector<1x1xf32>
    %c7_i32_530 = arith.constant 7 : i32
    %2078 = vector.broadcast %c7_i32_530 : i32 to vector<1x128xi32>
    %2079 = arith.cmpi eq, %578, %2078 : vector<1x128xi32>
    %cst_531 = arith.constant 0.000000e+00 : f32
    %2080 = vector.broadcast %cst_531 : f32 to vector<1x128xf32>
    %2081 = vector.shape_cast %2077 : vector<1x1xf32> to vector<1x1xf32>
    %2082 = vector.broadcast %2081 : vector<1x1xf32> to vector<1x128xf32>
    %2083 = arith.select %2079, %2082, %2080 : vector<1x128xi1>, vector<1x128xf32>
    %2084 = vector.broadcast %2077 : vector<1x1xf32> to vector<1x28xf32>
    %2085 = arith.cmpf oeq, %575, %2084 : vector<1x28xf32>
    %cst_532 = arith.constant 0.000000e+00 : f32
    %2086 = vector.broadcast %cst_532 : f32 to vector<1x28xf32>
    %2087 = arith.select %2085, %2063, %2086 : vector<1x28xi1>, vector<1x28xf32>
    %cst_533 = arith.constant dense<0.000000e+00> : vector<1xf32>
    %2088 = vector.multi_reduction <add>, %2087, %cst_533 [1] : vector<1x28xf32> to vector<1xf32>
    %2089 = vector.shape_cast %2088 : vector<1xf32> to vector<1x1xf32>
    %c6_i32_534 = arith.constant 6 : i32
    %2090 = vector.broadcast %c6_i32_534 : i32 to vector<1x128xi32>
    %2091 = arith.cmpi eq, %578, %2090 : vector<1x128xi32>
    %2092 = vector.shape_cast %2089 : vector<1x1xf32> to vector<1x1xf32>
    %2093 = vector.broadcast %2092 : vector<1x1xf32> to vector<1x128xf32>
    %2094 = arith.select %2091, %2093, %2083 : vector<1x128xi1>, vector<1x128xf32>
    %2095 = vector.broadcast %2089 : vector<1x1xf32> to vector<28x1xf32>
    %2096 = arith.cmpf oeq, %577, %2095 : vector<28x1xf32>
    %cst_535 = arith.constant 0.000000e+00 : f32
    %2097 = vector.broadcast %cst_535 : f32 to vector<28x1xf32>
    %2098 = arith.select %2096, %2049, %2097 : vector<28x1xi1>, vector<28x1xf32>
    %cst_536 = arith.constant dense<0.000000e+00> : vector<1xf32>
    %2099 = vector.multi_reduction <add>, %2098, %cst_536 [0] : vector<28x1xf32> to vector<1xf32>
    %2100 = vector.shape_cast %2099 : vector<1xf32> to vector<1x1xf32>
    %c5_i32_537 = arith.constant 5 : i32
    %2101 = vector.broadcast %c5_i32_537 : i32 to vector<1x128xi32>
    %2102 = arith.cmpi eq, %578, %2101 : vector<1x128xi32>
    %2103 = vector.shape_cast %2100 : vector<1x1xf32> to vector<1x1xf32>
    %2104 = vector.broadcast %2103 : vector<1x1xf32> to vector<1x128xf32>
    %2105 = arith.select %2102, %2104, %2094 : vector<1x128xi1>, vector<1x128xf32>
    %2106 = vector.broadcast %2100 : vector<1x1xf32> to vector<1x28xf32>
    %2107 = arith.cmpf oeq, %575, %2106 : vector<1x28xf32>
    %cst_538 = arith.constant 0.000000e+00 : f32
    %2108 = vector.broadcast %cst_538 : f32 to vector<1x28xf32>
    %2109 = arith.select %2107, %2035, %2108 : vector<1x28xi1>, vector<1x28xf32>
    %cst_539 = arith.constant dense<0.000000e+00> : vector<1xf32>
    %2110 = vector.multi_reduction <add>, %2109, %cst_539 [1] : vector<1x28xf32> to vector<1xf32>
    %2111 = vector.shape_cast %2110 : vector<1xf32> to vector<1x1xf32>
    %c4_i32_540 = arith.constant 4 : i32
    %2112 = vector.broadcast %c4_i32_540 : i32 to vector<1x128xi32>
    %2113 = arith.cmpi eq, %578, %2112 : vector<1x128xi32>
    %2114 = vector.shape_cast %2111 : vector<1x1xf32> to vector<1x1xf32>
    %2115 = vector.broadcast %2114 : vector<1x1xf32> to vector<1x128xf32>
    %2116 = arith.select %2113, %2115, %2105 : vector<1x128xi1>, vector<1x128xf32>
    %2117 = vector.broadcast %2111 : vector<1x1xf32> to vector<28x1xf32>
    %2118 = arith.cmpf oeq, %577, %2117 : vector<28x1xf32>
    %cst_541 = arith.constant 0.000000e+00 : f32
    %2119 = vector.broadcast %cst_541 : f32 to vector<28x1xf32>
    %2120 = arith.select %2118, %2021, %2119 : vector<28x1xi1>, vector<28x1xf32>
    %cst_542 = arith.constant dense<0.000000e+00> : vector<1xf32>
    %2121 = vector.multi_reduction <add>, %2120, %cst_542 [0] : vector<28x1xf32> to vector<1xf32>
    %2122 = vector.shape_cast %2121 : vector<1xf32> to vector<1x1xf32>
    %c3_i32_543 = arith.constant 3 : i32
    %2123 = vector.broadcast %c3_i32_543 : i32 to vector<1x128xi32>
    %2124 = arith.cmpi eq, %578, %2123 : vector<1x128xi32>
    %2125 = vector.shape_cast %2122 : vector<1x1xf32> to vector<1x1xf32>
    %2126 = vector.broadcast %2125 : vector<1x1xf32> to vector<1x128xf32>
    %2127 = arith.select %2124, %2126, %2116 : vector<1x128xi1>, vector<1x128xf32>
    %2128 = vector.broadcast %2122 : vector<1x1xf32> to vector<1x28xf32>
    %2129 = arith.cmpf oeq, %575, %2128 : vector<1x28xf32>
    %cst_544 = arith.constant 0.000000e+00 : f32
    %2130 = vector.broadcast %cst_544 : f32 to vector<1x28xf32>
    %2131 = arith.select %2129, %2007, %2130 : vector<1x28xi1>, vector<1x28xf32>
    %cst_545 = arith.constant dense<0.000000e+00> : vector<1xf32>
    %2132 = vector.multi_reduction <add>, %2131, %cst_545 [1] : vector<1x28xf32> to vector<1xf32>
    %2133 = vector.shape_cast %2132 : vector<1xf32> to vector<1x1xf32>
    %c2_i32_546 = arith.constant 2 : i32
    %2134 = vector.broadcast %c2_i32_546 : i32 to vector<1x128xi32>
    %2135 = arith.cmpi eq, %578, %2134 : vector<1x128xi32>
    %2136 = vector.shape_cast %2133 : vector<1x1xf32> to vector<1x1xf32>
    %2137 = vector.broadcast %2136 : vector<1x1xf32> to vector<1x128xf32>
    %2138 = arith.select %2135, %2137, %2127 : vector<1x128xi1>, vector<1x128xf32>
    %2139 = vector.broadcast %2133 : vector<1x1xf32> to vector<28x1xf32>
    %2140 = arith.cmpf oeq, %577, %2139 : vector<28x1xf32>
    %cst_547 = arith.constant 0.000000e+00 : f32
    %2141 = vector.broadcast %cst_547 : f32 to vector<28x1xf32>
    %2142 = arith.select %2140, %1993, %2141 : vector<28x1xi1>, vector<28x1xf32>
    %cst_548 = arith.constant dense<0.000000e+00> : vector<1xf32>
    %2143 = vector.multi_reduction <add>, %2142, %cst_548 [0] : vector<28x1xf32> to vector<1xf32>
    %2144 = vector.shape_cast %2143 : vector<1xf32> to vector<1x1xf32>
    %c1_i32_549 = arith.constant 1 : i32
    %2145 = vector.broadcast %c1_i32_549 : i32 to vector<1x128xi32>
    %2146 = arith.cmpi eq, %578, %2145 : vector<1x128xi32>
    %2147 = vector.shape_cast %2144 : vector<1x1xf32> to vector<1x1xf32>
    %2148 = vector.broadcast %2147 : vector<1x1xf32> to vector<1x128xf32>
    %2149 = arith.select %2146, %2148, %2138 : vector<1x128xi1>, vector<1x128xf32>
    %2150 = vector.broadcast %2144 : vector<1x1xf32> to vector<1x28xf32>
    %2151 = arith.cmpf oeq, %575, %2150 : vector<1x28xf32>
    %cst_550 = arith.constant 0.000000e+00 : f32
    %2152 = vector.broadcast %cst_550 : f32 to vector<1x28xf32>
    %2153 = arith.select %2151, %1979, %2152 : vector<1x28xi1>, vector<1x28xf32>
    %cst_551 = arith.constant dense<0.000000e+00> : vector<1xf32>
    %2154 = vector.multi_reduction <add>, %2153, %cst_551 [1] : vector<1x28xf32> to vector<1xf32>
    %2155 = vector.shape_cast %2154 : vector<1xf32> to vector<1x1xf32>
    %c0_i32_552 = arith.constant 0 : i32
    %2156 = vector.broadcast %c0_i32_552 : i32 to vector<1x128xi32>
    %2157 = arith.cmpi eq, %578, %2156 : vector<1x128xi32>
    %2158 = vector.shape_cast %2155 : vector<1x1xf32> to vector<1x1xf32>
    %2159 = vector.broadcast %2158 : vector<1x1xf32> to vector<1x128xf32>
    %2160 = arith.select %2157, %2159, %2149 : vector<1x128xi1>, vector<1x128xf32>
    %2161 = vector.broadcast %2155 : vector<1x1xf32> to vector<28x1xf32>
    %2162 = arith.cmpf oeq, %577, %2161 : vector<28x1xf32>
    %cst_553 = arith.constant 0.000000e+00 : f32
    %2163 = vector.broadcast %cst_553 : f32 to vector<28x1xf32>
    %2164 = arith.select %2162, %1965, %2163 : vector<28x1xi1>, vector<28x1xf32>
    %cst_554 = arith.constant dense<0.000000e+00> : vector<1xf32>
    %2165 = vector.multi_reduction <add>, %2164, %cst_554 [0] : vector<28x1xf32> to vector<1xf32>
    %2166 = vector.shape_cast %2165 : vector<1xf32> to vector<1x1xf32>
    %c8_i32_555 = arith.constant 8 : i32
    %2167 = vector.broadcast %c8_i32_555 : i32 to vector<1x128xi32>
    %2168 = arith.cmpi eq, %578, %2167 : vector<1x128xi32>
    %2169 = vector.shape_cast %2069 : vector<1x1xf32> to vector<1x1xf32>
    %2170 = vector.broadcast %2169 : vector<1x1xf32> to vector<1x128xf32>
    %2171 = arith.select %2168, %2170, %2160 : vector<1x128xi1>, vector<1x128xf32>
    %c9_i32_556 = arith.constant 9 : i32
    %2172 = vector.broadcast %c9_i32_556 : i32 to vector<1x128xi32>
    %2173 = arith.cmpi eq, %578, %2172 : vector<1x128xi32>
    %2174 = vector.shape_cast %2166 : vector<1x1xf32> to vector<1x1xf32>
    %2175 = vector.broadcast %2174 : vector<1x1xf32> to vector<1x128xf32>
    %2176 = arith.select %2173, %2175, %2171 : vector<1x128xi1>, vector<1x128xf32>
    %c6_i32_557 = arith.constant 6 : i32
    %2177 = vector.broadcast %c6_i32_557 : i32 to vector<8x128xi32>
    %2178 = arith.cmpi eq, %579, %2177 : vector<8x128xi32>
    %2179 = vector.shape_cast %2176 : vector<1x128xf32> to vector<1x128xf32>
    %2180 = vector.broadcast %2179 : vector<1x128xf32> to vector<8x128xf32>
    %2181 = arith.select %2178, %2180, %1953 : vector<8x128xi1>, vector<8x128xf32>
    %2182 = vector.broadcast %584 : vector<1x28xf32> to vector<28x28xf32>
    %2183 = arith.addf %572, %2182 : vector<28x28xf32>
    %cst_558 = arith.constant dense<0xFF800000> : vector<28xf32>
    %2184 = vector.multi_reduction <maximumf>, %2183, %cst_558 [1] : vector<28x28xf32> to vector<28xf32>
    %2185 = vector.shape_cast %2184 : vector<28xf32> to vector<28x1xf32>
    %2186 = tpu.iota {dimensions = array<i32: 1>} : vector<28x28xi32>
    %2187 = arith.sitofp %2186 : vector<28x28xi32> to vector<28x28xf32>
    %2188 = vector.broadcast %2185 : vector<28x1xf32> to vector<28x28xf32>
    %2189 = arith.cmpf oeq, %2183, %2188 : vector<28x28xf32>
    %cst_559 = arith.constant 2.800000e+01 : f32
    %2190 = vector.broadcast %cst_559 : f32 to vector<28x28xf32>
    %2191 = arith.select %2189, %2187, %2190 : vector<28x28xi1>, vector<28x28xf32>
    %cst_560 = arith.constant dense<0x7F800000> : vector<28xf32>
    %2192 = vector.multi_reduction <minimumf>, %2191, %cst_560 [1] : vector<28x28xf32> to vector<28xf32>
    %2193 = vector.shape_cast %2192 : vector<28xf32> to vector<28x1xf32>
    %2194 = vector.extract_strided_slice %571 {offsets = [0, 7], sizes = [28, 1], strides = [1, 1]} : vector<28x64xf32> to vector<28x1xf32>
    %2195 = arith.addf %2185, %2194 : vector<28x1xf32>
    %2196 = vector.broadcast %2195 : vector<28x1xf32> to vector<28x28xf32>
    %2197 = arith.addf %573, %2196 : vector<28x28xf32>
    %cst_561 = arith.constant dense<0xFF800000> : vector<28xf32>
    %2198 = vector.multi_reduction <maximumf>, %2197, %cst_561 [0] : vector<28x28xf32> to vector<28xf32>
    %2199 = vector.shape_cast %2198 : vector<28xf32> to vector<1x28xf32>
    %2200 = tpu.iota {dimensions = array<i32: 0>} : vector<28x28xi32>
    %2201 = arith.sitofp %2200 : vector<28x28xi32> to vector<28x28xf32>
    %2202 = vector.broadcast %2199 : vector<1x28xf32> to vector<28x28xf32>
    %2203 = arith.cmpf oeq, %2197, %2202 : vector<28x28xf32>
    %cst_562 = arith.constant 2.800000e+01 : f32
    %2204 = vector.broadcast %cst_562 : f32 to vector<28x28xf32>
    %2205 = arith.select %2203, %2201, %2204 : vector<28x28xi1>, vector<28x28xf32>
    %cst_563 = arith.constant dense<0x7F800000> : vector<28xf32>
    %2206 = vector.multi_reduction <minimumf>, %2205, %cst_563 [0] : vector<28x28xf32> to vector<28xf32>
    %2207 = vector.shape_cast %2206 : vector<28xf32> to vector<1x28xf32>
    %2208 = vector.extract_strided_slice %570 {offsets = [15, 0], sizes = [1, 28], strides = [1, 1]} : vector<64x28xf32> to vector<1x28xf32>
    %2209 = arith.addf %2199, %2208 : vector<1x28xf32>
    %2210 = vector.broadcast %2209 : vector<1x28xf32> to vector<28x28xf32>
    %2211 = arith.addf %572, %2210 : vector<28x28xf32>
    %cst_564 = arith.constant dense<0xFF800000> : vector<28xf32>
    %2212 = vector.multi_reduction <maximumf>, %2211, %cst_564 [1] : vector<28x28xf32> to vector<28xf32>
    %2213 = vector.shape_cast %2212 : vector<28xf32> to vector<28x1xf32>
    %2214 = tpu.iota {dimensions = array<i32: 1>} : vector<28x28xi32>
    %2215 = arith.sitofp %2214 : vector<28x28xi32> to vector<28x28xf32>
    %2216 = vector.broadcast %2213 : vector<28x1xf32> to vector<28x28xf32>
    %2217 = arith.cmpf oeq, %2211, %2216 : vector<28x28xf32>
    %cst_565 = arith.constant 2.800000e+01 : f32
    %2218 = vector.broadcast %cst_565 : f32 to vector<28x28xf32>
    %2219 = arith.select %2217, %2215, %2218 : vector<28x28xi1>, vector<28x28xf32>
    %cst_566 = arith.constant dense<0x7F800000> : vector<28xf32>
    %2220 = vector.multi_reduction <minimumf>, %2219, %cst_566 [1] : vector<28x28xf32> to vector<28xf32>
    %2221 = vector.shape_cast %2220 : vector<28xf32> to vector<28x1xf32>
    %2222 = vector.extract_strided_slice %571 {offsets = [0, 23], sizes = [28, 1], strides = [1, 1]} : vector<28x64xf32> to vector<28x1xf32>
    %2223 = arith.addf %2213, %2222 : vector<28x1xf32>
    %2224 = vector.broadcast %2223 : vector<28x1xf32> to vector<28x28xf32>
    %2225 = arith.addf %573, %2224 : vector<28x28xf32>
    %cst_567 = arith.constant dense<0xFF800000> : vector<28xf32>
    %2226 = vector.multi_reduction <maximumf>, %2225, %cst_567 [0] : vector<28x28xf32> to vector<28xf32>
    %2227 = vector.shape_cast %2226 : vector<28xf32> to vector<1x28xf32>
    %2228 = tpu.iota {dimensions = array<i32: 0>} : vector<28x28xi32>
    %2229 = arith.sitofp %2228 : vector<28x28xi32> to vector<28x28xf32>
    %2230 = vector.broadcast %2227 : vector<1x28xf32> to vector<28x28xf32>
    %2231 = arith.cmpf oeq, %2225, %2230 : vector<28x28xf32>
    %cst_568 = arith.constant 2.800000e+01 : f32
    %2232 = vector.broadcast %cst_568 : f32 to vector<28x28xf32>
    %2233 = arith.select %2231, %2229, %2232 : vector<28x28xi1>, vector<28x28xf32>
    %cst_569 = arith.constant dense<0x7F800000> : vector<28xf32>
    %2234 = vector.multi_reduction <minimumf>, %2233, %cst_569 [0] : vector<28x28xf32> to vector<28xf32>
    %2235 = vector.shape_cast %2234 : vector<28xf32> to vector<1x28xf32>
    %2236 = vector.extract_strided_slice %570 {offsets = [31, 0], sizes = [1, 28], strides = [1, 1]} : vector<64x28xf32> to vector<1x28xf32>
    %2237 = arith.addf %2227, %2236 : vector<1x28xf32>
    %2238 = vector.broadcast %2237 : vector<1x28xf32> to vector<28x28xf32>
    %2239 = arith.addf %572, %2238 : vector<28x28xf32>
    %cst_570 = arith.constant dense<0xFF800000> : vector<28xf32>
    %2240 = vector.multi_reduction <maximumf>, %2239, %cst_570 [1] : vector<28x28xf32> to vector<28xf32>
    %2241 = vector.shape_cast %2240 : vector<28xf32> to vector<28x1xf32>
    %2242 = tpu.iota {dimensions = array<i32: 1>} : vector<28x28xi32>
    %2243 = arith.sitofp %2242 : vector<28x28xi32> to vector<28x28xf32>
    %2244 = vector.broadcast %2241 : vector<28x1xf32> to vector<28x28xf32>
    %2245 = arith.cmpf oeq, %2239, %2244 : vector<28x28xf32>
    %cst_571 = arith.constant 2.800000e+01 : f32
    %2246 = vector.broadcast %cst_571 : f32 to vector<28x28xf32>
    %2247 = arith.select %2245, %2243, %2246 : vector<28x28xi1>, vector<28x28xf32>
    %cst_572 = arith.constant dense<0x7F800000> : vector<28xf32>
    %2248 = vector.multi_reduction <minimumf>, %2247, %cst_572 [1] : vector<28x28xf32> to vector<28xf32>
    %2249 = vector.shape_cast %2248 : vector<28xf32> to vector<28x1xf32>
    %2250 = vector.extract_strided_slice %571 {offsets = [0, 39], sizes = [28, 1], strides = [1, 1]} : vector<28x64xf32> to vector<28x1xf32>
    %2251 = arith.addf %2241, %2250 : vector<28x1xf32>
    %2252 = vector.broadcast %2251 : vector<28x1xf32> to vector<28x28xf32>
    %2253 = arith.addf %573, %2252 : vector<28x28xf32>
    %cst_573 = arith.constant dense<0xFF800000> : vector<28xf32>
    %2254 = vector.multi_reduction <maximumf>, %2253, %cst_573 [0] : vector<28x28xf32> to vector<28xf32>
    %2255 = vector.shape_cast %2254 : vector<28xf32> to vector<1x28xf32>
    %2256 = tpu.iota {dimensions = array<i32: 0>} : vector<28x28xi32>
    %2257 = arith.sitofp %2256 : vector<28x28xi32> to vector<28x28xf32>
    %2258 = vector.broadcast %2255 : vector<1x28xf32> to vector<28x28xf32>
    %2259 = arith.cmpf oeq, %2253, %2258 : vector<28x28xf32>
    %cst_574 = arith.constant 2.800000e+01 : f32
    %2260 = vector.broadcast %cst_574 : f32 to vector<28x28xf32>
    %2261 = arith.select %2259, %2257, %2260 : vector<28x28xi1>, vector<28x28xf32>
    %cst_575 = arith.constant dense<0x7F800000> : vector<28xf32>
    %2262 = vector.multi_reduction <minimumf>, %2261, %cst_575 [0] : vector<28x28xf32> to vector<28xf32>
    %2263 = vector.shape_cast %2262 : vector<28xf32> to vector<1x28xf32>
    %2264 = vector.extract_strided_slice %570 {offsets = [47, 0], sizes = [1, 28], strides = [1, 1]} : vector<64x28xf32> to vector<1x28xf32>
    %2265 = arith.addf %2255, %2264 : vector<1x28xf32>
    %2266 = vector.broadcast %2265 : vector<1x28xf32> to vector<28x28xf32>
    %2267 = arith.addf %572, %2266 : vector<28x28xf32>
    %cst_576 = arith.constant dense<0xFF800000> : vector<28xf32>
    %2268 = vector.multi_reduction <maximumf>, %2267, %cst_576 [1] : vector<28x28xf32> to vector<28xf32>
    %2269 = vector.shape_cast %2268 : vector<28xf32> to vector<28x1xf32>
    %2270 = tpu.iota {dimensions = array<i32: 1>} : vector<28x28xi32>
    %2271 = arith.sitofp %2270 : vector<28x28xi32> to vector<28x28xf32>
    %2272 = vector.broadcast %2269 : vector<28x1xf32> to vector<28x28xf32>
    %2273 = arith.cmpf oeq, %2267, %2272 : vector<28x28xf32>
    %cst_577 = arith.constant 2.800000e+01 : f32
    %2274 = vector.broadcast %cst_577 : f32 to vector<28x28xf32>
    %2275 = arith.select %2273, %2271, %2274 : vector<28x28xi1>, vector<28x28xf32>
    %cst_578 = arith.constant dense<0x7F800000> : vector<28xf32>
    %2276 = vector.multi_reduction <minimumf>, %2275, %cst_578 [1] : vector<28x28xf32> to vector<28xf32>
    %2277 = vector.shape_cast %2276 : vector<28xf32> to vector<28x1xf32>
    %2278 = vector.extract_strided_slice %571 {offsets = [0, 55], sizes = [28, 1], strides = [1, 1]} : vector<28x64xf32> to vector<28x1xf32>
    %2279 = arith.addf %2269, %2278 : vector<28x1xf32>
    %2280 = vector.broadcast %2279 : vector<28x1xf32> to vector<28x28xf32>
    %2281 = arith.addf %573, %2280 : vector<28x28xf32>
    %cst_579 = arith.constant dense<0xFF800000> : vector<28xf32>
    %2282 = vector.multi_reduction <maximumf>, %2281, %cst_579 [0] : vector<28x28xf32> to vector<28xf32>
    %2283 = vector.shape_cast %2282 : vector<28xf32> to vector<1x28xf32>
    %2284 = tpu.iota {dimensions = array<i32: 0>} : vector<28x28xi32>
    %2285 = arith.sitofp %2284 : vector<28x28xi32> to vector<28x28xf32>
    %2286 = vector.broadcast %2283 : vector<1x28xf32> to vector<28x28xf32>
    %2287 = arith.cmpf oeq, %2281, %2286 : vector<28x28xf32>
    %cst_580 = arith.constant 2.800000e+01 : f32
    %2288 = vector.broadcast %cst_580 : f32 to vector<28x28xf32>
    %2289 = arith.select %2287, %2285, %2288 : vector<28x28xi1>, vector<28x28xf32>
    %cst_581 = arith.constant dense<0x7F800000> : vector<28xf32>
    %2290 = vector.multi_reduction <minimumf>, %2289, %cst_581 [0] : vector<28x28xf32> to vector<28xf32>
    %2291 = vector.shape_cast %2290 : vector<28xf32> to vector<1x28xf32>
    %2292 = vector.extract_strided_slice %570 {offsets = [63, 0], sizes = [1, 28], strides = [1, 1]} : vector<64x28xf32> to vector<1x28xf32>
    %2293 = arith.addf %2283, %2292 : vector<1x28xf32>
    %2294 = vector.extract_strided_slice %572 {offsets = [27, 0], sizes = [1, 28], strides = [1, 1]} : vector<28x28xf32> to vector<1x28xf32>
    %2295 = arith.addf %2293, %2294 : vector<1x28xf32>
    %cst_582 = arith.constant dense<0xFF800000> : vector<1xf32>
    %2296 = vector.multi_reduction <maximumf>, %2295, %cst_582 [1] : vector<1x28xf32> to vector<1xf32>
    %2297 = vector.shape_cast %2296 : vector<1xf32> to vector<1x1xf32>
    %2298 = tpu.iota {dimensions = array<i32: 1>} : vector<1x28xi32>
    %2299 = arith.sitofp %2298 : vector<1x28xi32> to vector<1x28xf32>
    %2300 = vector.broadcast %2297 : vector<1x1xf32> to vector<1x28xf32>
    %2301 = arith.cmpf oeq, %2295, %2300 : vector<1x28xf32>
    %cst_583 = arith.constant 2.800000e+01 : f32
    %2302 = vector.broadcast %cst_583 : f32 to vector<1x28xf32>
    %2303 = arith.select %2301, %2299, %2302 : vector<1x28xi1>, vector<1x28xf32>
    %cst_584 = arith.constant dense<0x7F800000> : vector<1xf32>
    %2304 = vector.multi_reduction <minimumf>, %2303, %cst_584 [1] : vector<1x28xf32> to vector<1xf32>
    %2305 = vector.shape_cast %2304 : vector<1xf32> to vector<1x1xf32>
    %c7_i32_585 = arith.constant 7 : i32
    %2306 = vector.broadcast %c7_i32_585 : i32 to vector<1x128xi32>
    %2307 = arith.cmpi eq, %578, %2306 : vector<1x128xi32>
    %cst_586 = arith.constant 0.000000e+00 : f32
    %2308 = vector.broadcast %cst_586 : f32 to vector<1x128xf32>
    %2309 = vector.shape_cast %2305 : vector<1x1xf32> to vector<1x1xf32>
    %2310 = vector.broadcast %2309 : vector<1x1xf32> to vector<1x128xf32>
    %2311 = arith.select %2307, %2310, %2308 : vector<1x128xi1>, vector<1x128xf32>
    %2312 = vector.broadcast %2305 : vector<1x1xf32> to vector<1x28xf32>
    %2313 = arith.cmpf oeq, %575, %2312 : vector<1x28xf32>
    %cst_587 = arith.constant 0.000000e+00 : f32
    %2314 = vector.broadcast %cst_587 : f32 to vector<1x28xf32>
    %2315 = arith.select %2313, %2291, %2314 : vector<1x28xi1>, vector<1x28xf32>
    %cst_588 = arith.constant dense<0.000000e+00> : vector<1xf32>
    %2316 = vector.multi_reduction <add>, %2315, %cst_588 [1] : vector<1x28xf32> to vector<1xf32>
    %2317 = vector.shape_cast %2316 : vector<1xf32> to vector<1x1xf32>
    %c6_i32_589 = arith.constant 6 : i32
    %2318 = vector.broadcast %c6_i32_589 : i32 to vector<1x128xi32>
    %2319 = arith.cmpi eq, %578, %2318 : vector<1x128xi32>
    %2320 = vector.shape_cast %2317 : vector<1x1xf32> to vector<1x1xf32>
    %2321 = vector.broadcast %2320 : vector<1x1xf32> to vector<1x128xf32>
    %2322 = arith.select %2319, %2321, %2311 : vector<1x128xi1>, vector<1x128xf32>
    %2323 = vector.broadcast %2317 : vector<1x1xf32> to vector<28x1xf32>
    %2324 = arith.cmpf oeq, %577, %2323 : vector<28x1xf32>
    %cst_590 = arith.constant 0.000000e+00 : f32
    %2325 = vector.broadcast %cst_590 : f32 to vector<28x1xf32>
    %2326 = arith.select %2324, %2277, %2325 : vector<28x1xi1>, vector<28x1xf32>
    %cst_591 = arith.constant dense<0.000000e+00> : vector<1xf32>
    %2327 = vector.multi_reduction <add>, %2326, %cst_591 [0] : vector<28x1xf32> to vector<1xf32>
    %2328 = vector.shape_cast %2327 : vector<1xf32> to vector<1x1xf32>
    %c5_i32_592 = arith.constant 5 : i32
    %2329 = vector.broadcast %c5_i32_592 : i32 to vector<1x128xi32>
    %2330 = arith.cmpi eq, %578, %2329 : vector<1x128xi32>
    %2331 = vector.shape_cast %2328 : vector<1x1xf32> to vector<1x1xf32>
    %2332 = vector.broadcast %2331 : vector<1x1xf32> to vector<1x128xf32>
    %2333 = arith.select %2330, %2332, %2322 : vector<1x128xi1>, vector<1x128xf32>
    %2334 = vector.broadcast %2328 : vector<1x1xf32> to vector<1x28xf32>
    %2335 = arith.cmpf oeq, %575, %2334 : vector<1x28xf32>
    %cst_593 = arith.constant 0.000000e+00 : f32
    %2336 = vector.broadcast %cst_593 : f32 to vector<1x28xf32>
    %2337 = arith.select %2335, %2263, %2336 : vector<1x28xi1>, vector<1x28xf32>
    %cst_594 = arith.constant dense<0.000000e+00> : vector<1xf32>
    %2338 = vector.multi_reduction <add>, %2337, %cst_594 [1] : vector<1x28xf32> to vector<1xf32>
    %2339 = vector.shape_cast %2338 : vector<1xf32> to vector<1x1xf32>
    %c4_i32_595 = arith.constant 4 : i32
    %2340 = vector.broadcast %c4_i32_595 : i32 to vector<1x128xi32>
    %2341 = arith.cmpi eq, %578, %2340 : vector<1x128xi32>
    %2342 = vector.shape_cast %2339 : vector<1x1xf32> to vector<1x1xf32>
    %2343 = vector.broadcast %2342 : vector<1x1xf32> to vector<1x128xf32>
    %2344 = arith.select %2341, %2343, %2333 : vector<1x128xi1>, vector<1x128xf32>
    %2345 = vector.broadcast %2339 : vector<1x1xf32> to vector<28x1xf32>
    %2346 = arith.cmpf oeq, %577, %2345 : vector<28x1xf32>
    %cst_596 = arith.constant 0.000000e+00 : f32
    %2347 = vector.broadcast %cst_596 : f32 to vector<28x1xf32>
    %2348 = arith.select %2346, %2249, %2347 : vector<28x1xi1>, vector<28x1xf32>
    %cst_597 = arith.constant dense<0.000000e+00> : vector<1xf32>
    %2349 = vector.multi_reduction <add>, %2348, %cst_597 [0] : vector<28x1xf32> to vector<1xf32>
    %2350 = vector.shape_cast %2349 : vector<1xf32> to vector<1x1xf32>
    %c3_i32_598 = arith.constant 3 : i32
    %2351 = vector.broadcast %c3_i32_598 : i32 to vector<1x128xi32>
    %2352 = arith.cmpi eq, %578, %2351 : vector<1x128xi32>
    %2353 = vector.shape_cast %2350 : vector<1x1xf32> to vector<1x1xf32>
    %2354 = vector.broadcast %2353 : vector<1x1xf32> to vector<1x128xf32>
    %2355 = arith.select %2352, %2354, %2344 : vector<1x128xi1>, vector<1x128xf32>
    %2356 = vector.broadcast %2350 : vector<1x1xf32> to vector<1x28xf32>
    %2357 = arith.cmpf oeq, %575, %2356 : vector<1x28xf32>
    %cst_599 = arith.constant 0.000000e+00 : f32
    %2358 = vector.broadcast %cst_599 : f32 to vector<1x28xf32>
    %2359 = arith.select %2357, %2235, %2358 : vector<1x28xi1>, vector<1x28xf32>
    %cst_600 = arith.constant dense<0.000000e+00> : vector<1xf32>
    %2360 = vector.multi_reduction <add>, %2359, %cst_600 [1] : vector<1x28xf32> to vector<1xf32>
    %2361 = vector.shape_cast %2360 : vector<1xf32> to vector<1x1xf32>
    %c2_i32_601 = arith.constant 2 : i32
    %2362 = vector.broadcast %c2_i32_601 : i32 to vector<1x128xi32>
    %2363 = arith.cmpi eq, %578, %2362 : vector<1x128xi32>
    %2364 = vector.shape_cast %2361 : vector<1x1xf32> to vector<1x1xf32>
    %2365 = vector.broadcast %2364 : vector<1x1xf32> to vector<1x128xf32>
    %2366 = arith.select %2363, %2365, %2355 : vector<1x128xi1>, vector<1x128xf32>
    %2367 = vector.broadcast %2361 : vector<1x1xf32> to vector<28x1xf32>
    %2368 = arith.cmpf oeq, %577, %2367 : vector<28x1xf32>
    %cst_602 = arith.constant 0.000000e+00 : f32
    %2369 = vector.broadcast %cst_602 : f32 to vector<28x1xf32>
    %2370 = arith.select %2368, %2221, %2369 : vector<28x1xi1>, vector<28x1xf32>
    %cst_603 = arith.constant dense<0.000000e+00> : vector<1xf32>
    %2371 = vector.multi_reduction <add>, %2370, %cst_603 [0] : vector<28x1xf32> to vector<1xf32>
    %2372 = vector.shape_cast %2371 : vector<1xf32> to vector<1x1xf32>
    %c1_i32_604 = arith.constant 1 : i32
    %2373 = vector.broadcast %c1_i32_604 : i32 to vector<1x128xi32>
    %2374 = arith.cmpi eq, %578, %2373 : vector<1x128xi32>
    %2375 = vector.shape_cast %2372 : vector<1x1xf32> to vector<1x1xf32>
    %2376 = vector.broadcast %2375 : vector<1x1xf32> to vector<1x128xf32>
    %2377 = arith.select %2374, %2376, %2366 : vector<1x128xi1>, vector<1x128xf32>
    %2378 = vector.broadcast %2372 : vector<1x1xf32> to vector<1x28xf32>
    %2379 = arith.cmpf oeq, %575, %2378 : vector<1x28xf32>
    %cst_605 = arith.constant 0.000000e+00 : f32
    %2380 = vector.broadcast %cst_605 : f32 to vector<1x28xf32>
    %2381 = arith.select %2379, %2207, %2380 : vector<1x28xi1>, vector<1x28xf32>
    %cst_606 = arith.constant dense<0.000000e+00> : vector<1xf32>
    %2382 = vector.multi_reduction <add>, %2381, %cst_606 [1] : vector<1x28xf32> to vector<1xf32>
    %2383 = vector.shape_cast %2382 : vector<1xf32> to vector<1x1xf32>
    %c0_i32_607 = arith.constant 0 : i32
    %2384 = vector.broadcast %c0_i32_607 : i32 to vector<1x128xi32>
    %2385 = arith.cmpi eq, %578, %2384 : vector<1x128xi32>
    %2386 = vector.shape_cast %2383 : vector<1x1xf32> to vector<1x1xf32>
    %2387 = vector.broadcast %2386 : vector<1x1xf32> to vector<1x128xf32>
    %2388 = arith.select %2385, %2387, %2377 : vector<1x128xi1>, vector<1x128xf32>
    %2389 = vector.broadcast %2383 : vector<1x1xf32> to vector<28x1xf32>
    %2390 = arith.cmpf oeq, %577, %2389 : vector<28x1xf32>
    %cst_608 = arith.constant 0.000000e+00 : f32
    %2391 = vector.broadcast %cst_608 : f32 to vector<28x1xf32>
    %2392 = arith.select %2390, %2193, %2391 : vector<28x1xi1>, vector<28x1xf32>
    %cst_609 = arith.constant dense<0.000000e+00> : vector<1xf32>
    %2393 = vector.multi_reduction <add>, %2392, %cst_609 [0] : vector<28x1xf32> to vector<1xf32>
    %2394 = vector.shape_cast %2393 : vector<1xf32> to vector<1x1xf32>
    %c8_i32_610 = arith.constant 8 : i32
    %2395 = vector.broadcast %c8_i32_610 : i32 to vector<1x128xi32>
    %2396 = arith.cmpi eq, %578, %2395 : vector<1x128xi32>
    %2397 = vector.shape_cast %2297 : vector<1x1xf32> to vector<1x1xf32>
    %2398 = vector.broadcast %2397 : vector<1x1xf32> to vector<1x128xf32>
    %2399 = arith.select %2396, %2398, %2388 : vector<1x128xi1>, vector<1x128xf32>
    %c9_i32_611 = arith.constant 9 : i32
    %2400 = vector.broadcast %c9_i32_611 : i32 to vector<1x128xi32>
    %2401 = arith.cmpi eq, %578, %2400 : vector<1x128xi32>
    %2402 = vector.shape_cast %2394 : vector<1x1xf32> to vector<1x1xf32>
    %2403 = vector.broadcast %2402 : vector<1x1xf32> to vector<1x128xf32>
    %2404 = arith.select %2401, %2403, %2399 : vector<1x128xi1>, vector<1x128xf32>
    %c7_i32_612 = arith.constant 7 : i32
    %2405 = vector.broadcast %c7_i32_612 : i32 to vector<8x128xi32>
    %2406 = arith.cmpi eq, %579, %2405 : vector<8x128xi32>
    %2407 = vector.shape_cast %2404 : vector<1x128xf32> to vector<1x128xf32>
    %2408 = vector.broadcast %2407 : vector<1x128xf32> to vector<8x128xf32>
    %2409 = arith.select %2406, %2408, %2181 : vector<8x128xi1>, vector<8x128xf32>
    %c0_613 = arith.constant 0 : index
    %c0_614 = arith.constant 0 : index
    %2410 = vector.load %arg3[%c0_613, %c0_614] : memref<8x128xf32, #tpu.memory_space<vmem>>, vector<8x128xf32>
    tpu.vector_store %arg3[%c0_613, %c0_614], %2409 {strides = array<i32>} : memref<8x128xf32, #tpu.memory_space<vmem>>, vector<8x128xf32>,
    return
  }
  func.func @transform_0(%arg0: i32) -> (i32, i32) {
    %c0_i32 = arith.constant 0 : i32
    %c0_i32_0 = arith.constant 0 : i32
    return %arg0, %c0_i32 : i32, i32
  }
  func.func @transform_1(%arg0: i32) -> (i32, i32) {
    %c0_i32 = arith.constant 0 : i32
    %c0_i32_0 = arith.constant 0 : i32
    %c0_i32_1 = arith.constant 0 : i32
    return %c0_i32, %c0_i32_0 : i32, i32
  }
  func.func @transform_2(%arg0: i32) -> (i32, i32) {
    %c0_i32 = arith.constant 0 : i32
    %c0_i32_0 = arith.constant 0 : i32
    return %arg0, %c0_i32 : i32, i32
  }
}

</mosaic_0001>

<llo_original>
// kernel: ner_forward.1
$region0: #{ner_forward.1}
  #allocation0 [shape = 'u32[]', space=smem, size = 0x4, offset = 0x4, fixed_abs, tag = 'smem constant byte address 0x4 - core index']
  #allocation1 [shape = 'u32[72,128]{1,0:T(1,128)}', space=vmem, size = 0x9000, scoped, tag = 'internal scratch']
  %s0 = inlined_call_operand.vmem [shape: f32[128,24], index: 0, kind: input, shape index: {}]
  %s1 = inlined_call_operand.vmem [shape: f32[200,128], index: 1, kind: input, shape index: {}]
  %s2 = inlined_call_operand.vmem [shape: f32[16,128], index: 2, kind: output, shape index: {}]
  %s3 = sld [smem:[#allocation0]]
  $region41: #{ner_forward.1} parent=0
    _
  %s5 = ssub.s32 1, %s3
  %s6 = scalar_select 0, %s5, %s3
  loop: start=0, step=1, limit=4
  $region2: #{ner_forward.1} parent=0 // loop_pre_header
    _
  $region3: #{ner_forward.1} parent=0 // loop_header
    %s8 = sphi 0, %s12
    %p9 = scmp.ge.s32.totalorder %s8, 4
    %s18 = sphi 0, %s20
    %s21 = sphi 0, %s18
    %s22 = sphi 0, %s21
    %s38 = sphi 0, %s22
    %s42 = sphi 0, %s42
    %s44 = sphi 0, %s42
    %s45 = sphi 0, %s44
    %s59 = sphi 0, %s45
    %s65 = sphi 0, %s67
    %s68 = sphi 0, %s65
    %s69 = sphi 0, %s68
    %s85 = sphi 0, %s69
  $region4: #{ner_forward.1} parent=0 // loop_header_branch
    %11 = sbr.rel (%p9) target = $region8
  $region5: #{ner_forward.1} parent=0 // loop_body
    %s13 = ssub.s32 %s8, 1
    %s14 = ssub.s32 %s8, 2
    %s15 = sadd.s32 %s8, 1
    %s16 = ssub.s32 %s8, %s15
    %p17 = scmp.eq.s32.totalorder %s16, 0
    %s19 = sadd.s32 %s18, 1
    %s20 = scalar_select %p17, %s18, %s19
    %p23 = pneg %p17
    %p24 = scmp.eq.s32.totalorder %s8, 1
    %p25 = por %p23, %p24
    %p26 = scmp.ne.s32.totalorder %s18, %s21
    %p27 = scmp.eq.s32.totalorder %s8, 0
    %p28 = por %p26, %p27
    %p29 = scmp.ne.s32.totalorder %s18, %s21
    %p30 = scmp.eq.s32.totalorder %s13, 1
    %p31 = por %p29, %p30
    %p32 = scmp.ne.s32.totalorder %s21, %s22
    %p33 = scmp.eq.s32.totalorder %s13, 0
    %p34 = por %p32, %p33
    %p35 = scmp.ne.s32.totalorder %s21, %s22
    %p36 = scmp.eq.s32.totalorder %s14, 1
    %p37 = por %p35, %p36
    %p39 = scmp.ne.s32.totalorder %s22, %s38
    %p40 = scmp.eq.s32.totalorder %s14, 0
    %p41 = por %p39, %p40
    %s43 = sadd.s32 %s42, 1
    %p46 = scmp.eq.s32.totalorder %s8, 1
    %p47 = scmp.ne.s32.totalorder %s42, %s44
    %p48 = scmp.eq.s32.totalorder %s8, 0
    %p49 = por %p47, %p48
    %p50 = scmp.ne.s32.totalorder %s42, %s44
    %p51 = scmp.eq.s32.totalorder %s13, 1
    %p52 = por %p50, %p51
    %p53 = scmp.ne.s32.totalorder %s44, %s45
    %p54 = scmp.eq.s32.totalorder %s13, 0
    %p55 = por %p53, %p54
    %p56 = scmp.ne.s32.totalorder %s44, %s45
    %p57 = scmp.eq.s32.totalorder %s14, 1
    %p58 = por %p56, %p57
    %p60 = scmp.ne.s32.totalorder %s45, %s59
    %p61 = scmp.eq.s32.totalorder %s14, 0
    %p62 = por %p60, %p61
    %s63 = ssub.s32 %s8, %s15
    %p64 = scmp.eq.s32.totalorder %s63, 0
    %s66 = sadd.s32 %s65, 1
    %s67 = scalar_select %p64, %s65, %s66
    %p70 = pneg %p64
    %p71 = scmp.eq.s32.totalorder %s8, 1
    %p72 = por %p70, %p71
    %p73 = scmp.ne.s32.totalorder %s65, %s68
    %p74 = scmp.eq.s32.totalorder %s8, 0
    %p75 = por %p73, %p74
    %p76 = scmp.ne.s32.totalorder %s65, %s68
    %p77 = scmp.eq.s32.totalorder %s13, 1
    %p78 = por %p76, %p77
    %p79 = scmp.ne.s32.totalorder %s68, %s69
    %p80 = scmp.eq.s32.totalorder %s13, 0
    %p81 = por %p79, %p80
    %p82 = scmp.ne.s32.totalorder %s68, %s69
    %p83 = scmp.eq.s32.totalorder %s14, 1
    %p84 = por %p82, %p83
    %p86 = scmp.ne.s32.totalorder %s69, %s85
    %p87 = scmp.eq.s32.totalorder %s14, 0
    %p88 = por %p86, %p87
    %p89 = scmp.le.s32.totalorder 1, %s8
    %p90 = scmp.lt.s32.totalorder %s8, 3
    %p91 = pnand %p89, %p90
    %p92 = pneg %p91
    // Predicated region
    $region9: #{ner_forward.1} parent=5 // pred_check
      _
    $region10: #{ner_forward.1} parent=5 // pred_check_branch
      %94 = sbr.rel (%p91) target = $region12
    $region11: #{ner_forward.1} parent=5 // pred_region
      %s95 = ssub.s32 %s8, 1
      // Predicated region
      $region13: #{ner_forward.1} parent=11 // pred_check
        %p96 = pneg %p55
      $region14: #{ner_forward.1} parent=11 // pred_check_branch
        %98 = sbr.rel (%p96) target = $region16
      $region15: #{ner_forward.1} parent=11 // pred_region
        _
      $region16: #{ner_forward.1} parent=11 // pred_fallthru
        _
    $region12: #{ner_forward.1} parent=5 // pred_fallthru
      _
    %p99 = scmp.lt.s32.totalorder %s8, 2
    // Predicated region
    $region17: #{ner_forward.1} parent=5 // pred_check
      %p100 = pneg %p99
    $region18: #{ner_forward.1} parent=5 // pred_check_branch
      %102 = sbr.rel (%p100) target = $region20
    $region19: #{ner_forward.1} parent=5 // pred_region
      // Predicated region
      $region21: #{ner_forward.1} parent=19 // pred_check
        %p103 = pneg %p28
      $region22: #{ner_forward.1} parent=19 // pred_check_branch
        %105 = sbr.rel (%p103) target = $region24
      $region23: #{ner_forward.1} parent=19 // pred_region
        %s106 = smul.u32 8, %s8
        %p107 = scmp.lt.s32.totalorder %s106, 15
        %s108 = scalar_select %p107, %s106, 15
        %s109 = smul.addr %s108, 8
        %s110 = scalar_lea.vmem %s0, %s109
        %s111 = smul.u32 8, %s8
      $region24: #{ner_forward.1} parent=19 // pred_fallthru
        _
    $region20: #{ner_forward.1} parent=5 // pred_fallthru
      _
    %p112 = scmp.le.s32.totalorder 1, %s8
    %p113 = scmp.lt.s32.totalorder %s8, 3
    %p114 = pnand %p112, %p113
    %p115 = pneg %p114
    // Predicated region
    $region25: #{ner_forward.1} parent=5 // pred_check
      _
    $region26: #{ner_forward.1} parent=5 // pred_check_branch
      %117 = sbr.rel (%p114) target = $region28
    $region27: #{ner_forward.1} parent=5 // pred_region
      %s118 = ssub.s32 %s8, 1
      %s119 = smul.u32 8, %s13
      %p120 = scmp.lt.s32.totalorder %s119, 15
      %s121 = scalar_select %p120, %s119, 15
      %s122 = smul.addr %s121, 8
      %s123 = scalar_lea.vmem %s0, %s122
      %p124 = pneg %p34
      %p125 = pneg %p31
      %p126 = pneg %p55
      %p127 = pneg %p52
      %p128 = pneg %p81
      %p129 = pneg %p78
      %p130 = scmp.lt.s32.totalorder %s13, 1
      %s131 = scalar_select %p130, %s13, 1
      %s132 = smul.addr %s131, 8
      %s133 = scalar_lea.vmem %s2, %s132
      %s134 = smul.u32 8, %s13
      %p135 = scmp.lt.s32.totalorder %s134, 15
      %s136 = scalar_select %p135, %s134, 15
      %s137 = smul.addr %s136, 8
      %s138 = scalar_lea.vmem %s0, %s137
      %s139 = smul.u32 8, %s13
      %p140 = scmp.lt.s32.totalorder %s13, 1
      %s141 = scalar_select %p140, %s13, 1
      %s142 = smul.addr %s141, 8
      %s143 = scalar_lea.vmem %s2, %s142
      %v144 = vld [vmem:[%s138] sm:$0xff]
      %v145 = vld [vmem:[%s138 + $0x8] sm:$0xff]
      %v146 = vld [vmem:[%s138 + $0x10] sm:$0xff]
      %v147 = vld [vmem:[%s138 + $0x18] sm:$0xff]
      %v148 = vld [vmem:[%s138 + $0x20] sm:$0xff]
      %v149 = vld [vmem:[%s138 + $0x28] sm:$0xff]
      %v150 = vld [vmem:[%s138 + $0x30] sm:$0xff]
      %v151 = vld [vmem:[%s138 + $0x38] sm:$0xff]
      %v152 = vld [vmem:[%s1 + $0x28] sm:$0x1]
      %v153 = vld [vmem:[%s1] sm:$0xff]
      %v154 = vld [vmem:[%s1 + $0x8] sm:$0xff]
      %v155 = vld [vmem:[%s1 + $0x10] sm:$0xff]
      %vm156 = vcmask 195584
      %v158 = vsel %vm156, %v144, 0
      %v161 = vsel %vm156, %v145, 0
      %v164 = vsel %vm156, %v146, 0
      %v167 = vsel %vm156, %v147, 0
      %v170 = vsel %vm156, %v148, 0
      %v173 = vsel %vm156, %v149, 0
      %v176 = vsel %vm156, %v150, 0
      %v179 = vsel %vm156, %v151, 0
      %181 = vmatpush.msra.mxu0 0.0
      %182 = vmatpush.msra.mxu0 0.0
      %183 = vmatpush.msra.mxu0 0.0
      %184 = vmatpush.msra.mxu0 0.0
      %185 = vmatpush.msra.mxu0 0.0
      %186 = vmatpush.msra.mxu0 0.0
      %187 = vmatpush.msra.mxu0 0.0
      %188 = vmatpush.msra.mxu0 0.0
      %189 = vmatpush.msra.mxu0 0.0
      %190 = vmatpush.msra.mxu0 0.0
      %191 = vmatpush.msra.mxu0 0.0
      %192 = vmatpush.msra.mxu0 0.0
      %193 = vmatpush.msra.mxu0 0.0
      %194 = vmatpush.msra.mxu0 %v155
      %195 = vmatpush.msra.mxu0 %v154
      %196 = vmatpush.msra.mxu0 %v153
      %197 = vmatmul.f32.gmra.mxu0 %v158
      %v198 = vpop.f32.mrf.mxu0
      %v199 = vadd.f32 0.0, %v198
      %200 = vmatmul.f32.gmra.mxu0 %v161
      %v201 = vpop.f32.mrf.mxu0
      %v202 = vadd.f32 0.0, %v201
      %203 = vmatmul.f32.gmra.mxu0 %v164
      %v204 = vpop.f32.mrf.mxu0
      %v205 = vadd.f32 0.0, %v204
      %206 = vmatmul.f32.gmra.mxu0 %v167
      %v207 = vpop.f32.mrf.mxu0
      %v208 = vadd.f32 0.0, %v207
      %209 = vmatmul.f32.gmra.mxu0 %v170
      %v210 = vpop.f32.mrf.mxu0
      %v211 = vadd.f32 0.0, %v210
      %212 = vmatmul.f32.gmra.mxu0 %v173
      %v213 = vpop.f32.mrf.mxu0
      %v214 = vadd.f32 0.0, %v213
      %215 = vmatmul.f32.gmra.mxu0 %v176
      %v216 = vpop.f32.mrf.mxu0
      %v217 = vadd.f32 0.0, %v216
      %218 = vmatmul.f32.gmra.mxu0 %v179
      %v219 = vpop.f32.mrf.mxu0
      %v220 = vadd.f32 0.0, %v219
      %221 = vdwg.mxu0
      %v222 = vperm.slane %v152, 0
      %v223 = vadd.f32 %v222, %v199
      %v224 = vadd.f32 %v222, %v202
      %v225 = vadd.f32 %v222, %v205
      %v226 = vadd.f32 %v222, %v208
      %v227 = vadd.f32 %v222, %v211
      %v228 = vadd.f32 %v222, %v214
      %v229 = vadd.f32 %v222, %v217
      %v230 = vadd.f32 %v222, %v220
      %v231 = vld [vmem:[%s1 + $0x18] sm:$0xff]
      %v232 = vld [vmem:[%s1 + $0x20] sm:$0xff]
      %vm233 = vcmask 130048
      %v235 = vsel %vm233, 1.0, 0
      %237 = vmatpush.msra.mxu0 0.0
      %238 = vmatpush.msra.mxu0 0.0
      %239 = vmatpush.msra.mxu0 0.0
      %240 = vmatpush.msra.mxu0 0.0
      %241 = vmatpush.msra.mxu0 0.0
      %242 = vmatpush.msra.mxu0 0.0
      %243 = vmatpush.msra.mxu0 0.0
      %244 = vmatpush.msra.mxu0 0.0
      %245 = vmatpush.msra.mxu0 0.0
      %246 = vmatpush.msra.mxu0 0.0
      %247 = vmatpush.msra.mxu0 0.0
      %248 = vmatpush.msra.mxu0 0.0
      %249 = vmatpush.msra.mxu0 0.0
      %250 = vmatpush.msra.mxu0 0.0
      %251 = vmatpush.msra.mxu0 %v232
      %252 = vmatpush.msra.mxu0 %v231
      %253 = vmatmul.f32.gmra.mxu0 %v235
      %v254 = vpop.f32.mrf.mxu0
      %v255 = vadd.f32 0.0, %v254
      %256 = vdwg.mxu0
      %v257 = vadd.f32 %v223, %v255
      %v258 = vmul.f32 %v257, 0.5
      %v259 = vtanh.pop %v258
      %v260 = vmul.f32 %v259, 0.5
      %v261 = vadd.f32 %v260, 0.5
      %v262 = vtanh.pop %v257
      %264 = vrot.lane.b32.xlu0 %v262, 96
      %v265 = vpop.permute.xlu0 %264
      %v267 = vmul.f32 %v261, %v265
      %269 = vrot.lane.b32.xlu0 %v267, 16
      %v270 = vpop.permute.xlu0 %269
      %v272 = vadd.f32 %v261, %v270
      %v273 = vtanh.pop %v272
      %275 = vrot.lane.b32.xlu0 %v273, 32
      %v276 = vpop.permute.xlu0 %275
      %v278 = vmul.f32 %v261, %v276
      %280 = vrot.lane.b32.xlu0 %v278, 80
      %v281 = vpop.permute.xlu0 %280
      %v282 = vsel %vm233, %v281, 0
      %284 = vmatpush.msra.mxu0 0.0
      %285 = vmatpush.msra.mxu0 0.0
      %286 = vmatpush.msra.mxu0 0.0
      %287 = vmatpush.msra.mxu0 0.0
      %288 = vmatpush.msra.mxu0 0.0
      %289 = vmatpush.msra.mxu0 0.0
      %290 = vmatpush.msra.mxu0 0.0
      %291 = vmatpush.msra.mxu0 0.0
      %292 = vmatpush.msra.mxu0 0.0
      %293 = vmatpush.msra.mxu0 0.0
      %294 = vmatpush.msra.mxu0 0.0
      %295 = vmatpush.msra.mxu0 0.0
      %296 = vmatpush.msra.mxu0 0.0
      %297 = vmatpush.msra.mxu0 0.0
      %298 = vmatpush.msra.mxu0 %v232
      %299 = vmatpush.msra.mxu0 %v231
      %300 = vmatmul.f32.gmra.mxu0 %v282
      %v301 = vpop.f32.mrf.mxu0
      %v302 = vadd.f32 0.0, %v301
      %303 = vdwg.mxu0
      %v304 = vadd.f32 %v224, %v302
      %v305 = vmul.f32 %v304, 0.5
      %v306 = vtanh.pop %v305
      %v307 = vmul.f32 %v306, 0.5
      %v308 = vadd.f32 %v307, 0.5
      %v309 = vtanh.pop %v304
      %v310 = vmul.f32 %v308, %v272
      %312 = vrot.lane.b32.xlu0 %v309, 96
      %v313 = vpop.permute.xlu0 %312
      %v315 = vmul.f32 %v308, %v313
      %317 = vrot.lane.b32.xlu0 %v315, 16
      %v318 = vpop.permute.xlu0 %317
      %v320 = vadd.f32 %v310, %v318
      %v321 = vtanh.pop %v320
      %323 = vrot.lane.b32.xlu0 %v321, 32
      %v324 = vpop.permute.xlu0 %323
      %v326 = vmul.f32 %v308, %v324
      %328 = vrot.lane.b32.xlu0 %v326, 80
      %v329 = vpop.permute.xlu0 %328
      %v330 = vsel %vm233, %v329, 0
      %332 = vmatpush.msra.mxu0 0.0
      %333 = vmatpush.msra.mxu0 0.0
      %334 = vmatpush.msra.mxu0 0.0
      %335 = vmatpush.msra.mxu0 0.0
      %336 = vmatpush.msra.mxu0 0.0
      %337 = vmatpush.msra.mxu0 0.0
      %338 = vmatpush.msra.mxu0 0.0
      %339 = vmatpush.msra.mxu0 0.0
      %340 = vmatpush.msra.mxu0 0.0
      %341 = vmatpush.msra.mxu0 0.0
      %342 = vmatpush.msra.mxu0 0.0
      %343 = vmatpush.msra.mxu0 0.0
      %344 = vmatpush.msra.mxu0 0.0
      %345 = vmatpush.msra.mxu0 0.0
      %346 = vmatpush.msra.mxu0 %v232
      %347 = vmatpush.msra.mxu0 %v231
      %348 = vmatmul.f32.gmra.mxu0 %v330
      %v349 = vpop.f32.mrf.mxu0
      %v350 = vadd.f32 0.0, %v349
      %351 = vdwg.mxu0
      %v352 = vadd.f32 %v225, %v350
      %v353 = vmul.f32 %v352, 0.5
      %v354 = vtanh.pop %v353
      %v355 = vmul.f32 %v354, 0.5
      %v356 = vadd.f32 %v355, 0.5
      %v357 = vtanh.pop %v352
      %v358 = vmul.f32 %v356, %v320
      %360 = vrot.lane.b32.xlu0 %v357, 96
      %v361 = vpop.permute.xlu0 %360
      %v363 = vmul.f32 %v356, %v361
      %365 = vrot.lane.b32.xlu0 %v363, 16
      %v366 = vpop.permute.xlu0 %365
      %v368 = vadd.f32 %v358, %v366
      %v369 = vtanh.pop %v368
      %371 = vrot.lane.b32.xlu0 %v369, 32
      %v372 = vpop.permute.xlu0 %371
      %v374 = vmul.f32 %v356, %v372
      %376 = vrot.lane.b32.xlu0 %v374, 80
      %v377 = vpop.permute.xlu0 %376
      %v378 = vsel %vm233, %v377, 0
      %380 = vmatpush.msra.mxu0 0.0
      %381 = vmatpush.msra.mxu0 0.0
      %382 = vmatpush.msra.mxu0 0.0
      %383 = vmatpush.msra.mxu0 0.0
      %384 = vmatpush.msra.mxu0 0.0
      %385 = vmatpush.msra.mxu0 0.0
      %386 = vmatpush.msra.mxu0 0.0
      %387 = vmatpush.msra.mxu0 0.0
      %388 = vmatpush.msra.mxu0 0.0
      %389 = vmatpush.msra.mxu0 0.0
      %390 = vmatpush.msra.mxu0 0.0
      %391 = vmatpush.msra.mxu0 0.0
      %392 = vmatpush.msra.mxu0 0.0
      %393 = vmatpush.msra.mxu0 0.0
      %394 = vmatpush.msra.mxu0 %v232
      %395 = vmatpush.msra.mxu0 %v231
      %396 = vmatmul.f32.gmra.mxu0 %v378
      %v397 = vpop.f32.mrf.mxu0
      %v398 = vadd.f32 0.0, %v397
      %399 = vdwg.mxu0
      %v400 = vadd.f32 %v226, %v398
      %v401 = vmul.f32 %v400, 0.5
      %v402 = vtanh.pop %v401
      %v403 = vmul.f32 %v402, 0.5
      %v404 = vadd.f32 %v403, 0.5
      %v405 = vtanh.pop %v400
      %v406 = vmul.f32 %v404, %v368
      %408 = vrot.lane.b32.xlu0 %v405, 96
      %v409 = vpop.permute.xlu0 %408
      %v411 = vmul.f32 %v404, %v409
      %413 = vrot.lane.b32.xlu0 %v411, 16
      %v414 = vpop.permute.xlu0 %413
      %v416 = vadd.f32 %v406, %v414
      %v417 = vtanh.pop %v416
      %419 = vrot.lane.b32.xlu0 %v417, 32
      %v420 = vpop.permute.xlu0 %419
      %v422 = vmul.f32 %v404, %v420
      %424 = vrot.lane.b32.xlu0 %v422, 80
      %v425 = vpop.permute.xlu0 %424
      %v426 = vsel %vm233, %v425, 0
      %428 = vmatpush.msra.mxu0 0.0
      %429 = vmatpush.msra.mxu0 0.0
      %430 = vmatpush.msra.mxu0 0.0
      %431 = vmatpush.msra.mxu0 0.0
      %432 = vmatpush.msra.mxu0 0.0
      %433 = vmatpush.msra.mxu0 0.0
      %434 = vmatpush.msra.mxu0 0.0
      %435 = vmatpush.msra.mxu0 0.0
      %436 = vmatpush.msra.mxu0 0.0
      %437 = vmatpush.msra.mxu0 0.0
      %438 = vmatpush.msra.mxu0 0.0
      %439 = vmatpush.msra.mxu0 0.0
      %440 = vmatpush.msra.mxu0 0.0
      %441 = vmatpush.msra.mxu0 0.0
      %442 = vmatpush.msra.mxu0 %v232
      %443 = vmatpush.msra.mxu0 %v231
      %444 = vmatmul.f32.gmra.mxu0 %v426
      %v445 = vpop.f32.mrf.mxu0
      %v446 = vadd.f32 0.0, %v445
      %447 = vdwg.mxu0
      %v448 = vadd.f32 %v227, %v446
      %v449 = vmul.f32 %v448, 0.5
      %v450 = vtanh.pop %v449
      %v451 = vmul.f32 %v450, 0.5
      %v452 = vadd.f32 %v451, 0.5
      %v453 = vtanh.pop %v448
      %v454 = vmul.f32 %v452, %v416
      %456 = vrot.lane.b32.xlu0 %v453, 96
      %v457 = vpop.permute.xlu0 %456
      %v459 = vmul.f32 %v452, %v457
      %461 = vrot.lane.b32.xlu0 %v459, 16
      %v462 = vpop.permute.xlu0 %461
      %v464 = vadd.f32 %v454, %v462
      %v465 = vtanh.pop %v464
      %467 = vrot.lane.b32.xlu0 %v465, 32
      %v468 = vpop.permute.xlu0 %467
      %v470 = vmul.f32 %v452, %v468
      %472 = vrot.lane.b32.xlu0 %v470, 80
      %v473 = vpop.permute.xlu0 %472
      %v474 = vsel %vm233, %v473, 0
      %476 = vmatpush.msra.mxu0 0.0
      %477 = vmatpush.msra.mxu0 0.0
      %478 = vmatpush.msra.mxu0 0.0
      %479 = vmatpush.msra.mxu0 0.0
      %480 = vmatpush.msra.mxu0 0.0
      %481 = vmatpush.msra.mxu0 0.0
      %482 = vmatpush.msra.mxu0 0.0
      %483 = vmatpush.msra.mxu0 0.0
      %484 = vmatpush.msra.mxu0 0.0
      %485 = vmatpush.msra.mxu0 0.0
      %486 = vmatpush.msra.mxu0 0.0
      %487 = vmatpush.msra.mxu0 0.0
      %488 = vmatpush.msra.mxu0 0.0
      %489 = vmatpush.msra.mxu0 0.0
      %490 = vmatpush.msra.mxu0 %v232
      %491 = vmatpush.msra.mxu0 %v231
      %492 = vmatmul.f32.gmra.mxu0 %v474
      %v493 = vpop.f32.mrf.mxu0
      %v494 = vadd.f32 0.0, %v493
      %495 = vdwg.mxu0
      %v496 = vadd.f32 %v228, %v494
      %v497 = vmul.f32 %v496, 0.5
      %v498 = vtanh.pop %v497
      %v499 = vmul.f32 %v498, 0.5
      %v500 = vadd.f32 %v499, 0.5
      %v501 = vtanh.pop %v496
      %v502 = vmul.f32 %v500, %v464
      %504 = vrot.lane.b32.xlu0 %v501, 96
      %v505 = vpop.permute.xlu0 %504
      %v507 = vmul.f32 %v500, %v505
      %509 = vrot.lane.b32.xlu0 %v507, 16
      %v510 = vpop.permute.xlu0 %509
      %v512 = vadd.f32 %v502, %v510
      %v513 = vtanh.pop %v512
      %515 = vrot.lane.b32.xlu0 %v513, 32
      %v516 = vpop.permute.xlu0 %515
      %v518 = vmul.f32 %v500, %v516
      %520 = vrot.lane.b32.xlu0 %v518, 80
      %v521 = vpop.permute.xlu0 %520
      %v522 = vsel %vm233, %v521, 0
      %524 = vmatpush.msra.mxu0 0.0
      %525 = vmatpush.msra.mxu0 0.0
      %526 = vmatpush.msra.mxu0 0.0
      %527 = vmatpush.msra.mxu0 0.0
      %528 = vmatpush.msra.mxu0 0.0
      %529 = vmatpush.msra.mxu0 0.0
      %530 = vmatpush.msra.mxu0 0.0
      %531 = vmatpush.msra.mxu0 0.0
      %532 = vmatpush.msra.mxu0 0.0
      %533 = vmatpush.msra.mxu0 0.0
      %534 = vmatpush.msra.mxu0 0.0
      %535 = vmatpush.msra.mxu0 0.0
      %536 = vmatpush.msra.mxu0 0.0
      %537 = vmatpush.msra.mxu0 0.0
      %538 = vmatpush.msra.mxu0 %v232
      %539 = vmatpush.msra.mxu0 %v231
      %540 = vmatmul.f32.gmra.mxu0 %v522
      %v541 = vpop.f32.mrf.mxu0
      %v542 = vadd.f32 0.0, %v541
      %543 = vdwg.mxu0
      %v544 = vadd.f32 %v229, %v542
      %v545 = vmul.f32 %v544, 0.5
      %v546 = vtanh.pop %v545
      %v547 = vmul.f32 %v546, 0.5
      %v548 = vadd.f32 %v547, 0.5
      %v549 = vtanh.pop %v544
      %v550 = vmul.f32 %v548, %v512
      %552 = vrot.lane.b32.xlu0 %v549, 96
      %v553 = vpop.permute.xlu0 %552
      %v555 = vmul.f32 %v548, %v553
      %557 = vrot.lane.b32.xlu0 %v555, 16
      %v558 = vpop.permute.xlu0 %557
      %v560 = vadd.f32 %v550, %v558
      %v561 = vtanh.pop %v560
      %563 = vrot.lane.b32.xlu0 %v561, 32
      %v564 = vpop.permute.xlu0 %563
      %v566 = vmul.f32 %v548, %v564
      %568 = vrot.lane.b32.xlu0 %v566, 80
      %v569 = vpop.permute.xlu0 %568
      %v570 = vsel %vm233, %v569, 0
      %572 = vmatpush.msra.mxu0 0.0
      %573 = vmatpush.msra.mxu0 0.0
      %574 = vmatpush.msra.mxu0 0.0
      %575 = vmatpush.msra.mxu0 0.0
      %576 = vmatpush.msra.mxu0 0.0
      %577 = vmatpush.msra.mxu0 0.0
      %578 = vmatpush.msra.mxu0 0.0
      %579 = vmatpush.msra.mxu0 0.0
      %580 = vmatpush.msra.mxu0 0.0
      %581 = vmatpush.msra.mxu0 0.0
      %582 = vmatpush.msra.mxu0 0.0
      %583 = vmatpush.msra.mxu0 0.0
      %584 = vmatpush.msra.mxu0 0.0
      %585 = vmatpush.msra.mxu0 0.0
      %586 = vmatpush.msra.mxu0 %v232
      %587 = vmatpush.msra.mxu0 %v231
      %588 = vmatmul.f32.gmra.mxu0 %v570
      %v589 = vpop.f32.mrf.mxu0
      %v590 = vadd.f32 0.0, %v589
      %591 = vdwg.mxu0
      %v592 = vadd.f32 %v230, %v590
      %v593 = vmul.f32 %v592, 0.5
      %v594 = vtanh.pop %v593
      %v595 = vmul.f32 %v594, 0.5
      %v596 = vadd.f32 %v595, 0.5
      %v597 = vtanh.pop %v592
      %v598 = vmul.f32 %v596, %v560
      %600 = vrot.lane.b32.xlu0 %v597, 96
      %v601 = vpop.permute.xlu0 %600
      %v603 = vmul.f32 %v596, %v601
      %605 = vrot.lane.b32.xlu0 %v603, 16
      %v606 = vpop.permute.xlu0 %605
      %v608 = vadd.f32 %v598, %v606
      %v609 = vtanh.pop %v608
      %611 = vrot.lane.b32.xlu0 %v609, 32
      %v612 = vpop.permute.xlu0 %611
      %v614 = vmul.f32 %v596, %v612
      %v615 = vld [vmem:[%s1 + $0x58] sm:$0x1]
      %v616 = vld [vmem:[%s1 + $0x30] sm:$0xff]
      %v617 = vld [vmem:[%s1 + $0x38] sm:$0xff]
      %v618 = vld [vmem:[%s1 + $0x40] sm:$0xff]
      %619 = vmatpush.msra.mxu0 0.0
      %620 = vmatpush.msra.mxu0 0.0
      %621 = vmatpush.msra.mxu0 0.0
      %622 = vmatpush.msra.mxu0 0.0
      %623 = vmatpush.msra.mxu0 0.0
      %624 = vmatpush.msra.mxu0 0.0
      %625 = vmatpush.msra.mxu0 0.0
      %626 = vmatpush.msra.mxu0 0.0
      %627 = vmatpush.msra.mxu0 0.0
      %628 = vmatpush.msra.mxu0 0.0
      %629 = vmatpush.msra.mxu0 0.0
      %630 = vmatpush.msra.mxu0 0.0
      %631 = vmatpush.msra.mxu0 0.0
      %632 = vmatpush.msra.mxu0 %v618
      %633 = vmatpush.msra.mxu0 %v617
      %634 = vmatpush.msra.mxu0 %v616
      %635 = vmatmul.f32.gmra.mxu0 %v158
      %v636 = vpop.f32.mrf.mxu0
      %v637 = vadd.f32 0.0, %v636
      %638 = vmatmul.f32.gmra.mxu0 %v161
      %v639 = vpop.f32.mrf.mxu0
      %v640 = vadd.f32 0.0, %v639
      %641 = vmatmul.f32.gmra.mxu0 %v164
      %v642 = vpop.f32.mrf.mxu0
      %v643 = vadd.f32 0.0, %v642
      %644 = vmatmul.f32.gmra.mxu0 %v167
      %v645 = vpop.f32.mrf.mxu0
      %v646 = vadd.f32 0.0, %v645
      %647 = vmatmul.f32.gmra.mxu0 %v170
      %v648 = vpop.f32.mrf.mxu0
      %v649 = vadd.f32 0.0, %v648
      %650 = vmatmul.f32.gmra.mxu0 %v173
      %v651 = vpop.f32.mrf.mxu0
      %v652 = vadd.f32 0.0, %v651
      %653 = vmatmul.f32.gmra.mxu0 %v176
      %v654 = vpop.f32.mrf.mxu0
      %v655 = vadd.f32 0.0, %v654
      %656 = vmatmul.f32.gmra.mxu0 %v179
      %v657 = vpop.f32.mrf.mxu0
      %v658 = vadd.f32 0.0, %v657
      %659 = vdwg.mxu0
      %v660 = vperm.slane %v615, 0
      %v661 = vadd.f32 %v660, %v637
      %v662 = vadd.f32 %v660, %v640
      %v663 = vadd.f32 %v660, %v643
      %v664 = vadd.f32 %v660, %v646
      %v665 = vadd.f32 %v660, %v649
      %v666 = vadd.f32 %v660, %v652
      %v667 = vadd.f32 %v660, %v655
      %v668 = vadd.f32 %v660, %v658
      %v669 = vld [vmem:[%s1 + $0x48] sm:$0xff]
      %v670 = vld [vmem:[%s1 + $0x50] sm:$0xff]
      %671 = vmatpush.msra.mxu0 0.0
      %672 = vmatpush.msra.mxu0 0.0
      %673 = vmatpush.msra.mxu0 0.0
      %674 = vmatpush.msra.mxu0 0.0
      %675 = vmatpush.msra.mxu0 0.0
      %676 = vmatpush.msra.mxu0 0.0
      %677 = vmatpush.msra.mxu0 0.0
      %678 = vmatpush.msra.mxu0 0.0
      %679 = vmatpush.msra.mxu0 0.0
      %680 = vmatpush.msra.mxu0 0.0
      %681 = vmatpush.msra.mxu0 0.0
      %682 = vmatpush.msra.mxu0 0.0
      %683 = vmatpush.msra.mxu0 0.0
      %684 = vmatpush.msra.mxu0 0.0
      %685 = vmatpush.msra.mxu0 %v670
      %686 = vmatpush.msra.mxu0 %v669
      %687 = vmatmul.f32.gmra.mxu0 %v235
      %v688 = vpop.f32.mrf.mxu0
      %v689 = vadd.f32 0.0, %v688
      %690 = vdwg.mxu0
      %v691 = vadd.f32 %v668, %v689
      %v692 = vmul.f32 %v691, 0.5
      %v693 = vtanh.pop %v692
      %v694 = vmul.f32 %v693, 0.5
      %v695 = vadd.f32 %v694, 0.5
      %v696 = vtanh.pop %v691
      %698 = vrot.lane.b32.xlu0 %v696, 96
      %v699 = vpop.permute.xlu0 %698
      %v701 = vmul.f32 %v695, %v699
      %703 = vrot.lane.b32.xlu0 %v701, 16
      %v704 = vpop.permute.xlu0 %703
      %v706 = vadd.f32 %v695, %v704
      %v707 = vtanh.pop %v706
      %709 = vrot.lane.b32.xlu0 %v707, 32
      %v710 = vpop.permute.xlu0 %709
      %v712 = vmul.f32 %v695, %v710
      %714 = vrot.lane.b32.xlu0 %v712, 80
      %v715 = vpop.permute.xlu0 %714
      %v716 = vsel %vm233, %v715, 0
      %718 = vmatpush.msra.mxu0 0.0
      %719 = vmatpush.msra.mxu0 0.0
      %720 = vmatpush.msra.mxu0 0.0
      %721 = vmatpush.msra.mxu0 0.0
      %722 = vmatpush.msra.mxu0 0.0
      %723 = vmatpush.msra.mxu0 0.0
      %724 = vmatpush.msra.mxu0 0.0
      %725 = vmatpush.msra.mxu0 0.0
      %726 = vmatpush.msra.mxu0 0.0
      %727 = vmatpush.msra.mxu0 0.0
      %728 = vmatpush.msra.mxu0 0.0
      %729 = vmatpush.msra.mxu0 0.0
      %730 = vmatpush.msra.mxu0 0.0
      %731 = vmatpush.msra.mxu0 0.0
      %732 = vmatpush.msra.mxu0 %v670
      %733 = vmatpush.msra.mxu0 %v669
      %734 = vmatmul.f32.gmra.mxu0 %v716
      %v735 = vpop.f32.mrf.mxu0
      %v736 = vadd.f32 0.0, %v735
      %737 = vdwg.mxu0
      %v738 = vadd.f32 %v667, %v736
      %v739 = vmul.f32 %v738, 0.5
      %v740 = vtanh.pop %v739
      %v741 = vmul.f32 %v740, 0.5
      %v742 = vadd.f32 %v741, 0.5
      %v743 = vtanh.pop %v738
      %v744 = vmul.f32 %v742, %v706
      %746 = vrot.lane.b32.xlu0 %v743, 96
      %v747 = vpop.permute.xlu0 %746
      %v749 = vmul.f32 %v742, %v747
      %751 = vrot.lane.b32.xlu0 %v749, 16
      %v752 = vpop.permute.xlu0 %751
      %v754 = vadd.f32 %v744, %v752
      %v755 = vtanh.pop %v754
      %757 = vrot.lane.b32.xlu0 %v755, 32
      %v758 = vpop.permute.xlu0 %757
      %v760 = vmul.f32 %v742, %v758
      %762 = vrot.lane.b32.xlu0 %v760, 80
      %v763 = vpop.permute.xlu0 %762
      %v764 = vsel %vm233, %v763, 0
      %766 = vmatpush.msra.mxu0 0.0
      %767 = vmatpush.msra.mxu0 0.0
      %768 = vmatpush.msra.mxu0 0.0
      %769 = vmatpush.msra.mxu0 0.0
      %770 = vmatpush.msra.mxu0 0.0
      %771 = vmatpush.msra.mxu0 0.0
      %772 = vmatpush.msra.mxu0 0.0
      %773 = vmatpush.msra.mxu0 0.0
      %774 = vmatpush.msra.mxu0 0.0
      %775 = vmatpush.msra.mxu0 0.0
      %776 = vmatpush.msra.mxu0 0.0
      %777 = vmatpush.msra.mxu0 0.0
      %778 = vmatpush.msra.mxu0 0.0
      %779 = vmatpush.msra.mxu0 0.0
      %780 = vmatpush.msra.mxu0 %v670
      %781 = vmatpush.msra.mxu0 %v669
      %782 = vmatmul.f32.gmra.mxu0 %v764
      %v783 = vpop.f32.mrf.mxu0
      %v784 = vadd.f32 0.0, %v783
      %785 = vdwg.mxu0
      %v786 = vadd.f32 %v666, %v784
      %v787 = vmul.f32 %v786, 0.5
      %v788 = vtanh.pop %v787
      %v789 = vmul.f32 %v788, 0.5
      %v790 = vadd.f32 %v789, 0.5
      %v791 = vtanh.pop %v786
      %v792 = vmul.f32 %v790, %v754
      %794 = vrot.lane.b32.xlu0 %v791, 96
      %v795 = vpop.permute.xlu0 %794
      %v797 = vmul.f32 %v790, %v795
      %799 = vrot.lane.b32.xlu0 %v797, 16
      %v800 = vpop.permute.xlu0 %799
      %v802 = vadd.f32 %v792, %v800
      %v803 = vtanh.pop %v802
      %805 = vrot.lane.b32.xlu0 %v803, 32
      %v806 = vpop.permute.xlu0 %805
      %v808 = vmul.f32 %v790, %v806
      %810 = vrot.lane.b32.xlu0 %v808, 80
      %v811 = vpop.permute.xlu0 %810
      %v812 = vsel %vm233, %v811, 0
      %814 = vmatpush.msra.mxu0 0.0
      %815 = vmatpush.msra.mxu0 0.0
      %816 = vmatpush.msra.mxu0 0.0
      %817 = vmatpush.msra.mxu0 0.0
      %818 = vmatpush.msra.mxu0 0.0
      %819 = vmatpush.msra.mxu0 0.0
      %820 = vmatpush.msra.mxu0 0.0
      %821 = vmatpush.msra.mxu0 0.0
      %822 = vmatpush.msra.mxu0 0.0
      %823 = vmatpush.msra.mxu0 0.0
      %824 = vmatpush.msra.mxu0 0.0
      %825 = vmatpush.msra.mxu0 0.0
      %826 = vmatpush.msra.mxu0 0.0
      %827 = vmatpush.msra.mxu0 0.0
      %828 = vmatpush.msra.mxu0 %v670
      %829 = vmatpush.msra.mxu0 %v669
      %830 = vmatmul.f32.gmra.mxu0 %v812
      %v831 = vpop.f32.mrf.mxu0
      %v832 = vadd.f32 0.0, %v831
      %833 = vdwg.mxu0
      %v834 = vadd.f32 %v665, %v832
      %v835 = vmul.f32 %v834, 0.5
      %v836 = vtanh.pop %v835
      %v837 = vmul.f32 %v836, 0.5
      %v838 = vadd.f32 %v837, 0.5
      %v839 = vtanh.pop %v834
      %v840 = vmul.f32 %v838, %v802
      %842 = vrot.lane.b32.xlu0 %v839, 96
      %v843 = vpop.permute.xlu0 %842
      %v845 = vmul.f32 %v838, %v843
      %847 = vrot.lane.b32.xlu0 %v845, 16
      %v848 = vpop.permute.xlu0 %847
      %v850 = vadd.f32 %v840, %v848
      %v851 = vtanh.pop %v850
      %853 = vrot.lane.b32.xlu0 %v851, 32
      %v854 = vpop.permute.xlu0 %853
      %v856 = vmul.f32 %v838, %v854
      %858 = vrot.lane.b32.xlu0 %v856, 80
      %v859 = vpop.permute.xlu0 %858
      %v860 = vsel %vm233, %v859, 0
      %862 = vmatpush.msra.mxu0 0.0
      %863 = vmatpush.msra.mxu0 0.0
      %864 = vmatpush.msra.mxu0 0.0
      %865 = vmatpush.msra.mxu0 0.0
      %866 = vmatpush.msra.mxu0 0.0
      %867 = vmatpush.msra.mxu0 0.0
      %868 = vmatpush.msra.mxu0 0.0
      %869 = vmatpush.msra.mxu0 0.0
      %870 = vmatpush.msra.mxu0 0.0
      %871 = vmatpush.msra.mxu0 0.0
      %872 = vmatpush.msra.mxu0 0.0
      %873 = vmatpush.msra.mxu0 0.0
      %874 = vmatpush.msra.mxu0 0.0
      %875 = vmatpush.msra.mxu0 0.0
      %876 = vmatpush.msra.mxu0 %v670
      %877 = vmatpush.msra.mxu0 %v669
      %878 = vmatmul.f32.gmra.mxu0 %v860
      %v879 = vpop.f32.mrf.mxu0
      %v880 = vadd.f32 0.0, %v879
      %881 = vdwg.mxu0
      %v882 = vadd.f32 %v664, %v880
      %v883 = vmul.f32 %v882, 0.5
      %v884 = vtanh.pop %v883
      %v885 = vmul.f32 %v884, 0.5
      %v886 = vadd.f32 %v885, 0.5
      %v887 = vtanh.pop %v882
      %v888 = vmul.f32 %v886, %v850
      %890 = vrot.lane.b32.xlu0 %v887, 96
      %v891 = vpop.permute.xlu0 %890
      %v893 = vmul.f32 %v886, %v891
      %895 = vrot.lane.b32.xlu0 %v893, 16
      %v896 = vpop.permute.xlu0 %895
      %v898 = vadd.f32 %v888, %v896
      %v899 = vtanh.pop %v898
      %901 = vrot.lane.b32.xlu0 %v899, 32
      %v902 = vpop.permute.xlu0 %901
      %v904 = vmul.f32 %v886, %v902
      %906 = vrot.lane.b32.xlu0 %v904, 80
      %v907 = vpop.permute.xlu0 %906
      %v908 = vsel %vm233, %v907, 0
      %910 = vmatpush.msra.mxu0 0.0
      %911 = vmatpush.msra.mxu0 0.0
      %912 = vmatpush.msra.mxu0 0.0
      %913 = vmatpush.msra.mxu0 0.0
      %914 = vmatpush.msra.mxu0 0.0
      %915 = vmatpush.msra.mxu0 0.0
      %916 = vmatpush.msra.mxu0 0.0
      %917 = vmatpush.msra.mxu0 0.0
      %918 = vmatpush.msra.mxu0 0.0
      %919 = vmatpush.msra.mxu0 0.0
      %920 = vmatpush.msra.mxu0 0.0
      %921 = vmatpush.msra.mxu0 0.0
      %922 = vmatpush.msra.mxu0 0.0
      %923 = vmatpush.msra.mxu0 0.0
      %924 = vmatpush.msra.mxu0 %v670
      %925 = vmatpush.msra.mxu0 %v669
      %926 = vmatmul.f32.gmra.mxu0 %v908
      %v927 = vpop.f32.mrf.mxu0
      %v928 = vadd.f32 0.0, %v927
      %929 = vdwg.mxu0
      %v930 = vadd.f32 %v663, %v928
      %v931 = vmul.f32 %v930, 0.5
      %v932 = vtanh.pop %v931
      %v933 = vmul.f32 %v932, 0.5
      %v934 = vadd.f32 %v933, 0.5
      %v935 = vtanh.pop %v930
      %v936 = vmul.f32 %v934, %v898
      %938 = vrot.lane.b32.xlu0 %v935, 96
      %v939 = vpop.permute.xlu0 %938
      %v941 = vmul.f32 %v934, %v939
      %943 = vrot.lane.b32.xlu0 %v941, 16
      %v944 = vpop.permute.xlu0 %943
      %v946 = vadd.f32 %v936, %v944
      %v947 = vtanh.pop %v946
      %949 = vrot.lane.b32.xlu0 %v947, 32
      %v950 = vpop.permute.xlu0 %949
      %v952 = vmul.f32 %v934, %v950
      %954 = vrot.lane.b32.xlu0 %v952, 80
      %v955 = vpop.permute.xlu0 %954
      %v956 = vsel %vm233, %v955, 0
      %958 = vmatpush.msra.mxu0 0.0
      %959 = vmatpush.msra.mxu0 0.0
      %960 = vmatpush.msra.mxu0 0.0
      %961 = vmatpush.msra.mxu0 0.0
      %962 = vmatpush.msra.mxu0 0.0
      %963 = vmatpush.msra.mxu0 0.0
      %964 = vmatpush.msra.mxu0 0.0
      %965 = vmatpush.msra.mxu0 0.0
      %966 = vmatpush.msra.mxu0 0.0
      %967 = vmatpush.msra.mxu0 0.0
      %968 = vmatpush.msra.mxu0 0.0
      %969 = vmatpush.msra.mxu0 0.0
      %970 = vmatpush.msra.mxu0 0.0
      %971 = vmatpush.msra.mxu0 0.0
      %972 = vmatpush.msra.mxu0 %v670
      %973 = vmatpush.msra.mxu0 %v669
      %974 = vmatmul.f32.gmra.mxu0 %v956
      %v975 = vpop.f32.mrf.mxu0
      %v976 = vadd.f32 0.0, %v975
      %977 = vdwg.mxu0
      %v978 = vadd.f32 %v662, %v976
      %v979 = vmul.f32 %v978, 0.5
      %v980 = vtanh.pop %v979
      %v981 = vmul.f32 %v980, 0.5
      %v982 = vadd.f32 %v981, 0.5
      %v983 = vtanh.pop %v978
      %v984 = vmul.f32 %v982, %v946
      %986 = vrot.lane.b32.xlu0 %v983, 96
      %v987 = vpop.permute.xlu0 %986
      %v989 = vmul.f32 %v982, %v987
      %991 = vrot.lane.b32.xlu0 %v989, 16
      %v992 = vpop.permute.xlu0 %991
      %v994 = vadd.f32 %v984, %v992
      %v995 = vtanh.pop %v994
      %997 = vrot.lane.b32.xlu0 %v995, 32
      %v998 = vpop.permute.xlu0 %997
      %v1000 = vmul.f32 %v982, %v998
      %1002 = vrot.lane.b32.xlu0 %v1000, 80
      %v1003 = vpop.permute.xlu0 %1002
      %v1004 = vsel %vm233, %v1003, 0
      %1006 = vmatpush.msra.mxu0 0.0
      %1007 = vmatpush.msra.mxu0 0.0
      %1008 = vmatpush.msra.mxu0 0.0
      %1009 = vmatpush.msra.mxu0 0.0
      %1010 = vmatpush.msra.mxu0 0.0
      %1011 = vmatpush.msra.mxu0 0.0
      %1012 = vmatpush.msra.mxu0 0.0
      %1013 = vmatpush.msra.mxu0 0.0
      %1014 = vmatpush.msra.mxu0 0.0
      %1015 = vmatpush.msra.mxu0 0.0
      %1016 = vmatpush.msra.mxu0 0.0
      %1017 = vmatpush.msra.mxu0 0.0
      %1018 = vmatpush.msra.mxu0 0.0
      %1019 = vmatpush.msra.mxu0 0.0
      %1020 = vmatpush.msra.mxu0 %v670
      %1021 = vmatpush.msra.mxu0 %v669
      %1022 = vmatmul.f32.gmra.mxu0 %v1004
      %v1023 = vpop.f32.mrf.mxu0
      %v1024 = vadd.f32 0.0, %v1023
      %1025 = vdwg.mxu0
      %v1026 = vadd.f32 %v661, %v1024
      %v1027 = vmul.f32 %v1026, 0.5
      %v1028 = vtanh.pop %v1027
      %v1029 = vmul.f32 %v1028, 0.5
      %v1030 = vadd.f32 %v1029, 0.5
      %v1031 = vtanh.pop %v1026
      %v1032 = vmul.f32 %v1030, %v994
      %1034 = vrot.lane.b32.xlu0 %v1031, 96
      %v1035 = vpop.permute.xlu0 %1034
      %v1037 = vmul.f32 %v1030, %v1035
      %1039 = vrot.lane.b32.xlu0 %v1037, 16
      %v1040 = vpop.permute.xlu0 %1039
      %v1042 = vadd.f32 %v1032, %v1040
      %v1043 = vtanh.pop %v1042
      %1045 = vrot.lane.b32.xlu0 %v1043, 32
      %v1046 = vpop.permute.xlu0 %1045
      %v1048 = vmul.f32 %v1030, %v1046
      %v1049 = vld [vmem:[%s1 + $0x80] sm:$0x1]
      %v1050 = vld [vmem:[%s1 + $0x60] sm:$0xff]
      %v1051 = vld [vmem:[%s1 + $0x68] sm:$0xff]
      %1053 = vrot.lane.b32.xlu0 %v614, 80
      %v1054 = vpop.permute.xlu0 %1053
      %v1055 = vsel %vm233, %v1054, 0
      %1057 = vmatpush.msra.mxu0 0.0
      %1058 = vmatpush.msra.mxu0 0.0
      %1059 = vmatpush.msra.mxu0 0.0
      %1060 = vmatpush.msra.mxu0 0.0
      %1061 = vmatpush.msra.mxu0 0.0
      %1062 = vmatpush.msra.mxu0 0.0
      %1063 = vmatpush.msra.mxu0 0.0
      %1064 = vmatpush.msra.mxu0 0.0
      %1065 = vmatpush.msra.mxu0 0.0
      %1066 = vmatpush.msra.mxu0 0.0
      %1067 = vmatpush.msra.mxu0 0.0
      %1068 = vmatpush.msra.mxu0 0.0
      %1069 = vmatpush.msra.mxu0 0.0
      %1070 = vmatpush.msra.mxu0 0.0
      %1071 = vmatpush.msra.mxu0 %v1051
      %1072 = vmatpush.msra.mxu0 %v1050
      %1073 = vmatmul.f32.gmra.mxu0 %v282
      %v1074 = vpop.f32.mrf.mxu0
      %v1075 = vadd.f32 0.0, %v1074
      %1076 = vmatmul.f32.gmra.mxu0 %v330
      %v1077 = vpop.f32.mrf.mxu0
      %v1078 = vadd.f32 0.0, %v1077
      %1079 = vmatmul.f32.gmra.mxu0 %v378
      %v1080 = vpop.f32.mrf.mxu0
      %v1081 = vadd.f32 0.0, %v1080
      %1082 = vmatmul.f32.gmra.mxu0 %v426
      %v1083 = vpop.f32.mrf.mxu0
      %v1084 = vadd.f32 0.0, %v1083
      %1085 = vmatmul.f32.gmra.mxu0 %v474
      %v1086 = vpop.f32.mrf.mxu0
      %v1087 = vadd.f32 0.0, %v1086
      %1088 = vmatmul.f32.gmra.mxu0 %v522
      %v1089 = vpop.f32.mrf.mxu0
      %v1090 = vadd.f32 0.0, %v1089
      %1091 = vmatmul.f32.gmra.mxu0 %v570
      %v1092 = vpop.f32.mrf.mxu0
      %v1093 = vadd.f32 0.0, %v1092
      %1094 = vmatmul.f32.gmra.mxu0 %v1055
      %v1095 = vpop.f32.mrf.mxu0
      %v1096 = vadd.f32 0.0, %v1095
      %1097 = vdwg.mxu0
      %v1098 = vperm.slane %v1049, 0
      %v1099 = vadd.f32 %v1098, %v1075
      %v1100 = vadd.f32 %v1098, %v1078
      %v1101 = vadd.f32 %v1098, %v1081
      %v1102 = vadd.f32 %v1098, %v1084
      %v1103 = vadd.f32 %v1098, %v1087
      %v1104 = vadd.f32 %v1098, %v1090
      %v1105 = vadd.f32 %v1098, %v1093
      %v1106 = vadd.f32 %v1098, %v1096
      %v1107 = vld [vmem:[%s1 + $0x70] sm:$0xff]
      %v1108 = vld [vmem:[%s1 + $0x78] sm:$0xff]
      %1110 = vrot.lane.b32.xlu0 %v1048, 80
      %v1111 = vpop.permute.xlu0 %1110
      %v1112 = vsel %vm233, %v1111, 0
      %1114 = vmatpush.msra.mxu0 0.0
      %1115 = vmatpush.msra.mxu0 0.0
      %1116 = vmatpush.msra.mxu0 0.0
      %1117 = vmatpush.msra.mxu0 0.0
      %1118 = vmatpush.msra.mxu0 0.0
      %1119 = vmatpush.msra.mxu0 0.0
      %1120 = vmatpush.msra.mxu0 0.0
      %1121 = vmatpush.msra.mxu0 0.0
      %1122 = vmatpush.msra.mxu0 0.0
      %1123 = vmatpush.msra.mxu0 0.0
      %1124 = vmatpush.msra.mxu0 0.0
      %1125 = vmatpush.msra.mxu0 0.0
      %1126 = vmatpush.msra.mxu0 0.0
      %1127 = vmatpush.msra.mxu0 0.0
      %1128 = vmatpush.msra.mxu0 %v1108
      %1129 = vmatpush.msra.mxu0 %v1107
      %1130 = vmatmul.f32.gmra.mxu0 %v1112
      %v1131 = vpop.f32.mrf.mxu0
      %v1132 = vadd.f32 0.0, %v1131
      %1133 = vmatmul.f32.gmra.mxu0 %v1004
      %v1134 = vpop.f32.mrf.mxu0
      %v1135 = vadd.f32 0.0, %v1134
      %1136 = vmatmul.f32.gmra.mxu0 %v956
      %v1137 = vpop.f32.mrf.mxu0
      %v1138 = vadd.f32 0.0, %v1137
      %1139 = vmatmul.f32.gmra.mxu0 %v908
      %v1140 = vpop.f32.mrf.mxu0
      %v1141 = vadd.f32 0.0, %v1140
      %1142 = vmatmul.f32.gmra.mxu0 %v860
      %v1143 = vpop.f32.mrf.mxu0
      %v1144 = vadd.f32 0.0, %v1143
      %1145 = vmatmul.f32.gmra.mxu0 %v812
      %v1146 = vpop.f32.mrf.mxu0
      %v1147 = vadd.f32 0.0, %v1146
      %1148 = vmatmul.f32.gmra.mxu0 %v764
      %v1149 = vpop.f32.mrf.mxu0
      %v1150 = vadd.f32 0.0, %v1149
      %1151 = vmatmul.f32.gmra.mxu0 %v716
      %v1152 = vpop.f32.mrf.mxu0
      %v1153 = vadd.f32 0.0, %v1152
      %1154 = vdwg.mxu0
      %v1155 = vadd.f32 %v1099, %v1132
      %v1156 = vadd.f32 %v1100, %v1135
      %v1157 = vadd.f32 %v1101, %v1138
      %v1158 = vadd.f32 %v1102, %v1141
      %v1159 = vadd.f32 %v1103, %v1144
      %v1160 = vadd.f32 %v1104, %v1147
      %v1161 = vadd.f32 %v1105, %v1150
      %v1162 = vadd.f32 %v1106, %v1153
      %1163 = vxpose.xlu0.b32.start [1/16] %v1155, 128
      %1164 = vxpose.xlu0.b32.cont [2/16] %v1156, 128
      %1165 = vxpose.xlu0.b32.cont [3/16] %v1157, 128
      %1166 = vxpose.xlu0.b32.cont [4/16] %v1158, 128
      %1167 = vxpose.xlu0.b32.cont [5/16] %v1159, 128
      %1168 = vxpose.xlu0.b32.cont [6/16] %v1160, 128
      %1169 = vxpose.xlu0.b32.cont [7/16] %v1161, 128
      %1170 = vxpose.xlu0.b32.cont [8/16] %v1162, 128
      %1171 = vxpose.xlu0.b32.cont [9/16] 0.0, 128
      %1172 = vxpose.xlu0.b32.cont [10/16] 0.0, 128
      %1173 = vxpose.xlu0.b32.cont [11/16] 0.0, 128
      %1174 = vxpose.xlu0.b32.cont [12/16] 0.0, 128
      %1175 = vxpose.xlu0.b32.cont [13/16] 0.0, 128
      %1176 = vxpose.xlu0.b32.cont [14/16] 0.0, 128
      %1177 = vxpose.xlu0.b32.cont [15/16] 0.0, 128
      %1178 = vxpose.xlu0.b32.end [16/16] 0.0, 128
      %v1179 = vpop.trf.xlu0
      %v1180 = vpop.trf.xlu0
      %v1181 = vpop.trf.xlu0
      %v1182 = vpop.trf.xlu0
      %v1183 = vpop.trf.xlu0
      %v1184 = vpop.trf.xlu0
      %v1185 = vpop.trf.xlu0
      %v1186 = vpop.trf.xlu0
      %v1187 = vpop.trf.xlu0
      %v1188 = vpop.trf.xlu0
      %v1189 = vpop.trf.xlu0
      %v1190 = vpop.trf.xlu0
      %v1191 = vpop.trf.xlu0
      %v1192 = vpop.trf.xlu0
      %v1193 = vpop.trf.xlu0
      %v1194 = vpop.trf.xlu0
      %v1195 = vld [vmem:[%s1 + $0x88] sm:$0xff]
      %v1196 = vld [vmem:[%s1 + $0x90] sm:$0xff]
      %v1197 = vld [vmem:[%s1 + $0x98] sm:$0xff]
      %v1198 = vld [vmem:[%s1 + $0xa0] sm:$0xf]
      %v1199 = vld [vmem:[%s1 + $0xa8] sm:$0xff]
      %v1200 = vld [vmem:[%s1 + $0xb0] sm:$0xff]
      %v1201 = vld [vmem:[%s1 + $0xb8] sm:$0xff]
      %v1202 = vld [vmem:[%s1 + $0xc0] sm:$0xf]
      %v1203 = vlaneseq
      %v1204 = vand.u32 %v1203, 127
      %v1205 = vcvt.s32.f32 %v1204
      %v1206 = vlaneseq
      %v1207 = vshrl.u32 %v1206, 7
      %v1208 = vadd.s32 %v1207, 8
      %v1209 = vadd.s32 %v1207, 16
      %v1210 = vadd.s32 %v1207, 24
      %v1211 = vcvt.s32.f32 %v1207
      %v1212 = vcvt.s32.f32 %v1208
      %v1213 = vcvt.s32.f32 %v1209
      %v1214 = vcvt.s32.f32 %v1210
      %vm1215 = vcmp.eq.s32.totalorder %v1204, 26
      %v1216 = vsel %vm1215, 0.0, -10000.0
      %v1217 = vadd.f32 %v1195, %v1216
      %v1218 = vadd.f32 %v1196, %v1216
      %v1219 = vadd.f32 %v1197, %v1216
      %v1220 = vadd.f32 %v1198, %v1216
      %vm1221 = vcmask 228352
      %v1222 = vsel %vm1221, %v1217, -inf
      %1223 = vmax.xlane.f32.xlu0 %v1222
      %v1224 = vpop.xlane.xlu0 %1223
      %v1225 = vsel %vm1221, %v1218, -inf
      %1226 = vmax.xlane.f32.xlu0 %v1225
      %v1227 = vpop.xlane.xlu0 %1226
      %v1228 = vsel %vm1221, %v1219, -inf
      %1229 = vmax.xlane.f32.xlu0 %v1228
      %v1230 = vpop.xlane.xlu0 %1229
      %vm1231 = vcmask 224256
      %v1232 = vsel %vm1231, %v1220, -inf
      %1233 = vmax.xlane.f32.xlu0 %v1232
      %v1234 = vpop.xlane.xlu0 %1233
      %vm1235 = vcmp.eq.f32.partialorder %v1217, %v1224
      %vm1236 = vcmp.eq.f32.partialorder %v1218, %v1227
      %vm1237 = vcmp.eq.f32.partialorder %v1219, %v1230
      %vm1238 = vcmp.eq.f32.partialorder %v1220, %v1234
      %v1239 = vsel %vm1235, %v1205, 28.0
      %v1240 = vsel %vm1236, %v1205, 28.0
      %v1241 = vsel %vm1237, %v1205, 28.0
      %v1242 = vsel %vm1238, %v1205, 28.0
      %v1243 = vsel %vm1221, %v1239, inf
      %1244 = vmin.xlane.f32.xlu0 %v1243
      %v1245 = vpop.xlane.xlu0 %1244
      %v1246 = vsel %vm1221, %v1240, inf
      %1247 = vmin.xlane.f32.xlu0 %v1246
      %v1248 = vpop.xlane.xlu0 %1247
      %v1249 = vsel %vm1221, %v1241, inf
      %1250 = vmin.xlane.f32.xlu0 %v1249
      %v1251 = vpop.xlane.xlu0 %1250
      %v1252 = vsel %vm1231, %v1242, inf
      %1253 = vmin.xlane.f32.xlu0 %v1252
      %v1254 = vpop.xlane.xlu0 %1253
      %v1255 = vadd.f32 %v1224, %v1179
      %v1256 = vadd.f32 %v1227, %v1180
      %v1257 = vadd.f32 %v1230, %v1181
      %v1258 = vadd.f32 %v1234, %v1182
      %1260 = vset.pattern.permute.xlu0 0
      %1261 = vperm.xlu0 %1260, %v1255
      %v1262 = vpop.permute.xlu0 %1261
      %1265 = vset.pattern.permute.xlu0 0
      %1266 = vperm.xlu0 %1265, %v1256
      %v1267 = vpop.permute.xlu0 %1266
      %1270 = vset.pattern.permute.xlu0 0
      %1271 = vperm.xlu0 %1270, %v1257
      %v1272 = vpop.permute.xlu0 %1271
      %1275 = vset.pattern.permute.xlu0 0
      %1276 = vperm.xlu0 %1275, %v1258
      %v1277 = vpop.permute.xlu0 %1276
      %v1279 = vadd.f32 %v1199, %v1262
      %v1280 = vadd.f32 %v1200, %v1267
      %v1281 = vadd.f32 %v1201, %v1272
      %v1282 = vadd.f32 %v1202, %v1277
      %v1283 = vsel %vm1221, %v1279, -inf
      %v1284 = vsel %vm1221, %v1280, -inf
      %v1285 = vsel %vm1221, %v1281, -inf
      %v1286 = vsel %vm1231, %v1282, -inf
      %v1287 = vmax.f32 %v1283, %v1284
      %v1288 = vmax.f32 %v1285, %v1286
      %v1289 = vmax.f32 %v1287, %v1288
      %v1290 = vrot.slane %v1289, 4
      %v1291 = vmax.f32 %v1289, %v1290
      %v1292 = vrot.slane %v1291, 2
      %v1293 = vmax.f32 %v1291, %v1292
      %v1294 = vrot.slane %v1293, 1
      %v1295 = vmax.f32 %v1293, %v1294
      %vm1296 = vcmp.eq.f32.partialorder %v1279, %v1295
      %vm1297 = vcmp.eq.f32.partialorder %v1280, %v1295
      %vm1298 = vcmp.eq.f32.partialorder %v1281, %v1295
      %vm1299 = vcmp.eq.f32.partialorder %v1282, %v1295
      %v1300 = vsel %vm1296, %v1211, 28.0
      %v1301 = vsel %vm1297, %v1212, 28.0
      %v1302 = vsel %vm1298, %v1213, 28.0
      %v1303 = vsel %vm1299, %v1214, 28.0
      %v1304 = vsel %vm1221, %v1300, inf
      %v1305 = vsel %vm1221, %v1301, inf
      %v1306 = vsel %vm1221, %v1302, inf
      %v1307 = vsel %vm1231, %v1303, inf
      %v1308 = vmin.f32 %v1304, %v1305
      %v1309 = vmin.f32 %v1306, %v1307
      %v1310 = vmin.f32 %v1308, %v1309
      %v1311 = vrot.slane %v1310, 4
      %v1312 = vmin.f32 %v1310, %v1311
      %v1313 = vrot.slane %v1312, 2
      %v1314 = vmin.f32 %v1312, %v1313
      %v1315 = vrot.slane %v1314, 1
      %v1316 = vmin.f32 %v1314, %v1315
      %v1317 = vadd.f32 %v1295, %v1156
      %v1318 = vperm.slane %v1317, 0
      %v1319 = vadd.f32 %v1195, %v1318
      %v1320 = vadd.f32 %v1196, %v1318
      %v1321 = vadd.f32 %v1197, %v1318
      %v1322 = vadd.f32 %v1198, %v1318
      %v1323 = vsel %vm1221, %v1319, -inf
      %1324 = vmax.xlane.f32.xlu0 %v1323
      %v1325 = vpop.xlane.xlu0 %1324
      %v1326 = vsel %vm1221, %v1320, -inf
      %1327 = vmax.xlane.f32.xlu0 %v1326
      %v1328 = vpop.xlane.xlu0 %1327
      %v1329 = vsel %vm1221, %v1321, -inf
      %1330 = vmax.xlane.f32.xlu0 %v1329
      %v1331 = vpop.xlane.xlu0 %1330
      %v1332 = vsel %vm1231, %v1322, -inf
      %1333 = vmax.xlane.f32.xlu0 %v1332
      %v1334 = vpop.xlane.xlu0 %1333
      %vm1335 = vcmp.eq.f32.partialorder %v1319, %v1325
      %vm1336 = vcmp.eq.f32.partialorder %v1320, %v1328
      %vm1337 = vcmp.eq.f32.partialorder %v1321, %v1331
      %vm1338 = vcmp.eq.f32.partialorder %v1322, %v1334
      %v1339 = vsel %vm1335, %v1205, 28.0
      %v1340 = vsel %vm1336, %v1205, 28.0
      %v1341 = vsel %vm1337, %v1205, 28.0
      %v1342 = vsel %vm1338, %v1205, 28.0
      %v1343 = vsel %vm1221, %v1339, inf
      %1344 = vmin.xlane.f32.xlu0 %v1343
      %v1345 = vpop.xlane.xlu0 %1344
      %v1346 = vsel %vm1221, %v1340, inf
      %1347 = vmin.xlane.f32.xlu0 %v1346
      %v1348 = vpop.xlane.xlu0 %1347
      %v1349 = vsel %vm1221, %v1341, inf
      %1350 = vmin.xlane.f32.xlu0 %v1349
      %v1351 = vpop.xlane.xlu0 %1350
      %v1352 = vsel %vm1231, %v1342, inf
      %1353 = vmin.xlane.f32.xlu0 %v1352
      %v1354 = vpop.xlane.xlu0 %1353
      %v1355 = vadd.f32 %v1325, %v1179
      %v1356 = vadd.f32 %v1328, %v1180
      %v1357 = vadd.f32 %v1331, %v1181
      %v1358 = vadd.f32 %v1334, %v1182
      %1360 = vset.pattern.permute.xlu0 16
      %1361 = vperm.xlu0 %1360, %v1355
      %v1362 = vpop.permute.xlu0 %1361
      %1365 = vset.pattern.permute.xlu0 16
      %1366 = vperm.xlu0 %1365, %v1356
      %v1367 = vpop.permute.xlu0 %1366
      %1370 = vset.pattern.permute.xlu0 16
      %1371 = vperm.xlu0 %1370, %v1357
      %v1372 = vpop.permute.xlu0 %1371
      %1375 = vset.pattern.permute.xlu0 16
      %1376 = vperm.xlu0 %1375, %v1358
      %v1377 = vpop.permute.xlu0 %1376
      %v1379 = vadd.f32 %v1199, %v1362
      %v1380 = vadd.f32 %v1200, %v1367
      %v1381 = vadd.f32 %v1201, %v1372
      %v1382 = vadd.f32 %v1202, %v1377
      %v1383 = vsel %vm1221, %v1379, -inf
      %v1384 = vsel %vm1221, %v1380, -inf
      %v1385 = vsel %vm1221, %v1381, -inf
      %v1386 = vsel %vm1231, %v1382, -inf
      %v1387 = vmax.f32 %v1383, %v1384
      %v1388 = vmax.f32 %v1385, %v1386
      %v1389 = vmax.f32 %v1387, %v1388
      %v1390 = vrot.slane %v1389, 4
      %v1391 = vmax.f32 %v1389, %v1390
      %v1392 = vrot.slane %v1391, 2
      %v1393 = vmax.f32 %v1391, %v1392
      %v1394 = vrot.slane %v1393, 1
      %v1395 = vmax.f32 %v1393, %v1394
      %vm1396 = vcmp.eq.f32.partialorder %v1379, %v1395
      %vm1397 = vcmp.eq.f32.partialorder %v1380, %v1395
      %vm1398 = vcmp.eq.f32.partialorder %v1381, %v1395
      %vm1399 = vcmp.eq.f32.partialorder %v1382, %v1395
      %v1400 = vsel %vm1396, %v1211, 28.0
      %v1401 = vsel %vm1397, %v1212, 28.0
      %v1402 = vsel %vm1398, %v1213, 28.0
      %v1403 = vsel %vm1399, %v1214, 28.0
      %v1404 = vsel %vm1221, %v1400, inf
      %v1405 = vsel %vm1221, %v1401, inf
      %v1406 = vsel %vm1221, %v1402, inf
      %v1407 = vsel %vm1231, %v1403, inf
      %v1408 = vmin.f32 %v1404, %v1405
      %v1409 = vmin.f32 %v1406, %v1407
      %v1410 = vmin.f32 %v1408, %v1409
      %v1411 = vrot.slane %v1410, 4
      %v1412 = vmin.f32 %v1410, %v1411
      %v1413 = vrot.slane %v1412, 2
      %v1414 = vmin.f32 %v1412, %v1413
      %v1415 = vrot.slane %v1414, 1
      %v1416 = vmin.f32 %v1414, %v1415
      %v1417 = vadd.f32 %v1395, %v1158
      %v1418 = vperm.slane %v1417, 0
      %v1419 = vadd.f32 %v1195, %v1418
      %v1420 = vadd.f32 %v1196, %v1418
      %v1421 = vadd.f32 %v1197, %v1418
      %v1422 = vadd.f32 %v1198, %v1418
      %v1423 = vsel %vm1221, %v1419, -inf
      %1424 = vmax.xlane.f32.xlu0 %v1423
      %v1425 = vpop.xlane.xlu0 %1424
      %v1426 = vsel %vm1221, %v1420, -inf
      %1427 = vmax.xlane.f32.xlu0 %v1426
      %v1428 = vpop.xlane.xlu0 %1427
      %v1429 = vsel %vm1221, %v1421, -inf
      %1430 = vmax.xlane.f32.xlu0 %v1429
      %v1431 = vpop.xlane.xlu0 %1430
      %v1432 = vsel %vm1231, %v1422, -inf
      %1433 = vmax.xlane.f32.xlu0 %v1432
      %v1434 = vpop.xlane.xlu0 %1433
      %vm1435 = vcmp.eq.f32.partialorder %v1419, %v1425
      %vm1436 = vcmp.eq.f32.partialorder %v1420, %v1428
      %vm1437 = vcmp.eq.f32.partialorder %v1421, %v1431
      %vm1438 = vcmp.eq.f32.partialorder %v1422, %v1434
      %v1439 = vsel %vm1435, %v1205, 28.0
      %v1440 = vsel %vm1436, %v1205, 28.0
      %v1441 = vsel %vm1437, %v1205, 28.0
      %v1442 = vsel %vm1438, %v1205, 28.0
      %v1443 = vsel %vm1221, %v1439, inf
      %1444 = vmin.xlane.f32.xlu0 %v1443
      %v1445 = vpop.xlane.xlu0 %1444
      %v1446 = vsel %vm1221, %v1440, inf
      %1447 = vmin.xlane.f32.xlu0 %v1446
      %v1448 = vpop.xlane.xlu0 %1447
      %v1449 = vsel %vm1221, %v1441, inf
      %1450 = vmin.xlane.f32.xlu0 %v1449
      %v1451 = vpop.xlane.xlu0 %1450
      %v1452 = vsel %vm1231, %v1442, inf
      %1453 = vmin.xlane.f32.xlu0 %v1452
      %v1454 = vpop.xlane.xlu0 %1453
      %v1455 = vadd.f32 %v1425, %v1179
      %v1456 = vadd.f32 %v1428, %v1180
      %v1457 = vadd.f32 %v1431, %v1181
      %v1458 = vadd.f32 %v1434, %v1182
      %1460 = vset.pattern.permute.xlu0 32
      %1461 = vperm.xlu0 %1460, %v1455
      %v1462 = vpop.permute.xlu0 %1461
      %1465 = vset.pattern.permute.xlu0 32
      %1466 = vperm.xlu0 %1465, %v1456
      %v1467 = vpop.permute.xlu0 %1466
      %1470 = vset.pattern.permute.xlu0 32
      %1471 = vperm.xlu0 %1470, %v1457
      %v1472 = vpop.permute.xlu0 %1471
      %1475 = vset.pattern.permute.xlu0 32
      %1476 = vperm.xlu0 %1475, %v1458
      %v1477 = vpop.permute.xlu0 %1476
      %v1479 = vadd.f32 %v1199, %v1462
      %v1480 = vadd.f32 %v1200, %v1467
      %v1481 = vadd.f32 %v1201, %v1472
      %v1482 = vadd.f32 %v1202, %v1477
      %v1483 = vsel %vm1221, %v1479, -inf
      %v1484 = vsel %vm1221, %v1480, -inf
      %v1485 = vsel %vm1221, %v1481, -inf
      %v1486 = vsel %vm1231, %v1482, -inf
      %v1487 = vmax.f32 %v1483, %v1484
      %v1488 = vmax.f32 %v1485, %v1486
      %v1489 = vmax.f32 %v1487, %v1488
      %v1490 = vrot.slane %v1489, 4
      %v1491 = vmax.f32 %v1489, %v1490
      %v1492 = vrot.slane %v1491, 2
      %v1493 = vmax.f32 %v1491, %v1492
      %v1494 = vrot.slane %v1493, 1
      %v1495 = vmax.f32 %v1493, %v1494
      %vm1496 = vcmp.eq.f32.partialorder %v1479, %v1495
      %vm1497 = vcmp.eq.f32.partialorder %v1480, %v1495
      %vm1498 = vcmp.eq.f32.partialorder %v1481, %v1495
      %vm1499 = vcmp.eq.f32.partialorder %v1482, %v1495
      %v1500 = vsel %vm1496, %v1211, 28.0
      %v1501 = vsel %vm1497, %v1212, 28.0
      %v1502 = vsel %vm1498, %v1213, 28.0
      %v1503 = vsel %vm1499, %v1214, 28.0
      %v1504 = vsel %vm1221, %v1500, inf
      %v1505 = vsel %vm1221, %v1501, inf
      %v1506 = vsel %vm1221, %v1502, inf
      %v1507 = vsel %vm1231, %v1503, inf
      %v1508 = vmin.f32 %v1504, %v1505
      %v1509 = vmin.f32 %v1506, %v1507
      %v1510 = vmin.f32 %v1508, %v1509
      %v1511 = vrot.slane %v1510, 4
      %v1512 = vmin.f32 %v1510, %v1511
      %v1513 = vrot.slane %v1512, 2
      %v1514 = vmin.f32 %v1512, %v1513
      %v1515 = vrot.slane %v1514, 1
      %v1516 = vmin.f32 %v1514, %v1515
      %v1517 = vadd.f32 %v1495, %v1160
      %v1518 = vperm.slane %v1517, 0
      %v1519 = vadd.f32 %v1195, %v1518
      %v1520 = vadd.f32 %v1196, %v1518
      %v1521 = vadd.f32 %v1197, %v1518
      %v1522 = vadd.f32 %v1198, %v1518
      %v1523 = vsel %vm1221, %v1519, -inf
      %1524 = vmax.xlane.f32.xlu0 %v1523
      %v1525 = vpop.xlane.xlu0 %1524
      %v1526 = vsel %vm1221, %v1520, -inf
      %1527 = vmax.xlane.f32.xlu0 %v1526
      %v1528 = vpop.xlane.xlu0 %1527
      %v1529 = vsel %vm1221, %v1521, -inf
      %1530 = vmax.xlane.f32.xlu0 %v1529
      %v1531 = vpop.xlane.xlu0 %1530
      %v1532 = vsel %vm1231, %v1522, -inf
      %1533 = vmax.xlane.f32.xlu0 %v1532
      %v1534 = vpop.xlane.xlu0 %1533
      %vm1535 = vcmp.eq.f32.partialorder %v1519, %v1525
      %vm1536 = vcmp.eq.f32.partialorder %v1520, %v1528
      %vm1537 = vcmp.eq.f32.partialorder %v1521, %v1531
      %vm1538 = vcmp.eq.f32.partialorder %v1522, %v1534
      %v1539 = vsel %vm1535, %v1205, 28.0
      %v1540 = vsel %vm1536, %v1205, 28.0
      %v1541 = vsel %vm1537, %v1205, 28.0
      %v1542 = vsel %vm1538, %v1205, 28.0
      %v1543 = vsel %vm1221, %v1539, inf
      %1544 = vmin.xlane.f32.xlu0 %v1543
      %v1545 = vpop.xlane.xlu0 %1544
      %v1546 = vsel %vm1221, %v1540, inf
      %1547 = vmin.xlane.f32.xlu0 %v1546
      %v1548 = vpop.xlane.xlu0 %1547
      %v1549 = vsel %vm1221, %v1541, inf
      %1550 = vmin.xlane.f32.xlu0 %v1549
      %v1551 = vpop.xlane.xlu0 %1550
      %v1552 = vsel %vm1231, %v1542, inf
      %1553 = vmin.xlane.f32.xlu0 %v1552
      %v1554 = vpop.xlane.xlu0 %1553
      %v1555 = vadd.f32 %v1525, %v1179
      %v1556 = vadd.f32 %v1528, %v1180
      %v1557 = vadd.f32 %v1531, %v1181
      %v1558 = vadd.f32 %v1534, %v1182
      %1560 = vset.pattern.permute.xlu0 48
      %1561 = vperm.xlu0 %1560, %v1555
      %v1562 = vpop.permute.xlu0 %1561
      %1565 = vset.pattern.permute.xlu0 48
      %1566 = vperm.xlu0 %1565, %v1556
      %v1567 = vpop.permute.xlu0 %1566
      %1570 = vset.pattern.permute.xlu0 48
      %1571 = vperm.xlu0 %1570, %v1557
      %v1572 = vpop.permute.xlu0 %1571
      %1575 = vset.pattern.permute.xlu0 48
      %1576 = vperm.xlu0 %1575, %v1558
      %v1577 = vpop.permute.xlu0 %1576
      %v1579 = vadd.f32 %v1199, %v1562
      %v1580 = vadd.f32 %v1200, %v1567
      %v1581 = vadd.f32 %v1201, %v1572
      %v1582 = vadd.f32 %v1202, %v1577
      %v1583 = vsel %vm1221, %v1579, -inf
      %v1584 = vsel %vm1221, %v1580, -inf
      %v1585 = vsel %vm1221, %v1581, -inf
      %v1586 = vsel %vm1231, %v1582, -inf
      %v1587 = vmax.f32 %v1583, %v1584
      %v1588 = vmax.f32 %v1585, %v1586
      %v1589 = vmax.f32 %v1587, %v1588
      %v1590 = vrot.slane %v1589, 4
      %v1591 = vmax.f32 %v1589, %v1590
      %v1592 = vrot.slane %v1591, 2
      %v1593 = vmax.f32 %v1591, %v1592
      %v1594 = vrot.slane %v1593, 1
      %v1595 = vmax.f32 %v1593, %v1594
      %vm1596 = vcmp.eq.f32.partialorder %v1579, %v1595
      %vm1597 = vcmp.eq.f32.partialorder %v1580, %v1595
      %vm1598 = vcmp.eq.f32.partialorder %v1581, %v1595
      %vm1599 = vcmp.eq.f32.partialorder %v1582, %v1595
      %v1600 = vsel %vm1596, %v1211, 28.0
      %v1601 = vsel %vm1597, %v1212, 28.0
      %v1602 = vsel %vm1598, %v1213, 28.0
      %v1603 = vsel %vm1599, %v1214, 28.0
      %v1604 = vsel %vm1221, %v1600, inf
      %v1605 = vsel %vm1221, %v1601, inf
      %v1606 = vsel %vm1221, %v1602, inf
      %v1607 = vsel %vm1231, %v1603, inf
      %v1608 = vmin.f32 %v1604, %v1605
      %v1609 = vmin.f32 %v1606, %v1607
      %v1610 = vmin.f32 %v1608, %v1609
      %v1611 = vrot.slane %v1610, 4
      %v1612 = vmin.f32 %v1610, %v1611
      %v1613 = vrot.slane %v1612, 2
      %v1614 = vmin.f32 %v1612, %v1613
      %v1615 = vrot.slane %v1614, 1
      %v1616 = vmin.f32 %v1614, %v1615
      %v1617 = vadd.f32 %v1595, %v1162
      %v1619 = vrot.slane %v1198, 3
      %v1621 = vadd.f32 %v1617, %v1619
      %vm1622 = vcmask 221184
      %v1623 = vsel %vm1622, %v1621, -inf
      %1624 = vmax.xlane.f32.xlu0 %v1623
      %v1625 = vpop.xlane.xlu0 %1624
      %vm1626 = vcmp.eq.f32.partialorder %v1621, %v1625
      %v1627 = vsel %vm1626, %v1205, 28.0
      %v1628 = vsel %vm1622, %v1627, inf
      %1629 = vmin.xlane.f32.xlu0 %v1628
      %v1630 = vpop.xlane.xlu0 %1629
      %vm1631 = vcmp.eq.s32.totalorder %v1204, 7
      %v1632 = vsel %vm1631, %v1630, 0.0
      %vm1633 = vcmp.eq.f32.partialorder %v1205, %v1630
      %v1634 = vsel %vm1633, %v1616, 0.0
      %v1635 = vsel %vm1622, %v1634, 0.0
      %1636 = vadd.xlane.f32.xlu0 %v1635
      %v1637 = vpop.xlane.xlu0 %1636
      %vm1638 = vcmp.eq.s32.totalorder %v1204, 6
      %v1639 = vsel %vm1638, %v1637, %v1632
      %v1640 = vperm.slane %v1637, 0
      %vm1641 = vcmp.eq.f32.partialorder %v1211, %v1640
      %vm1642 = vcmp.eq.f32.partialorder %v1212, %v1640
      %vm1643 = vcmp.eq.f32.partialorder %v1213, %v1640
      %vm1644 = vcmp.eq.f32.partialorder %v1214, %v1640
      %v1645 = vsel %vm1641, %v1545, 0.0
      %v1646 = vsel %vm1642, %v1548, 0.0
      %v1647 = vsel %vm1643, %v1551, 0.0
      %v1648 = vsel %vm1644, %v1554, 0.0
      %v1649 = vadd.f32 %v1645, %v1646
      %v1650 = vadd.f32 %v1649, %v1647
      %vm1651 = vcmask 1043456
      %v1652 = vsel %vm1651, %v1648, 0.0
      %v1653 = vadd.f32 %v1650, %v1652
      %v1654 = vrot.slane %v1653, 4
      %v1655 = vadd.f32 %v1653, %v1654
      %v1656 = vrot.slane %v1655, 2
      %v1657 = vadd.f32 %v1655, %v1656
      %v1658 = vrot.slane %v1657, 1
      %v1659 = vadd.f32 %v1657, %v1658
      %vm1660 = vcmp.eq.s32.totalorder %v1204, 5
      %v1661 = vsel %vm1660, %v1659, %v1639
      %vm1662 = vcmp.eq.f32.partialorder %v1205, %v1659
      %v1663 = vsel %vm1662, %v1516, 0.0
      %v1664 = vsel %vm1221, %v1663, 0.0
      %1665 = vadd.xlane.f32.xlu0 %v1664
      %v1666 = vpop.xlane.xlu0 %1665
      %vm1667 = vcmp.eq.s32.totalorder %v1204, 4
      %v1668 = vsel %vm1667, %v1666, %v1661
      %vm1669 = vcmp.eq.f32.partialorder %v1211, %v1666
      %vm1670 = vcmp.eq.f32.partialorder %v1212, %v1666
      %vm1671 = vcmp.eq.f32.partialorder %v1213, %v1666
      %vm1672 = vcmp.eq.f32.partialorder %v1214, %v1666
      %v1673 = vsel %vm1669, %v1445, 0.0
      %v1674 = vsel %vm1670, %v1448, 0.0
      %v1675 = vsel %vm1671, %v1451, 0.0
      %v1676 = vsel %vm1672, %v1454, 0.0
      %v1677 = vadd.f32 %v1673, %v1674
      %v1678 = vadd.f32 %v1677, %v1675
      %v1679 = vsel %vm1651, %v1676, 0.0
      %v1680 = vadd.f32 %v1678, %v1679
      %v1681 = vrot.slane %v1680, 4
      %v1682 = vadd.f32 %v1680, %v1681
      %v1683 = vrot.slane %v1682, 2
      %v1684 = vadd.f32 %v1682, %v1683
      %v1685 = vrot.slane %v1684, 1
      %v1686 = vadd.f32 %v1684, %v1685
      %vm1687 = vcmp.eq.s32.totalorder %v1204, 3
      %v1688 = vsel %vm1687, %v1686, %v1668
      %vm1689 = vcmp.eq.f32.partialorder %v1205, %v1686
      %v1690 = vsel %vm1689, %v1416, 0.0
      %v1691 = vsel %vm1221, %v1690, 0.0
      %1692 = vadd.xlane.f32.xlu0 %v1691
      %v1693 = vpop.xlane.xlu0 %1692
      %vm1694 = vcmp.eq.s32.totalorder %v1204, 2
      %v1695 = vsel %vm1694, %v1693, %v1688
      %vm1696 = vcmp.eq.f32.partialorder %v1211, %v1693
      %vm1697 = vcmp.eq.f32.partialorder %v1212, %v1693
      %vm1698 = vcmp.eq.f32.partialorder %v1213, %v1693
      %vm1699 = vcmp.eq.f32.partialorder %v1214, %v1693
      %v1700 = vsel %vm1696, %v1345, 0.0
      %v1701 = vsel %vm1697, %v1348, 0.0
      %v1702 = vsel %vm1698, %v1351, 0.0
      %v1703 = vsel %vm1699, %v1354, 0.0
      %v1704 = vadd.f32 %v1700, %v1701
      %v1705 = vadd.f32 %v1704, %v1702
      %v1706 = vsel %vm1651, %v1703, 0.0
      %v1707 = vadd.f32 %v1705, %v1706
      %v1708 = vrot.slane %v1707, 4
      %v1709 = vadd.f32 %v1707, %v1708
      %v1710 = vrot.slane %v1709, 2
      %v1711 = vadd.f32 %v1709, %v1710
      %v1712 = vrot.slane %v1711, 1
      %v1713 = vadd.f32 %v1711, %v1712
      %vm1714 = vcmp.eq.s32.totalorder %v1204, 1
      %v1715 = vsel %vm1714, %v1713, %v1695
      %vm1716 = vcmp.eq.f32.partialorder %v1205, %v1713
      %v1717 = vsel %vm1716, %v1316, 0.0
      %v1718 = vsel %vm1221, %v1717, 0.0
      %1719 = vadd.xlane.f32.xlu0 %v1718
      %v1720 = vpop.xlane.xlu0 %1719
      %vm1721 = vcmp.eq.s32.totalorder %v1204, 0
      %v1722 = vsel %vm1721, %v1720, %v1715
      %vm1723 = vcmp.eq.f32.partialorder %v1211, %v1720
      %vm1724 = vcmp.eq.f32.partialorder %v1212, %v1720
      %vm1725 = vcmp.eq.f32.partialorder %v1213, %v1720
      %vm1726 = vcmp.eq.f32.partialorder %v1214, %v1720
      %v1727 = vsel %vm1723, %v1245, 0.0
      %v1728 = vsel %vm1724, %v1248, 0.0
      %v1729 = vsel %vm1725, %v1251, 0.0
      %v1730 = vsel %vm1726, %v1254, 0.0
      %v1731 = vadd.f32 %v1727, %v1728
      %v1732 = vadd.f32 %v1731, %v1729
      %v1733 = vsel %vm1651, %v1730, 0.0
      %v1734 = vadd.f32 %v1732, %v1733
      %v1735 = vrot.slane %v1734, 4
      %v1736 = vadd.f32 %v1734, %v1735
      %v1737 = vrot.slane %v1736, 2
      %v1738 = vadd.f32 %v1736, %v1737
      %v1739 = vrot.slane %v1738, 1
      %v1740 = vadd.f32 %v1738, %v1739
      %vm1741 = vcmp.eq.s32.totalorder %v1204, 8
      %v1742 = vsel %vm1741, %v1625, %v1722
      %vm1743 = vcmp.eq.s32.totalorder %v1204, 9
      %v1744 = vsel %vm1743, %v1740, %v1742
      %vm1745 = vcmp.eq.s32.totalorder %v1207, 0
      %v1746 = vperm.slane %v1744, 0
      %v1747 = vsel %vm1745, %v1746, 0.0
      %1748 = vset.pattern.permute.xlu0 1
      %1749 = vperm.xlu0 %1748, %v1255
      %v1750 = vpop.permute.xlu0 %1749
      %1752 = vset.pattern.permute.xlu0 1
      %1753 = vperm.xlu0 %1752, %v1256
      %v1754 = vpop.permute.xlu0 %1753
      %1756 = vset.pattern.permute.xlu0 1
      %1757 = vperm.xlu0 %1756, %v1257
      %v1758 = vpop.permute.xlu0 %1757
      %1760 = vset.pattern.permute.xlu0 1
      %1761 = vperm.xlu0 %1760, %v1258
      %v1762 = vpop.permute.xlu0 %1761
      %v1764 = vadd.f32 %v1199, %v1750
      %v1765 = vadd.f32 %v1200, %v1754
      %v1766 = vadd.f32 %v1201, %v1758
      %v1767 = vadd.f32 %v1202, %v1762
      %v1768 = vsel %vm1221, %v1764, -inf
      %v1769 = vsel %vm1221, %v1765, -inf
      %v1770 = vsel %vm1221, %v1766, -inf
      %v1771 = vsel %vm1231, %v1767, -inf
      %v1772 = vmax.f32 %v1768, %v1769
      %v1773 = vmax.f32 %v1770, %v1771
      %v1774 = vmax.f32 %v1772, %v1773
      %v1775 = vrot.slane %v1774, 4
      %v1776 = vmax.f32 %v1774, %v1775
      %v1777 = vrot.slane %v1776, 2
      %v1778 = vmax.f32 %v1776, %v1777
      %v1779 = vrot.slane %v1778, 1
      %v1780 = vmax.f32 %v1778, %v1779
      %vm1781 = vcmp.eq.f32.partialorder %v1764, %v1780
      %vm1782 = vcmp.eq.f32.partialorder %v1765, %v1780
      %vm1783 = vcmp.eq.f32.partialorder %v1766, %v1780
      %vm1784 = vcmp.eq.f32.partialorder %v1767, %v1780
      %v1785 = vsel %vm1781, %v1211, 28.0
      %v1786 = vsel %vm1782, %v1212, 28.0
      %v1787 = vsel %vm1783, %v1213, 28.0
      %v1788 = vsel %vm1784, %v1214, 28.0
      %v1789 = vsel %vm1221, %v1785, inf
      %v1790 = vsel %vm1221, %v1786, inf
      %v1791 = vsel %vm1221, %v1787, inf
      %v1792 = vsel %vm1231, %v1788, inf
      %v1793 = vmin.f32 %v1789, %v1790
      %v1794 = vmin.f32 %v1791, %v1792
      %v1795 = vmin.f32 %v1793, %v1794
      %v1796 = vrot.slane %v1795, 4
      %v1797 = vmin.f32 %v1795, %v1796
      %v1798 = vrot.slane %v1797, 2
      %v1799 = vmin.f32 %v1797, %v1798
      %v1800 = vrot.slane %v1799, 1
      %v1801 = vmin.f32 %v1799, %v1800
      %v1802 = vadd.f32 %v1780, %v1156
      %v1803 = vperm.slane %v1802, 1
      %v1804 = vadd.f32 %v1195, %v1803
      %v1805 = vadd.f32 %v1196, %v1803
      %v1806 = vadd.f32 %v1197, %v1803
      %v1807 = vadd.f32 %v1198, %v1803
      %v1808 = vsel %vm1221, %v1804, -inf
      %1809 = vmax.xlane.f32.xlu0 %v1808
      %v1810 = vpop.xlane.xlu0 %1809
      %v1811 = vsel %vm1221, %v1805, -inf
      %1812 = vmax.xlane.f32.xlu0 %v1811
      %v1813 = vpop.xlane.xlu0 %1812
      %v1814 = vsel %vm1221, %v1806, -inf
      %1815 = vmax.xlane.f32.xlu0 %v1814
      %v1816 = vpop.xlane.xlu0 %1815
      %v1817 = vsel %vm1231, %v1807, -inf
      %1818 = vmax.xlane.f32.xlu0 %v1817
      %v1819 = vpop.xlane.xlu0 %1818
      %vm1820 = vcmp.eq.f32.partialorder %v1804, %v1810
      %vm1821 = vcmp.eq.f32.partialorder %v1805, %v1813
      %vm1822 = vcmp.eq.f32.partialorder %v1806, %v1816
      %vm1823 = vcmp.eq.f32.partialorder %v1807, %v1819
      %v1824 = vsel %vm1820, %v1205, 28.0
      %v1825 = vsel %vm1821, %v1205, 28.0
      %v1826 = vsel %vm1822, %v1205, 28.0
      %v1827 = vsel %vm1823, %v1205, 28.0
      %v1828 = vsel %vm1221, %v1824, inf
      %1829 = vmin.xlane.f32.xlu0 %v1828
      %v1830 = vpop.xlane.xlu0 %1829
      %v1831 = vsel %vm1221, %v1825, inf
      %1832 = vmin.xlane.f32.xlu0 %v1831
      %v1833 = vpop.xlane.xlu0 %1832
      %v1834 = vsel %vm1221, %v1826, inf
      %1835 = vmin.xlane.f32.xlu0 %v1834
      %v1836 = vpop.xlane.xlu0 %1835
      %v1837 = vsel %vm1231, %v1827, inf
      %1838 = vmin.xlane.f32.xlu0 %v1837
      %v1839 = vpop.xlane.xlu0 %1838
      %v1840 = vadd.f32 %v1810, %v1179
      %v1841 = vadd.f32 %v1813, %v1180
      %v1842 = vadd.f32 %v1816, %v1181
      %v1843 = vadd.f32 %v1819, %v1182
      %1845 = vset.pattern.permute.xlu0 17
      %1846 = vperm.xlu0 %1845, %v1840
      %v1847 = vpop.permute.xlu0 %1846
      %1850 = vset.pattern.permute.xlu0 17
      %1851 = vperm.xlu0 %1850, %v1841
      %v1852 = vpop.permute.xlu0 %1851
      %1855 = vset.pattern.permute.xlu0 17
      %1856 = vperm.xlu0 %1855, %v1842
      %v1857 = vpop.permute.xlu0 %1856
      %1860 = vset.pattern.permute.xlu0 17
      %1861 = vperm.xlu0 %1860, %v1843
      %v1862 = vpop.permute.xlu0 %1861
      %v1864 = vadd.f32 %v1199, %v1847
      %v1865 = vadd.f32 %v1200, %v1852
      %v1866 = vadd.f32 %v1201, %v1857
      %v1867 = vadd.f32 %v1202, %v1862
      %v1868 = vsel %vm1221, %v1864, -inf
      %v1869 = vsel %vm1221, %v1865, -inf
      %v1870 = vsel %vm1221, %v1866, -inf
      %v1871 = vsel %vm1231, %v1867, -inf
      %v1872 = vmax.f32 %v1868, %v1869
      %v1873 = vmax.f32 %v1870, %v1871
      %v1874 = vmax.f32 %v1872, %v1873
      %v1875 = vrot.slane %v1874, 4
      %v1876 = vmax.f32 %v1874, %v1875
      %v1877 = vrot.slane %v1876, 2
      %v1878 = vmax.f32 %v1876, %v1877
      %v1879 = vrot.slane %v1878, 1
      %v1880 = vmax.f32 %v1878, %v1879
      %vm1881 = vcmp.eq.f32.partialorder %v1864, %v1880
      %vm1882 = vcmp.eq.f32.partialorder %v1865, %v1880
      %vm1883 = vcmp.eq.f32.partialorder %v1866, %v1880
      %vm1884 = vcmp.eq.f32.partialorder %v1867, %v1880
      %v1885 = vsel %vm1881, %v1211, 28.0
      %v1886 = vsel %vm1882, %v1212, 28.0
      %v1887 = vsel %vm1883, %v1213, 28.0
      %v1888 = vsel %vm1884, %v1214, 28.0
      %v1889 = vsel %vm1221, %v1885, inf
      %v1890 = vsel %vm1221, %v1886, inf
      %v1891 = vsel %vm1221, %v1887, inf
      %v1892 = vsel %vm1231, %v1888, inf
      %v1893 = vmin.f32 %v1889, %v1890
      %v1894 = vmin.f32 %v1891, %v1892
      %v1895 = vmin.f32 %v1893, %v1894
      %v1896 = vrot.slane %v1895, 4
      %v1897 = vmin.f32 %v1895, %v1896
      %v1898 = vrot.slane %v1897, 2
      %v1899 = vmin.f32 %v1897, %v1898
      %v1900 = vrot.slane %v1899, 1
      %v1901 = vmin.f32 %v1899, %v1900
      %v1902 = vadd.f32 %v1880, %v1158
      %v1903 = vperm.slane %v1902, 1
      %v1904 = vadd.f32 %v1195, %v1903
      %v1905 = vadd.f32 %v1196, %v1903
      %v1906 = vadd.f32 %v1197, %v1903
      %v1907 = vadd.f32 %v1198, %v1903
      %v1908 = vsel %vm1221, %v1904, -inf
      %1909 = vmax.xlane.f32.xlu0 %v1908
      %v1910 = vpop.xlane.xlu0 %1909
      %v1911 = vsel %vm1221, %v1905, -inf
      %1912 = vmax.xlane.f32.xlu0 %v1911
      %v1913 = vpop.xlane.xlu0 %1912
      %v1914 = vsel %vm1221, %v1906, -inf
      %1915 = vmax.xlane.f32.xlu0 %v1914
      %v1916 = vpop.xlane.xlu0 %1915
      %v1917 = vsel %vm1231, %v1907, -inf
      %1918 = vmax.xlane.f32.xlu0 %v1917
      %v1919 = vpop.xlane.xlu0 %1918
      %vm1920 = vcmp.eq.f32.partialorder %v1904, %v1910
      %vm1921 = vcmp.eq.f32.partialorder %v1905, %v1913
      %vm1922 = vcmp.eq.f32.partialorder %v1906, %v1916
      %vm1923 = vcmp.eq.f32.partialorder %v1907, %v1919
      %v1924 = vsel %vm1920, %v1205, 28.0
      %v1925 = vsel %vm1921, %v1205, 28.0
      %v1926 = vsel %vm1922, %v1205, 28.0
      %v1927 = vsel %vm1923, %v1205, 28.0
      %v1928 = vsel %vm1221, %v1924, inf
      %1929 = vmin.xlane.f32.xlu0 %v1928
      %v1930 = vpop.xlane.xlu0 %1929
      %v1931 = vsel %vm1221, %v1925, inf
      %1932 = vmin.xlane.f32.xlu0 %v1931
      %v1933 = vpop.xlane.xlu0 %1932
      %v1934 = vsel %vm1221, %v1926, inf
      %1935 = vmin.xlane.f32.xlu0 %v1934
      %v1936 = vpop.xlane.xlu0 %1935
      %v1937 = vsel %vm1231, %v1927, inf
      %1938 = vmin.xlane.f32.xlu0 %v1937
      %v1939 = vpop.xlane.xlu0 %1938
      %v1940 = vadd.f32 %v1910, %v1179
      %v1941 = vadd.f32 %v1913, %v1180
      %v1942 = vadd.f32 %v1916, %v1181
      %v1943 = vadd.f32 %v1919, %v1182
      %1945 = vset.pattern.permute.xlu0 33
      %1946 = vperm.xlu0 %1945, %v1940
      %v1947 = vpop.permute.xlu0 %1946
      %1950 = vset.pattern.permute.xlu0 33
      %1951 = vperm.xlu0 %1950, %v1941
      %v1952 = vpop.permute.xlu0 %1951
      %1955 = vset.pattern.permute.xlu0 33
      %1956 = vperm.xlu0 %1955, %v1942
      %v1957 = vpop.permute.xlu0 %1956
      %1960 = vset.pattern.permute.xlu0 33
      %1961 = vperm.xlu0 %1960, %v1943
      %v1962 = vpop.permute.xlu0 %1961
      %v1964 = vadd.f32 %v1199, %v1947
      %v1965 = vadd.f32 %v1200, %v1952
      %v1966 = vadd.f32 %v1201, %v1957
      %v1967 = vadd.f32 %v1202, %v1962
      %v1968 = vsel %vm1221, %v1964, -inf
      %v1969 = vsel %vm1221, %v1965, -inf
      %v1970 = vsel %vm1221, %v1966, -inf
      %v1971 = vsel %vm1231, %v1967, -inf
      %v1972 = vmax.f32 %v1968, %v1969
      %v1973 = vmax.f32 %v1970, %v1971
      %v1974 = vmax.f32 %v1972, %v1973
      %v1975 = vrot.slane %v1974, 4
      %v1976 = vmax.f32 %v1974, %v1975
      %v1977 = vrot.slane %v1976, 2
      %v1978 = vmax.f32 %v1976, %v1977
      %v1979 = vrot.slane %v1978, 1
      %v1980 = vmax.f32 %v1978, %v1979
      %vm1981 = vcmp.eq.f32.partialorder %v1964, %v1980
      %vm1982 = vcmp.eq.f32.partialorder %v1965, %v1980
      %vm1983 = vcmp.eq.f32.partialorder %v1966, %v1980
      %vm1984 = vcmp.eq.f32.partialorder %v1967, %v1980
      %v1985 = vsel %vm1981, %v1211, 28.0
      %v1986 = vsel %vm1982, %v1212, 28.0
      %v1987 = vsel %vm1983, %v1213, 28.0
      %v1988 = vsel %vm1984, %v1214, 28.0
      %v1989 = vsel %vm1221, %v1985, inf
      %v1990 = vsel %vm1221, %v1986, inf
      %v1991 = vsel %vm1221, %v1987, inf
      %v1992 = vsel %vm1231, %v1988, inf
      %v1993 = vmin.f32 %v1989, %v1990
      %v1994 = vmin.f32 %v1991, %v1992
      %v1995 = vmin.f32 %v1993, %v1994
      %v1996 = vrot.slane %v1995, 4
      %v1997 = vmin.f32 %v1995, %v1996
      %v1998 = vrot.slane %v1997, 2
      %v1999 = vmin.f32 %v1997, %v1998
      %v2000 = vrot.slane %v1999, 1
      %v2001 = vmin.f32 %v1999, %v2000
      %v2002 = vadd.f32 %v1980, %v1160
      %v2003 = vperm.slane %v2002, 1
      %v2004 = vadd.f32 %v1195, %v2003
      %v2005 = vadd.f32 %v1196, %v2003
      %v2006 = vadd.f32 %v1197, %v2003
      %v2007 = vadd.f32 %v1198, %v2003
      %v2008 = vsel %vm1221, %v2004, -inf
      %2009 = vmax.xlane.f32.xlu0 %v2008
      %v2010 = vpop.xlane.xlu0 %2009
      %v2011 = vsel %vm1221, %v2005, -inf
      %2012 = vmax.xlane.f32.xlu0 %v2011
      %v2013 = vpop.xlane.xlu0 %2012
      %v2014 = vsel %vm1221, %v2006, -inf
      %2015 = vmax.xlane.f32.xlu0 %v2014
      %v2016 = vpop.xlane.xlu0 %2015
      %v2017 = vsel %vm1231, %v2007, -inf
      %2018 = vmax.xlane.f32.xlu0 %v2017
      %v2019 = vpop.xlane.xlu0 %2018
      %vm2020 = vcmp.eq.f32.partialorder %v2004, %v2010
      %vm2021 = vcmp.eq.f32.partialorder %v2005, %v2013
      %vm2022 = vcmp.eq.f32.partialorder %v2006, %v2016
      %vm2023 = vcmp.eq.f32.partialorder %v2007, %v2019
      %v2024 = vsel %vm2020, %v1205, 28.0
      %v2025 = vsel %vm2021, %v1205, 28.0
      %v2026 = vsel %vm2022, %v1205, 28.0
      %v2027 = vsel %vm2023, %v1205, 28.0
      %v2028 = vsel %vm1221, %v2024, inf
      %2029 = vmin.xlane.f32.xlu0 %v2028
      %v2030 = vpop.xlane.xlu0 %2029
      %v2031 = vsel %vm1221, %v2025, inf
      %2032 = vmin.xlane.f32.xlu0 %v2031
      %v2033 = vpop.xlane.xlu0 %2032
      %v2034 = vsel %vm1221, %v2026, inf
      %2035 = vmin.xlane.f32.xlu0 %v2034
      %v2036 = vpop.xlane.xlu0 %2035
      %v2037 = vsel %vm1231, %v2027, inf
      %2038 = vmin.xlane.f32.xlu0 %v2037
      %v2039 = vpop.xlane.xlu0 %2038
      %v2040 = vadd.f32 %v2010, %v1179
      %v2041 = vadd.f32 %v2013, %v1180
      %v2042 = vadd.f32 %v2016, %v1181
      %v2043 = vadd.f32 %v2019, %v1182
      %2045 = vset.pattern.permute.xlu0 49
      %2046 = vperm.xlu0 %2045, %v2040
      %v2047 = vpop.permute.xlu0 %2046
      %2050 = vset.pattern.permute.xlu0 49
      %2051 = vperm.xlu0 %2050, %v2041
      %v2052 = vpop.permute.xlu0 %2051
      %2055 = vset.pattern.permute.xlu0 49
      %2056 = vperm.xlu0 %2055, %v2042
      %v2057 = vpop.permute.xlu0 %2056
      %2060 = vset.pattern.permute.xlu0 49
      %2061 = vperm.xlu0 %2060, %v2043
      %v2062 = vpop.permute.xlu0 %2061
      %v2064 = vadd.f32 %v1199, %v2047
      %v2065 = vadd.f32 %v1200, %v2052
      %v2066 = vadd.f32 %v1201, %v2057
      %v2067 = vadd.f32 %v1202, %v2062
      %v2068 = vsel %vm1221, %v2064, -inf
      %v2069 = vsel %vm1221, %v2065, -inf
      %v2070 = vsel %vm1221, %v2066, -inf
      %v2071 = vsel %vm1231, %v2067, -inf
      %v2072 = vmax.f32 %v2068, %v2069
      %v2073 = vmax.f32 %v2070, %v2071
      %v2074 = vmax.f32 %v2072, %v2073
      %v2075 = vrot.slane %v2074, 4
      %v2076 = vmax.f32 %v2074, %v2075
      %v2077 = vrot.slane %v2076, 2
      %v2078 = vmax.f32 %v2076, %v2077
      %v2079 = vrot.slane %v2078, 1
      %v2080 = vmax.f32 %v2078, %v2079
      %vm2081 = vcmp.eq.f32.partialorder %v2064, %v2080
      %vm2082 = vcmp.eq.f32.partialorder %v2065, %v2080
      %vm2083 = vcmp.eq.f32.partialorder %v2066, %v2080
      %vm2084 = vcmp.eq.f32.partialorder %v2067, %v2080
      %v2085 = vsel %vm2081, %v1211, 28.0
      %v2086 = vsel %vm2082, %v1212, 28.0
      %v2087 = vsel %vm2083, %v1213, 28.0
      %v2088 = vsel %vm2084, %v1214, 28.0
      %v2089 = vsel %vm1221, %v2085, inf
      %v2090 = vsel %vm1221, %v2086, inf
      %v2091 = vsel %vm1221, %v2087, inf
      %v2092 = vsel %vm1231, %v2088, inf
      %v2093 = vmin.f32 %v2089, %v2090
      %v2094 = vmin.f32 %v2091, %v2092
      %v2095 = vmin.f32 %v2093, %v2094
      %v2096 = vrot.slane %v2095, 4
      %v2097 = vmin.f32 %v2095, %v2096
      %v2098 = vrot.slane %v2097, 2
      %v2099 = vmin.f32 %v2097, %v2098
      %v2100 = vrot.slane %v2099, 1
      %v2101 = vmin.f32 %v2099, %v2100
      %v2102 = vadd.f32 %v2080, %v1162
      %v2103 = vrot.slane %v1198, 2
      %v2105 = vadd.f32 %v2102, %v2103
      %vm2106 = vcmask 222209
      %v2107 = vsel %vm2106, %v2105, -inf
      %2108 = vmax.xlane.f32.xlu0 %v2107
      %v2109 = vpop.xlane.xlu0 %2108
      %vm2110 = vcmp.eq.f32.partialorder %v2105, %v2109
      %v2111 = vsel %vm2110, %v1205, 28.0
      %v2112 = vsel %vm2106, %v2111, inf
      %2113 = vmin.xlane.f32.xlu0 %v2112
      %v2114 = vpop.xlane.xlu0 %2113
      %v2115 = vsel %vm1631, %v2114, 0.0
      %vm2116 = vcmp.eq.f32.partialorder %v1205, %v2114
      %v2117 = vsel %vm2116, %v2101, 0.0
      %v2118 = vsel %vm2106, %v2117, 0.0
      %2119 = vadd.xlane.f32.xlu0 %v2118
      %v2120 = vpop.xlane.xlu0 %2119
      %v2121 = vsel %vm1638, %v2120, %v2115
      %v2122 = vperm.slane %v2120, 1
      %vm2123 = vcmp.eq.f32.partialorder %v1211, %v2122
      %vm2124 = vcmp.eq.f32.partialorder %v1212, %v2122
      %vm2125 = vcmp.eq.f32.partialorder %v1213, %v2122
      %vm2126 = vcmp.eq.f32.partialorder %v1214, %v2122
      %v2127 = vsel %vm2123, %v2030, 0.0
      %v2128 = vsel %vm2124, %v2033, 0.0
      %v2129 = vsel %vm2125, %v2036, 0.0
      %v2130 = vsel %vm2126, %v2039, 0.0
      %v2131 = vadd.f32 %v2127, %v2128
      %v2132 = vadd.f32 %v2131, %v2129
      %v2133 = vsel %vm1651, %v2130, 0.0
      %v2134 = vadd.f32 %v2132, %v2133
      %v2135 = vrot.slane %v2134, 4
      %v2136 = vadd.f32 %v2134, %v2135
      %v2137 = vrot.slane %v2136, 2
      %v2138 = vadd.f32 %v2136, %v2137
      %v2139 = vrot.slane %v2138, 1
      %v2140 = vadd.f32 %v2138, %v2139
      %v2141 = vsel %vm1660, %v2140, %v2121
      %vm2142 = vcmp.eq.f32.partialorder %v1205, %v2140
      %v2143 = vsel %vm2142, %v2001, 0.0
      %v2144 = vsel %vm1221, %v2143, 0.0
      %2145 = vadd.xlane.f32.xlu0 %v2144
      %v2146 = vpop.xlane.xlu0 %2145
      %v2147 = vsel %vm1667, %v2146, %v2141
      %vm2148 = vcmp.eq.f32.partialorder %v1211, %v2146
      %vm2149 = vcmp.eq.f32.partialorder %v1212, %v2146
      %vm2150 = vcmp.eq.f32.partialorder %v1213, %v2146
      %vm2151 = vcmp.eq.f32.partialorder %v1214, %v2146
      %v2152 = vsel %vm2148, %v1930, 0.0
      %v2153 = vsel %vm2149, %v1933, 0.0
      %v2154 = vsel %vm2150, %v1936, 0.0
      %v2155 = vsel %vm2151, %v1939, 0.0
      %v2156 = vadd.f32 %v2152, %v2153
      %v2157 = vadd.f32 %v2156, %v2154
      %v2158 = vsel %vm1651, %v2155, 0.0
      %v2159 = vadd.f32 %v2157, %v2158
      %v2160 = vrot.slane %v2159, 4
      %v2161 = vadd.f32 %v2159, %v2160
      %v2162 = vrot.slane %v2161, 2
      %v2163 = vadd.f32 %v2161, %v2162
      %v2164 = vrot.slane %v2163, 1
      %v2165 = vadd.f32 %v2163, %v2164
      %v2166 = vsel %vm1687, %v2165, %v2147
      %vm2167 = vcmp.eq.f32.partialorder %v1205, %v2165
      %v2168 = vsel %vm2167, %v1901, 0.0
      %v2169 = vsel %vm1221, %v2168, 0.0
      %2170 = vadd.xlane.f32.xlu0 %v2169
      %v2171 = vpop.xlane.xlu0 %2170
      %v2172 = vsel %vm1694, %v2171, %v2166
      %vm2173 = vcmp.eq.f32.partialorder %v1211, %v2171
      %vm2174 = vcmp.eq.f32.partialorder %v1212, %v2171
      %vm2175 = vcmp.eq.f32.partialorder %v1213, %v2171
      %vm2176 = vcmp.eq.f32.partialorder %v1214, %v2171
      %v2177 = vsel %vm2173, %v1830, 0.0
      %v2178 = vsel %vm2174, %v1833, 0.0
      %v2179 = vsel %vm2175, %v1836, 0.0
      %v2180 = vsel %vm2176, %v1839, 0.0
      %v2181 = vadd.f32 %v2177, %v2178
      %v2182 = vadd.f32 %v2181, %v2179
      %v2183 = vsel %vm1651, %v2180, 0.0
      %v2184 = vadd.f32 %v2182, %v2183
      %v2185 = vrot.slane %v2184, 4
      %v2186 = vadd.f32 %v2184, %v2185
      %v2187 = vrot.slane %v2186, 2
      %v2188 = vadd.f32 %v2186, %v2187
      %v2189 = vrot.slane %v2188, 1
      %v2190 = vadd.f32 %v2188, %v2189
      %v2191 = vsel %vm1714, %v2190, %v2172
      %vm2192 = vcmp.eq.f32.partialorder %v1205, %v2190
      %v2193 = vsel %vm2192, %v1801, 0.0
      %v2194 = vsel %vm1221, %v2193, 0.0
      %2195 = vadd.xlane.f32.xlu0 %v2194
      %v2196 = vpop.xlane.xlu0 %2195
      %v2197 = vsel %vm1721, %v2196, %v2191
      %vm2198 = vcmp.eq.f32.partialorder %v1211, %v2196
      %vm2199 = vcmp.eq.f32.partialorder %v1212, %v2196
      %vm2200 = vcmp.eq.f32.partialorder %v1213, %v2196
      %vm2201 = vcmp.eq.f32.partialorder %v1214, %v2196
      %v2202 = vsel %vm2198, %v1245, 0.0
      %v2203 = vsel %vm2199, %v1248, 0.0
      %v2204 = vsel %vm2200, %v1251, 0.0
      %v2205 = vsel %vm2201, %v1254, 0.0
      %v2206 = vadd.f32 %v2202, %v2203
      %v2207 = vadd.f32 %v2206, %v2204
      %v2208 = vsel %vm1651, %v2205, 0.0
      %v2209 = vadd.f32 %v2207, %v2208
      %v2210 = vrot.slane %v2209, 4
      %v2211 = vadd.f32 %v2209, %v2210
      %v2212 = vrot.slane %v2211, 2
      %v2213 = vadd.f32 %v2211, %v2212
      %v2214 = vrot.slane %v2213, 1
      %v2215 = vadd.f32 %v2213, %v2214
      %v2216 = vsel %vm1741, %v2109, %v2197
      %v2217 = vsel %vm1743, %v2215, %v2216
      %vm2218 = vcmp.eq.s32.totalorder %v1207, 1
      %v2219 = vperm.slane %v2217, 1
      %v2220 = vsel %vm2218, %v2219, %v1747
      %2221 = vset.pattern.permute.xlu0 2
      %2222 = vperm.xlu0 %2221, %v1255
      %v2223 = vpop.permute.xlu0 %2222
      %2225 = vset.pattern.permute.xlu0 2
      %2226 = vperm.xlu0 %2225, %v1256
      %v2227 = vpop.permute.xlu0 %2226
      %2229 = vset.pattern.permute.xlu0 2
      %2230 = vperm.xlu0 %2229, %v1257
      %v2231 = vpop.permute.xlu0 %2230
      %2233 = vset.pattern.permute.xlu0 2
      %2234 = vperm.xlu0 %2233, %v1258
      %v2235 = vpop.permute.xlu0 %2234
      %v2237 = vadd.f32 %v1199, %v2223
      %v2238 = vadd.f32 %v1200, %v2227
      %v2239 = vadd.f32 %v1201, %v2231
      %v2240 = vadd.f32 %v1202, %v2235
      %v2241 = vsel %vm1221, %v2237, -inf
      %v2242 = vsel %vm1221, %v2238, -inf
      %v2243 = vsel %vm1221, %v2239, -inf
      %v2244 = vsel %vm1231, %v2240, -inf
      %v2245 = vmax.f32 %v2241, %v2242
      %v2246 = vmax.f32 %v2243, %v2244
      %v2247 = vmax.f32 %v2245, %v2246
      %v2248 = vrot.slane %v2247, 4
      %v2249 = vmax.f32 %v2247, %v2248
      %v2250 = vrot.slane %v2249, 2
      %v2251 = vmax.f32 %v2249, %v2250
      %v2252 = vrot.slane %v2251, 1
      %v2253 = vmax.f32 %v2251, %v2252
      %vm2254 = vcmp.eq.f32.partialorder %v2237, %v2253
      %vm2255 = vcmp.eq.f32.partialorder %v2238, %v2253
      %vm2256 = vcmp.eq.f32.partialorder %v2239, %v2253
      %vm2257 = vcmp.eq.f32.partialorder %v2240, %v2253
      %v2258 = vsel %vm2254, %v1211, 28.0
      %v2259 = vsel %vm2255, %v1212, 28.0
      %v2260 = vsel %vm2256, %v1213, 28.0
      %v2261 = vsel %vm2257, %v1214, 28.0
      %v2262 = vsel %vm1221, %v2258, inf
      %v2263 = vsel %vm1221, %v2259, inf
      %v2264 = vsel %vm1221, %v2260, inf
      %v2265 = vsel %vm1231, %v2261, inf
      %v2266 = vmin.f32 %v2262, %v2263
      %v2267 = vmin.f32 %v2264, %v2265
      %v2268 = vmin.f32 %v2266, %v2267
      %v2269 = vrot.slane %v2268, 4
      %v2270 = vmin.f32 %v2268, %v2269
      %v2271 = vrot.slane %v2270, 2
      %v2272 = vmin.f32 %v2270, %v2271
      %v2273 = vrot.slane %v2272, 1
      %v2274 = vmin.f32 %v2272, %v2273
      %v2275 = vadd.f32 %v2253, %v1156
      %v2276 = vperm.slane %v2275, 2
      %v2277 = vadd.f32 %v1195, %v2276
      %v2278 = vadd.f32 %v1196, %v2276
      %v2279 = vadd.f32 %v1197, %v2276
      %v2280 = vadd.f32 %v1198, %v2276
      %v2281 = vsel %vm1221, %v2277, -inf
      %2282 = vmax.xlane.f32.xlu0 %v2281
      %v2283 = vpop.xlane.xlu0 %2282
      %v2284 = vsel %vm1221, %v2278, -inf
      %2285 = vmax.xlane.f32.xlu0 %v2284
      %v2286 = vpop.xlane.xlu0 %2285
      %v2287 = vsel %vm1221, %v2279, -inf
      %2288 = vmax.xlane.f32.xlu0 %v2287
      %v2289 = vpop.xlane.xlu0 %2288
      %v2290 = vsel %vm1231, %v2280, -inf
      %2291 = vmax.xlane.f32.xlu0 %v2290
      %v2292 = vpop.xlane.xlu0 %2291
      %vm2293 = vcmp.eq.f32.partialorder %v2277, %v2283
      %vm2294 = vcmp.eq.f32.partialorder %v2278, %v2286
      %vm2295 = vcmp.eq.f32.partialorder %v2279, %v2289
      %vm2296 = vcmp.eq.f32.partialorder %v2280, %v2292
      %v2297 = vsel %vm2293, %v1205, 28.0
      %v2298 = vsel %vm2294, %v1205, 28.0
      %v2299 = vsel %vm2295, %v1205, 28.0
      %v2300 = vsel %vm2296, %v1205, 28.0
      %v2301 = vsel %vm1221, %v2297, inf
      %2302 = vmin.xlane.f32.xlu0 %v2301
      %v2303 = vpop.xlane.xlu0 %2302
      %v2304 = vsel %vm1221, %v2298, inf
      %2305 = vmin.xlane.f32.xlu0 %v2304
      %v2306 = vpop.xlane.xlu0 %2305
      %v2307 = vsel %vm1221, %v2299, inf
      %2308 = vmin.xlane.f32.xlu0 %v2307
      %v2309 = vpop.xlane.xlu0 %2308
      %v2310 = vsel %vm1231, %v2300, inf
      %2311 = vmin.xlane.f32.xlu0 %v2310
      %v2312 = vpop.xlane.xlu0 %2311
      %v2313 = vadd.f32 %v2283, %v1179
      %v2314 = vadd.f32 %v2286, %v1180
      %v2315 = vadd.f32 %v2289, %v1181
      %v2316 = vadd.f32 %v2292, %v1182
      %2318 = vset.pattern.permute.xlu0 18
      %2319 = vperm.xlu0 %2318, %v2313
      %v2320 = vpop.permute.xlu0 %2319
      %2323 = vset.pattern.permute.xlu0 18
      %2324 = vperm.xlu0 %2323, %v2314
      %v2325 = vpop.permute.xlu0 %2324
      %2328 = vset.pattern.permute.xlu0 18
      %2329 = vperm.xlu0 %2328, %v2315
      %v2330 = vpop.permute.xlu0 %2329
      %2333 = vset.pattern.permute.xlu0 18
      %2334 = vperm.xlu0 %2333, %v2316
      %v2335 = vpop.permute.xlu0 %2334
      %v2337 = vadd.f32 %v1199, %v2320
      %v2338 = vadd.f32 %v1200, %v2325
      %v2339 = vadd.f32 %v1201, %v2330
      %v2340 = vadd.f32 %v1202, %v2335
      %v2341 = vsel %vm1221, %v2337, -inf
      %v2342 = vsel %vm1221, %v2338, -inf
      %v2343 = vsel %vm1221, %v2339, -inf
      %v2344 = vsel %vm1231, %v2340, -inf
      %v2345 = vmax.f32 %v2341, %v2342
      %v2346 = vmax.f32 %v2343, %v2344
      %v2347 = vmax.f32 %v2345, %v2346
      %v2348 = vrot.slane %v2347, 4
      %v2349 = vmax.f32 %v2347, %v2348
      %v2350 = vrot.slane %v2349, 2
      %v2351 = vmax.f32 %v2349, %v2350
      %v2352 = vrot.slane %v2351, 1
      %v2353 = vmax.f32 %v2351, %v2352
      %vm2354 = vcmp.eq.f32.partialorder %v2337, %v2353
      %vm2355 = vcmp.eq.f32.partialorder %v2338, %v2353
      %vm2356 = vcmp.eq.f32.partialorder %v2339, %v2353
      %vm2357 = vcmp.eq.f32.partialorder %v2340, %v2353
      %v2358 = vsel %vm2354, %v1211, 28.0
      %v2359 = vsel %vm2355, %v1212, 28.0
      %v2360 = vsel %vm2356, %v1213, 28.0
      %v2361 = vsel %vm2357, %v1214, 28.0
      %v2362 = vsel %vm1221, %v2358, inf
      %v2363 = vsel %vm1221, %v2359, inf
      %v2364 = vsel %vm1221, %v2360, inf
      %v2365 = vsel %vm1231, %v2361, inf
      %v2366 = vmin.f32 %v2362, %v2363
      %v2367 = vmin.f32 %v2364, %v2365
      %v2368 = vmin.f32 %v2366, %v2367
      %v2369 = vrot.slane %v2368, 4
      %v2370 = vmin.f32 %v2368, %v2369
      %v2371 = vrot.slane %v2370, 2
      %v2372 = vmin.f32 %v2370, %v2371
      %v2373 = vrot.slane %v2372, 1
      %v2374 = vmin.f32 %v2372, %v2373
      %v2375 = vadd.f32 %v2353, %v1158
      %v2376 = vperm.slane %v2375, 2
      %v2377 = vadd.f32 %v1195, %v2376
      %v2378 = vadd.f32 %v1196, %v2376
      %v2379 = vadd.f32 %v1197, %v2376
      %v2380 = vadd.f32 %v1198, %v2376
      %v2381 = vsel %vm1221, %v2377, -inf
      %2382 = vmax.xlane.f32.xlu0 %v2381
      %v2383 = vpop.xlane.xlu0 %2382
      %v2384 = vsel %vm1221, %v2378, -inf
      %2385 = vmax.xlane.f32.xlu0 %v2384
      %v2386 = vpop.xlane.xlu0 %2385
      %v2387 = vsel %vm1221, %v2379, -inf
      %2388 = vmax.xlane.f32.xlu0 %v2387
      %v2389 = vpop.xlane.xlu0 %2388
      %v2390 = vsel %vm1231, %v2380, -inf
      %2391 = vmax.xlane.f32.xlu0 %v2390
      %v2392 = vpop.xlane.xlu0 %2391
      %vm2393 = vcmp.eq.f32.partialorder %v2377, %v2383
      %vm2394 = vcmp.eq.f32.partialorder %v2378, %v2386
      %vm2395 = vcmp.eq.f32.partialorder %v2379, %v2389
      %vm2396 = vcmp.eq.f32.partialorder %v2380, %v2392
      %v2397 = vsel %vm2393, %v1205, 28.0
      %v2398 = vsel %vm2394, %v1205, 28.0
      %v2399 = vsel %vm2395, %v1205, 28.0
      %v2400 = vsel %vm2396, %v1205, 28.0
      %v2401 = vsel %vm1221, %v2397, inf
      %2402 = vmin.xlane.f32.xlu0 %v2401
      %v2403 = vpop.xlane.xlu0 %2402
      %v2404 = vsel %vm1221, %v2398, inf
      %2405 = vmin.xlane.f32.xlu0 %v2404
      %v2406 = vpop.xlane.xlu0 %2405
      %v2407 = vsel %vm1221, %v2399, inf
      %2408 = vmin.xlane.f32.xlu0 %v2407
      %v2409 = vpop.xlane.xlu0 %2408
      %v2410 = vsel %vm1231, %v2400, inf
      %2411 = vmin.xlane.f32.xlu0 %v2410
      %v2412 = vpop.xlane.xlu0 %2411
      %v2413 = vadd.f32 %v2383, %v1179
      %v2414 = vadd.f32 %v2386, %v1180
      %v2415 = vadd.f32 %v2389, %v1181
      %v2416 = vadd.f32 %v2392, %v1182
      %2418 = vset.pattern.permute.xlu0 34
      %2419 = vperm.xlu0 %2418, %v2413
      %v2420 = vpop.permute.xlu0 %2419
      %2423 = vset.pattern.permute.xlu0 34
      %2424 = vperm.xlu0 %2423, %v2414
      %v2425 = vpop.permute.xlu0 %2424
      %2428 = vset.pattern.permute.xlu0 34
      %2429 = vperm.xlu0 %2428, %v2415
      %v2430 = vpop.permute.xlu0 %2429
      %2433 = vset.pattern.permute.xlu0 34
      %2434 = vperm.xlu0 %2433, %v2416
      %v2435 = vpop.permute.xlu0 %2434
      %v2437 = vadd.f32 %v1199, %v2420
      %v2438 = vadd.f32 %v1200, %v2425
      %v2439 = vadd.f32 %v1201, %v2430
      %v2440 = vadd.f32 %v1202, %v2435
      %v2441 = vsel %vm1221, %v2437, -inf
      %v2442 = vsel %vm1221, %v2438, -inf
      %v2443 = vsel %vm1221, %v2439, -inf
      %v2444 = vsel %vm1231, %v2440, -inf
      %v2445 = vmax.f32 %v2441, %v2442
      %v2446 = vmax.f32 %v2443, %v2444
      %v2447 = vmax.f32 %v2445, %v2446
      %v2448 = vrot.slane %v2447, 4
      %v2449 = vmax.f32 %v2447, %v2448
      %v2450 = vrot.slane %v2449, 2
      %v2451 = vmax.f32 %v2449, %v2450
      %v2452 = vrot.slane %v2451, 1
      %v2453 = vmax.f32 %v2451, %v2452
      %vm2454 = vcmp.eq.f32.partialorder %v2437, %v2453
      %vm2455 = vcmp.eq.f32.partialorder %v2438, %v2453
      %vm2456 = vcmp.eq.f32.partialorder %v2439, %v2453
      %vm2457 = vcmp.eq.f32.partialorder %v2440, %v2453
      %v2458 = vsel %vm2454, %v1211, 28.0
      %v2459 = vsel %vm2455, %v1212, 28.0
      %v2460 = vsel %vm2456, %v1213, 28.0
      %v2461 = vsel %vm2457, %v1214, 28.0
      %v2462 = vsel %vm1221, %v2458, inf
      %v2463 = vsel %vm1221, %v2459, inf
      %v2464 = vsel %vm1221, %v2460, inf
      %v2465 = vsel %vm1231, %v2461, inf
      %v2466 = vmin.f32 %v2462, %v2463
      %v2467 = vmin.f32 %v2464, %v2465
      %v2468 = vmin.f32 %v2466, %v2467
      %v2469 = vrot.slane %v2468, 4
      %v2470 = vmin.f32 %v2468, %v2469
      %v2471 = vrot.slane %v2470, 2
      %v2472 = vmin.f32 %v2470, %v2471
      %v2473 = vrot.slane %v2472, 1
      %v2474 = vmin.f32 %v2472, %v2473
      %v2475 = vadd.f32 %v2453, %v1160
      %v2476 = vperm.slane %v2475, 2
      %v2477 = vadd.f32 %v1195, %v2476
      %v2478 = vadd.f32 %v1196, %v2476
      %v2479 = vadd.f32 %v1197, %v2476
      %v2480 = vadd.f32 %v1198, %v2476
      %v2481 = vsel %vm1221, %v2477, -inf
      %2482 = vmax.xlane.f32.xlu0 %v2481
      %v2483 = vpop.xlane.xlu0 %2482
      %v2484 = vsel %vm1221, %v2478, -inf
      %2485 = vmax.xlane.f32.xlu0 %v2484
      %v2486 = vpop.xlane.xlu0 %2485
      %v2487 = vsel %vm1221, %v2479, -inf
      %2488 = vmax.xlane.f32.xlu0 %v2487
      %v2489 = vpop.xlane.xlu0 %2488
      %v2490 = vsel %vm1231, %v2480, -inf
      %2491 = vmax.xlane.f32.xlu0 %v2490
      %v2492 = vpop.xlane.xlu0 %2491
      %vm2493 = vcmp.eq.f32.partialorder %v2477, %v2483
      %vm2494 = vcmp.eq.f32.partialorder %v2478, %v2486
      %vm2495 = vcmp.eq.f32.partialorder %v2479, %v2489
      %vm2496 = vcmp.eq.f32.partialorder %v2480, %v2492
      %v2497 = vsel %vm2493, %v1205, 28.0
      %v2498 = vsel %vm2494, %v1205, 28.0
      %v2499 = vsel %vm2495, %v1205, 28.0
      %v2500 = vsel %vm2496, %v1205, 28.0
      %v2501 = vsel %vm1221, %v2497, inf
      %2502 = vmin.xlane.f32.xlu0 %v2501
      %v2503 = vpop.xlane.xlu0 %2502
      %v2504 = vsel %vm1221, %v2498, inf
      %2505 = vmin.xlane.f32.xlu0 %v2504
      %v2506 = vpop.xlane.xlu0 %2505
      %v2507 = vsel %vm1221, %v2499, inf
      %2508 = vmin.xlane.f32.xlu0 %v2507
      %v2509 = vpop.xlane.xlu0 %2508
      %v2510 = vsel %vm1231, %v2500, inf
      %2511 = vmin.xlane.f32.xlu0 %v2510
      %v2512 = vpop.xlane.xlu0 %2511
      %v2513 = vadd.f32 %v2483, %v1179
      %v2514 = vadd.f32 %v2486, %v1180
      %v2515 = vadd.f32 %v2489, %v1181
      %v2516 = vadd.f32 %v2492, %v1182
      %2518 = vset.pattern.permute.xlu0 50
      %2519 = vperm.xlu0 %2518, %v2513
      %v2520 = vpop.permute.xlu0 %2519
      %2523 = vset.pattern.permute.xlu0 50
      %2524 = vperm.xlu0 %2523, %v2514
      %v2525 = vpop.permute.xlu0 %2524
      %2528 = vset.pattern.permute.xlu0 50
      %2529 = vperm.xlu0 %2528, %v2515
      %v2530 = vpop.permute.xlu0 %2529
      %2533 = vset.pattern.permute.xlu0 50
      %2534 = vperm.xlu0 %2533, %v2516
      %v2535 = vpop.permute.xlu0 %2534
      %v2537 = vadd.f32 %v1199, %v2520
      %v2538 = vadd.f32 %v1200, %v2525
      %v2539 = vadd.f32 %v1201, %v2530
      %v2540 = vadd.f32 %v1202, %v2535
      %v2541 = vsel %vm1221, %v2537, -inf
      %v2542 = vsel %vm1221, %v2538, -inf
      %v2543 = vsel %vm1221, %v2539, -inf
      %v2544 = vsel %vm1231, %v2540, -inf
      %v2545 = vmax.f32 %v2541, %v2542
      %v2546 = vmax.f32 %v2543, %v2544
      %v2547 = vmax.f32 %v2545, %v2546
      %v2548 = vrot.slane %v2547, 4
      %v2549 = vmax.f32 %v2547, %v2548
      %v2550 = vrot.slane %v2549, 2
      %v2551 = vmax.f32 %v2549, %v2550
      %v2552 = vrot.slane %v2551, 1
      %v2553 = vmax.f32 %v2551, %v2552
      %vm2554 = vcmp.eq.f32.partialorder %v2537, %v2553
      %vm2555 = vcmp.eq.f32.partialorder %v2538, %v2553
      %vm2556 = vcmp.eq.f32.partialorder %v2539, %v2553
      %vm2557 = vcmp.eq.f32.partialorder %v2540, %v2553
      %v2558 = vsel %vm2554, %v1211, 28.0
      %v2559 = vsel %vm2555, %v1212, 28.0
      %v2560 = vsel %vm2556, %v1213, 28.0
      %v2561 = vsel %vm2557, %v1214, 28.0
      %v2562 = vsel %vm1221, %v2558, inf
      %v2563 = vsel %vm1221, %v2559, inf
      %v2564 = vsel %vm1221, %v2560, inf
      %v2565 = vsel %vm1231, %v2561, inf
      %v2566 = vmin.f32 %v2562, %v2563
      %v2567 = vmin.f32 %v2564, %v2565
      %v2568 = vmin.f32 %v2566, %v2567
      %v2569 = vrot.slane %v2568, 4
      %v2570 = vmin.f32 %v2568, %v2569
      %v2571 = vrot.slane %v2570, 2
      %v2572 = vmin.f32 %v2570, %v2571
      %v2573 = vrot.slane %v2572, 1
      %v2574 = vmin.f32 %v2572, %v2573
      %v2575 = vadd.f32 %v2553, %v1162
      %v2576 = vrot.slane %v1198, 1
      %v2578 = vadd.f32 %v2575, %v2576
      %vm2579 = vcmask 223234
      %v2580 = vsel %vm2579, %v2578, -inf
      %2581 = vmax.xlane.f32.xlu0 %v2580
      %v2582 = vpop.xlane.xlu0 %2581
      %vm2583 = vcmp.eq.f32.partialorder %v2578, %v2582
      %v2584 = vsel %vm2583, %v1205, 28.0
      %v2585 = vsel %vm2579, %v2584, inf
      %2586 = vmin.xlane.f32.xlu0 %v2585
      %v2587 = vpop.xlane.xlu0 %2586
      %v2588 = vsel %vm1631, %v2587, 0.0
      %vm2589 = vcmp.eq.f32.partialorder %v1205, %v2587
      %v2590 = vsel %vm2589, %v2574, 0.0
      %v2591 = vsel %vm2579, %v2590, 0.0
      %2592 = vadd.xlane.f32.xlu0 %v2591
      %v2593 = vpop.xlane.xlu0 %2592
      %v2594 = vsel %vm1638, %v2593, %v2588
      %v2595 = vperm.slane %v2593, 2
      %vm2596 = vcmp.eq.f32.partialorder %v1211, %v2595
      %vm2597 = vcmp.eq.f32.partialorder %v1212, %v2595
      %vm2598 = vcmp.eq.f32.partialorder %v1213, %v2595
      %vm2599 = vcmp.eq.f32.partialorder %v1214, %v2595
      %v2600 = vsel %vm2596, %v2503, 0.0
      %v2601 = vsel %vm2597, %v2506, 0.0
      %v2602 = vsel %vm2598, %v2509, 0.0
      %v2603 = vsel %vm2599, %v2512, 0.0
      %v2604 = vadd.f32 %v2600, %v2601
      %v2605 = vadd.f32 %v2604, %v2602
      %v2606 = vsel %vm1651, %v2603, 0.0
      %v2607 = vadd.f32 %v2605, %v2606
      %v2608 = vrot.slane %v2607, 4
      %v2609 = vadd.f32 %v2607, %v2608
      %v2610 = vrot.slane %v2609, 2
      %v2611 = vadd.f32 %v2609, %v2610
      %v2612 = vrot.slane %v2611, 1
      %v2613 = vadd.f32 %v2611, %v2612
      %v2614 = vsel %vm1660, %v2613, %v2594
      %vm2615 = vcmp.eq.f32.partialorder %v1205, %v2613
      %v2616 = vsel %vm2615, %v2474, 0.0
      %v2617 = vsel %vm1221, %v2616, 0.0
      %2618 = vadd.xlane.f32.xlu0 %v2617
      %v2619 = vpop.xlane.xlu0 %2618
      %v2620 = vsel %vm1667, %v2619, %v2614
      %vm2621 = vcmp.eq.f32.partialorder %v1211, %v2619
      %vm2622 = vcmp.eq.f32.partialorder %v1212, %v2619
      %vm2623 = vcmp.eq.f32.partialorder %v1213, %v2619
      %vm2624 = vcmp.eq.f32.partialorder %v1214, %v2619
      %v2625 = vsel %vm2621, %v2403, 0.0
      %v2626 = vsel %vm2622, %v2406, 0.0
      %v2627 = vsel %vm2623, %v2409, 0.0
      %v2628 = vsel %vm2624, %v2412, 0.0
      %v2629 = vadd.f32 %v2625, %v2626
      %v2630 = vadd.f32 %v2629, %v2627
      %v2631 = vsel %vm1651, %v2628, 0.0
      %v2632 = vadd.f32 %v2630, %v2631
      %v2633 = vrot.slane %v2632, 4
      %v2634 = vadd.f32 %v2632, %v2633
      %v2635 = vrot.slane %v2634, 2
      %v2636 = vadd.f32 %v2634, %v2635
      %v2637 = vrot.slane %v2636, 1
      %v2638 = vadd.f32 %v2636, %v2637
      %v2639 = vsel %vm1687, %v2638, %v2620
      %vm2640 = vcmp.eq.f32.partialorder %v1205, %v2638
      %v2641 = vsel %vm2640, %v2374, 0.0
      %v2642 = vsel %vm1221, %v2641, 0.0
      %2643 = vadd.xlane.f32.xlu0 %v2642
      %v2644 = vpop.xlane.xlu0 %2643
      %v2645 = vsel %vm1694, %v2644, %v2639
      %vm2646 = vcmp.eq.f32.partialorder %v1211, %v2644
      %vm2647 = vcmp.eq.f32.partialorder %v1212, %v2644
      %vm2648 = vcmp.eq.f32.partialorder %v1213, %v2644
      %vm2649 = vcmp.eq.f32.partialorder %v1214, %v2644
      %v2650 = vsel %vm2646, %v2303, 0.0
      %v2651 = vsel %vm2647, %v2306, 0.0
      %v2652 = vsel %vm2648, %v2309, 0.0
      %v2653 = vsel %vm2649, %v2312, 0.0
      %v2654 = vadd.f32 %v2650, %v2651
      %v2655 = vadd.f32 %v2654, %v2652
      %v2656 = vsel %vm1651, %v2653, 0.0
      %v2657 = vadd.f32 %v2655, %v2656
      %v2658 = vrot.slane %v2657, 4
      %v2659 = vadd.f32 %v2657, %v2658
      %v2660 = vrot.slane %v2659, 2
      %v2661 = vadd.f32 %v2659, %v2660
      %v2662 = vrot.slane %v2661, 1
      %v2663 = vadd.f32 %v2661, %v2662
      %v2664 = vsel %vm1714, %v2663, %v2645
      %vm2665 = vcmp.eq.f32.partialorder %v1205, %v2663
      %v2666 = vsel %vm2665, %v2274, 0.0
      %v2667 = vsel %vm1221, %v2666, 0.0
      %2668 = vadd.xlane.f32.xlu0 %v2667
      %v2669 = vpop.xlane.xlu0 %2668
      %v2670 = vsel %vm1721, %v2669, %v2664
      %vm2671 = vcmp.eq.f32.partialorder %v1211, %v2669
      %vm2672 = vcmp.eq.f32.partialorder %v1212, %v2669
      %vm2673 = vcmp.eq.f32.partialorder %v1213, %v2669
      %vm2674 = vcmp.eq.f32.partialorder %v1214, %v2669
      %v2675 = vsel %vm2671, %v1245, 0.0
      %v2676 = vsel %vm2672, %v1248, 0.0
      %v2677 = vsel %vm2673, %v1251, 0.0
      %v2678 = vsel %vm2674, %v1254, 0.0
      %v2679 = vadd.f32 %v2675, %v2676
      %v2680 = vadd.f32 %v2679, %v2677
      %v2681 = vsel %vm1651, %v2678, 0.0
      %v2682 = vadd.f32 %v2680, %v2681
      %v2683 = vrot.slane %v2682, 4
      %v2684 = vadd.f32 %v2682, %v2683
      %v2685 = vrot.slane %v2684, 2
      %v2686 = vadd.f32 %v2684, %v2685
      %v2687 = vrot.slane %v2686, 1
      %v2688 = vadd.f32 %v2686, %v2687
      %v2689 = vsel %vm1741, %v2582, %v2670
      %v2690 = vsel %vm1743, %v2688, %v2689
      %vm2691 = vcmp.eq.s32.totalorder %v1207, 2
      %v2692 = vperm.slane %v2690, 2
      %v2693 = vsel %vm2691, %v2692, %v2220
      %2694 = vset.pattern.permute.xlu0 3
      %2695 = vperm.xlu0 %2694, %v1255
      %v2696 = vpop.permute.xlu0 %2695
      %2698 = vset.pattern.permute.xlu0 3
      %2699 = vperm.xlu0 %2698, %v1256
      %v2700 = vpop.permute.xlu0 %2699
      %2702 = vset.pattern.permute.xlu0 3
      %2703 = vperm.xlu0 %2702, %v1257
      %v2704 = vpop.permute.xlu0 %2703
      %2706 = vset.pattern.permute.xlu0 3
      %2707 = vperm.xlu0 %2706, %v1258
      %v2708 = vpop.permute.xlu0 %2707
      %v2710 = vadd.f32 %v1199, %v2696
      %v2711 = vadd.f32 %v1200, %v2700
      %v2712 = vadd.f32 %v1201, %v2704
      %v2713 = vadd.f32 %v1202, %v2708
      %v2714 = vsel %vm1221, %v2710, -inf
      %v2715 = vsel %vm1221, %v2711, -inf
      %v2716 = vsel %vm1221, %v2712, -inf
      %v2717 = vsel %vm1231, %v2713, -inf
      %v2718 = vmax.f32 %v2714, %v2715
      %v2719 = vmax.f32 %v2716, %v2717
      %v2720 = vmax.f32 %v2718, %v2719
      %v2721 = vrot.slane %v2720, 4
      %v2722 = vmax.f32 %v2720, %v2721
      %v2723 = vrot.slane %v2722, 2
      %v2724 = vmax.f32 %v2722, %v2723
      %v2725 = vrot.slane %v2724, 1
      %v2726 = vmax.f32 %v2724, %v2725
      %vm2727 = vcmp.eq.f32.partialorder %v2710, %v2726
      %vm2728 = vcmp.eq.f32.partialorder %v2711, %v2726
      %vm2729 = vcmp.eq.f32.partialorder %v2712, %v2726
      %vm2730 = vcmp.eq.f32.partialorder %v2713, %v2726
      %v2731 = vsel %vm2727, %v1211, 28.0
      %v2732 = vsel %vm2728, %v1212, 28.0
      %v2733 = vsel %vm2729, %v1213, 28.0
      %v2734 = vsel %vm2730, %v1214, 28.0
      %v2735 = vsel %vm1221, %v2731, inf
      %v2736 = vsel %vm1221, %v2732, inf
      %v2737 = vsel %vm1221, %v2733, inf
      %v2738 = vsel %vm1231, %v2734, inf
      %v2739 = vmin.f32 %v2735, %v2736
      %v2740 = vmin.f32 %v2737, %v2738
      %v2741 = vmin.f32 %v2739, %v2740
      %v2742 = vrot.slane %v2741, 4
      %v2743 = vmin.f32 %v2741, %v2742
      %v2744 = vrot.slane %v2743, 2
      %v2745 = vmin.f32 %v2743, %v2744
      %v2746 = vrot.slane %v2745, 1
      %v2747 = vmin.f32 %v2745, %v2746
      %v2748 = vadd.f32 %v2726, %v1156
      %v2749 = vperm.slane %v2748, 3
      %v2750 = vadd.f32 %v1195, %v2749
      %v2751 = vadd.f32 %v1196, %v2749
      %v2752 = vadd.f32 %v1197, %v2749
      %v2753 = vadd.f32 %v1198, %v2749
      %v2754 = vsel %vm1221, %v2750, -inf
      %2755 = vmax.xlane.f32.xlu0 %v2754
      %v2756 = vpop.xlane.xlu0 %2755
      %v2757 = vsel %vm1221, %v2751, -inf
      %2758 = vmax.xlane.f32.xlu0 %v2757
      %v2759 = vpop.xlane.xlu0 %2758
      %v2760 = vsel %vm1221, %v2752, -inf
      %2761 = vmax.xlane.f32.xlu0 %v2760
      %v2762 = vpop.xlane.xlu0 %2761
      %v2763 = vsel %vm1231, %v2753, -inf
      %2764 = vmax.xlane.f32.xlu0 %v2763
      %v2765 = vpop.xlane.xlu0 %2764
      %vm2766 = vcmp.eq.f32.partialorder %v2750, %v2756
      %vm2767 = vcmp.eq.f32.partialorder %v2751, %v2759
      %vm2768 = vcmp.eq.f32.partialorder %v2752, %v2762
      %vm2769 = vcmp.eq.f32.partialorder %v2753, %v2765
      %v2770 = vsel %vm2766, %v1205, 28.0
      %v2771 = vsel %vm2767, %v1205, 28.0
      %v2772 = vsel %vm2768, %v1205, 28.0
      %v2773 = vsel %vm2769, %v1205, 28.0
      %v2774 = vsel %vm1221, %v2770, inf
      %2775 = vmin.xlane.f32.xlu0 %v2774
      %v2776 = vpop.xlane.xlu0 %2775
      %v2777 = vsel %vm1221, %v2771, inf
      %2778 = vmin.xlane.f32.xlu0 %v2777
      %v2779 = vpop.xlane.xlu0 %2778
      %v2780 = vsel %vm1221, %v2772, inf
      %2781 = vmin.xlane.f32.xlu0 %v2780
      %v2782 = vpop.xlane.xlu0 %2781
      %v2783 = vsel %vm1231, %v2773, inf
      %2784 = vmin.xlane.f32.xlu0 %v2783
      %v2785 = vpop.xlane.xlu0 %2784
      %v2786 = vadd.f32 %v2756, %v1179
      %v2787 = vadd.f32 %v2759, %v1180
      %v2788 = vadd.f32 %v2762, %v1181
      %v2789 = vadd.f32 %v2765, %v1182
      %2791 = vset.pattern.permute.xlu0 19
      %2792 = vperm.xlu0 %2791, %v2786
      %v2793 = vpop.permute.xlu0 %2792
      %2796 = vset.pattern.permute.xlu0 19
      %2797 = vperm.xlu0 %2796, %v2787
      %v2798 = vpop.permute.xlu0 %2797
      %2801 = vset.pattern.permute.xlu0 19
      %2802 = vperm.xlu0 %2801, %v2788
      %v2803 = vpop.permute.xlu0 %2802
      %2806 = vset.pattern.permute.xlu0 19
      %2807 = vperm.xlu0 %2806, %v2789
      %v2808 = vpop.permute.xlu0 %2807
      %v2810 = vadd.f32 %v1199, %v2793
      %v2811 = vadd.f32 %v1200, %v2798
      %v2812 = vadd.f32 %v1201, %v2803
      %v2813 = vadd.f32 %v1202, %v2808
      %v2814 = vsel %vm1221, %v2810, -inf
      %v2815 = vsel %vm1221, %v2811, -inf
      %v2816 = vsel %vm1221, %v2812, -inf
      %v2817 = vsel %vm1231, %v2813, -inf
      %v2818 = vmax.f32 %v2814, %v2815
      %v2819 = vmax.f32 %v2816, %v2817
      %v2820 = vmax.f32 %v2818, %v2819
      %v2821 = vrot.slane %v2820, 4
      %v2822 = vmax.f32 %v2820, %v2821
      %v2823 = vrot.slane %v2822, 2
      %v2824 = vmax.f32 %v2822, %v2823
      %v2825 = vrot.slane %v2824, 1
      %v2826 = vmax.f32 %v2824, %v2825
      %vm2827 = vcmp.eq.f32.partialorder %v2810, %v2826
      %vm2828 = vcmp.eq.f32.partialorder %v2811, %v2826
      %vm2829 = vcmp.eq.f32.partialorder %v2812, %v2826
      %vm2830 = vcmp.eq.f32.partialorder %v2813, %v2826
      %v2831 = vsel %vm2827, %v1211, 28.0
      %v2832 = vsel %vm2828, %v1212, 28.0
      %v2833 = vsel %vm2829, %v1213, 28.0
      %v2834 = vsel %vm2830, %v1214, 28.0
      %v2835 = vsel %vm1221, %v2831, inf
      %v2836 = vsel %vm1221, %v2832, inf
      %v2837 = vsel %vm1221, %v2833, inf
      %v2838 = vsel %vm1231, %v2834, inf
      %v2839 = vmin.f32 %v2835, %v2836
      %v2840 = vmin.f32 %v2837, %v2838
      %v2841 = vmin.f32 %v2839, %v2840
      %v2842 = vrot.slane %v2841, 4
      %v2843 = vmin.f32 %v2841, %v2842
      %v2844 = vrot.slane %v2843, 2
      %v2845 = vmin.f32 %v2843, %v2844
      %v2846 = vrot.slane %v2845, 1
      %v2847 = vmin.f32 %v2845, %v2846
      %v2848 = vadd.f32 %v2826, %v1158
      %v2849 = vperm.slane %v2848, 3
      %v2850 = vadd.f32 %v1195, %v2849
      %v2851 = vadd.f32 %v1196, %v2849
      %v2852 = vadd.f32 %v1197, %v2849
      %v2853 = vadd.f32 %v1198, %v2849
      %v2854 = vsel %vm1221, %v2850, -inf
      %2855 = vmax.xlane.f32.xlu0 %v2854
      %v2856 = vpop.xlane.xlu0 %2855
      %v2857 = vsel %vm1221, %v2851, -inf
      %2858 = vmax.xlane.f32.xlu0 %v2857
      %v2859 = vpop.xlane.xlu0 %2858
      %v2860 = vsel %vm1221, %v2852, -inf
      %2861 = vmax.xlane.f32.xlu0 %v2860
      %v2862 = vpop.xlane.xlu0 %2861
      %v2863 = vsel %vm1231, %v2853, -inf
      %2864 = vmax.xlane.f32.xlu0 %v2863
      %v2865 = vpop.xlane.xlu0 %2864
      %vm2866 = vcmp.eq.f32.partialorder %v2850, %v2856
      %vm2867 = vcmp.eq.f32.partialorder %v2851, %v2859
      %vm2868 = vcmp.eq.f32.partialorder %v2852, %v2862
      %vm2869 = vcmp.eq.f32.partialorder %v2853, %v2865
      %v2870 = vsel %vm2866, %v1205, 28.0
      %v2871 = vsel %vm2867, %v1205, 28.0
      %v2872 = vsel %vm2868, %v1205, 28.0
      %v2873 = vsel %vm2869, %v1205, 28.0
      %v2874 = vsel %vm1221, %v2870, inf
      %2875 = vmin.xlane.f32.xlu0 %v2874
      %v2876 = vpop.xlane.xlu0 %2875
      %v2877 = vsel %vm1221, %v2871, inf
      %2878 = vmin.xlane.f32.xlu0 %v2877
      %v2879 = vpop.xlane.xlu0 %2878
      %v2880 = vsel %vm1221, %v2872, inf
      %2881 = vmin.xlane.f32.xlu0 %v2880
      %v2882 = vpop.xlane.xlu0 %2881
      %v2883 = vsel %vm1231, %v2873, inf
      %2884 = vmin.xlane.f32.xlu0 %v2883
      %v2885 = vpop.xlane.xlu0 %2884
      %v2886 = vadd.f32 %v2856, %v1179
      %v2887 = vadd.f32 %v2859, %v1180
      %v2888 = vadd.f32 %v2862, %v1181
      %v2889 = vadd.f32 %v2865, %v1182
      %2891 = vset.pattern.permute.xlu0 35
      %2892 = vperm.xlu0 %2891, %v2886
      %v2893 = vpop.permute.xlu0 %2892
      %2896 = vset.pattern.permute.xlu0 35
      %2897 = vperm.xlu0 %2896, %v2887
      %v2898 = vpop.permute.xlu0 %2897
      %2901 = vset.pattern.permute.xlu0 35
      %2902 = vperm.xlu0 %2901, %v2888
      %v2903 = vpop.permute.xlu0 %2902
      %2906 = vset.pattern.permute.xlu0 35
      %2907 = vperm.xlu0 %2906, %v2889
      %v2908 = vpop.permute.xlu0 %2907
      %v2910 = vadd.f32 %v1199, %v2893
      %v2911 = vadd.f32 %v1200, %v2898
      %v2912 = vadd.f32 %v1201, %v2903
      %v2913 = vadd.f32 %v1202, %v2908
      %v2914 = vsel %vm1221, %v2910, -inf
      %v2915 = vsel %vm1221, %v2911, -inf
      %v2916 = vsel %vm1221, %v2912, -inf
      %v2917 = vsel %vm1231, %v2913, -inf
      %v2918 = vmax.f32 %v2914, %v2915
      %v2919 = vmax.f32 %v2916, %v2917
      %v2920 = vmax.f32 %v2918, %v2919
      %v2921 = vrot.slane %v2920, 4
      %v2922 = vmax.f32 %v2920, %v2921
      %v2923 = vrot.slane %v2922, 2
      %v2924 = vmax.f32 %v2922, %v2923
      %v2925 = vrot.slane %v2924, 1
      %v2926 = vmax.f32 %v2924, %v2925
      %vm2927 = vcmp.eq.f32.partialorder %v2910, %v2926
      %vm2928 = vcmp.eq.f32.partialorder %v2911, %v2926
      %vm2929 = vcmp.eq.f32.partialorder %v2912, %v2926
      %vm2930 = vcmp.eq.f32.partialorder %v2913, %v2926
      %v2931 = vsel %vm2927, %v1211, 28.0
      %v2932 = vsel %vm2928, %v1212, 28.0
      %v2933 = vsel %vm2929, %v1213, 28.0
      %v2934 = vsel %vm2930, %v1214, 28.0
      %v2935 = vsel %vm1221, %v2931, inf
      %v2936 = vsel %vm1221, %v2932, inf
      %v2937 = vsel %vm1221, %v2933, inf
      %v2938 = vsel %vm1231, %v2934, inf
      %v2939 = vmin.f32 %v2935, %v2936
      %v2940 = vmin.f32 %v2937, %v2938
      %v2941 = vmin.f32 %v2939, %v2940
      %v2942 = vrot.slane %v2941, 4
      %v2943 = vmin.f32 %v2941, %v2942
      %v2944 = vrot.slane %v2943, 2
      %v2945 = vmin.f32 %v2943, %v2944
      %v2946 = vrot.slane %v2945, 1
      %v2947 = vmin.f32 %v2945, %v2946
      %v2948 = vadd.f32 %v2926, %v1160
      %v2949 = vperm.slane %v2948, 3
      %v2950 = vadd.f32 %v1195, %v2949
      %v2951 = vadd.f32 %v1196, %v2949
      %v2952 = vadd.f32 %v1197, %v2949
      %v2953 = vadd.f32 %v1198, %v2949
      %v2954 = vsel %vm1221, %v2950, -inf
      %2955 = vmax.xlane.f32.xlu0 %v2954
      %v2956 = vpop.xlane.xlu0 %2955
      %v2957 = vsel %vm1221, %v2951, -inf
      %2958 = vmax.xlane.f32.xlu0 %v2957
      %v2959 = vpop.xlane.xlu0 %2958
      %v2960 = vsel %vm1221, %v2952, -inf
      %2961 = vmax.xlane.f32.xlu0 %v2960
      %v2962 = vpop.xlane.xlu0 %2961
      %v2963 = vsel %vm1231, %v2953, -inf
      %2964 = vmax.xlane.f32.xlu0 %v2963
      %v2965 = vpop.xlane.xlu0 %2964
      %vm2966 = vcmp.eq.f32.partialorder %v2950, %v2956
      %vm2967 = vcmp.eq.f32.partialorder %v2951, %v2959
      %vm2968 = vcmp.eq.f32.partialorder %v2952, %v2962
      %vm2969 = vcmp.eq.f32.partialorder %v2953, %v2965
      %v2970 = vsel %vm2966, %v1205, 28.0
      %v2971 = vsel %vm2967, %v1205, 28.0
      %v2972 = vsel %vm2968, %v1205, 28.0
      %v2973 = vsel %vm2969, %v1205, 28.0
      %v2974 = vsel %vm1221, %v2970, inf
      %2975 = vmin.xlane.f32.xlu0 %v2974
      %v2976 = vpop.xlane.xlu0 %2975
      %v2977 = vsel %vm1221, %v2971, inf
      %2978 = vmin.xlane.f32.xlu0 %v2977
      %v2979 = vpop.xlane.xlu0 %2978
      %v2980 = vsel %vm1221, %v2972, inf
      %2981 = vmin.xlane.f32.xlu0 %v2980
      %v2982 = vpop.xlane.xlu0 %2981
      %v2983 = vsel %vm1231, %v2973, inf
      %2984 = vmin.xlane.f32.xlu0 %v2983
      %v2985 = vpop.xlane.xlu0 %2984
      %v2986 = vadd.f32 %v2956, %v1179
      %v2987 = vadd.f32 %v2959, %v1180
      %v2988 = vadd.f32 %v2962, %v1181
      %v2989 = vadd.f32 %v2965, %v1182
      %2991 = vset.pattern.permute.xlu0 51
      %2992 = vperm.xlu0 %2991, %v2986
      %v2993 = vpop.permute.xlu0 %2992
      %2996 = vset.pattern.permute.xlu0 51
      %2997 = vperm.xlu0 %2996, %v2987
      %v2998 = vpop.permute.xlu0 %2997
      %3001 = vset.pattern.permute.xlu0 51
      %3002 = vperm.xlu0 %3001, %v2988
      %v3003 = vpop.permute.xlu0 %3002
      %3006 = vset.pattern.permute.xlu0 51
      %3007 = vperm.xlu0 %3006, %v2989
      %v3008 = vpop.permute.xlu0 %3007
      %v3010 = vadd.f32 %v1199, %v2993
      %v3011 = vadd.f32 %v1200, %v2998
      %v3012 = vadd.f32 %v1201, %v3003
      %v3013 = vadd.f32 %v1202, %v3008
      %v3014 = vsel %vm1221, %v3010, -inf
      %v3015 = vsel %vm1221, %v3011, -inf
      %v3016 = vsel %vm1221, %v3012, -inf
      %v3017 = vsel %vm1231, %v3013, -inf
      %v3018 = vmax.f32 %v3014, %v3015
      %v3019 = vmax.f32 %v3016, %v3017
      %v3020 = vmax.f32 %v3018, %v3019
      %v3021 = vrot.slane %v3020, 4
      %v3022 = vmax.f32 %v3020, %v3021
      %v3023 = vrot.slane %v3022, 2
      %v3024 = vmax.f32 %v3022, %v3023
      %v3025 = vrot.slane %v3024, 1
      %v3026 = vmax.f32 %v3024, %v3025
      %vm3027 = vcmp.eq.f32.partialorder %v3010, %v3026
      %vm3028 = vcmp.eq.f32.partialorder %v3011, %v3026
      %vm3029 = vcmp.eq.f32.partialorder %v3012, %v3026
      %vm3030 = vcmp.eq.f32.partialorder %v3013, %v3026
      %v3031 = vsel %vm3027, %v1211, 28.0
      %v3032 = vsel %vm3028, %v1212, 28.0
      %v3033 = vsel %vm3029, %v1213, 28.0
      %v3034 = vsel %vm3030, %v1214, 28.0
      %v3035 = vsel %vm1221, %v3031, inf
      %v3036 = vsel %vm1221, %v3032, inf
      %v3037 = vsel %vm1221, %v3033, inf
      %v3038 = vsel %vm1231, %v3034, inf
      %v3039 = vmin.f32 %v3035, %v3036
      %v3040 = vmin.f32 %v3037, %v3038
      %v3041 = vmin.f32 %v3039, %v3040
      %v3042 = vrot.slane %v3041, 4
      %v3043 = vmin.f32 %v3041, %v3042
      %v3044 = vrot.slane %v3043, 2
      %v3045 = vmin.f32 %v3043, %v3044
      %v3046 = vrot.slane %v3045, 1
      %v3047 = vmin.f32 %v3045, %v3046
      %v3048 = vadd.f32 %v3026, %v1162
      %v3049 = vadd.f32 %v3048, %v1198
      %vm3050 = vcmask 224259
      %v3051 = vsel %vm3050, %v3049, -inf
      %3052 = vmax.xlane.f32.xlu0 %v3051
      %v3053 = vpop.xlane.xlu0 %3052
      %vm3054 = vcmp.eq.f32.partialorder %v3049, %v3053
      %v3055 = vsel %vm3054, %v1205, 28.0
      %v3056 = vsel %vm3050, %v3055, inf
      %3057 = vmin.xlane.f32.xlu0 %v3056
      %v3058 = vpop.xlane.xlu0 %3057
      %v3059 = vsel %vm1631, %v3058, 0.0
      %vm3060 = vcmp.eq.f32.partialorder %v1205, %v3058
      %v3061 = vsel %vm3060, %v3047, 0.0
      %v3062 = vsel %vm3050, %v3061, 0.0
      %3063 = vadd.xlane.f32.xlu0 %v3062
      %v3064 = vpop.xlane.xlu0 %3063
      %v3065 = vsel %vm1638, %v3064, %v3059
      %v3066 = vperm.slane %v3064, 3
      %vm3067 = vcmp.eq.f32.partialorder %v1211, %v3066
      %vm3068 = vcmp.eq.f32.partialorder %v1212, %v3066
      %vm3069 = vcmp.eq.f32.partialorder %v1213, %v3066
      %vm3070 = vcmp.eq.f32.partialorder %v1214, %v3066
      %v3071 = vsel %vm3067, %v2976, 0.0
      %v3072 = vsel %vm3068, %v2979, 0.0
      %v3073 = vsel %vm3069, %v2982, 0.0
      %v3074 = vsel %vm3070, %v2985, 0.0
      %v3075 = vadd.f32 %v3071, %v3072
      %v3076 = vadd.f32 %v3075, %v3073
      %v3077 = vsel %vm1651, %v3074, 0.0
      %v3078 = vadd.f32 %v3076, %v3077
      %v3079 = vrot.slane %v3078, 4
      %v3080 = vadd.f32 %v3078, %v3079
      %v3081 = vrot.slane %v3080, 2
      %v3082 = vadd.f32 %v3080, %v3081
      %v3083 = vrot.slane %v3082, 1
      %v3084 = vadd.f32 %v3082, %v3083
      %v3085 = vsel %vm1660, %v3084, %v3065
      %vm3086 = vcmp.eq.f32.partialorder %v1205, %v3084
      %v3087 = vsel %vm3086, %v2947, 0.0
      %v3088 = vsel %vm1221, %v3087, 0.0
      %3089 = vadd.xlane.f32.xlu0 %v3088
      %v3090 = vpop.xlane.xlu0 %3089
      %v3091 = vsel %vm1667, %v3090, %v3085
      %vm3092 = vcmp.eq.f32.partialorder %v1211, %v3090
      %vm3093 = vcmp.eq.f32.partialorder %v1212, %v3090
      %vm3094 = vcmp.eq.f32.partialorder %v1213, %v3090
      %vm3095 = vcmp.eq.f32.partialorder %v1214, %v3090
      %v3096 = vsel %vm3092, %v2876, 0.0
      %v3097 = vsel %vm3093, %v2879, 0.0
      %v3098 = vsel %vm3094, %v2882, 0.0
      %v3099 = vsel %vm3095, %v2885, 0.0
      %v3100 = vadd.f32 %v3096, %v3097
      %v3101 = vadd.f32 %v3100, %v3098
      %v3102 = vsel %vm1651, %v3099, 0.0
      %v3103 = vadd.f32 %v3101, %v3102
      %v3104 = vrot.slane %v3103, 4
      %v3105 = vadd.f32 %v3103, %v3104
      %v3106 = vrot.slane %v3105, 2
      %v3107 = vadd.f32 %v3105, %v3106
      %v3108 = vrot.slane %v3107, 1
      %v3109 = vadd.f32 %v3107, %v3108
      %v3110 = vsel %vm1687, %v3109, %v3091
      %vm3111 = vcmp.eq.f32.partialorder %v1205, %v3109
      %v3112 = vsel %vm3111, %v2847, 0.0
      %v3113 = vsel %vm1221, %v3112, 0.0
      %3114 = vadd.xlane.f32.xlu0 %v3113
      %v3115 = vpop.xlane.xlu0 %3114
      %v3116 = vsel %vm1694, %v3115, %v3110
      %vm3117 = vcmp.eq.f32.partialorder %v1211, %v3115
      %vm3118 = vcmp.eq.f32.partialorder %v1212, %v3115
      %vm3119 = vcmp.eq.f32.partialorder %v1213, %v3115
      %vm3120 = vcmp.eq.f32.partialorder %v1214, %v3115
      %v3121 = vsel %vm3117, %v2776, 0.0
      %v3122 = vsel %vm3118, %v2779, 0.0
      %v3123 = vsel %vm3119, %v2782, 0.0
      %v3124 = vsel %vm3120, %v2785, 0.0
      %v3125 = vadd.f32 %v3121, %v3122
      %v3126 = vadd.f32 %v3125, %v3123
      %v3127 = vsel %vm1651, %v3124, 0.0
      %v3128 = vadd.f32 %v3126, %v3127
      %v3129 = vrot.slane %v3128, 4
      %v3130 = vadd.f32 %v3128, %v3129
      %v3131 = vrot.slane %v3130, 2
      %v3132 = vadd.f32 %v3130, %v3131
      %v3133 = vrot.slane %v3132, 1
      %v3134 = vadd.f32 %v3132, %v3133
      %v3135 = vsel %vm1714, %v3134, %v3116
      %vm3136 = vcmp.eq.f32.partialorder %v1205, %v3134
      %v3137 = vsel %vm3136, %v2747, 0.0
      %v3138 = vsel %vm1221, %v3137, 0.0
      %3139 = vadd.xlane.f32.xlu0 %v3138
      %v3140 = vpop.xlane.xlu0 %3139
      %v3141 = vsel %vm1721, %v3140, %v3135
      %vm3142 = vcmp.eq.f32.partialorder %v1211, %v3140
      %vm3143 = vcmp.eq.f32.partialorder %v1212, %v3140
      %vm3144 = vcmp.eq.f32.partialorder %v1213, %v3140
      %vm3145 = vcmp.eq.f32.partialorder %v1214, %v3140
      %v3146 = vsel %vm3142, %v1245, 0.0
      %v3147 = vsel %vm3143, %v1248, 0.0
      %v3148 = vsel %vm3144, %v1251, 0.0
      %v3149 = vsel %vm3145, %v1254, 0.0
      %v3150 = vadd.f32 %v3146, %v3147
      %v3151 = vadd.f32 %v3150, %v3148
      %v3152 = vsel %vm1651, %v3149, 0.0
      %v3153 = vadd.f32 %v3151, %v3152
      %v3154 = vrot.slane %v3153, 4
      %v3155 = vadd.f32 %v3153, %v3154
      %v3156 = vrot.slane %v3155, 2
      %v3157 = vadd.f32 %v3155, %v3156
      %v3158 = vrot.slane %v3157, 1
      %v3159 = vadd.f32 %v3157, %v3158
      %v3160 = vsel %vm1741, %v3053, %v3141
      %v3161 = vsel %vm1743, %v3159, %v3160
      %vm3162 = vcmp.eq.s32.totalorder %v1207, 3
      %v3163 = vperm.slane %v3161, 3
      %v3164 = vsel %vm3162, %v3163, %v2693
      %3165 = vset.pattern.permute.xlu0 4
      %3166 = vperm.xlu0 %3165, %v1255
      %v3167 = vpop.permute.xlu0 %3166
      %3169 = vset.pattern.permute.xlu0 4
      %3170 = vperm.xlu0 %3169, %v1256
      %v3171 = vpop.permute.xlu0 %3170
      %3173 = vset.pattern.permute.xlu0 4
      %3174 = vperm.xlu0 %3173, %v1257
      %v3175 = vpop.permute.xlu0 %3174
      %3177 = vset.pattern.permute.xlu0 4
      %3178 = vperm.xlu0 %3177, %v1258
      %v3179 = vpop.permute.xlu0 %3178
      %v3181 = vadd.f32 %v1199, %v3167
      %v3182 = vadd.f32 %v1200, %v3171
      %v3183 = vadd.f32 %v1201, %v3175
      %v3184 = vadd.f32 %v1202, %v3179
      %v3185 = vsel %vm1221, %v3181, -inf
      %v3186 = vsel %vm1221, %v3182, -inf
      %v3187 = vsel %vm1221, %v3183, -inf
      %v3188 = vsel %vm1231, %v3184, -inf
      %v3189 = vmax.f32 %v3185, %v3186
      %v3190 = vmax.f32 %v3187, %v3188
      %v3191 = vmax.f32 %v3189, %v3190
      %v3192 = vrot.slane %v3191, 4
      %v3193 = vmax.f32 %v3191, %v3192
      %v3194 = vrot.slane %v3193, 2
      %v3195 = vmax.f32 %v3193, %v3194
      %v3196 = vrot.slane %v3195, 1
      %v3197 = vmax.f32 %v3195, %v3196
      %vm3198 = vcmp.eq.f32.partialorder %v3181, %v3197
      %vm3199 = vcmp.eq.f32.partialorder %v3182, %v3197
      %vm3200 = vcmp.eq.f32.partialorder %v3183, %v3197
      %vm3201 = vcmp.eq.f32.partialorder %v3184, %v3197
      %v3202 = vsel %vm3198, %v1211, 28.0
      %v3203 = vsel %vm3199, %v1212, 28.0
      %v3204 = vsel %vm3200, %v1213, 28.0
      %v3205 = vsel %vm3201, %v1214, 28.0
      %v3206 = vsel %vm1221, %v3202, inf
      %v3207 = vsel %vm1221, %v3203, inf
      %v3208 = vsel %vm1221, %v3204, inf
      %v3209 = vsel %vm1231, %v3205, inf
      %v3210 = vmin.f32 %v3206, %v3207
      %v3211 = vmin.f32 %v3208, %v3209
      %v3212 = vmin.f32 %v3210, %v3211
      %v3213 = vrot.slane %v3212, 4
      %v3214 = vmin.f32 %v3212, %v3213
      %v3215 = vrot.slane %v3214, 2
      %v3216 = vmin.f32 %v3214, %v3215
      %v3217 = vrot.slane %v3216, 1
      %v3218 = vmin.f32 %v3216, %v3217
      %v3219 = vadd.f32 %v3197, %v1156
      %v3220 = vperm.slane %v3219, 4
      %v3221 = vadd.f32 %v1195, %v3220
      %v3222 = vadd.f32 %v1196, %v3220
      %v3223 = vadd.f32 %v1197, %v3220
      %v3224 = vadd.f32 %v1198, %v3220
      %v3225 = vsel %vm1221, %v3221, -inf
      %3226 = vmax.xlane.f32.xlu0 %v3225
      %v3227 = vpop.xlane.xlu0 %3226
      %v3228 = vsel %vm1221, %v3222, -inf
      %3229 = vmax.xlane.f32.xlu0 %v3228
      %v3230 = vpop.xlane.xlu0 %3229
      %v3231 = vsel %vm1221, %v3223, -inf
      %3232 = vmax.xlane.f32.xlu0 %v3231
      %v3233 = vpop.xlane.xlu0 %3232
      %v3234 = vsel %vm1231, %v3224, -inf
      %3235 = vmax.xlane.f32.xlu0 %v3234
      %v3236 = vpop.xlane.xlu0 %3235
      %vm3237 = vcmp.eq.f32.partialorder %v3221, %v3227
      %vm3238 = vcmp.eq.f32.partialorder %v3222, %v3230
      %vm3239 = vcmp.eq.f32.partialorder %v3223, %v3233
      %vm3240 = vcmp.eq.f32.partialorder %v3224, %v3236
      %v3241 = vsel %vm3237, %v1205, 28.0
      %v3242 = vsel %vm3238, %v1205, 28.0
      %v3243 = vsel %vm3239, %v1205, 28.0
      %v3244 = vsel %vm3240, %v1205, 28.0
      %v3245 = vsel %vm1221, %v3241, inf
      %3246 = vmin.xlane.f32.xlu0 %v3245
      %v3247 = vpop.xlane.xlu0 %3246
      %v3248 = vsel %vm1221, %v3242, inf
      %3249 = vmin.xlane.f32.xlu0 %v3248
      %v3250 = vpop.xlane.xlu0 %3249
      %v3251 = vsel %vm1221, %v3243, inf
      %3252 = vmin.xlane.f32.xlu0 %v3251
      %v3253 = vpop.xlane.xlu0 %3252
      %v3254 = vsel %vm1231, %v3244, inf
      %3255 = vmin.xlane.f32.xlu0 %v3254
      %v3256 = vpop.xlane.xlu0 %3255
      %v3257 = vadd.f32 %v3227, %v1179
      %v3258 = vadd.f32 %v3230, %v1180
      %v3259 = vadd.f32 %v3233, %v1181
      %v3260 = vadd.f32 %v3236, %v1182
      %3262 = vset.pattern.permute.xlu0 20
      %3263 = vperm.xlu0 %3262, %v3257
      %v3264 = vpop.permute.xlu0 %3263
      %3267 = vset.pattern.permute.xlu0 20
      %3268 = vperm.xlu0 %3267, %v3258
      %v3269 = vpop.permute.xlu0 %3268
      %3272 = vset.pattern.permute.xlu0 20
      %3273 = vperm.xlu0 %3272, %v3259
      %v3274 = vpop.permute.xlu0 %3273
      %3277 = vset.pattern.permute.xlu0 20
      %3278 = vperm.xlu0 %3277, %v3260
      %v3279 = vpop.permute.xlu0 %3278
      %v3281 = vadd.f32 %v1199, %v3264
      %v3282 = vadd.f32 %v1200, %v3269
      %v3283 = vadd.f32 %v1201, %v3274
      %v3284 = vadd.f32 %v1202, %v3279
      %v3285 = vsel %vm1221, %v3281, -inf
      %v3286 = vsel %vm1221, %v3282, -inf
      %v3287 = vsel %vm1221, %v3283, -inf
      %v3288 = vsel %vm1231, %v3284, -inf
      %v3289 = vmax.f32 %v3285, %v3286
      %v3290 = vmax.f32 %v3287, %v3288
      %v3291 = vmax.f32 %v3289, %v3290
      %v3292 = vrot.slane %v3291, 4
      %v3293 = vmax.f32 %v3291, %v3292
      %v3294 = vrot.slane %v3293, 2
      %v3295 = vmax.f32 %v3293, %v3294
      %v3296 = vrot.slane %v3295, 1
      %v3297 = vmax.f32 %v3295, %v3296
      %vm3298 = vcmp.eq.f32.partialorder %v3281, %v3297
      %vm3299 = vcmp.eq.f32.partialorder %v3282, %v3297
      %vm3300 = vcmp.eq.f32.partialorder %v3283, %v3297
      %vm3301 = vcmp.eq.f32.partialorder %v3284, %v3297
      %v3302 = vsel %vm3298, %v1211, 28.0
      %v3303 = vsel %vm3299, %v1212, 28.0
      %v3304 = vsel %vm3300, %v1213, 28.0
      %v3305 = vsel %vm3301, %v1214, 28.0
      %v3306 = vsel %vm1221, %v3302, inf
      %v3307 = vsel %vm1221, %v3303, inf
      %v3308 = vsel %vm1221, %v3304, inf
      %v3309 = vsel %vm1231, %v3305, inf
      %v3310 = vmin.f32 %v3306, %v3307
      %v3311 = vmin.f32 %v3308, %v3309
      %v3312 = vmin.f32 %v3310, %v3311
      %v3313 = vrot.slane %v3312, 4
      %v3314 = vmin.f32 %v3312, %v3313
      %v3315 = vrot.slane %v3314, 2
      %v3316 = vmin.f32 %v3314, %v3315
      %v3317 = vrot.slane %v3316, 1
      %v3318 = vmin.f32 %v3316, %v3317
      %v3319 = vadd.f32 %v3297, %v1158
      %v3320 = vperm.slane %v3319, 4
      %v3321 = vadd.f32 %v1195, %v3320
      %v3322 = vadd.f32 %v1196, %v3320
      %v3323 = vadd.f32 %v1197, %v3320
      %v3324 = vadd.f32 %v1198, %v3320
      %v3325 = vsel %vm1221, %v3321, -inf
      %3326 = vmax.xlane.f32.xlu0 %v3325
      %v3327 = vpop.xlane.xlu0 %3326
      %v3328 = vsel %vm1221, %v3322, -inf
      %3329 = vmax.xlane.f32.xlu0 %v3328
      %v3330 = vpop.xlane.xlu0 %3329
      %v3331 = vsel %vm1221, %v3323, -inf
      %3332 = vmax.xlane.f32.xlu0 %v3331
      %v3333 = vpop.xlane.xlu0 %3332
      %v3334 = vsel %vm1231, %v3324, -inf
      %3335 = vmax.xlane.f32.xlu0 %v3334
      %v3336 = vpop.xlane.xlu0 %3335
      %vm3337 = vcmp.eq.f32.partialorder %v3321, %v3327
      %vm3338 = vcmp.eq.f32.partialorder %v3322, %v3330
      %vm3339 = vcmp.eq.f32.partialorder %v3323, %v3333
      %vm3340 = vcmp.eq.f32.partialorder %v3324, %v3336
      %v3341 = vsel %vm3337, %v1205, 28.0
      %v3342 = vsel %vm3338, %v1205, 28.0
      %v3343 = vsel %vm3339, %v1205, 28.0
      %v3344 = vsel %vm3340, %v1205, 28.0
      %v3345 = vsel %vm1221, %v3341, inf
      %3346 = vmin.xlane.f32.xlu0 %v3345
      %v3347 = vpop.xlane.xlu0 %3346
      %v3348 = vsel %vm1221, %v3342, inf
      %3349 = vmin.xlane.f32.xlu0 %v3348
      %v3350 = vpop.xlane.xlu0 %3349
      %v3351 = vsel %vm1221, %v3343, inf
      %3352 = vmin.xlane.f32.xlu0 %v3351
      %v3353 = vpop.xlane.xlu0 %3352
      %v3354 = vsel %vm1231, %v3344, inf
      %3355 = vmin.xlane.f32.xlu0 %v3354
      %v3356 = vpop.xlane.xlu0 %3355
      %v3357 = vadd.f32 %v3327, %v1179
      %v3358 = vadd.f32 %v3330, %v1180
      %v3359 = vadd.f32 %v3333, %v1181
      %v3360 = vadd.f32 %v3336, %v1182
      %3362 = vset.pattern.permute.xlu0 36
      %3363 = vperm.xlu0 %3362, %v3357
      %v3364 = vpop.permute.xlu0 %3363
      %3367 = vset.pattern.permute.xlu0 36
      %3368 = vperm.xlu0 %3367, %v3358
      %v3369 = vpop.permute.xlu0 %3368
      %3372 = vset.pattern.permute.xlu0 36
      %3373 = vperm.xlu0 %3372, %v3359
      %v3374 = vpop.permute.xlu0 %3373
      %3377 = vset.pattern.permute.xlu0 36
      %3378 = vperm.xlu0 %3377, %v3360
      %v3379 = vpop.permute.xlu0 %3378
      %v3381 = vadd.f32 %v1199, %v3364
      %v3382 = vadd.f32 %v1200, %v3369
      %v3383 = vadd.f32 %v1201, %v3374
      %v3384 = vadd.f32 %v1202, %v3379
      %v3385 = vsel %vm1221, %v3381, -inf
      %v3386 = vsel %vm1221, %v3382, -inf
      %v3387 = vsel %vm1221, %v3383, -inf
      %v3388 = vsel %vm1231, %v3384, -inf
      %v3389 = vmax.f32 %v3385, %v3386
      %v3390 = vmax.f32 %v3387, %v3388
      %v3391 = vmax.f32 %v3389, %v3390
      %v3392 = vrot.slane %v3391, 4
      %v3393 = vmax.f32 %v3391, %v3392
      %v3394 = vrot.slane %v3393, 2
      %v3395 = vmax.f32 %v3393, %v3394
      %v3396 = vrot.slane %v3395, 1
      %v3397 = vmax.f32 %v3395, %v3396
      %vm3398 = vcmp.eq.f32.partialorder %v3381, %v3397
      %vm3399 = vcmp.eq.f32.partialorder %v3382, %v3397
      %vm3400 = vcmp.eq.f32.partialorder %v3383, %v3397
      %vm3401 = vcmp.eq.f32.partialorder %v3384, %v3397
      %v3402 = vsel %vm3398, %v1211, 28.0
      %v3403 = vsel %vm3399, %v1212, 28.0
      %v3404 = vsel %vm3400, %v1213, 28.0
      %v3405 = vsel %vm3401, %v1214, 28.0
      %v3406 = vsel %vm1221, %v3402, inf
      %v3407 = vsel %vm1221, %v3403, inf
      %v3408 = vsel %vm1221, %v3404, inf
      %v3409 = vsel %vm1231, %v3405, inf
      %v3410 = vmin.f32 %v3406, %v3407
      %v3411 = vmin.f32 %v3408, %v3409
      %v3412 = vmin.f32 %v3410, %v3411
      %v3413 = vrot.slane %v3412, 4
      %v3414 = vmin.f32 %v3412, %v3413
      %v3415 = vrot.slane %v3414, 2
      %v3416 = vmin.f32 %v3414, %v3415
      %v3417 = vrot.slane %v3416, 1
      %v3418 = vmin.f32 %v3416, %v3417
      %v3419 = vadd.f32 %v3397, %v1160
      %v3420 = vperm.slane %v3419, 4
      %v3421 = vadd.f32 %v1195, %v3420
      %v3422 = vadd.f32 %v1196, %v3420
      %v3423 = vadd.f32 %v1197, %v3420
      %v3424 = vadd.f32 %v1198, %v3420
      %v3425 = vsel %vm1221, %v3421, -inf
      %3426 = vmax.xlane.f32.xlu0 %v3425
      %v3427 = vpop.xlane.xlu0 %3426
      %v3428 = vsel %vm1221, %v3422, -inf
      %3429 = vmax.xlane.f32.xlu0 %v3428
      %v3430 = vpop.xlane.xlu0 %3429
      %v3431 = vsel %vm1221, %v3423, -inf
      %3432 = vmax.xlane.f32.xlu0 %v3431
      %v3433 = vpop.xlane.xlu0 %3432
      %v3434 = vsel %vm1231, %v3424, -inf
      %3435 = vmax.xlane.f32.xlu0 %v3434
      %v3436 = vpop.xlane.xlu0 %3435
      %vm3437 = vcmp.eq.f32.partialorder %v3421, %v3427
      %vm3438 = vcmp.eq.f32.partialorder %v3422, %v3430
      %vm3439 = vcmp.eq.f32.partialorder %v3423, %v3433
      %vm3440 = vcmp.eq.f32.partialorder %v3424, %v3436
      %v3441 = vsel %vm3437, %v1205, 28.0
      %v3442 = vsel %vm3438, %v1205, 28.0
      %v3443 = vsel %vm3439, %v1205, 28.0
      %v3444 = vsel %vm3440, %v1205, 28.0
      %v3445 = vsel %vm1221, %v3441, inf
      %3446 = vmin.xlane.f32.xlu0 %v3445
      %v3447 = vpop.xlane.xlu0 %3446
      %v3448 = vsel %vm1221, %v3442, inf
      %3449 = vmin.xlane.f32.xlu0 %v3448
      %v3450 = vpop.xlane.xlu0 %3449
      %v3451 = vsel %vm1221, %v3443, inf
      %3452 = vmin.xlane.f32.xlu0 %v3451
      %v3453 = vpop.xlane.xlu0 %3452
      %v3454 = vsel %vm1231, %v3444, inf
      %3455 = vmin.xlane.f32.xlu0 %v3454
      %v3456 = vpop.xlane.xlu0 %3455
      %v3457 = vadd.f32 %v3427, %v1179
      %v3458 = vadd.f32 %v3430, %v1180
      %v3459 = vadd.f32 %v3433, %v1181
      %v3460 = vadd.f32 %v3436, %v1182
      %3462 = vset.pattern.permute.xlu0 52
      %3463 = vperm.xlu0 %3462, %v3457
      %v3464 = vpop.permute.xlu0 %3463
      %3467 = vset.pattern.permute.xlu0 52
      %3468 = vperm.xlu0 %3467, %v3458
      %v3469 = vpop.permute.xlu0 %3468
      %3472 = vset.pattern.permute.xlu0 52
      %3473 = vperm.xlu0 %3472, %v3459
      %v3474 = vpop.permute.xlu0 %3473
      %3477 = vset.pattern.permute.xlu0 52
      %3478 = vperm.xlu0 %3477, %v3460
      %v3479 = vpop.permute.xlu0 %3478
      %v3481 = vadd.f32 %v1199, %v3464
      %v3482 = vadd.f32 %v1200, %v3469
      %v3483 = vadd.f32 %v1201, %v3474
      %v3484 = vadd.f32 %v1202, %v3479
      %v3485 = vsel %vm1221, %v3481, -inf
      %v3486 = vsel %vm1221, %v3482, -inf
      %v3487 = vsel %vm1221, %v3483, -inf
      %v3488 = vsel %vm1231, %v3484, -inf
      %v3489 = vmax.f32 %v3485, %v3486
      %v3490 = vmax.f32 %v3487, %v3488
      %v3491 = vmax.f32 %v3489, %v3490
      %v3492 = vrot.slane %v3491, 4
      %v3493 = vmax.f32 %v3491, %v3492
      %v3494 = vrot.slane %v3493, 2
      %v3495 = vmax.f32 %v3493, %v3494
      %v3496 = vrot.slane %v3495, 1
      %v3497 = vmax.f32 %v3495, %v3496
      %vm3498 = vcmp.eq.f32.partialorder %v3481, %v3497
      %vm3499 = vcmp.eq.f32.partialorder %v3482, %v3497
      %vm3500 = vcmp.eq.f32.partialorder %v3483, %v3497
      %vm3501 = vcmp.eq.f32.partialorder %v3484, %v3497
      %v3502 = vsel %vm3498, %v1211, 28.0
      %v3503 = vsel %vm3499, %v1212, 28.0
      %v3504 = vsel %vm3500, %v1213, 28.0
      %v3505 = vsel %vm3501, %v1214, 28.0
      %v3506 = vsel %vm1221, %v3502, inf
      %v3507 = vsel %vm1221, %v3503, inf
      %v3508 = vsel %vm1221, %v3504, inf
      %v3509 = vsel %vm1231, %v3505, inf
      %v3510 = vmin.f32 %v3506, %v3507
      %v3511 = vmin.f32 %v3508, %v3509
      %v3512 = vmin.f32 %v3510, %v3511
      %v3513 = vrot.slane %v3512, 4
      %v3514 = vmin.f32 %v3512, %v3513
      %v3515 = vrot.slane %v3514, 2
      %v3516 = vmin.f32 %v3514, %v3515
      %v3517 = vrot.slane %v3516, 1
      %v3518 = vmin.f32 %v3516, %v3517
      %v3519 = vadd.f32 %v3497, %v1162
      %v3520 = vrot.slane %v1198, 7
      %v3522 = vadd.f32 %v3519, %v3520
      %vm3523 = vcmask 225284
      %v3524 = vsel %vm3523, %v3522, -inf
      %3525 = vmax.xlane.f32.xlu0 %v3524
      %v3526 = vpop.xlane.xlu0 %3525
      %vm3527 = vcmp.eq.f32.partialorder %v3522, %v3526
      %v3528 = vsel %vm3527, %v1205, 28.0
      %v3529 = vsel %vm3523, %v3528, inf
      %3530 = vmin.xlane.f32.xlu0 %v3529
      %v3531 = vpop.xlane.xlu0 %3530
      %v3532 = vsel %vm1631, %v3531, 0.0
      %vm3533 = vcmp.eq.f32.partialorder %v1205, %v3531
      %v3534 = vsel %vm3533, %v3518, 0.0
      %v3535 = vsel %vm3523, %v3534, 0.0
      %3536 = vadd.xlane.f32.xlu0 %v3535
      %v3537 = vpop.xlane.xlu0 %3536
      %v3538 = vsel %vm1638, %v3537, %v3532
      %v3539 = vperm.slane %v3537, 4
      %vm3540 = vcmp.eq.f32.partialorder %v1211, %v3539
      %vm3541 = vcmp.eq.f32.partialorder %v1212, %v3539
      %vm3542 = vcmp.eq.f32.partialorder %v1213, %v3539
      %vm3543 = vcmp.eq.f32.partialorder %v1214, %v3539
      %v3544 = vsel %vm3540, %v3447, 0.0
      %v3545 = vsel %vm3541, %v3450, 0.0
      %v3546 = vsel %vm3542, %v3453, 0.0
      %v3547 = vsel %vm3543, %v3456, 0.0
      %v3548 = vadd.f32 %v3544, %v3545
      %v3549 = vadd.f32 %v3548, %v3546
      %v3550 = vsel %vm1651, %v3547, 0.0
      %v3551 = vadd.f32 %v3549, %v3550
      %v3552 = vrot.slane %v3551, 4
      %v3553 = vadd.f32 %v3551, %v3552
      %v3554 = vrot.slane %v3553, 2
      %v3555 = vadd.f32 %v3553, %v3554
      %v3556 = vrot.slane %v3555, 1
      %v3557 = vadd.f32 %v3555, %v3556
      %v3558 = vsel %vm1660, %v3557, %v3538
      %vm3559 = vcmp.eq.f32.partialorder %v1205, %v3557
      %v3560 = vsel %vm3559, %v3418, 0.0
      %v3561 = vsel %vm1221, %v3560, 0.0
      %3562 = vadd.xlane.f32.xlu0 %v3561
      %v3563 = vpop.xlane.xlu0 %3562
      %v3564 = vsel %vm1667, %v3563, %v3558
      %vm3565 = vcmp.eq.f32.partialorder %v1211, %v3563
      %vm3566 = vcmp.eq.f32.partialorder %v1212, %v3563
      %vm3567 = vcmp.eq.f32.partialorder %v1213, %v3563
      %vm3568 = vcmp.eq.f32.partialorder %v1214, %v3563
      %v3569 = vsel %vm3565, %v3347, 0.0
      %v3570 = vsel %vm3566, %v3350, 0.0
      %v3571 = vsel %vm3567, %v3353, 0.0
      %v3572 = vsel %vm3568, %v3356, 0.0
      %v3573 = vadd.f32 %v3569, %v3570
      %v3574 = vadd.f32 %v3573, %v3571
      %v3575 = vsel %vm1651, %v3572, 0.0
      %v3576 = vadd.f32 %v3574, %v3575
      %v3577 = vrot.slane %v3576, 4
      %v3578 = vadd.f32 %v3576, %v3577
      %v3579 = vrot.slane %v3578, 2
      %v3580 = vadd.f32 %v3578, %v3579
      %v3581 = vrot.slane %v3580, 1
      %v3582 = vadd.f32 %v3580, %v3581
      %v3583 = vsel %vm1687, %v3582, %v3564
      %vm3584 = vcmp.eq.f32.partialorder %v1205, %v3582
      %v3585 = vsel %vm3584, %v3318, 0.0
      %v3586 = vsel %vm1221, %v3585, 0.0
      %3587 = vadd.xlane.f32.xlu0 %v3586
      %v3588 = vpop.xlane.xlu0 %3587
      %v3589 = vsel %vm1694, %v3588, %v3583
      %vm3590 = vcmp.eq.f32.partialorder %v1211, %v3588
      %vm3591 = vcmp.eq.f32.partialorder %v1212, %v3588
      %vm3592 = vcmp.eq.f32.partialorder %v1213, %v3588
      %vm3593 = vcmp.eq.f32.partialorder %v1214, %v3588
      %v3594 = vsel %vm3590, %v3247, 0.0
      %v3595 = vsel %vm3591, %v3250, 0.0
      %v3596 = vsel %vm3592, %v3253, 0.0
      %v3597 = vsel %vm3593, %v3256, 0.0
      %v3598 = vadd.f32 %v3594, %v3595
      %v3599 = vadd.f32 %v3598, %v3596
      %v3600 = vsel %vm1651, %v3597, 0.0
      %v3601 = vadd.f32 %v3599, %v3600
      %v3602 = vrot.slane %v3601, 4
      %v3603 = vadd.f32 %v3601, %v3602
      %v3604 = vrot.slane %v3603, 2
      %v3605 = vadd.f32 %v3603, %v3604
      %v3606 = vrot.slane %v3605, 1
      %v3607 = vadd.f32 %v3605, %v3606
      %v3608 = vsel %vm1714, %v3607, %v3589
      %vm3609 = vcmp.eq.f32.partialorder %v1205, %v3607
      %v3610 = vsel %vm3609, %v3218, 0.0
      %v3611 = vsel %vm1221, %v3610, 0.0
      %3612 = vadd.xlane.f32.xlu0 %v3611
      %v3613 = vpop.xlane.xlu0 %3612
      %v3614 = vsel %vm1721, %v3613, %v3608
      %vm3615 = vcmp.eq.f32.partialorder %v1211, %v3613
      %vm3616 = vcmp.eq.f32.partialorder %v1212, %v3613
      %vm3617 = vcmp.eq.f32.partialorder %v1213, %v3613
      %vm3618 = vcmp.eq.f32.partialorder %v1214, %v3613
      %v3619 = vsel %vm3615, %v1245, 0.0
      %v3620 = vsel %vm3616, %v1248, 0.0
      %v3621 = vsel %vm3617, %v1251, 0.0
      %v3622 = vsel %vm3618, %v1254, 0.0
      %v3623 = vadd.f32 %v3619, %v3620
      %v3624 = vadd.f32 %v3623, %v3621
      %v3625 = vsel %vm1651, %v3622, 0.0
      %v3626 = vadd.f32 %v3624, %v3625
      %v3627 = vrot.slane %v3626, 4
      %v3628 = vadd.f32 %v3626, %v3627
      %v3629 = vrot.slane %v3628, 2
      %v3630 = vadd.f32 %v3628, %v3629
      %v3631 = vrot.slane %v3630, 1
      %v3632 = vadd.f32 %v3630, %v3631
      %v3633 = vsel %vm1741, %v3526, %v3614
      %v3634 = vsel %vm1743, %v3632, %v3633
      %vm3635 = vcmp.eq.s32.totalorder %v1207, 4
      %v3636 = vperm.slane %v3634, 4
      %v3637 = vsel %vm3635, %v3636, %v3164
      %3638 = vset.pattern.permute.xlu0 5
      %3639 = vperm.xlu0 %3638, %v1255
      %v3640 = vpop.permute.xlu0 %3639
      %3642 = vset.pattern.permute.xlu0 5
      %3643 = vperm.xlu0 %3642, %v1256
      %v3644 = vpop.permute.xlu0 %3643
      %3646 = vset.pattern.permute.xlu0 5
      %3647 = vperm.xlu0 %3646, %v1257
      %v3648 = vpop.permute.xlu0 %3647
      %3650 = vset.pattern.permute.xlu0 5
      %3651 = vperm.xlu0 %3650, %v1258
      %v3652 = vpop.permute.xlu0 %3651
      %v3654 = vadd.f32 %v1199, %v3640
      %v3655 = vadd.f32 %v1200, %v3644
      %v3656 = vadd.f32 %v1201, %v3648
      %v3657 = vadd.f32 %v1202, %v3652
      %v3658 = vsel %vm1221, %v3654, -inf
      %v3659 = vsel %vm1221, %v3655, -inf
      %v3660 = vsel %vm1221, %v3656, -inf
      %v3661 = vsel %vm1231, %v3657, -inf
      %v3662 = vmax.f32 %v3658, %v3659
      %v3663 = vmax.f32 %v3660, %v3661
      %v3664 = vmax.f32 %v3662, %v3663
      %v3665 = vrot.slane %v3664, 4
      %v3666 = vmax.f32 %v3664, %v3665
      %v3667 = vrot.slane %v3666, 2
      %v3668 = vmax.f32 %v3666, %v3667
      %v3669 = vrot.slane %v3668, 1
      %v3670 = vmax.f32 %v3668, %v3669
      %vm3671 = vcmp.eq.f32.partialorder %v3654, %v3670
      %vm3672 = vcmp.eq.f32.partialorder %v3655, %v3670
      %vm3673 = vcmp.eq.f32.partialorder %v3656, %v3670
      %vm3674 = vcmp.eq.f32.partialorder %v3657, %v3670
      %v3675 = vsel %vm3671, %v1211, 28.0
      %v3676 = vsel %vm3672, %v1212, 28.0
      %v3677 = vsel %vm3673, %v1213, 28.0
      %v3678 = vsel %vm3674, %v1214, 28.0
      %v3679 = vsel %vm1221, %v3675, inf
      %v3680 = vsel %vm1221, %v3676, inf
      %v3681 = vsel %vm1221, %v3677, inf
      %v3682 = vsel %vm1231, %v3678, inf
      %v3683 = vmin.f32 %v3679, %v3680
      %v3684 = vmin.f32 %v3681, %v3682
      %v3685 = vmin.f32 %v3683, %v3684
      %v3686 = vrot.slane %v3685, 4
      %v3687 = vmin.f32 %v3685, %v3686
      %v3688 = vrot.slane %v3687, 2
      %v3689 = vmin.f32 %v3687, %v3688
      %v3690 = vrot.slane %v3689, 1
      %v3691 = vmin.f32 %v3689, %v3690
      %v3692 = vadd.f32 %v3670, %v1156
      %v3693 = vperm.slane %v3692, 5
      %v3694 = vadd.f32 %v1195, %v3693
      %v3695 = vadd.f32 %v1196, %v3693
      %v3696 = vadd.f32 %v1197, %v3693
      %v3697 = vadd.f32 %v1198, %v3693
      %v3698 = vsel %vm1221, %v3694, -inf
      %3699 = vmax.xlane.f32.xlu0 %v3698
      %v3700 = vpop.xlane.xlu0 %3699
      %v3701 = vsel %vm1221, %v3695, -inf
      %3702 = vmax.xlane.f32.xlu0 %v3701
      %v3703 = vpop.xlane.xlu0 %3702
      %v3704 = vsel %vm1221, %v3696, -inf
      %3705 = vmax.xlane.f32.xlu0 %v3704
      %v3706 = vpop.xlane.xlu0 %3705
      %v3707 = vsel %vm1231, %v3697, -inf
      %3708 = vmax.xlane.f32.xlu0 %v3707
      %v3709 = vpop.xlane.xlu0 %3708
      %vm3710 = vcmp.eq.f32.partialorder %v3694, %v3700
      %vm3711 = vcmp.eq.f32.partialorder %v3695, %v3703
      %vm3712 = vcmp.eq.f32.partialorder %v3696, %v3706
      %vm3713 = vcmp.eq.f32.partialorder %v3697, %v3709
      %v3714 = vsel %vm3710, %v1205, 28.0
      %v3715 = vsel %vm3711, %v1205, 28.0
      %v3716 = vsel %vm3712, %v1205, 28.0
      %v3717 = vsel %vm3713, %v1205, 28.0
      %v3718 = vsel %vm1221, %v3714, inf
      %3719 = vmin.xlane.f32.xlu0 %v3718
      %v3720 = vpop.xlane.xlu0 %3719
      %v3721 = vsel %vm1221, %v3715, inf
      %3722 = vmin.xlane.f32.xlu0 %v3721
      %v3723 = vpop.xlane.xlu0 %3722
      %v3724 = vsel %vm1221, %v3716, inf
      %3725 = vmin.xlane.f32.xlu0 %v3724
      %v3726 = vpop.xlane.xlu0 %3725
      %v3727 = vsel %vm1231, %v3717, inf
      %3728 = vmin.xlane.f32.xlu0 %v3727
      %v3729 = vpop.xlane.xlu0 %3728
      %v3730 = vadd.f32 %v3700, %v1179
      %v3731 = vadd.f32 %v3703, %v1180
      %v3732 = vadd.f32 %v3706, %v1181
      %v3733 = vadd.f32 %v3709, %v1182
      %3735 = vset.pattern.permute.xlu0 21
      %3736 = vperm.xlu0 %3735, %v3730
      %v3737 = vpop.permute.xlu0 %3736
      %3740 = vset.pattern.permute.xlu0 21
      %3741 = vperm.xlu0 %3740, %v3731
      %v3742 = vpop.permute.xlu0 %3741
      %3745 = vset.pattern.permute.xlu0 21
      %3746 = vperm.xlu0 %3745, %v3732
      %v3747 = vpop.permute.xlu0 %3746
      %3750 = vset.pattern.permute.xlu0 21
      %3751 = vperm.xlu0 %3750, %v3733
      %v3752 = vpop.permute.xlu0 %3751
      %v3754 = vadd.f32 %v1199, %v3737
      %v3755 = vadd.f32 %v1200, %v3742
      %v3756 = vadd.f32 %v1201, %v3747
      %v3757 = vadd.f32 %v1202, %v3752
      %v3758 = vsel %vm1221, %v3754, -inf
      %v3759 = vsel %vm1221, %v3755, -inf
      %v3760 = vsel %vm1221, %v3756, -inf
      %v3761 = vsel %vm1231, %v3757, -inf
      %v3762 = vmax.f32 %v3758, %v3759
      %v3763 = vmax.f32 %v3760, %v3761
      %v3764 = vmax.f32 %v3762, %v3763
      %v3765 = vrot.slane %v3764, 4
      %v3766 = vmax.f32 %v3764, %v3765
      %v3767 = vrot.slane %v3766, 2
      %v3768 = vmax.f32 %v3766, %v3767
      %v3769 = vrot.slane %v3768, 1
      %v3770 = vmax.f32 %v3768, %v3769
      %vm3771 = vcmp.eq.f32.partialorder %v3754, %v3770
      %vm3772 = vcmp.eq.f32.partialorder %v3755, %v3770
      %vm3773 = vcmp.eq.f32.partialorder %v3756, %v3770
      %vm3774 = vcmp.eq.f32.partialorder %v3757, %v3770
      %v3775 = vsel %vm3771, %v1211, 28.0
      %v3776 = vsel %vm3772, %v1212, 28.0
      %v3777 = vsel %vm3773, %v1213, 28.0
      %v3778 = vsel %vm3774, %v1214, 28.0
      %v3779 = vsel %vm1221, %v3775, inf
      %v3780 = vsel %vm1221, %v3776, inf
      %v3781 = vsel %vm1221, %v3777, inf
      %v3782 = vsel %vm1231, %v3778, inf
      %v3783 = vmin.f32 %v3779, %v3780
      %v3784 = vmin.f32 %v3781, %v3782
      %v3785 = vmin.f32 %v3783, %v3784
      %v3786 = vrot.slane %v3785, 4
      %v3787 = vmin.f32 %v3785, %v3786
      %v3788 = vrot.slane %v3787, 2
      %v3789 = vmin.f32 %v3787, %v3788
      %v3790 = vrot.slane %v3789, 1
      %v3791 = vmin.f32 %v3789, %v3790
      %v3792 = vadd.f32 %v3770, %v1158
      %v3793 = vperm.slane %v3792, 5
      %v3794 = vadd.f32 %v1195, %v3793
      %v3795 = vadd.f32 %v1196, %v3793
      %v3796 = vadd.f32 %v1197, %v3793
      %v3797 = vadd.f32 %v1198, %v3793
      %v3798 = vsel %vm1221, %v3794, -inf
      %3799 = vmax.xlane.f32.xlu0 %v3798
      %v3800 = vpop.xlane.xlu0 %3799
      %v3801 = vsel %vm1221, %v3795, -inf
      %3802 = vmax.xlane.f32.xlu0 %v3801
      %v3803 = vpop.xlane.xlu0 %3802
      %v3804 = vsel %vm1221, %v3796, -inf
      %3805 = vmax.xlane.f32.xlu0 %v3804
      %v3806 = vpop.xlane.xlu0 %3805
      %v3807 = vsel %vm1231, %v3797, -inf
      %3808 = vmax.xlane.f32.xlu0 %v3807
      %v3809 = vpop.xlane.xlu0 %3808
      %vm3810 = vcmp.eq.f32.partialorder %v3794, %v3800
      %vm3811 = vcmp.eq.f32.partialorder %v3795, %v3803
      %vm3812 = vcmp.eq.f32.partialorder %v3796, %v3806
      %vm3813 = vcmp.eq.f32.partialorder %v3797, %v3809
      %v3814 = vsel %vm3810, %v1205, 28.0
      %v3815 = vsel %vm3811, %v1205, 28.0
      %v3816 = vsel %vm3812, %v1205, 28.0
      %v3817 = vsel %vm3813, %v1205, 28.0
      %v3818 = vsel %vm1221, %v3814, inf
      %3819 = vmin.xlane.f32.xlu0 %v3818
      %v3820 = vpop.xlane.xlu0 %3819
      %v3821 = vsel %vm1221, %v3815, inf
      %3822 = vmin.xlane.f32.xlu0 %v3821
      %v3823 = vpop.xlane.xlu0 %3822
      %v3824 = vsel %vm1221, %v3816, inf
      %3825 = vmin.xlane.f32.xlu0 %v3824
      %v3826 = vpop.xlane.xlu0 %3825
      %v3827 = vsel %vm1231, %v3817, inf
      %3828 = vmin.xlane.f32.xlu0 %v3827
      %v3829 = vpop.xlane.xlu0 %3828
      %v3830 = vadd.f32 %v3800, %v1179
      %v3831 = vadd.f32 %v3803, %v1180
      %v3832 = vadd.f32 %v3806, %v1181
      %v3833 = vadd.f32 %v3809, %v1182
      %3835 = vset.pattern.permute.xlu0 37
      %3836 = vperm.xlu0 %3835, %v3830
      %v3837 = vpop.permute.xlu0 %3836
      %3840 = vset.pattern.permute.xlu0 37
      %3841 = vperm.xlu0 %3840, %v3831
      %v3842 = vpop.permute.xlu0 %3841
      %3845 = vset.pattern.permute.xlu0 37
      %3846 = vperm.xlu0 %3845, %v3832
      %v3847 = vpop.permute.xlu0 %3846
      %3850 = vset.pattern.permute.xlu0 37
      %3851 = vperm.xlu0 %3850, %v3833
      %v3852 = vpop.permute.xlu0 %3851
      %v3854 = vadd.f32 %v1199, %v3837
      %v3855 = vadd.f32 %v1200, %v3842
      %v3856 = vadd.f32 %v1201, %v3847
      %v3857 = vadd.f32 %v1202, %v3852
      %v3858 = vsel %vm1221, %v3854, -inf
      %v3859 = vsel %vm1221, %v3855, -inf
      %v3860 = vsel %vm1221, %v3856, -inf
      %v3861 = vsel %vm1231, %v3857, -inf
      %v3862 = vmax.f32 %v3858, %v3859
      %v3863 = vmax.f32 %v3860, %v3861
      %v3864 = vmax.f32 %v3862, %v3863
      %v3865 = vrot.slane %v3864, 4
      %v3866 = vmax.f32 %v3864, %v3865
      %v3867 = vrot.slane %v3866, 2
      %v3868 = vmax.f32 %v3866, %v3867
      %v3869 = vrot.slane %v3868, 1
      %v3870 = vmax.f32 %v3868, %v3869
      %vm3871 = vcmp.eq.f32.partialorder %v3854, %v3870
      %vm3872 = vcmp.eq.f32.partialorder %v3855, %v3870
      %vm3873 = vcmp.eq.f32.partialorder %v3856, %v3870
      %vm3874 = vcmp.eq.f32.partialorder %v3857, %v3870
      %v3875 = vsel %vm3871, %v1211, 28.0
      %v3876 = vsel %vm3872, %v1212, 28.0
      %v3877 = vsel %vm3873, %v1213, 28.0
      %v3878 = vsel %vm3874, %v1214, 28.0
      %v3879 = vsel %vm1221, %v3875, inf
      %v3880 = vsel %vm1221, %v3876, inf
      %v3881 = vsel %vm1221, %v3877, inf
      %v3882 = vsel %vm1231, %v3878, inf
      %v3883 = vmin.f32 %v3879, %v3880
      %v3884 = vmin.f32 %v3881, %v3882
      %v3885 = vmin.f32 %v3883, %v3884
      %v3886 = vrot.slane %v3885, 4
      %v3887 = vmin.f32 %v3885, %v3886
      %v3888 = vrot.slane %v3887, 2
      %v3889 = vmin.f32 %v3887, %v3888
      %v3890 = vrot.slane %v3889, 1
      %v3891 = vmin.f32 %v3889, %v3890
      %v3892 = vadd.f32 %v3870, %v1160
      %v3893 = vperm.slane %v3892, 5
      %v3894 = vadd.f32 %v1195, %v3893
      %v3895 = vadd.f32 %v1196, %v3893
      %v3896 = vadd.f32 %v1197, %v3893
      %v3897 = vadd.f32 %v1198, %v3893
      %v3898 = vsel %vm1221, %v3894, -inf
      %3899 = vmax.xlane.f32.xlu0 %v3898
      %v3900 = vpop.xlane.xlu0 %3899
      %v3901 = vsel %vm1221, %v3895, -inf
      %3902 = vmax.xlane.f32.xlu0 %v3901
      %v3903 = vpop.xlane.xlu0 %3902
      %v3904 = vsel %vm1221, %v3896, -inf
      %3905 = vmax.xlane.f32.xlu0 %v3904
      %v3906 = vpop.xlane.xlu0 %3905
      %v3907 = vsel %vm1231, %v3897, -inf
      %3908 = vmax.xlane.f32.xlu0 %v3907
      %v3909 = vpop.xlane.xlu0 %3908
      %vm3910 = vcmp.eq.f32.partialorder %v3894, %v3900
      %vm3911 = vcmp.eq.f32.partialorder %v3895, %v3903
      %vm3912 = vcmp.eq.f32.partialorder %v3896, %v3906
      %vm3913 = vcmp.eq.f32.partialorder %v3897, %v3909
      %v3914 = vsel %vm3910, %v1205, 28.0
      %v3915 = vsel %vm3911, %v1205, 28.0
      %v3916 = vsel %vm3912, %v1205, 28.0
      %v3917 = vsel %vm3913, %v1205, 28.0
      %v3918 = vsel %vm1221, %v3914, inf
      %3919 = vmin.xlane.f32.xlu0 %v3918
      %v3920 = vpop.xlane.xlu0 %3919
      %v3921 = vsel %vm1221, %v3915, inf
      %3922 = vmin.xlane.f32.xlu0 %v3921
      %v3923 = vpop.xlane.xlu0 %3922
      %v3924 = vsel %vm1221, %v3916, inf
      %3925 = vmin.xlane.f32.xlu0 %v3924
      %v3926 = vpop.xlane.xlu0 %3925
      %v3927 = vsel %vm1231, %v3917, inf
      %3928 = vmin.xlane.f32.xlu0 %v3927
      %v3929 = vpop.xlane.xlu0 %3928
      %v3930 = vadd.f32 %v3900, %v1179
      %v3931 = vadd.f32 %v3903, %v1180
      %v3932 = vadd.f32 %v3906, %v1181
      %v3933 = vadd.f32 %v3909, %v1182
      %3935 = vset.pattern.permute.xlu0 53
      %3936 = vperm.xlu0 %3935, %v3930
      %v3937 = vpop.permute.xlu0 %3936
      %3940 = vset.pattern.permute.xlu0 53
      %3941 = vperm.xlu0 %3940, %v3931
      %v3942 = vpop.permute.xlu0 %3941
      %3945 = vset.pattern.permute.xlu0 53
      %3946 = vperm.xlu0 %3945, %v3932
      %v3947 = vpop.permute.xlu0 %3946
      %3950 = vset.pattern.permute.xlu0 53
      %3951 = vperm.xlu0 %3950, %v3933
      %v3952 = vpop.permute.xlu0 %3951
      %v3954 = vadd.f32 %v1199, %v3937
      %v3955 = vadd.f32 %v1200, %v3942
      %v3956 = vadd.f32 %v1201, %v3947
      %v3957 = vadd.f32 %v1202, %v3952
      %v3958 = vsel %vm1221, %v3954, -inf
      %v3959 = vsel %vm1221, %v3955, -inf
      %v3960 = vsel %vm1221, %v3956, -inf
      %v3961 = vsel %vm1231, %v3957, -inf
      %v3962 = vmax.f32 %v3958, %v3959
      %v3963 = vmax.f32 %v3960, %v3961
      %v3964 = vmax.f32 %v3962, %v3963
      %v3965 = vrot.slane %v3964, 4
      %v3966 = vmax.f32 %v3964, %v3965
      %v3967 = vrot.slane %v3966, 2
      %v3968 = vmax.f32 %v3966, %v3967
      %v3969 = vrot.slane %v3968, 1
      %v3970 = vmax.f32 %v3968, %v3969
      %vm3971 = vcmp.eq.f32.partialorder %v3954, %v3970
      %vm3972 = vcmp.eq.f32.partialorder %v3955, %v3970
      %vm3973 = vcmp.eq.f32.partialorder %v3956, %v3970
      %vm3974 = vcmp.eq.f32.partialorder %v3957, %v3970
      %v3975 = vsel %vm3971, %v1211, 28.0
      %v3976 = vsel %vm3972, %v1212, 28.0
      %v3977 = vsel %vm3973, %v1213, 28.0
      %v3978 = vsel %vm3974, %v1214, 28.0
      %v3979 = vsel %vm1221, %v3975, inf
      %v3980 = vsel %vm1221, %v3976, inf
      %v3981 = vsel %vm1221, %v3977, inf
      %v3982 = vsel %vm1231, %v3978, inf
      %v3983 = vmin.f32 %v3979, %v3980
      %v3984 = vmin.f32 %v3981, %v3982
      %v3985 = vmin.f32 %v3983, %v3984
      %v3986 = vrot.slane %v3985, 4
      %v3987 = vmin.f32 %v3985, %v3986
      %v3988 = vrot.slane %v3987, 2
      %v3989 = vmin.f32 %v3987, %v3988
      %v3990 = vrot.slane %v3989, 1
      %v3991 = vmin.f32 %v3989, %v3990
      %v3992 = vadd.f32 %v3970, %v1162
      %v3993 = vrot.slane %v1198, 6
      %v3995 = vadd.f32 %v3992, %v3993
      %vm3996 = vcmask 226309
      %v3997 = vsel %vm3996, %v3995, -inf
      %3998 = vmax.xlane.f32.xlu0 %v3997
      %v3999 = vpop.xlane.xlu0 %3998
      %vm4000 = vcmp.eq.f32.partialorder %v3995, %v3999
      %v4001 = vsel %vm4000, %v1205, 28.0
      %v4002 = vsel %vm3996, %v4001, inf
      %4003 = vmin.xlane.f32.xlu0 %v4002
      %v4004 = vpop.xlane.xlu0 %4003
      %v4005 = vsel %vm1631, %v4004, 0.0
      %vm4006 = vcmp.eq.f32.partialorder %v1205, %v4004
      %v4007 = vsel %vm4006, %v3991, 0.0
      %v4008 = vsel %vm3996, %v4007, 0.0
      %4009 = vadd.xlane.f32.xlu0 %v4008
      %v4010 = vpop.xlane.xlu0 %4009
      %v4011 = vsel %vm1638, %v4010, %v4005
      %v4012 = vperm.slane %v4010, 5
      %vm4013 = vcmp.eq.f32.partialorder %v1211, %v4012
      %vm4014 = vcmp.eq.f32.partialorder %v1212, %v4012
      %vm4015 = vcmp.eq.f32.partialorder %v1213, %v4012
      %vm4016 = vcmp.eq.f32.partialorder %v1214, %v4012
      %v4017 = vsel %vm4013, %v3920, 0.0
      %v4018 = vsel %vm4014, %v3923, 0.0
      %v4019 = vsel %vm4015, %v3926, 0.0
      %v4020 = vsel %vm4016, %v3929, 0.0
      %v4021 = vadd.f32 %v4017, %v4018
      %v4022 = vadd.f32 %v4021, %v4019
      %v4023 = vsel %vm1651, %v4020, 0.0
      %v4024 = vadd.f32 %v4022, %v4023
      %v4025 = vrot.slane %v4024, 4
      %v4026 = vadd.f32 %v4024, %v4025
      %v4027 = vrot.slane %v4026, 2
      %v4028 = vadd.f32 %v4026, %v4027
      %v4029 = vrot.slane %v4028, 1
      %v4030 = vadd.f32 %v4028, %v4029
      %v4031 = vsel %vm1660, %v4030, %v4011
      %vm4032 = vcmp.eq.f32.partialorder %v1205, %v4030
      %v4033 = vsel %vm4032, %v3891, 0.0
      %v4034 = vsel %vm1221, %v4033, 0.0
      %4035 = vadd.xlane.f32.xlu0 %v4034
      %v4036 = vpop.xlane.xlu0 %4035
      %v4037 = vsel %vm1667, %v4036, %v4031
      %vm4038 = vcmp.eq.f32.partialorder %v1211, %v4036
      %vm4039 = vcmp.eq.f32.partialorder %v1212, %v4036
      %vm4040 = vcmp.eq.f32.partialorder %v1213, %v4036
      %vm4041 = vcmp.eq.f32.partialorder %v1214, %v4036
      %v4042 = vsel %vm4038, %v3820, 0.0
      %v4043 = vsel %vm4039, %v3823, 0.0
      %v4044 = vsel %vm4040, %v3826, 0.0
      %v4045 = vsel %vm4041, %v3829, 0.0
      %v4046 = vadd.f32 %v4042, %v4043
      %v4047 = vadd.f32 %v4046, %v4044
      %v4048 = vsel %vm1651, %v4045, 0.0
      %v4049 = vadd.f32 %v4047, %v4048
      %v4050 = vrot.slane %v4049, 4
      %v4051 = vadd.f32 %v4049, %v4050
      %v4052 = vrot.slane %v4051, 2
      %v4053 = vadd.f32 %v4051, %v4052
      %v4054 = vrot.slane %v4053, 1
      %v4055 = vadd.f32 %v4053, %v4054
      %v4056 = vsel %vm1687, %v4055, %v4037
      %vm4057 = vcmp.eq.f32.partialorder %v1205, %v4055
      %v4058 = vsel %vm4057, %v3791, 0.0
      %v4059 = vsel %vm1221, %v4058, 0.0
      %4060 = vadd.xlane.f32.xlu0 %v4059
      %v4061 = vpop.xlane.xlu0 %4060
      %v4062 = vsel %vm1694, %v4061, %v4056
      %vm4063 = vcmp.eq.f32.partialorder %v1211, %v4061
      %vm4064 = vcmp.eq.f32.partialorder %v1212, %v4061
      %vm4065 = vcmp.eq.f32.partialorder %v1213, %v4061
      %vm4066 = vcmp.eq.f32.partialorder %v1214, %v4061
      %v4067 = vsel %vm4063, %v3720, 0.0
      %v4068 = vsel %vm4064, %v3723, 0.0
      %v4069 = vsel %vm4065, %v3726, 0.0
      %v4070 = vsel %vm4066, %v3729, 0.0
      %v4071 = vadd.f32 %v4067, %v4068
      %v4072 = vadd.f32 %v4071, %v4069
      %v4073 = vsel %vm1651, %v4070, 0.0
      %v4074 = vadd.f32 %v4072, %v4073
      %v4075 = vrot.slane %v4074, 4
      %v4076 = vadd.f32 %v4074, %v4075
      %v4077 = vrot.slane %v4076, 2
      %v4078 = vadd.f32 %v4076, %v4077
      %v4079 = vrot.slane %v4078, 1
      %v4080 = vadd.f32 %v4078, %v4079
      %v4081 = vsel %vm1714, %v4080, %v4062
      %vm4082 = vcmp.eq.f32.partialorder %v1205, %v4080
      %v4083 = vsel %vm4082, %v3691, 0.0
      %v4084 = vsel %vm1221, %v4083, 0.0
      %4085 = vadd.xlane.f32.xlu0 %v4084
      %v4086 = vpop.xlane.xlu0 %4085
      %v4087 = vsel %vm1721, %v4086, %v4081
      %vm4088 = vcmp.eq.f32.partialorder %v1211, %v4086
      %vm4089 = vcmp.eq.f32.partialorder %v1212, %v4086
      %vm4090 = vcmp.eq.f32.partialorder %v1213, %v4086
      %vm4091 = vcmp.eq.f32.partialorder %v1214, %v4086
      %v4092 = vsel %vm4088, %v1245, 0.0
      %v4093 = vsel %vm4089, %v1248, 0.0
      %v4094 = vsel %vm4090, %v1251, 0.0
      %v4095 = vsel %vm4091, %v1254, 0.0
      %v4096 = vadd.f32 %v4092, %v4093
      %v4097 = vadd.f32 %v4096, %v4094
      %v4098 = vsel %vm1651, %v4095, 0.0
      %v4099 = vadd.f32 %v4097, %v4098
      %v4100 = vrot.slane %v4099, 4
      %v4101 = vadd.f32 %v4099, %v4100
      %v4102 = vrot.slane %v4101, 2
      %v4103 = vadd.f32 %v4101, %v4102
      %v4104 = vrot.slane %v4103, 1
      %v4105 = vadd.f32 %v4103, %v4104
      %v4106 = vsel %vm1741, %v3999, %v4087
      %v4107 = vsel %vm1743, %v4105, %v4106
      %vm4108 = vcmp.eq.s32.totalorder %v1207, 5
      %v4109 = vperm.slane %v4107, 5
      %v4110 = vsel %vm4108, %v4109, %v3637
      %4111 = vset.pattern.permute.xlu0 6
      %4112 = vperm.xlu0 %4111, %v1255
      %v4113 = vpop.permute.xlu0 %4112
      %4115 = vset.pattern.permute.xlu0 6
      %4116 = vperm.xlu0 %4115, %v1256
      %v4117 = vpop.permute.xlu0 %4116
      %4119 = vset.pattern.permute.xlu0 6
      %4120 = vperm.xlu0 %4119, %v1257
      %v4121 = vpop.permute.xlu0 %4120
      %4123 = vset.pattern.permute.xlu0 6
      %4124 = vperm.xlu0 %4123, %v1258
      %v4125 = vpop.permute.xlu0 %4124
      %v4127 = vadd.f32 %v1199, %v4113
      %v4128 = vadd.f32 %v1200, %v4117
      %v4129 = vadd.f32 %v1201, %v4121
      %v4130 = vadd.f32 %v1202, %v4125
      %v4131 = vsel %vm1221, %v4127, -inf
      %v4132 = vsel %vm1221, %v4128, -inf
      %v4133 = vsel %vm1221, %v4129, -inf
      %v4134 = vsel %vm1231, %v4130, -inf
      %v4135 = vmax.f32 %v4131, %v4132
      %v4136 = vmax.f32 %v4133, %v4134
      %v4137 = vmax.f32 %v4135, %v4136
      %v4138 = vrot.slane %v4137, 4
      %v4139 = vmax.f32 %v4137, %v4138
      %v4140 = vrot.slane %v4139, 2
      %v4141 = vmax.f32 %v4139, %v4140
      %v4142 = vrot.slane %v4141, 1
      %v4143 = vmax.f32 %v4141, %v4142
      %vm4144 = vcmp.eq.f32.partialorder %v4127, %v4143
      %vm4145 = vcmp.eq.f32.partialorder %v4128, %v4143
      %vm4146 = vcmp.eq.f32.partialorder %v4129, %v4143
      %vm4147 = vcmp.eq.f32.partialorder %v4130, %v4143
      %v4148 = vsel %vm4144, %v1211, 28.0
      %v4149 = vsel %vm4145, %v1212, 28.0
      %v4150 = vsel %vm4146, %v1213, 28.0
      %v4151 = vsel %vm4147, %v1214, 28.0
      %v4152 = vsel %vm1221, %v4148, inf
      %v4153 = vsel %vm1221, %v4149, inf
      %v4154 = vsel %vm1221, %v4150, inf
      %v4155 = vsel %vm1231, %v4151, inf
      %v4156 = vmin.f32 %v4152, %v4153
      %v4157 = vmin.f32 %v4154, %v4155
      %v4158 = vmin.f32 %v4156, %v4157
      %v4159 = vrot.slane %v4158, 4
      %v4160 = vmin.f32 %v4158, %v4159
      %v4161 = vrot.slane %v4160, 2
      %v4162 = vmin.f32 %v4160, %v4161
      %v4163 = vrot.slane %v4162, 1
      %v4164 = vmin.f32 %v4162, %v4163
      %v4165 = vadd.f32 %v4143, %v1156
      %v4166 = vperm.slane %v4165, 6
      %v4167 = vadd.f32 %v1195, %v4166
      %v4168 = vadd.f32 %v1196, %v4166
      %v4169 = vadd.f32 %v1197, %v4166
      %v4170 = vadd.f32 %v1198, %v4166
      %v4171 = vsel %vm1221, %v4167, -inf
      %4172 = vmax.xlane.f32.xlu0 %v4171
      %v4173 = vpop.xlane.xlu0 %4172
      %v4174 = vsel %vm1221, %v4168, -inf
      %4175 = vmax.xlane.f32.xlu0 %v4174
      %v4176 = vpop.xlane.xlu0 %4175
      %v4177 = vsel %vm1221, %v4169, -inf
      %4178 = vmax.xlane.f32.xlu0 %v4177
      %v4179 = vpop.xlane.xlu0 %4178
      %v4180 = vsel %vm1231, %v4170, -inf
      %4181 = vmax.xlane.f32.xlu0 %v4180
      %v4182 = vpop.xlane.xlu0 %4181
      %vm4183 = vcmp.eq.f32.partialorder %v4167, %v4173
      %vm4184 = vcmp.eq.f32.partialorder %v4168, %v4176
      %vm4185 = vcmp.eq.f32.partialorder %v4169, %v4179
      %vm4186 = vcmp.eq.f32.partialorder %v4170, %v4182
      %v4187 = vsel %vm4183, %v1205, 28.0
      %v4188 = vsel %vm4184, %v1205, 28.0
      %v4189 = vsel %vm4185, %v1205, 28.0
      %v4190 = vsel %vm4186, %v1205, 28.0
      %v4191 = vsel %vm1221, %v4187, inf
      %4192 = vmin.xlane.f32.xlu0 %v4191
      %v4193 = vpop.xlane.xlu0 %4192
      %v4194 = vsel %vm1221, %v4188, inf
      %4195 = vmin.xlane.f32.xlu0 %v4194
      %v4196 = vpop.xlane.xlu0 %4195
      %v4197 = vsel %vm1221, %v4189, inf
      %4198 = vmin.xlane.f32.xlu0 %v4197
      %v4199 = vpop.xlane.xlu0 %4198
      %v4200 = vsel %vm1231, %v4190, inf
      %4201 = vmin.xlane.f32.xlu0 %v4200
      %v4202 = vpop.xlane.xlu0 %4201
      %v4203 = vadd.f32 %v4173, %v1179
      %v4204 = vadd.f32 %v4176, %v1180
      %v4205 = vadd.f32 %v4179, %v1181
      %v4206 = vadd.f32 %v4182, %v1182
      %4208 = vset.pattern.permute.xlu0 22
      %4209 = vperm.xlu0 %4208, %v4203
      %v4210 = vpop.permute.xlu0 %4209
      %4213 = vset.pattern.permute.xlu0 22
      %4214 = vperm.xlu0 %4213, %v4204
      %v4215 = vpop.permute.xlu0 %4214
      %4218 = vset.pattern.permute.xlu0 22
      %4219 = vperm.xlu0 %4218, %v4205
      %v4220 = vpop.permute.xlu0 %4219
      %4223 = vset.pattern.permute.xlu0 22
      %4224 = vperm.xlu0 %4223, %v4206
      %v4225 = vpop.permute.xlu0 %4224
      %v4227 = vadd.f32 %v1199, %v4210
      %v4228 = vadd.f32 %v1200, %v4215
      %v4229 = vadd.f32 %v1201, %v4220
      %v4230 = vadd.f32 %v1202, %v4225
      %v4231 = vsel %vm1221, %v4227, -inf
      %v4232 = vsel %vm1221, %v4228, -inf
      %v4233 = vsel %vm1221, %v4229, -inf
      %v4234 = vsel %vm1231, %v4230, -inf
      %v4235 = vmax.f32 %v4231, %v4232
      %v4236 = vmax.f32 %v4233, %v4234
      %v4237 = vmax.f32 %v4235, %v4236
      %v4238 = vrot.slane %v4237, 4
      %v4239 = vmax.f32 %v4237, %v4238
      %v4240 = vrot.slane %v4239, 2
      %v4241 = vmax.f32 %v4239, %v4240
      %v4242 = vrot.slane %v4241, 1
      %v4243 = vmax.f32 %v4241, %v4242
      %vm4244 = vcmp.eq.f32.partialorder %v4227, %v4243
      %vm4245 = vcmp.eq.f32.partialorder %v4228, %v4243
      %vm4246 = vcmp.eq.f32.partialorder %v4229, %v4243
      %vm4247 = vcmp.eq.f32.partialorder %v4230, %v4243
      %v4248 = vsel %vm4244, %v1211, 28.0
      %v4249 = vsel %vm4245, %v1212, 28.0
      %v4250 = vsel %vm4246, %v1213, 28.0
      %v4251 = vsel %vm4247, %v1214, 28.0
      %v4252 = vsel %vm1221, %v4248, inf
      %v4253 = vsel %vm1221, %v4249, inf
      %v4254 = vsel %vm1221, %v4250, inf
      %v4255 = vsel %vm1231, %v4251, inf
      %v4256 = vmin.f32 %v4252, %v4253
      %v4257 = vmin.f32 %v4254, %v4255
      %v4258 = vmin.f32 %v4256, %v4257
      %v4259 = vrot.slane %v4258, 4
      %v4260 = vmin.f32 %v4258, %v4259
      %v4261 = vrot.slane %v4260, 2
      %v4262 = vmin.f32 %v4260, %v4261
      %v4263 = vrot.slane %v4262, 1
      %v4264 = vmin.f32 %v4262, %v4263
      %v4265 = vadd.f32 %v4243, %v1158
      %v4266 = vperm.slane %v4265, 6
      %v4267 = vadd.f32 %v1195, %v4266
      %v4268 = vadd.f32 %v1196, %v4266
      %v4269 = vadd.f32 %v1197, %v4266
      %v4270 = vadd.f32 %v1198, %v4266
      %v4271 = vsel %vm1221, %v4267, -inf
      %4272 = vmax.xlane.f32.xlu0 %v4271
      %v4273 = vpop.xlane.xlu0 %4272
      %v4274 = vsel %vm1221, %v4268, -inf
      %4275 = vmax.xlane.f32.xlu0 %v4274
      %v4276 = vpop.xlane.xlu0 %4275
      %v4277 = vsel %vm1221, %v4269, -inf
      %4278 = vmax.xlane.f32.xlu0 %v4277
      %v4279 = vpop.xlane.xlu0 %4278
      %v4280 = vsel %vm1231, %v4270, -inf
      %4281 = vmax.xlane.f32.xlu0 %v4280
      %v4282 = vpop.xlane.xlu0 %4281
      %vm4283 = vcmp.eq.f32.partialorder %v4267, %v4273
      %vm4284 = vcmp.eq.f32.partialorder %v4268, %v4276
      %vm4285 = vcmp.eq.f32.partialorder %v4269, %v4279
      %vm4286 = vcmp.eq.f32.partialorder %v4270, %v4282
      %v4287 = vsel %vm4283, %v1205, 28.0
      %v4288 = vsel %vm4284, %v1205, 28.0
      %v4289 = vsel %vm4285, %v1205, 28.0
      %v4290 = vsel %vm4286, %v1205, 28.0
      %v4291 = vsel %vm1221, %v4287, inf
      %4292 = vmin.xlane.f32.xlu0 %v4291
      %v4293 = vpop.xlane.xlu0 %4292
      %v4294 = vsel %vm1221, %v4288, inf
      %4295 = vmin.xlane.f32.xlu0 %v4294
      %v4296 = vpop.xlane.xlu0 %4295
      %v4297 = vsel %vm1221, %v4289, inf
      %4298 = vmin.xlane.f32.xlu0 %v4297
      %v4299 = vpop.xlane.xlu0 %4298
      %v4300 = vsel %vm1231, %v4290, inf
      %4301 = vmin.xlane.f32.xlu0 %v4300
      %v4302 = vpop.xlane.xlu0 %4301
      %v4303 = vadd.f32 %v4273, %v1179
      %v4304 = vadd.f32 %v4276, %v1180
      %v4305 = vadd.f32 %v4279, %v1181
      %v4306 = vadd.f32 %v4282, %v1182
      %4308 = vset.pattern.permute.xlu0 38
      %4309 = vperm.xlu0 %4308, %v4303
      %v4310 = vpop.permute.xlu0 %4309
      %4313 = vset.pattern.permute.xlu0 38
      %4314 = vperm.xlu0 %4313, %v4304
      %v4315 = vpop.permute.xlu0 %4314
      %4318 = vset.pattern.permute.xlu0 38
      %4319 = vperm.xlu0 %4318, %v4305
      %v4320 = vpop.permute.xlu0 %4319
      %4323 = vset.pattern.permute.xlu0 38
      %4324 = vperm.xlu0 %4323, %v4306
      %v4325 = vpop.permute.xlu0 %4324
      %v4327 = vadd.f32 %v1199, %v4310
      %v4328 = vadd.f32 %v1200, %v4315
      %v4329 = vadd.f32 %v1201, %v4320
      %v4330 = vadd.f32 %v1202, %v4325
      %v4331 = vsel %vm1221, %v4327, -inf
      %v4332 = vsel %vm1221, %v4328, -inf
      %v4333 = vsel %vm1221, %v4329, -inf
      %v4334 = vsel %vm1231, %v4330, -inf
      %v4335 = vmax.f32 %v4331, %v4332
      %v4336 = vmax.f32 %v4333, %v4334
      %v4337 = vmax.f32 %v4335, %v4336
      %v4338 = vrot.slane %v4337, 4
      %v4339 = vmax.f32 %v4337, %v4338
      %v4340 = vrot.slane %v4339, 2
      %v4341 = vmax.f32 %v4339, %v4340
      %v4342 = vrot.slane %v4341, 1
      %v4343 = vmax.f32 %v4341, %v4342
      %vm4344 = vcmp.eq.f32.partialorder %v4327, %v4343
      %vm4345 = vcmp.eq.f32.partialorder %v4328, %v4343
      %vm4346 = vcmp.eq.f32.partialorder %v4329, %v4343
      %vm4347 = vcmp.eq.f32.partialorder %v4330, %v4343
      %v4348 = vsel %vm4344, %v1211, 28.0
      %v4349 = vsel %vm4345, %v1212, 28.0
      %v4350 = vsel %vm4346, %v1213, 28.0
      %v4351 = vsel %vm4347, %v1214, 28.0
      %v4352 = vsel %vm1221, %v4348, inf
      %v4353 = vsel %vm1221, %v4349, inf
      %v4354 = vsel %vm1221, %v4350, inf
      %v4355 = vsel %vm1231, %v4351, inf
      %v4356 = vmin.f32 %v4352, %v4353
      %v4357 = vmin.f32 %v4354, %v4355
      %v4358 = vmin.f32 %v4356, %v4357
      %v4359 = vrot.slane %v4358, 4
      %v4360 = vmin.f32 %v4358, %v4359
      %v4361 = vrot.slane %v4360, 2
      %v4362 = vmin.f32 %v4360, %v4361
      %v4363 = vrot.slane %v4362, 1
      %v4364 = vmin.f32 %v4362, %v4363
      %v4365 = vadd.f32 %v4343, %v1160
      %v4366 = vperm.slane %v4365, 6
      %v4367 = vadd.f32 %v1195, %v4366
      %v4368 = vadd.f32 %v1196, %v4366
      %v4369 = vadd.f32 %v1197, %v4366
      %v4370 = vadd.f32 %v1198, %v4366
      %v4371 = vsel %vm1221, %v4367, -inf
      %4372 = vmax.xlane.f32.xlu0 %v4371
      %v4373 = vpop.xlane.xlu0 %4372
      %v4374 = vsel %vm1221, %v4368, -inf
      %4375 = vmax.xlane.f32.xlu0 %v4374
      %v4376 = vpop.xlane.xlu0 %4375
      %v4377 = vsel %vm1221, %v4369, -inf
      %4378 = vmax.xlane.f32.xlu0 %v4377
      %v4379 = vpop.xlane.xlu0 %4378
      %v4380 = vsel %vm1231, %v4370, -inf
      %4381 = vmax.xlane.f32.xlu0 %v4380
      %v4382 = vpop.xlane.xlu0 %4381
      %vm4383 = vcmp.eq.f32.partialorder %v4367, %v4373
      %vm4384 = vcmp.eq.f32.partialorder %v4368, %v4376
      %vm4385 = vcmp.eq.f32.partialorder %v4369, %v4379
      %vm4386 = vcmp.eq.f32.partialorder %v4370, %v4382
      %v4387 = vsel %vm4383, %v1205, 28.0
      %v4388 = vsel %vm4384, %v1205, 28.0
      %v4389 = vsel %vm4385, %v1205, 28.0
      %v4390 = vsel %vm4386, %v1205, 28.0
      %v4391 = vsel %vm1221, %v4387, inf
      %4392 = vmin.xlane.f32.xlu0 %v4391
      %v4393 = vpop.xlane.xlu0 %4392
      %v4394 = vsel %vm1221, %v4388, inf
      %4395 = vmin.xlane.f32.xlu0 %v4394
      %v4396 = vpop.xlane.xlu0 %4395
      %v4397 = vsel %vm1221, %v4389, inf
      %4398 = vmin.xlane.f32.xlu0 %v4397
      %v4399 = vpop.xlane.xlu0 %4398
      %v4400 = vsel %vm1231, %v4390, inf
      %4401 = vmin.xlane.f32.xlu0 %v4400
      %v4402 = vpop.xlane.xlu0 %4401
      %v4403 = vadd.f32 %v4373, %v1179
      %v4404 = vadd.f32 %v4376, %v1180
      %v4405 = vadd.f32 %v4379, %v1181
      %v4406 = vadd.f32 %v4382, %v1182
      %4408 = vset.pattern.permute.xlu0 54
      %4409 = vperm.xlu0 %4408, %v4403
      %v4410 = vpop.permute.xlu0 %4409
      %4413 = vset.pattern.permute.xlu0 54
      %4414 = vperm.xlu0 %4413, %v4404
      %v4415 = vpop.permute.xlu0 %4414
      %4418 = vset.pattern.permute.xlu0 54
      %4419 = vperm.xlu0 %4418, %v4405
      %v4420 = vpop.permute.xlu0 %4419
      %4423 = vset.pattern.permute.xlu0 54
      %4424 = vperm.xlu0 %4423, %v4406
      %v4425 = vpop.permute.xlu0 %4424
      %v4427 = vadd.f32 %v1199, %v4410
      %v4428 = vadd.f32 %v1200, %v4415
      %v4429 = vadd.f32 %v1201, %v4420
      %v4430 = vadd.f32 %v1202, %v4425
      %v4431 = vsel %vm1221, %v4427, -inf
      %v4432 = vsel %vm1221, %v4428, -inf
      %v4433 = vsel %vm1221, %v4429, -inf
      %v4434 = vsel %vm1231, %v4430, -inf
      %v4435 = vmax.f32 %v4431, %v4432
      %v4436 = vmax.f32 %v4433, %v4434
      %v4437 = vmax.f32 %v4435, %v4436
      %v4438 = vrot.slane %v4437, 4
      %v4439 = vmax.f32 %v4437, %v4438
      %v4440 = vrot.slane %v4439, 2
      %v4441 = vmax.f32 %v4439, %v4440
      %v4442 = vrot.slane %v4441, 1
      %v4443 = vmax.f32 %v4441, %v4442
      %vm4444 = vcmp.eq.f32.partialorder %v4427, %v4443
      %vm4445 = vcmp.eq.f32.partialorder %v4428, %v4443
      %vm4446 = vcmp.eq.f32.partialorder %v4429, %v4443
      %vm4447 = vcmp.eq.f32.partialorder %v4430, %v4443
      %v4448 = vsel %vm4444, %v1211, 28.0
      %v4449 = vsel %vm4445, %v1212, 28.0
      %v4450 = vsel %vm4446, %v1213, 28.0
      %v4451 = vsel %vm4447, %v1214, 28.0
      %v4452 = vsel %vm1221, %v4448, inf
      %v4453 = vsel %vm1221, %v4449, inf
      %v4454 = vsel %vm1221, %v4450, inf
      %v4455 = vsel %vm1231, %v4451, inf
      %v4456 = vmin.f32 %v4452, %v4453
      %v4457 = vmin.f32 %v4454, %v4455
      %v4458 = vmin.f32 %v4456, %v4457
      %v4459 = vrot.slane %v4458, 4
      %v4460 = vmin.f32 %v4458, %v4459
      %v4461 = vrot.slane %v4460, 2
      %v4462 = vmin.f32 %v4460, %v4461
      %v4463 = vrot.slane %v4462, 1
      %v4464 = vmin.f32 %v4462, %v4463
      %v4465 = vadd.f32 %v4443, %v1162
      %v4466 = vrot.slane %v1198, 5
      %v4468 = vadd.f32 %v4465, %v4466
      %vm4469 = vcmask 227334
      %v4470 = vsel %vm4469, %v4468, -inf
      %4471 = vmax.xlane.f32.xlu0 %v4470
      %v4472 = vpop.xlane.xlu0 %4471
      %vm4473 = vcmp.eq.f32.partialorder %v4468, %v4472
      %v4474 = vsel %vm4473, %v1205, 28.0
      %v4475 = vsel %vm4469, %v4474, inf
      %4476 = vmin.xlane.f32.xlu0 %v4475
      %v4477 = vpop.xlane.xlu0 %4476
      %v4478 = vsel %vm1631, %v4477, 0.0
      %vm4479 = vcmp.eq.f32.partialorder %v1205, %v4477
      %v4480 = vsel %vm4479, %v4464, 0.0
      %v4481 = vsel %vm4469, %v4480, 0.0
      %4482 = vadd.xlane.f32.xlu0 %v4481
      %v4483 = vpop.xlane.xlu0 %4482
      %v4484 = vsel %vm1638, %v4483, %v4478
      %v4485 = vperm.slane %v4483, 6
      %vm4486 = vcmp.eq.f32.partialorder %v1211, %v4485
      %vm4487 = vcmp.eq.f32.partialorder %v1212, %v4485
      %vm4488 = vcmp.eq.f32.partialorder %v1213, %v4485
      %vm4489 = vcmp.eq.f32.partialorder %v1214, %v4485
      %v4490 = vsel %vm4486, %v4393, 0.0
      %v4491 = vsel %vm4487, %v4396, 0.0
      %v4492 = vsel %vm4488, %v4399, 0.0
      %v4493 = vsel %vm4489, %v4402, 0.0
      %v4494 = vadd.f32 %v4490, %v4491
      %v4495 = vadd.f32 %v4494, %v4492
      %v4496 = vsel %vm1651, %v4493, 0.0
      %v4497 = vadd.f32 %v4495, %v4496
      %v4498 = vrot.slane %v4497, 4
      %v4499 = vadd.f32 %v4497, %v4498
      %v4500 = vrot.slane %v4499, 2
      %v4501 = vadd.f32 %v4499, %v4500
      %v4502 = vrot.slane %v4501, 1
      %v4503 = vadd.f32 %v4501, %v4502
      %v4504 = vsel %vm1660, %v4503, %v4484
      %vm4505 = vcmp.eq.f32.partialorder %v1205, %v4503
      %v4506 = vsel %vm4505, %v4364, 0.0
      %v4507 = vsel %vm1221, %v4506, 0.0
      %4508 = vadd.xlane.f32.xlu0 %v4507
      %v4509 = vpop.xlane.xlu0 %4508
      %v4510 = vsel %vm1667, %v4509, %v4504
      %vm4511 = vcmp.eq.f32.partialorder %v1211, %v4509
      %vm4512 = vcmp.eq.f32.partialorder %v1212, %v4509
      %vm4513 = vcmp.eq.f32.partialorder %v1213, %v4509
      %vm4514 = vcmp.eq.f32.partialorder %v1214, %v4509
      %v4515 = vsel %vm4511, %v4293, 0.0
      %v4516 = vsel %vm4512, %v4296, 0.0
      %v4517 = vsel %vm4513, %v4299, 0.0
      %v4518 = vsel %vm4514, %v4302, 0.0
      %v4519 = vadd.f32 %v4515, %v4516
      %v4520 = vadd.f32 %v4519, %v4517
      %v4521 = vsel %vm1651, %v4518, 0.0
      %v4522 = vadd.f32 %v4520, %v4521
      %v4523 = vrot.slane %v4522, 4
      %v4524 = vadd.f32 %v4522, %v4523
      %v4525 = vrot.slane %v4524, 2
      %v4526 = vadd.f32 %v4524, %v4525
      %v4527 = vrot.slane %v4526, 1
      %v4528 = vadd.f32 %v4526, %v4527
      %v4529 = vsel %vm1687, %v4528, %v4510
      %vm4530 = vcmp.eq.f32.partialorder %v1205, %v4528
      %v4531 = vsel %vm4530, %v4264, 0.0
      %v4532 = vsel %vm1221, %v4531, 0.0
      %4533 = vadd.xlane.f32.xlu0 %v4532
      %v4534 = vpop.xlane.xlu0 %4533
      %v4535 = vsel %vm1694, %v4534, %v4529
      %vm4536 = vcmp.eq.f32.partialorder %v1211, %v4534
      %vm4537 = vcmp.eq.f32.partialorder %v1212, %v4534
      %vm4538 = vcmp.eq.f32.partialorder %v1213, %v4534
      %vm4539 = vcmp.eq.f32.partialorder %v1214, %v4534
      %v4540 = vsel %vm4536, %v4193, 0.0
      %v4541 = vsel %vm4537, %v4196, 0.0
      %v4542 = vsel %vm4538, %v4199, 0.0
      %v4543 = vsel %vm4539, %v4202, 0.0
      %v4544 = vadd.f32 %v4540, %v4541
      %v4545 = vadd.f32 %v4544, %v4542
      %v4546 = vsel %vm1651, %v4543, 0.0
      %v4547 = vadd.f32 %v4545, %v4546
      %v4548 = vrot.slane %v4547, 4
      %v4549 = vadd.f32 %v4547, %v4548
      %v4550 = vrot.slane %v4549, 2
      %v4551 = vadd.f32 %v4549, %v4550
      %v4552 = vrot.slane %v4551, 1
      %v4553 = vadd.f32 %v4551, %v4552
      %v4554 = vsel %vm1714, %v4553, %v4535
      %vm4555 = vcmp.eq.f32.partialorder %v1205, %v4553
      %v4556 = vsel %vm4555, %v4164, 0.0
      %v4557 = vsel %vm1221, %v4556, 0.0
      %4558 = vadd.xlane.f32.xlu0 %v4557
      %v4559 = vpop.xlane.xlu0 %4558
      %v4560 = vsel %vm1721, %v4559, %v4554
      %vm4561 = vcmp.eq.f32.partialorder %v1211, %v4559
      %vm4562 = vcmp.eq.f32.partialorder %v1212, %v4559
      %vm4563 = vcmp.eq.f32.partialorder %v1213, %v4559
      %vm4564 = vcmp.eq.f32.partialorder %v1214, %v4559
      %v4565 = vsel %vm4561, %v1245, 0.0
      %v4566 = vsel %vm4562, %v1248, 0.0
      %v4567 = vsel %vm4563, %v1251, 0.0
      %v4568 = vsel %vm4564, %v1254, 0.0
      %v4569 = vadd.f32 %v4565, %v4566
      %v4570 = vadd.f32 %v4569, %v4567
      %v4571 = vsel %vm1651, %v4568, 0.0
      %v4572 = vadd.f32 %v4570, %v4571
      %v4573 = vrot.slane %v4572, 4
      %v4574 = vadd.f32 %v4572, %v4573
      %v4575 = vrot.slane %v4574, 2
      %v4576 = vadd.f32 %v4574, %v4575
      %v4577 = vrot.slane %v4576, 1
      %v4578 = vadd.f32 %v4576, %v4577
      %v4579 = vsel %vm1741, %v4472, %v4560
      %v4580 = vsel %vm1743, %v4578, %v4579
      %vm4581 = vcmp.eq.s32.totalorder %v1207, 6
      %v4582 = vperm.slane %v4580, 6
      %v4583 = vsel %vm4581, %v4582, %v4110
      %4584 = vset.pattern.permute.xlu0 7
      %4585 = vperm.xlu0 %4584, %v1255
      %v4586 = vpop.permute.xlu0 %4585
      %4588 = vset.pattern.permute.xlu0 7
      %4589 = vperm.xlu0 %4588, %v1256
      %v4590 = vpop.permute.xlu0 %4589
      %4592 = vset.pattern.permute.xlu0 7
      %4593 = vperm.xlu0 %4592, %v1257
      %v4594 = vpop.permute.xlu0 %4593
      %4596 = vset.pattern.permute.xlu0 7
      %4597 = vperm.xlu0 %4596, %v1258
      %v4598 = vpop.permute.xlu0 %4597
      %v4600 = vadd.f32 %v1199, %v4586
      %v4601 = vadd.f32 %v1200, %v4590
      %v4602 = vadd.f32 %v1201, %v4594
      %v4603 = vadd.f32 %v1202, %v4598
      %v4604 = vsel %vm1221, %v4600, -inf
      %v4605 = vsel %vm1221, %v4601, -inf
      %v4606 = vsel %vm1221, %v4602, -inf
      %v4607 = vsel %vm1231, %v4603, -inf
      %v4608 = vmax.f32 %v4604, %v4605
      %v4609 = vmax.f32 %v4606, %v4607
      %v4610 = vmax.f32 %v4608, %v4609
      %v4611 = vrot.slane %v4610, 4
      %v4612 = vmax.f32 %v4610, %v4611
      %v4613 = vrot.slane %v4612, 2
      %v4614 = vmax.f32 %v4612, %v4613
      %v4615 = vrot.slane %v4614, 1
      %v4616 = vmax.f32 %v4614, %v4615
      %vm4617 = vcmp.eq.f32.partialorder %v4600, %v4616
      %vm4618 = vcmp.eq.f32.partialorder %v4601, %v4616
      %vm4619 = vcmp.eq.f32.partialorder %v4602, %v4616
      %vm4620 = vcmp.eq.f32.partialorder %v4603, %v4616
      %v4621 = vsel %vm4617, %v1211, 28.0
      %v4622 = vsel %vm4618, %v1212, 28.0
      %v4623 = vsel %vm4619, %v1213, 28.0
      %v4624 = vsel %vm4620, %v1214, 28.0
      %v4625 = vsel %vm1221, %v4621, inf
      %v4626 = vsel %vm1221, %v4622, inf
      %v4627 = vsel %vm1221, %v4623, inf
      %v4628 = vsel %vm1231, %v4624, inf
      %v4629 = vmin.f32 %v4625, %v4626
      %v4630 = vmin.f32 %v4627, %v4628
      %v4631 = vmin.f32 %v4629, %v4630
      %v4632 = vrot.slane %v4631, 4
      %v4633 = vmin.f32 %v4631, %v4632
      %v4634 = vrot.slane %v4633, 2
      %v4635 = vmin.f32 %v4633, %v4634
      %v4636 = vrot.slane %v4635, 1
      %v4637 = vmin.f32 %v4635, %v4636
      %v4638 = vadd.f32 %v4616, %v1156
      %v4639 = vperm.slane %v4638, 7
      %v4640 = vadd.f32 %v1195, %v4639
      %v4641 = vadd.f32 %v1196, %v4639
      %v4642 = vadd.f32 %v1197, %v4639
      %v4643 = vadd.f32 %v1198, %v4639
      %v4644 = vsel %vm1221, %v4640, -inf
      %4645 = vmax.xlane.f32.xlu0 %v4644
      %v4646 = vpop.xlane.xlu0 %4645
      %v4647 = vsel %vm1221, %v4641, -inf
      %4648 = vmax.xlane.f32.xlu0 %v4647
      %v4649 = vpop.xlane.xlu0 %4648
      %v4650 = vsel %vm1221, %v4642, -inf
      %4651 = vmax.xlane.f32.xlu0 %v4650
      %v4652 = vpop.xlane.xlu0 %4651
      %v4653 = vsel %vm1231, %v4643, -inf
      %4654 = vmax.xlane.f32.xlu0 %v4653
      %v4655 = vpop.xlane.xlu0 %4654
      %vm4656 = vcmp.eq.f32.partialorder %v4640, %v4646
      %vm4657 = vcmp.eq.f32.partialorder %v4641, %v4649
      %vm4658 = vcmp.eq.f32.partialorder %v4642, %v4652
      %vm4659 = vcmp.eq.f32.partialorder %v4643, %v4655
      %v4660 = vsel %vm4656, %v1205, 28.0
      %v4661 = vsel %vm4657, %v1205, 28.0
      %v4662 = vsel %vm4658, %v1205, 28.0
      %v4663 = vsel %vm4659, %v1205, 28.0
      %v4664 = vsel %vm1221, %v4660, inf
      %4665 = vmin.xlane.f32.xlu0 %v4664
      %v4666 = vpop.xlane.xlu0 %4665
      %v4667 = vsel %vm1221, %v4661, inf
      %4668 = vmin.xlane.f32.xlu0 %v4667
      %v4669 = vpop.xlane.xlu0 %4668
      %v4670 = vsel %vm1221, %v4662, inf
      %4671 = vmin.xlane.f32.xlu0 %v4670
      %v4672 = vpop.xlane.xlu0 %4671
      %v4673 = vsel %vm1231, %v4663, inf
      %4674 = vmin.xlane.f32.xlu0 %v4673
      %v4675 = vpop.xlane.xlu0 %4674
      %v4676 = vadd.f32 %v4646, %v1179
      %v4677 = vadd.f32 %v4649, %v1180
      %v4678 = vadd.f32 %v4652, %v1181
      %v4679 = vadd.f32 %v4655, %v1182
      %4681 = vset.pattern.permute.xlu0 23
      %4682 = vperm.xlu0 %4681, %v4676
      %v4683 = vpop.permute.xlu0 %4682
      %4686 = vset.pattern.permute.xlu0 23
      %4687 = vperm.xlu0 %4686, %v4677
      %v4688 = vpop.permute.xlu0 %4687
      %4691 = vset.pattern.permute.xlu0 23
      %4692 = vperm.xlu0 %4691, %v4678
      %v4693 = vpop.permute.xlu0 %4692
      %4696 = vset.pattern.permute.xlu0 23
      %4697 = vperm.xlu0 %4696, %v4679
      %v4698 = vpop.permute.xlu0 %4697
      %v4700 = vadd.f32 %v1199, %v4683
      %v4701 = vadd.f32 %v1200, %v4688
      %v4702 = vadd.f32 %v1201, %v4693
      %v4703 = vadd.f32 %v1202, %v4698
      %v4704 = vsel %vm1221, %v4700, -inf
      %v4705 = vsel %vm1221, %v4701, -inf
      %v4706 = vsel %vm1221, %v4702, -inf
      %v4707 = vsel %vm1231, %v4703, -inf
      %v4708 = vmax.f32 %v4704, %v4705
      %v4709 = vmax.f32 %v4706, %v4707
      %v4710 = vmax.f32 %v4708, %v4709
      %v4711 = vrot.slane %v4710, 4
      %v4712 = vmax.f32 %v4710, %v4711
      %v4713 = vrot.slane %v4712, 2
      %v4714 = vmax.f32 %v4712, %v4713
      %v4715 = vrot.slane %v4714, 1
      %v4716 = vmax.f32 %v4714, %v4715
      %vm4717 = vcmp.eq.f32.partialorder %v4700, %v4716
      %vm4718 = vcmp.eq.f32.partialorder %v4701, %v4716
      %vm4719 = vcmp.eq.f32.partialorder %v4702, %v4716
      %vm4720 = vcmp.eq.f32.partialorder %v4703, %v4716
      %v4721 = vsel %vm4717, %v1211, 28.0
      %v4722 = vsel %vm4718, %v1212, 28.0
      %v4723 = vsel %vm4719, %v1213, 28.0
      %v4724 = vsel %vm4720, %v1214, 28.0
      %v4725 = vsel %vm1221, %v4721, inf
      %v4726 = vsel %vm1221, %v4722, inf
      %v4727 = vsel %vm1221, %v4723, inf
      %v4728 = vsel %vm1231, %v4724, inf
      %v4729 = vmin.f32 %v4725, %v4726
      %v4730 = vmin.f32 %v4727, %v4728
      %v4731 = vmin.f32 %v4729, %v4730
      %v4732 = vrot.slane %v4731, 4
      %v4733 = vmin.f32 %v4731, %v4732
      %v4734 = vrot.slane %v4733, 2
      %v4735 = vmin.f32 %v4733, %v4734
      %v4736 = vrot.slane %v4735, 1
      %v4737 = vmin.f32 %v4735, %v4736
      %v4738 = vadd.f32 %v4716, %v1158
      %v4739 = vperm.slane %v4738, 7
      %v4740 = vadd.f32 %v1195, %v4739
      %v4741 = vadd.f32 %v1196, %v4739
      %v4742 = vadd.f32 %v1197, %v4739
      %v4743 = vadd.f32 %v1198, %v4739
      %v4744 = vsel %vm1221, %v4740, -inf
      %4745 = vmax.xlane.f32.xlu0 %v4744
      %v4746 = vpop.xlane.xlu0 %4745
      %v4747 = vsel %vm1221, %v4741, -inf
      %4748 = vmax.xlane.f32.xlu0 %v4747
      %v4749 = vpop.xlane.xlu0 %4748
      %v4750 = vsel %vm1221, %v4742, -inf
      %4751 = vmax.xlane.f32.xlu0 %v4750
      %v4752 = vpop.xlane.xlu0 %4751
      %v4753 = vsel %vm1231, %v4743, -inf
      %4754 = vmax.xlane.f32.xlu0 %v4753
      %v4755 = vpop.xlane.xlu0 %4754
      %vm4756 = vcmp.eq.f32.partialorder %v4740, %v4746
      %vm4757 = vcmp.eq.f32.partialorder %v4741, %v4749
      %vm4758 = vcmp.eq.f32.partialorder %v4742, %v4752
      %vm4759 = vcmp.eq.f32.partialorder %v4743, %v4755
      %v4760 = vsel %vm4756, %v1205, 28.0
      %v4761 = vsel %vm4757, %v1205, 28.0
      %v4762 = vsel %vm4758, %v1205, 28.0
      %v4763 = vsel %vm4759, %v1205, 28.0
      %v4764 = vsel %vm1221, %v4760, inf
      %4765 = vmin.xlane.f32.xlu0 %v4764
      %v4766 = vpop.xlane.xlu0 %4765
      %v4767 = vsel %vm1221, %v4761, inf
      %4768 = vmin.xlane.f32.xlu0 %v4767
      %v4769 = vpop.xlane.xlu0 %4768
      %v4770 = vsel %vm1221, %v4762, inf
      %4771 = vmin.xlane.f32.xlu0 %v4770
      %v4772 = vpop.xlane.xlu0 %4771
      %v4773 = vsel %vm1231, %v4763, inf
      %4774 = vmin.xlane.f32.xlu0 %v4773
      %v4775 = vpop.xlane.xlu0 %4774
      %v4776 = vadd.f32 %v4746, %v1179
      %v4777 = vadd.f32 %v4749, %v1180
      %v4778 = vadd.f32 %v4752, %v1181
      %v4779 = vadd.f32 %v4755, %v1182
      %4781 = vset.pattern.permute.xlu0 39
      %4782 = vperm.xlu0 %4781, %v4776
      %v4783 = vpop.permute.xlu0 %4782
      %4786 = vset.pattern.permute.xlu0 39
      %4787 = vperm.xlu0 %4786, %v4777
      %v4788 = vpop.permute.xlu0 %4787
      %4791 = vset.pattern.permute.xlu0 39
      %4792 = vperm.xlu0 %4791, %v4778
      %v4793 = vpop.permute.xlu0 %4792
      %4796 = vset.pattern.permute.xlu0 39
      %4797 = vperm.xlu0 %4796, %v4779
      %v4798 = vpop.permute.xlu0 %4797
      %v4800 = vadd.f32 %v1199, %v4783
      %v4801 = vadd.f32 %v1200, %v4788
      %v4802 = vadd.f32 %v1201, %v4793
      %v4803 = vadd.f32 %v1202, %v4798
      %v4804 = vsel %vm1221, %v4800, -inf
      %v4805 = vsel %vm1221, %v4801, -inf
      %v4806 = vsel %vm1221, %v4802, -inf
      %v4807 = vsel %vm1231, %v4803, -inf
      %v4808 = vmax.f32 %v4804, %v4805
      %v4809 = vmax.f32 %v4806, %v4807
      %v4810 = vmax.f32 %v4808, %v4809
      %v4811 = vrot.slane %v4810, 4
      %v4812 = vmax.f32 %v4810, %v4811
      %v4813 = vrot.slane %v4812, 2
      %v4814 = vmax.f32 %v4812, %v4813
      %v4815 = vrot.slane %v4814, 1
      %v4816 = vmax.f32 %v4814, %v4815
      %vm4817 = vcmp.eq.f32.partialorder %v4800, %v4816
      %vm4818 = vcmp.eq.f32.partialorder %v4801, %v4816
      %vm4819 = vcmp.eq.f32.partialorder %v4802, %v4816
      %vm4820 = vcmp.eq.f32.partialorder %v4803, %v4816
      %v4821 = vsel %vm4817, %v1211, 28.0
      %v4822 = vsel %vm4818, %v1212, 28.0
      %v4823 = vsel %vm4819, %v1213, 28.0
      %v4824 = vsel %vm4820, %v1214, 28.0
      %v4825 = vsel %vm1221, %v4821, inf
      %v4826 = vsel %vm1221, %v4822, inf
      %v4827 = vsel %vm1221, %v4823, inf
      %v4828 = vsel %vm1231, %v4824, inf
      %v4829 = vmin.f32 %v4825, %v4826
      %v4830 = vmin.f32 %v4827, %v4828
      %v4831 = vmin.f32 %v4829, %v4830
      %v4832 = vrot.slane %v4831, 4
      %v4833 = vmin.f32 %v4831, %v4832
      %v4834 = vrot.slane %v4833, 2
      %v4835 = vmin.f32 %v4833, %v4834
      %v4836 = vrot.slane %v4835, 1
      %v4837 = vmin.f32 %v4835, %v4836
      %v4838 = vadd.f32 %v4816, %v1160
      %v4839 = vperm.slane %v4838, 7
      %v4840 = vadd.f32 %v1195, %v4839
      %v4841 = vadd.f32 %v1196, %v4839
      %v4842 = vadd.f32 %v1197, %v4839
      %v4843 = vadd.f32 %v1198, %v4839
      %v4844 = vsel %vm1221, %v4840, -inf
      %4845 = vmax.xlane.f32.xlu0 %v4844
      %v4846 = vpop.xlane.xlu0 %4845
      %v4847 = vsel %vm1221, %v4841, -inf
      %4848 = vmax.xlane.f32.xlu0 %v4847
      %v4849 = vpop.xlane.xlu0 %4848
      %v4850 = vsel %vm1221, %v4842, -inf
      %4851 = vmax.xlane.f32.xlu0 %v4850
      %v4852 = vpop.xlane.xlu0 %4851
      %v4853 = vsel %vm1231, %v4843, -inf
      %4854 = vmax.xlane.f32.xlu0 %v4853
      %v4855 = vpop.xlane.xlu0 %4854
      %vm4856 = vcmp.eq.f32.partialorder %v4840, %v4846
      %vm4857 = vcmp.eq.f32.partialorder %v4841, %v4849
      %vm4858 = vcmp.eq.f32.partialorder %v4842, %v4852
      %vm4859 = vcmp.eq.f32.partialorder %v4843, %v4855
      %v4860 = vsel %vm4856, %v1205, 28.0
      %v4861 = vsel %vm4857, %v1205, 28.0
      %v4862 = vsel %vm4858, %v1205, 28.0
      %v4863 = vsel %vm4859, %v1205, 28.0
      %v4864 = vsel %vm1221, %v4860, inf
      %4865 = vmin.xlane.f32.xlu0 %v4864
      %v4866 = vpop.xlane.xlu0 %4865
      %v4867 = vsel %vm1221, %v4861, inf
      %4868 = vmin.xlane.f32.xlu0 %v4867
      %v4869 = vpop.xlane.xlu0 %4868
      %v4870 = vsel %vm1221, %v4862, inf
      %4871 = vmin.xlane.f32.xlu0 %v4870
      %v4872 = vpop.xlane.xlu0 %4871
      %v4873 = vsel %vm1231, %v4863, inf
      %4874 = vmin.xlane.f32.xlu0 %v4873
      %v4875 = vpop.xlane.xlu0 %4874
      %v4876 = vadd.f32 %v4846, %v1179
      %v4877 = vadd.f32 %v4849, %v1180
      %v4878 = vadd.f32 %v4852, %v1181
      %v4879 = vadd.f32 %v4855, %v1182
      %4881 = vset.pattern.permute.xlu0 55
      %4882 = vperm.xlu0 %4881, %v4876
      %v4883 = vpop.permute.xlu0 %4882
      %4886 = vset.pattern.permute.xlu0 55
      %4887 = vperm.xlu0 %4886, %v4877
      %v4888 = vpop.permute.xlu0 %4887
      %4891 = vset.pattern.permute.xlu0 55
      %4892 = vperm.xlu0 %4891, %v4878
      %v4893 = vpop.permute.xlu0 %4892
      %4896 = vset.pattern.permute.xlu0 55
      %4897 = vperm.xlu0 %4896, %v4879
      %v4898 = vpop.permute.xlu0 %4897
      %v4900 = vadd.f32 %v1199, %v4883
      %v4901 = vadd.f32 %v1200, %v4888
      %v4902 = vadd.f32 %v1201, %v4893
      %v4903 = vadd.f32 %v1202, %v4898
      %v4904 = vsel %vm1221, %v4900, -inf
      %v4905 = vsel %vm1221, %v4901, -inf
      %v4906 = vsel %vm1221, %v4902, -inf
      %v4907 = vsel %vm1231, %v4903, -inf
      %v4908 = vmax.f32 %v4904, %v4905
      %v4909 = vmax.f32 %v4906, %v4907
      %v4910 = vmax.f32 %v4908, %v4909
      %v4911 = vrot.slane %v4910, 4
      %v4912 = vmax.f32 %v4910, %v4911
      %v4913 = vrot.slane %v4912, 2
      %v4914 = vmax.f32 %v4912, %v4913
      %v4915 = vrot.slane %v4914, 1
      %v4916 = vmax.f32 %v4914, %v4915
      %vm4917 = vcmp.eq.f32.partialorder %v4900, %v4916
      %vm4918 = vcmp.eq.f32.partialorder %v4901, %v4916
      %vm4919 = vcmp.eq.f32.partialorder %v4902, %v4916
      %vm4920 = vcmp.eq.f32.partialorder %v4903, %v4916
      %v4921 = vsel %vm4917, %v1211, 28.0
      %v4922 = vsel %vm4918, %v1212, 28.0
      %v4923 = vsel %vm4919, %v1213, 28.0
      %v4924 = vsel %vm4920, %v1214, 28.0
      %v4925 = vsel %vm1221, %v4921, inf
      %v4926 = vsel %vm1221, %v4922, inf
      %v4927 = vsel %vm1221, %v4923, inf
      %v4928 = vsel %vm1231, %v4924, inf
      %v4929 = vmin.f32 %v4925, %v4926
      %v4930 = vmin.f32 %v4927, %v4928
      %v4931 = vmin.f32 %v4929, %v4930
      %v4932 = vrot.slane %v4931, 4
      %v4933 = vmin.f32 %v4931, %v4932
      %v4934 = vrot.slane %v4933, 2
      %v4935 = vmin.f32 %v4933, %v4934
      %v4936 = vrot.slane %v4935, 1
      %v4937 = vmin.f32 %v4935, %v4936
      %v4938 = vadd.f32 %v4916, %v1162
      %v4939 = vrot.slane %v1198, 4
      %v4941 = vadd.f32 %v4938, %v4939
      %vm4942 = vcmask 228359
      %v4943 = vsel %vm4942, %v4941, -inf
      %4944 = vmax.xlane.f32.xlu0 %v4943
      %v4945 = vpop.xlane.xlu0 %4944
      %vm4946 = vcmp.eq.f32.partialorder %v4941, %v4945
      %v4947 = vsel %vm4946, %v1205, 28.0
      %v4948 = vsel %vm4942, %v4947, inf
      %4949 = vmin.xlane.f32.xlu0 %v4948
      %v4950 = vpop.xlane.xlu0 %4949
      %v4951 = vsel %vm1631, %v4950, 0.0
      %vm4952 = vcmp.eq.f32.partialorder %v1205, %v4950
      %v4953 = vsel %vm4952, %v4937, 0.0
      %v4954 = vsel %vm4942, %v4953, 0.0
      %4955 = vadd.xlane.f32.xlu0 %v4954
      %v4956 = vpop.xlane.xlu0 %4955
      %v4957 = vsel %vm1638, %v4956, %v4951
      %v4958 = vperm.slane %v4956, 7
      %vm4959 = vcmp.eq.f32.partialorder %v1211, %v4958
      %vm4960 = vcmp.eq.f32.partialorder %v1212, %v4958
      %vm4961 = vcmp.eq.f32.partialorder %v1213, %v4958
      %vm4962 = vcmp.eq.f32.partialorder %v1214, %v4958
      %v4963 = vsel %vm4959, %v4866, 0.0
      %v4964 = vsel %vm4960, %v4869, 0.0
      %v4965 = vsel %vm4961, %v4872, 0.0
      %v4966 = vsel %vm4962, %v4875, 0.0
      %v4967 = vadd.f32 %v4963, %v4964
      %v4968 = vadd.f32 %v4967, %v4965
      %v4969 = vsel %vm1651, %v4966, 0.0
      %v4970 = vadd.f32 %v4968, %v4969
      %v4971 = vrot.slane %v4970, 4
      %v4972 = vadd.f32 %v4970, %v4971
      %v4973 = vrot.slane %v4972, 2
      %v4974 = vadd.f32 %v4972, %v4973
      %v4975 = vrot.slane %v4974, 1
      %v4976 = vadd.f32 %v4974, %v4975
      %v4977 = vsel %vm1660, %v4976, %v4957
      %vm4978 = vcmp.eq.f32.partialorder %v1205, %v4976
      %v4979 = vsel %vm4978, %v4837, 0.0
      %v4980 = vsel %vm1221, %v4979, 0.0
      %4981 = vadd.xlane.f32.xlu0 %v4980
      %v4982 = vpop.xlane.xlu0 %4981
      %v4983 = vsel %vm1667, %v4982, %v4977
      %vm4984 = vcmp.eq.f32.partialorder %v1211, %v4982
      %vm4985 = vcmp.eq.f32.partialorder %v1212, %v4982
      %vm4986 = vcmp.eq.f32.partialorder %v1213, %v4982
      %vm4987 = vcmp.eq.f32.partialorder %v1214, %v4982
      %v4988 = vsel %vm4984, %v4766, 0.0
      %v4989 = vsel %vm4985, %v4769, 0.0
      %v4990 = vsel %vm4986, %v4772, 0.0
      %v4991 = vsel %vm4987, %v4775, 0.0
      %v4992 = vadd.f32 %v4988, %v4989
      %v4993 = vadd.f32 %v4992, %v4990
      %v4994 = vsel %vm1651, %v4991, 0.0
      %v4995 = vadd.f32 %v4993, %v4994
      %v4996 = vrot.slane %v4995, 4
      %v4997 = vadd.f32 %v4995, %v4996
      %v4998 = vrot.slane %v4997, 2
      %v4999 = vadd.f32 %v4997, %v4998
      %v5000 = vrot.slane %v4999, 1
      %v5001 = vadd.f32 %v4999, %v5000
      %v5002 = vsel %vm1687, %v5001, %v4983
      %vm5003 = vcmp.eq.f32.partialorder %v1205, %v5001
      %v5004 = vsel %vm5003, %v4737, 0.0
      %v5005 = vsel %vm1221, %v5004, 0.0
      %5006 = vadd.xlane.f32.xlu0 %v5005
      %v5007 = vpop.xlane.xlu0 %5006
      %v5008 = vsel %vm1694, %v5007, %v5002
      %vm5009 = vcmp.eq.f32.partialorder %v1211, %v5007
      %vm5010 = vcmp.eq.f32.partialorder %v1212, %v5007
      %vm5011 = vcmp.eq.f32.partialorder %v1213, %v5007
      %vm5012 = vcmp.eq.f32.partialorder %v1214, %v5007
      %v5013 = vsel %vm5009, %v4666, 0.0
      %v5014 = vsel %vm5010, %v4669, 0.0
      %v5015 = vsel %vm5011, %v4672, 0.0
      %v5016 = vsel %vm5012, %v4675, 0.0
      %v5017 = vadd.f32 %v5013, %v5014
      %v5018 = vadd.f32 %v5017, %v5015
      %v5019 = vsel %vm1651, %v5016, 0.0
      %v5020 = vadd.f32 %v5018, %v5019
      %v5021 = vrot.slane %v5020, 4
      %v5022 = vadd.f32 %v5020, %v5021
      %v5023 = vrot.slane %v5022, 2
      %v5024 = vadd.f32 %v5022, %v5023
      %v5025 = vrot.slane %v5024, 1
      %v5026 = vadd.f32 %v5024, %v5025
      %v5027 = vsel %vm1714, %v5026, %v5008
      %vm5028 = vcmp.eq.f32.partialorder %v1205, %v5026
      %v5029 = vsel %vm5028, %v4637, 0.0
      %v5030 = vsel %vm1221, %v5029, 0.0
      %5031 = vadd.xlane.f32.xlu0 %v5030
      %v5032 = vpop.xlane.xlu0 %5031
      %v5033 = vsel %vm1721, %v5032, %v5027
      %vm5034 = vcmp.eq.f32.partialorder %v1211, %v5032
      %vm5035 = vcmp.eq.f32.partialorder %v1212, %v5032
      %vm5036 = vcmp.eq.f32.partialorder %v1213, %v5032
      %vm5037 = vcmp.eq.f32.partialorder %v1214, %v5032
      %v5038 = vsel %vm5034, %v1245, 0.0
      %v5039 = vsel %vm5035, %v1248, 0.0
      %v5040 = vsel %vm5036, %v1251, 0.0
      %v5041 = vsel %vm5037, %v1254, 0.0
      %v5042 = vadd.f32 %v5038, %v5039
      %v5043 = vadd.f32 %v5042, %v5040
      %v5044 = vsel %vm1651, %v5041, 0.0
      %v5045 = vadd.f32 %v5043, %v5044
      %v5046 = vrot.slane %v5045, 4
      %v5047 = vadd.f32 %v5045, %v5046
      %v5048 = vrot.slane %v5047, 2
      %v5049 = vadd.f32 %v5047, %v5048
      %v5050 = vrot.slane %v5049, 1
      %v5051 = vadd.f32 %v5049, %v5050
      %v5052 = vsel %vm1741, %v4945, %v5033
      %v5053 = vsel %vm1743, %v5051, %v5052
      %vm5054 = vcmp.eq.s32.totalorder %v1207, 7
      %v5055 = vperm.slane %v5053, 7
      %v5056 = vsel %vm5054, %v5055, %v4583
      %5057 = vst [vmem:[%s143] sm:$0xff] %v5056
      %p5058 = scmp.lt.s32.totalorder %s13, 1
      %s5059 = scalar_select %p5058, %s13, 1
      %s5060 = smul.addr %s5059, 8
      %s5061 = scalar_lea.vmem %s2, %s5060
      // Predicated region
      $region29: #{ner_forward.1} parent=27 // pred_check
        %p5062 = pneg %p78
      $region30: #{ner_forward.1} parent=27 // pred_check_branch
        %5064 = sbr.rel (%p5062) target = $region32
      $region31: #{ner_forward.1} parent=27 // pred_region
        _
      $region32: #{ner_forward.1} parent=27 // pred_fallthru
        _
    $region28: #{ner_forward.1} parent=5 // pred_fallthru
      _
    %p5065 = scmp.le.s32.totalorder 2, %s8
    // Predicated region
    $region33: #{ner_forward.1} parent=5 // pred_check
      %p5066 = pneg %p5065
    $region34: #{ner_forward.1} parent=5 // pred_check_branch
      %5068 = sbr.rel (%p5066) target = $region36
    $region35: #{ner_forward.1} parent=5 // pred_region
      %s5069 = ssub.s32 %s8, 2
      // Predicated region
      $region37: #{ner_forward.1} parent=35 // pred_check
        %p5070 = pneg %p84
      $region38: #{ner_forward.1} parent=35 // pred_check_branch
        %5072 = sbr.rel (%p5070) target = $region40
      $region39: #{ner_forward.1} parent=35 // pred_region
        %p5073 = scmp.lt.s32.totalorder %s14, 1
        %s5074 = scalar_select %p5073, %s14, 1
        %s5075 = smul.addr %s5074, 8
        %s5076 = scalar_lea.vmem %s2, %s5075
      $region40: #{ner_forward.1} parent=35 // pred_fallthru
        _
    $region36: #{ner_forward.1} parent=5 // pred_fallthru
      _
  $region6: #{ner_forward.1} parent=0 // loop_footer
    %s12 = sadd.s32 1, %s8
  $region7: #{ner_forward.1} parent=0 // loop_footer_branch
    %7 = sbr.rel target = $region3
  $region8: #{ner_forward.1} parent=0 // loop_exit
    _

</llo_original>
